<compile_context>
chip_gen: v7x
topology: tpu7x:2x2x1
jax: 0.10.0
libtpu: 0.0.40
codegen_flags: <defaults>
</compile_context>

<pallas_src>
import functools

import jax
import jax.numpy as jnp
from jax.experimental import pallas as pl
from jax.experimental.pallas import tpu as pltpu

nclasses = 20

MATMUL_DTYPE = jnp.float32   # flip to jnp.bfloat16 on v6e/v7x for MXU rate
ACT_DTYPE = jnp.float32      # inter-layer activations (bf16 also valid on v6e/v7x)
DH_PAD = 64                  # fc1 hidden width 50 padded to 64 lanes


def _default_vmem_limit():
    """Generation-aware scoped-VMEM budget (v7x: 64 MiB physical; v5e/v6e: 128)."""
    try:
        cap = int(pltpu.get_tpu_info().vmem_capacity_bytes)
    except Exception:
        cap = 64 * 1024 * 1024
    return max(32 * 1024 * 1024, min(cap * 3 // 4, 96 * 1024 * 1024))


VMEM_LIMIT = _default_vmem_limit()


def _pick_block(n, target, prefer_multi_step=False):
    """Largest divisor of n that is <= target; keep >=2 grid steps if asked."""
    bn = max(1, min(target, n))
    while n % bn:
        bn -= 1
    if prefer_multi_step and n >= 2 and n // bn < 2:
        bn = max(1, bn // 2)
        while n % bn:
            bn -= 1
    return bn


def _pick_batch_tile(n, target):
    """Largest divisor of n <= target that is sublane aligned (mult of 8);
    falls back to the full batch (legal: block dim == full dim)."""
    for bn in range(min(target, n), 0, -1):
        if n % bn == 0 and bn % 8 == 0:
            return bn
    return n


# ----------------------------------------------------------------------------
# Fused [merged-K conv matmul] -> bias -> maxpool(2) -> relu kernel
# ----------------------------------------------------------------------------
def _conv_pool_relu_kernel(p_ref, w_ref, b_ref, o_ref, pool_ref,
                           *, BN, Ho, Wo, K, C):
    # p_ref   : (BN, Ho*Wo, K)   im2col patches, K = 5*5*Cin (dense, merged)
    # w_ref   : (K, C)           merged conv weights (real channel counts)
    # b_ref   : (1, C)           bias
    # o_ref   : (BN, Hp*Wp, C)   pooled + relu'd activations
    # pool_ref: (BN*Hp*Wo, C)    f32 scratch for the W-direction pool
    Hp, Wp = Ho // 2, Wo // 2

    # One K-dense MXU pass per block; accumulation stays in the MXU/vregs,
    # no per-tap VMEM read-modify-write.
    lhs = p_ref[...].reshape(BN * Ho * Wo, K)
    z = jnp.dot(lhs.astype(w_ref.dtype), w_ref[...],
                preferred_element_type=jnp.float32)            # (BN*Ho*Wo, C)

    # 2x2 max pool.  H-pool: rows are ((b*Ho + y)*Wo + x); splitting y into
    # (Hp, 2) is layout preserving because Wo is a multiple of 8 (56/24/8).
    z4 = z.reshape(BN * Hp, 2, Wo, C)
    zh = jnp.maximum(z4[:, 0], z4[:, 1])                       # (BN*Hp, Wo, C)
    pool_ref[...] = zh.reshape(BN * Hp * Wo, C)
    # W-pool: even/odd columns are even/odd sublane rows -> stride-2 reads.
    even = pool_ref[pl.ds(0, BN * Hp * Wp, 2), :]
    odd = pool_ref[pl.ds(1, BN * Hp * Wp, 2), :]
    zp = jnp.maximum(even, odd)                                # (BN*Hp*Wp, C)

    # Bias commutes with the 2x2 max, so relu(maxpool(conv + b)) == this.
    out = jnp.maximum(zp + b_ref[...], 0.0)
    o_ref[...] = out.astype(o_ref.dtype).reshape(BN, Hp * Wp, C)


def conv_pool_relu(x_nhwc, w_kc, b_row, *, ksize=5, bn_target=1):
    """Fused Conv2d(k=5, valid) -> max_pool2d(2) -> relu.

    x_nhwc: (N, H, W, Cin) activations at their REAL channel width.
    w_kc:   (k*k*Cin, Cout) merged-tap weights.  Returns (N, Hp, Wp, Cout).
    """
    N, H, W, Cin = x_nhwc.shape
    K, C = w_kc.shape
    assert K == ksize * ksize * Cin
    Ho, Wo = H - ksize + 1, W - ksize + 1
    Hp, Wp = Ho // 2, Wo // 2

    # XLA-side im2col (pure layout prep, fused by XLA): tap order (ky, kx)
    # major with channels minor -- matches the merged weight rows.  This lets
    # the kernel do ONE K-dense matmul (K = 75 / 400 / 1600) per block.
    taps = [x_nhwc[:, ky:ky + Ho, kx:kx + Wo, :]
            for ky in range(ksize) for kx in range(ksize)]
    patches = jnp.concatenate(taps, axis=-1).reshape(N, Ho * Wo, K)
    patches = patches.astype(w_kc.dtype)   # cast once (bf16 halves patch DMA)

    BN = _pick_block(N, bn_target, prefer_multi_step=True)
    grid = (N // BN,)

    kernel = functools.partial(_conv_pool_relu_kernel,
                               BN=BN, Ho=Ho, Wo=Wo, K=K, C=C)
    cost = pl.CostEstimate(
        flops=2 * N * Ho * Wo * K * C,
        transcendentals=0,
        bytes_accessed=int(patches.size * patches.dtype.itemsize
                           + w_kc.size * w_kc.dtype.itemsize
                           + N * Hp * Wp * C * jnp.dtype(ACT_DTYPE).itemsize),
    )

    out = pl.pallas_call(
        kernel,
        out_shape=jax.ShapeDtypeStruct((N, Hp * Wp, C), ACT_DTYPE),
        grid=grid,
        in_specs=[
            pl.BlockSpec((BN, Ho * Wo, K), lambda g: (g, 0, 0)),
            pl.BlockSpec((K, C), lambda g: (0, 0)),
            pl.BlockSpec((1, C), lambda g: (0, 0)),
        ],
        out_specs=pl.BlockSpec((BN, Hp * Wp, C), lambda g: (g, 0, 0)),
        scratch_shapes=[pltpu.VMEM((BN * Hp * Wo, C), jnp.float32)],
        compiler_params=pltpu.CompilerParams(
            dimension_semantics=("parallel",),
            vmem_limit_bytes=VMEM_LIMIT,
        ),
        cost_estimate=cost,
    )(patches, w_kc, b_row)
    return out.reshape(N, Hp, Wp, C)


# ----------------------------------------------------------------------------
# Fused fc1(+relu) -> fc2 head, batch-tiled; hidden activation stays in VMEM
# ----------------------------------------------------------------------------
def _mlp_kernel(x_ref, w1_ref, b1_ref, w2_ref, b2_ref, o_ref):
    h = jnp.dot(x_ref[...].astype(w1_ref.dtype), w1_ref[...],
                preferred_element_type=jnp.float32)
    h = jnp.maximum(h + b1_ref[...], 0.0)
    z = jnp.dot(h.astype(w2_ref.dtype), w2_ref[...],
                preferred_element_type=jnp.float32)
    o_ref[...] = z + b2_ref[...]


def mlp_head(x_flat, w1, b1, w2, b2, *, tn_target=256):
    N, Din = x_flat.shape
    Dh, Dout = w1.shape[1], w2.shape[1]
    TN = _pick_batch_tile(N, tn_target)
    grid = (N // TN,)
    cost = pl.CostEstimate(
        flops=2 * N * (Din * Dh + Dh * Dout),
        transcendentals=0,
        bytes_accessed=int(x_flat.size * x_flat.dtype.itemsize
                           + w1.size * w1.dtype.itemsize
                           + w2.size * w2.dtype.itemsize + N * Dout * 4),
    )
    return pl.pallas_call(
        _mlp_kernel,
        out_shape=jax.ShapeDtypeStruct((N, Dout), jnp.float32),
        grid=grid,
        in_specs=[
            pl.BlockSpec((TN, Din), lambda g: (g, 0)),
            pl.BlockSpec((Din, Dh), lambda g: (0, 0)),
            pl.BlockSpec((1, Dh), lambda g: (0, 0)),
            pl.BlockSpec((Dh, Dout), lambda g: (0, 0)),
            pl.BlockSpec((1, Dout), lambda g: (0, 0)),
        ],
        out_specs=pl.BlockSpec((TN, Dout), lambda g: (g, 0)),
        compiler_params=pltpu.CompilerParams(
            dimension_semantics=("parallel",),
            vmem_limit_bytes=VMEM_LIMIT,
        ),
        cost_estimate=cost,
    )(x_flat, w1, b1, w2, b2)


# ----------------------------------------------------------------------------
# Full Net forward
# ----------------------------------------------------------------------------
def net_forward(prepped, x_nchw):
    x = jnp.transpose(x_nchw, (0, 2, 3, 1)).astype(jnp.float32)       # NCHW -> NHWC
    x = conv_pool_relu(x, prepped["w1"], prepped["b1"], bn_target=1)  # (N, 28, 28, 16)
    x = conv_pool_relu(x, prepped["w2"], prepped["b2"], bn_target=4)  # (N, 12, 12, 64)
    x = conv_pool_relu(x, prepped["w3"], prepped["b3"], bn_target=8)  # (N,  4,  4, 128)
    N = x.shape[0]
    x = x.reshape(N, 4 * 4 * 128).astype(jnp.float32)  # NHWC flatten; torch's
    # NCHW view(-1, 16*128) order is folded into fc1's weight rows (see prep).
    return mlp_head(x, prepped["fc1_w"], prepped["fc1_b"],
                    prepped["fc2_w"], prepped["fc2_b"])


# ----------------------------------------------------------------------------
# Parameters: torch-layout init + one-time kernel-layout preparation
# ----------------------------------------------------------------------------
def init_params(key):
    """Deterministic synthetic parameters with the exact torch layouts/shapes."""
    ks = jax.random.split(key, 10)

    def u(k, shape, fan_in):
        bound = 1.0 / jnp.sqrt(fan_in)
        return jax.random.uniform(k, shape, jnp.float32, -bound, bound)

    return {
        "conv1_w": u(ks[0], (16, 3, 5, 5), 3 * 25),
        "conv1_b": u(ks[1], (16,), 3 * 25),
        "conv2_w": u(ks[2], (64, 16, 5, 5), 16 * 25),
        "conv2_b": u(ks[3], (64,), 16 * 25),
        "conv3_w": u(ks[4], (128, 64, 5, 5), 64 * 25),
        "conv3_b": u(ks[5], (128,), 64 * 25),
        "fc1_w": u(ks[6], (50, 16 * 128), 16 * 128),   # torch layout (out, in)
        "fc1_b": u(ks[7], (50,), 16 * 128),
        "fc2_w": u(ks[8], (nclasses, 50), 50),
        "fc2_b": u(ks[9], (nclasses,), 50),
    }


def prepare_params(p, dtype=MATMUL_DTYPE):
    """One-time conversion from torch layouts to merged-K kernel layouts."""
    def prep_conv(w, b):
        cout, cin, kh, kw = w.shape
        # (cout, cin, kh, kw) -> rows ordered (ky, kx, cin), matching im2col.
        wk = jnp.transpose(w, (2, 3, 1, 0)).reshape(kh * kw * cin, cout)
        return wk.astype(dtype), b.reshape(1, cout).astype(jnp.float32)

    w1, b1 = prep_conv(p["conv1_w"], p["conv1_b"])
    w2, b2 = prep_conv(p["conv2_w"], p["conv2_b"])
    w3, b3 = prep_conv(p["conv3_w"], p["conv3_b"])

    # fc1: fold torch's NCHW view(-1, 16*128) permutation into the weight rows
    # (our flatten is NHWC) and pad hidden 50 -> 64.  Padded columns get zero
    # weights + zero bias (relu(0)=0) and hit zero fc2 rows -> bit-identical.
    fc1 = p["fc1_w"].reshape(50, 128, 4, 4).transpose(2, 3, 1, 0).reshape(16 * 128, 50)
    fc1 = jnp.pad(fc1, ((0, 0), (0, DH_PAD - 50))).astype(dtype)
    fc1_b = jnp.pad(p["fc1_b"], (0, DH_PAD - 50)).reshape(1, DH_PAD).astype(jnp.float32)
    fc2 = jnp.pad(p["fc2_w"].T, ((0, DH_PAD - 50), (0, 0))).astype(dtype)
    fc2_b = p["fc2_b"].reshape(1, nclasses).astype(jnp.float32)

    return {"w1": w1, "b1": b1, "w2": w2, "b2": b2, "w3": w3, "b3": b3,
            "fc1_w": fc1, "fc1_b": fc1_b, "fc2_w": fc2, "fc2_b": fc2_b}


if __name__ == "__main__":
    key = jax.random.PRNGKey(0)
    pkey, xkey = jax.random.split(key)
    params = init_params(pkey)
    prepped = prepare_params(params)

    # 60x60 input -> 56->28 -> 24->12 -> 8->4, i.e. 4*4*128 = 16*128 features
    # exactly as the fc1 in-features imply.
    x = jax.random.normal(xkey, (2, 3, 60, 60), dtype=jnp.float32)

    logits = jax.jit(net_forward)(prepped, x)
    jax.block_until_ready(logits)
    assert logits.shape == (2, nclasses), logits.shape
    print("KERNEL_OK")
</pallas_src>

<mosaic_0001>
module attributes {stable_mosaic.version = 11 : i64} {
  func.func @_conv_pool_relu_kernel(%arg0: i32, %arg1: memref<1x3136x75xf32, #tpu.memory_space<vmem>>, %arg2: memref<75x16xf32, #tpu.memory_space<vmem>>, %arg3: memref<1x16xf32, #tpu.memory_space<vmem>>, %arg4: memref<1x784x16xf32, #tpu.memory_space<vmem>>, %arg5: memref<1568x16xf32, #tpu.memory_space<vmem>>) attributes {dimension_semantics = [#tpu.dimension_semantics<parallel>], iteration_bounds = array<i64: 2>, scalar_prefetch = 0 : i64, scratch_operands = 1 : i64, tpu.core_type = #tpu.core_type<tc>, window_params = [{transform_indices = @transform_0, window_bounds = array<i64: 1, 3136, 75>}, {pipeline_mode = #tpu.pipeline_mode<synchronous>, transform_indices = @transform_1, window_bounds = array<i64: 75, 16>}, {pipeline_mode = #tpu.pipeline_mode<synchronous>, transform_indices = @transform_2, window_bounds = array<i64: 1, 16>}, {transform_indices = @transform_3, window_bounds = array<i64: 1, 784, 16>}]} {
    %c0 = arith.constant 0 : index
    %c0_0 = arith.constant 0 : index
    %c0_1 = arith.constant 0 : index
    %0 = vector.load %arg1[%c0, %c0_0, %c0_1] : memref<1x3136x75xf32, #tpu.memory_space<vmem>>, vector<1x3136x75xf32>
    %1 = vector.shape_cast %0 : vector<1x3136x75xf32> to vector<3136x75xf32>
    %c0_2 = arith.constant 0 : index
    %c0_3 = arith.constant 0 : index
    %2 = vector.load %arg2[%c0_2, %c0_3] : memref<75x16xf32, #tpu.memory_space<vmem>>, vector<75x16xf32>
    %cst = arith.constant dense<0.000000e+00> : vector<3136x16xf32>
    %3 = tpu.matmul %1, %2, %cst {dimension_numbers = #tpu.dot_dimension_numbers<[1], [0], [0], [1], [0, 0, 1, 1], [], []>} : vector<3136x75xf32>, vector<75x16xf32>, vector<3136x16xf32> -> vector<3136x16xf32>
    %4 = vector.shape_cast %3 : vector<3136x16xf32> to vector<28x2x56x16xf32>
    %5 = vector.extract_strided_slice %4 {offsets = [0, 0, 0, 0], sizes = [28, 1, 56, 16], strides = [1, 1, 1, 1]} : vector<28x2x56x16xf32> to vector<28x1x56x16xf32>
    %6 = vector.shape_cast %5 : vector<28x1x56x16xf32> to vector<28x56x16xf32>
    %7 = vector.extract_strided_slice %4 {offsets = [0, 1, 0, 0], sizes = [28, 1, 56, 16], strides = [1, 1, 1, 1]} : vector<28x2x56x16xf32> to vector<28x1x56x16xf32>
    %8 = vector.shape_cast %7 : vector<28x1x56x16xf32> to vector<28x56x16xf32>
    %9 = arith.maximumf %6, %8 : vector<28x56x16xf32>
    %10 = vector.shape_cast %9 : vector<28x56x16xf32> to vector<1568x16xf32>
    %c0_4 = arith.constant 0 : index
    %c0_5 = arith.constant 0 : index
    %11 = vector.load %arg5[%c0_4, %c0_5] : memref<1568x16xf32, #tpu.memory_space<vmem>>, vector<1568x16xf32>
    tpu.vector_store %arg5[%c0_4, %c0_5], %10 {strides = array<i32>} : memref<1568x16xf32, #tpu.memory_space<vmem>>, vector<1568x16xf32>,
    %c0_6 = arith.constant 0 : index
    %c0_7 = arith.constant 0 : index
    %12 = tpu.strided_load %arg5[%c0_6, %c0_7] {strides = array<i32: 2, 1>} : memref<1568x16xf32, #tpu.memory_space<vmem>>, vector<784x16xf32>
    %c1 = arith.constant 1 : index
    %c0_8 = arith.constant 0 : index
    %13 = tpu.strided_load %arg5[%c1, %c0_8] {strides = array<i32: 2, 1>} : memref<1568x16xf32, #tpu.memory_space<vmem>>, vector<784x16xf32>
    %14 = arith.maximumf %12, %13 : vector<784x16xf32>
    %c0_9 = arith.constant 0 : index
    %c0_10 = arith.constant 0 : index
    %15 = vector.load %arg3[%c0_9, %c0_10] : memref<1x16xf32, #tpu.memory_space<vmem>>, vector<1x16xf32>
    %16 = vector.broadcast %15 : vector<1x16xf32> to vector<784x16xf32>
    %17 = arith.addf %14, %16 : vector<784x16xf32>
    %cst_11 = arith.constant 0.000000e+00 : f32
    %18 = vector.broadcast %cst_11 : f32 to vector<784x16xf32>
    %19 = arith.maximumf %17, %18 : vector<784x16xf32>
    %20 = vector.shape_cast %19 : vector<784x16xf32> to vector<1x784x16xf32>
    %c0_12 = arith.constant 0 : index
    %c0_13 = arith.constant 0 : index
    %c0_14 = arith.constant 0 : index
    %21 = vector.load %arg4[%c0_12, %c0_13, %c0_14] : memref<1x784x16xf32, #tpu.memory_space<vmem>>, vector<1x784x16xf32>
    tpu.vector_store %arg4[%c0_12, %c0_13, %c0_14], %20 {strides = array<i32>} : memref<1x784x16xf32, #tpu.memory_space<vmem>>, vector<1x784x16xf32>,
    return
  }
  func.func @transform_0(%arg0: i32) -> (i32, i32, i32) {
    %c0_i32 = arith.constant 0 : i32
    %c0_i32_0 = arith.constant 0 : i32
    %c0_i32_1 = arith.constant 0 : i32
    return %arg0, %c0_i32, %c0_i32_0 : i32, i32, i32
  }
  func.func @transform_1(%arg0: i32) -> (i32, i32) {
    %c0_i32 = arith.constant 0 : i32
    %c0_i32_0 = arith.constant 0 : i32
    %c0_i32_1 = arith.constant 0 : i32
    return %c0_i32, %c0_i32_0 : i32, i32
  }
  func.func @transform_2(%arg0: i32) -> (i32, i32) {
    %c0_i32 = arith.constant 0 : i32
    %c0_i32_0 = arith.constant 0 : i32
    %c0_i32_1 = arith.constant 0 : i32
    return %c0_i32, %c0_i32_0 : i32, i32
  }
  func.func @transform_3(%arg0: i32) -> (i32, i32, i32) {
    %c0_i32 = arith.constant 0 : i32
    %c0_i32_0 = arith.constant 0 : i32
    %c0_i32_1 = arith.constant 0 : i32
    return %arg0, %c0_i32, %c0_i32_0 : i32, i32, i32
  }
}

module attributes {stable_mosaic.version = 11 : i64} {
  func.func @_conv_pool_relu_kernel(%arg0: i32, %arg1: memref<1x576x400xf32, #tpu.memory_space<vmem>>, %arg2: memref<400x64xf32, #tpu.memory_space<vmem>>, %arg3: memref<1x64xf32, #tpu.memory_space<vmem>>, %arg4: memref<1x144x64xf32, #tpu.memory_space<vmem>>, %arg5: memref<288x64xf32, #tpu.memory_space<vmem>>) attributes {dimension_semantics = [#tpu.dimension_semantics<parallel>], iteration_bounds = array<i64: 2>, scalar_prefetch = 0 : i64, scratch_operands = 1 : i64, tpu.core_type = #tpu.core_type<tc>, window_params = [{transform_indices = @transform_0, window_bounds = array<i64: 1, 576, 400>}, {pipeline_mode = #tpu.pipeline_mode<synchronous>, transform_indices = @transform_1, window_bounds = array<i64: 400, 64>}, {pipeline_mode = #tpu.pipeline_mode<synchronous>, transform_indices = @transform_2, window_bounds = array<i64: 1, 64>}, {transform_indices = @transform_3, window_bounds = array<i64: 1, 144, 64>}]} {
    %c0 = arith.constant 0 : index
    %c0_0 = arith.constant 0 : index
    %c0_1 = arith.constant 0 : index
    %0 = vector.load %arg1[%c0, %c0_0, %c0_1] : memref<1x576x400xf32, #tpu.memory_space<vmem>>, vector<1x576x400xf32>
    %1 = vector.shape_cast %0 : vector<1x576x400xf32> to vector<576x400xf32>
    %c0_2 = arith.constant 0 : index
    %c0_3 = arith.constant 0 : index
    %2 = vector.load %arg2[%c0_2, %c0_3] : memref<400x64xf32, #tpu.memory_space<vmem>>, vector<400x64xf32>
    %cst = arith.constant dense<0.000000e+00> : vector<576x64xf32>
    %3 = tpu.matmul %1, %2, %cst {dimension_numbers = #tpu.dot_dimension_numbers<[1], [0], [0], [1], [0, 0, 1, 1], [], []>} : vector<576x400xf32>, vector<400x64xf32>, vector<576x64xf32> -> vector<576x64xf32>
    %4 = vector.shape_cast %3 : vector<576x64xf32> to vector<12x2x24x64xf32>
    %5 = vector.extract_strided_slice %4 {offsets = [0, 0, 0, 0], sizes = [12, 1, 24, 64], strides = [1, 1, 1, 1]} : vector<12x2x24x64xf32> to vector<12x1x24x64xf32>
    %6 = vector.shape_cast %5 : vector<12x1x24x64xf32> to vector<12x24x64xf32>
    %7 = vector.extract_strided_slice %4 {offsets = [0, 1, 0, 0], sizes = [12, 1, 24, 64], strides = [1, 1, 1, 1]} : vector<12x2x24x64xf32> to vector<12x1x24x64xf32>
    %8 = vector.shape_cast %7 : vector<12x1x24x64xf32> to vector<12x24x64xf32>
    %9 = arith.maximumf %6, %8 : vector<12x24x64xf32>
    %10 = vector.shape_cast %9 : vector<12x24x64xf32> to vector<288x64xf32>
    %c0_4 = arith.constant 0 : index
    %c0_5 = arith.constant 0 : index
    %11 = vector.load %arg5[%c0_4, %c0_5] : memref<288x64xf32, #tpu.memory_space<vmem>>, vector<288x64xf32>
    tpu.vector_store %arg5[%c0_4, %c0_5], %10 {strides = array<i32>} : memref<288x64xf32, #tpu.memory_space<vmem>>, vector<288x64xf32>,
    %c0_6 = arith.constant 0 : index
    %c0_7 = arith.constant 0 : index
    %12 = tpu.strided_load %arg5[%c0_6, %c0_7] {strides = array<i32: 2, 1>} : memref<288x64xf32, #tpu.memory_space<vmem>>, vector<144x64xf32>
    %c1 = arith.constant 1 : index
    %c0_8 = arith.constant 0 : index
    %13 = tpu.strided_load %arg5[%c1, %c0_8] {strides = array<i32: 2, 1>} : memref<288x64xf32, #tpu.memory_space<vmem>>, vector<144x64xf32>
    %14 = arith.maximumf %12, %13 : vector<144x64xf32>
    %c0_9 = arith.constant 0 : index
    %c0_10 = arith.constant 0 : index
    %15 = vector.load %arg3[%c0_9, %c0_10] : memref<1x64xf32, #tpu.memory_space<vmem>>, vector<1x64xf32>
    %16 = vector.broadcast %15 : vector<1x64xf32> to vector<144x64xf32>
    %17 = arith.addf %14, %16 : vector<144x64xf32>
    %cst_11 = arith.constant 0.000000e+00 : f32
    %18 = vector.broadcast %cst_11 : f32 to vector<144x64xf32>
    %19 = arith.maximumf %17, %18 : vector<144x64xf32>
    %20 = vector.shape_cast %19 : vector<144x64xf32> to vector<1x144x64xf32>
    %c0_12 = arith.constant 0 : index
    %c0_13 = arith.constant 0 : index
    %c0_14 = arith.constant 0 : index
    %21 = vector.load %arg4[%c0_12, %c0_13, %c0_14] : memref<1x144x64xf32, #tpu.memory_space<vmem>>, vector<1x144x64xf32>
    tpu.vector_store %arg4[%c0_12, %c0_13, %c0_14], %20 {strides = array<i32>} : memref<1x144x64xf32, #tpu.memory_space<vmem>>, vector<1x144x64xf32>,
    return
  }
  func.func @transform_0(%arg0: i32) -> (i32, i32, i32) {
    %c0_i32 = arith.constant 0 : i32
    %c0_i32_0 = arith.constant 0 : i32
    %c0_i32_1 = arith.constant 0 : i32
    return %arg0, %c0_i32, %c0_i32_0 : i32, i32, i32
  }
  func.func @transform_1(%arg0: i32) -> (i32, i32) {
    %c0_i32 = arith.constant 0 : i32
    %c0_i32_0 = arith.constant 0 : i32
    %c0_i32_1 = arith.constant 0 : i32
    return %c0_i32, %c0_i32_0 : i32, i32
  }
  func.func @transform_2(%arg0: i32) -> (i32, i32) {
    %c0_i32 = arith.constant 0 : i32
    %c0_i32_0 = arith.constant 0 : i32
    %c0_i32_1 = arith.constant 0 : i32
    return %c0_i32, %c0_i32_0 : i32, i32
  }
  func.func @transform_3(%arg0: i32) -> (i32, i32, i32) {
    %c0_i32 = arith.constant 0 : i32
    %c0_i32_0 = arith.constant 0 : i32
    %c0_i32_1 = arith.constant 0 : i32
    return %arg0, %c0_i32, %c0_i32_0 : i32, i32, i32
  }
}

module attributes {stable_mosaic.version = 11 : i64} {
  func.func @_conv_pool_relu_kernel(%arg0: i32, %arg1: memref<1x64x1600xf32, #tpu.memory_space<vmem>>, %arg2: memref<1600x128xf32, #tpu.memory_space<vmem>>, %arg3: memref<1x128xf32, #tpu.memory_space<vmem>>, %arg4: memref<1x16x128xf32, #tpu.memory_space<vmem>>, %arg5: memref<32x128xf32, #tpu.memory_space<vmem>>) attributes {dimension_semantics = [#tpu.dimension_semantics<parallel>], iteration_bounds = array<i64: 2>, scalar_prefetch = 0 : i64, scratch_operands = 1 : i64, tpu.core_type = #tpu.core_type<tc>, window_params = [{transform_indices = @transform_0, window_bounds = array<i64: 1, 64, 1600>}, {pipeline_mode = #tpu.pipeline_mode<synchronous>, transform_indices = @transform_1, window_bounds = array<i64: 1600, 128>}, {pipeline_mode = #tpu.pipeline_mode<synchronous>, transform_indices = @transform_2, window_bounds = array<i64: 1, 128>}, {transform_indices = @transform_3, window_bounds = array<i64: 1, 16, 128>}]} {
    %c0 = arith.constant 0 : index
    %c0_0 = arith.constant 0 : index
    %c0_1 = arith.constant 0 : index
    %0 = vector.load %arg1[%c0, %c0_0, %c0_1] : memref<1x64x1600xf32, #tpu.memory_space<vmem>>, vector<1x64x1600xf32>
    %1 = vector.shape_cast %0 : vector<1x64x1600xf32> to vector<64x1600xf32>
    %c0_2 = arith.constant 0 : index
    %c0_3 = arith.constant 0 : index
    %2 = vector.load %arg2[%c0_2, %c0_3] : memref<1600x128xf32, #tpu.memory_space<vmem>>, vector<1600x128xf32>
    %cst = arith.constant dense<0.000000e+00> : vector<64x128xf32>
    %3 = tpu.matmul %1, %2, %cst {dimension_numbers = #tpu.dot_dimension_numbers<[1], [0], [0], [1], [0, 0, 1, 1], [], []>} : vector<64x1600xf32>, vector<1600x128xf32>, vector<64x128xf32> -> vector<64x128xf32>
    %4 = vector.shape_cast %3 : vector<64x128xf32> to vector<4x2x8x128xf32>
    %5 = vector.extract_strided_slice %4 {offsets = [0, 0, 0, 0], sizes = [4, 1, 8, 128], strides = [1, 1, 1, 1]} : vector<4x2x8x128xf32> to vector<4x1x8x128xf32>
    %6 = vector.shape_cast %5 : vector<4x1x8x128xf32> to vector<4x8x128xf32>
    %7 = vector.extract_strided_slice %4 {offsets = [0, 1, 0, 0], sizes = [4, 1, 8, 128], strides = [1, 1, 1, 1]} : vector<4x2x8x128xf32> to vector<4x1x8x128xf32>
    %8 = vector.shape_cast %7 : vector<4x1x8x128xf32> to vector<4x8x128xf32>
    %9 = arith.maximumf %6, %8 : vector<4x8x128xf32>
    %10 = vector.shape_cast %9 : vector<4x8x128xf32> to vector<32x128xf32>
    %c0_4 = arith.constant 0 : index
    %c0_5 = arith.constant 0 : index
    %11 = vector.load %arg5[%c0_4, %c0_5] : memref<32x128xf32, #tpu.memory_space<vmem>>, vector<32x128xf32>
    tpu.vector_store %arg5[%c0_4, %c0_5], %10 {strides = array<i32>} : memref<32x128xf32, #tpu.memory_space<vmem>>, vector<32x128xf32>,
    %c0_6 = arith.constant 0 : index
    %c0_7 = arith.constant 0 : index
    %12 = tpu.strided_load %arg5[%c0_6, %c0_7] {strides = array<i32: 2, 1>} : memref<32x128xf32, #tpu.memory_space<vmem>>, vector<16x128xf32>
    %c1 = arith.constant 1 : index
    %c0_8 = arith.constant 0 : index
    %13 = tpu.strided_load %arg5[%c1, %c0_8] {strides = array<i32: 2, 1>} : memref<32x128xf32, #tpu.memory_space<vmem>>, vector<16x128xf32>
    %14 = arith.maximumf %12, %13 : vector<16x128xf32>
    %c0_9 = arith.constant 0 : index
    %c0_10 = arith.constant 0 : index
    %15 = vector.load %arg3[%c0_9, %c0_10] : memref<1x128xf32, #tpu.memory_space<vmem>>, vector<1x128xf32>
    %16 = vector.broadcast %15 : vector<1x128xf32> to vector<16x128xf32>
    %17 = arith.addf %14, %16 : vector<16x128xf32>
    %cst_11 = arith.constant 0.000000e+00 : f32
    %18 = vector.broadcast %cst_11 : f32 to vector<16x128xf32>
    %19 = arith.maximumf %17, %18 : vector<16x128xf32>
    %20 = vector.shape_cast %19 : vector<16x128xf32> to vector<1x16x128xf32>
    %c0_12 = arith.constant 0 : index
    %c0_13 = arith.constant 0 : index
    %c0_14 = arith.constant 0 : index
    %21 = vector.load %arg4[%c0_12, %c0_13, %c0_14] : memref<1x16x128xf32, #tpu.memory_space<vmem>>, vector<1x16x128xf32>
    tpu.vector_store %arg4[%c0_12, %c0_13, %c0_14], %20 {strides = array<i32>} : memref<1x16x128xf32, #tpu.memory_space<vmem>>, vector<1x16x128xf32>,
    return
  }
  func.func @transform_0(%arg0: i32) -> (i32, i32, i32) {
    %c0_i32 = arith.constant 0 : i32
    %c0_i32_0 = arith.constant 0 : i32
    %c0_i32_1 = arith.constant 0 : i32
    return %arg0, %c0_i32, %c0_i32_0 : i32, i32, i32
  }
  func.func @transform_1(%arg0: i32) -> (i32, i32) {
    %c0_i32 = arith.constant 0 : i32
    %c0_i32_0 = arith.constant 0 : i32
    %c0_i32_1 = arith.constant 0 : i32
    return %c0_i32, %c0_i32_0 : i32, i32
  }
  func.func @transform_2(%arg0: i32) -> (i32, i32) {
    %c0_i32 = arith.constant 0 : i32
    %c0_i32_0 = arith.constant 0 : i32
    %c0_i32_1 = arith.constant 0 : i32
    return %c0_i32, %c0_i32_0 : i32, i32
  }
  func.func @transform_3(%arg0: i32) -> (i32, i32, i32) {
    %c0_i32 = arith.constant 0 : i32
    %c0_i32_0 = arith.constant 0 : i32
    %c0_i32_1 = arith.constant 0 : i32
    return %arg0, %c0_i32, %c0_i32_0 : i32, i32, i32
  }
}

module attributes {stable_mosaic.version = 11 : i64} {
  func.func @_mlp_kernel(%arg0: i32, %arg1: memref<2x2048xf32, #tpu.memory_space<vmem>>, %arg2: memref<2048x64xf32, #tpu.memory_space<vmem>>, %arg3: memref<1x64xf32, #tpu.memory_space<vmem>>, %arg4: memref<64x20xf32, #tpu.memory_space<vmem>>, %arg5: memref<1x20xf32, #tpu.memory_space<vmem>>, %arg6: memref<2x20xf32, #tpu.memory_space<vmem>>) attributes {dimension_semantics = [#tpu.dimension_semantics<parallel>], iteration_bounds = array<i64: 1>, scalar_prefetch = 0 : i64, scratch_operands = 0 : i64, tpu.core_type = #tpu.core_type<tc>, window_params = [{transform_indices = @transform_0, window_bounds = array<i64: 2, 2048>}, {pipeline_mode = #tpu.pipeline_mode<synchronous>, transform_indices = @transform_1, window_bounds = array<i64: 2048, 64>}, {pipeline_mode = #tpu.pipeline_mode<synchronous>, transform_indices = @transform_2, window_bounds = array<i64: 1, 64>}, {pipeline_mode = #tpu.pipeline_mode<synchronous>, transform_indices = @transform_3, window_bounds = array<i64: 64, 20>}, {pipeline_mode = #tpu.pipeline_mode<synchronous>, transform_indices = @transform_4, window_bounds = array<i64: 1, 20>}, {transform_indices = @transform_5, window_bounds = array<i64: 2, 20>}]} {
    %c0 = arith.constant 0 : index
    %c0_0 = arith.constant 0 : index
    %0 = vector.load %arg1[%c0, %c0_0] : memref<2x2048xf32, #tpu.memory_space<vmem>>, vector<2x2048xf32>
    %c0_1 = arith.constant 0 : index
    %c0_2 = arith.constant 0 : index
    %1 = vector.load %arg2[%c0_1, %c0_2] : memref<2048x64xf32, #tpu.memory_space<vmem>>, vector<2048x64xf32>
    %cst = arith.constant dense<0.000000e+00> : vector<2x64xf32>
    %2 = tpu.matmul %0, %1, %cst {dimension_numbers = #tpu.dot_dimension_numbers<[1], [0], [0], [1], [0, 0, 1, 1], [], []>} : vector<2x2048xf32>, vector<2048x64xf32>, vector<2x64xf32> -> vector<2x64xf32>
    %c0_3 = arith.constant 0 : index
    %c0_4 = arith.constant 0 : index
    %3 = vector.load %arg3[%c0_3, %c0_4] : memref<1x64xf32, #tpu.memory_space<vmem>>, vector<1x64xf32>
    %4 = vector.broadcast %3 : vector<1x64xf32> to vector<2x64xf32>
    %5 = arith.addf %2, %4 : vector<2x64xf32>
    %cst_5 = arith.constant 0.000000e+00 : f32
    %6 = vector.broadcast %cst_5 : f32 to vector<2x64xf32>
    %7 = arith.maximumf %5, %6 : vector<2x64xf32>
    %c0_6 = arith.constant 0 : index
    %c0_7 = arith.constant 0 : index
    %8 = vector.load %arg4[%c0_6, %c0_7] : memref<64x20xf32, #tpu.memory_space<vmem>>, vector<64x20xf32>
    %cst_8 = arith.constant dense<0.000000e+00> : vector<2x20xf32>
    %9 = tpu.matmul %7, %8, %cst_8 {dimension_numbers = #tpu.dot_dimension_numbers<[1], [0], [0], [1], [0, 0, 1, 1], [], []>} : vector<2x64xf32>, vector<64x20xf32>, vector<2x20xf32> -> vector<2x20xf32>
    %c0_9 = arith.constant 0 : index
    %c0_10 = arith.constant 0 : index
    %10 = vector.load %arg5[%c0_9, %c0_10] : memref<1x20xf32, #tpu.memory_space<vmem>>, vector<1x20xf32>
    %11 = vector.broadcast %10 : vector<1x20xf32> to vector<2x20xf32>
    %12 = arith.addf %9, %11 : vector<2x20xf32>
    %c0_11 = arith.constant 0 : index
    %c0_12 = arith.constant 0 : index
    %13 = vector.load %arg6[%c0_11, %c0_12] : memref<2x20xf32, #tpu.memory_space<vmem>>, vector<2x20xf32>
    tpu.vector_store %arg6[%c0_11, %c0_12], %12 {strides = array<i32>} : memref<2x20xf32, #tpu.memory_space<vmem>>, vector<2x20xf32>,
    return
  }
  func.func @transform_0(%arg0: i32) -> (i32, i32) {
    %c0_i32 = arith.constant 0 : i32
    %c0_i32_0 = arith.constant 0 : i32
    return %arg0, %c0_i32 : i32, i32
  }
  func.func @transform_1(%arg0: i32) -> (i32, i32) {
    %c0_i32 = arith.constant 0 : i32
    %c0_i32_0 = arith.constant 0 : i32
    %c0_i32_1 = arith.constant 0 : i32
    return %c0_i32, %c0_i32_0 : i32, i32
  }
  func.func @transform_2(%arg0: i32) -> (i32, i32) {
    %c0_i32 = arith.constant 0 : i32
    %c0_i32_0 = arith.constant 0 : i32
    %c0_i32_1 = arith.constant 0 : i32
    return %c0_i32, %c0_i32_0 : i32, i32
  }
  func.func @transform_3(%arg0: i32) -> (i32, i32) {
    %c0_i32 = arith.constant 0 : i32
    %c0_i32_0 = arith.constant 0 : i32
    %c0_i32_1 = arith.constant 0 : i32
    return %c0_i32, %c0_i32_0 : i32, i32
  }
  func.func @transform_4(%arg0: i32) -> (i32, i32) {
    %c0_i32 = arith.constant 0 : i32
    %c0_i32_0 = arith.constant 0 : i32
    %c0_i32_1 = arith.constant 0 : i32
    return %c0_i32, %c0_i32_0 : i32, i32
  }
  func.func @transform_5(%arg0: i32) -> (i32, i32) {
    %c0_i32 = arith.constant 0 : i32
    %c0_i32_0 = arith.constant 0 : i32
    return %arg0, %c0_i32 : i32, i32
  }
}

</mosaic_0001>

<llo_original>
// kernel: net_forward.4
$region0: #{net_forward.4}
  #allocation0 [shape = 'u32[]', space=smem, size = 0x4, offset = 0x4, fixed_abs, tag = 'smem constant byte address 0x4 - core index']
  #allocation1 [shape = 'u32[144,128]{1,0:T(1,128)}', space=vmem, size = 0x12000, scoped, tag = 'internal scratch']
  #allocation2 [shape = 'f32[1568,16]{1,0:T(8,128)}', space=vmem, size = 0xc4000, scoped, tag = 'scratch operand']
  %s0 = inlined_call_operand.vmem [shape: f32[2,3136,75], index: 0, kind: input, shape index: {}]
  %s1 = inlined_call_operand.vmem [shape: f32[75,16], index: 1, kind: input, shape index: {}]
  %s2 = inlined_call_operand.vmem [shape: f32[1,16], index: 2, kind: input, shape index: {}]
  %s3 = inlined_call_operand.vmem [shape: f32[2,784,16], index: 3, kind: output, shape index: {}]
  %s4 = sld [smem:[#allocation0]]
  $region45: #{net_forward.4} parent=0
    _
  %s6 = ssub.s32 1, %s4
  %s7 = scalar_select 0, %s6, %s4
  loop: start=0, step=1, limit=4
  $region2: #{net_forward.4} parent=0 // loop_pre_header
    _
  $region3: #{net_forward.4} parent=0 // loop_header
    %s9 = sphi 0, %s13
    %p10 = scmp.ge.s32.totalorder %s9, 4
    %s19 = sphi 0, %s21
    %s22 = sphi 0, %s19
    %s23 = sphi 0, %s22
    %s39 = sphi 0, %s23
    %s43 = sphi 0, %s43
    %s45 = sphi 0, %s43
    %s46 = sphi 0, %s45
    %s60 = sphi 0, %s46
    %s64 = sphi 0, %s64
    %s66 = sphi 0, %s64
    %s67 = sphi 0, %s66
    %s81 = sphi 0, %s67
    %s87 = sphi 0, %s89
    %s90 = sphi 0, %s87
    %s91 = sphi 0, %s90
    %s107 = sphi 0, %s91
  $region4: #{net_forward.4} parent=0 // loop_header_branch
    %12 = sbr.rel (%p10) target = $region8
  $region5: #{net_forward.4} parent=0 // loop_body
    %s14 = ssub.s32 %s9, 1
    %s15 = ssub.s32 %s9, 2
    %s16 = sadd.s32 %s9, 1
    %s17 = ssub.s32 %s9, %s16
    %p18 = scmp.eq.s32.totalorder %s17, 0
    %s20 = sadd.s32 %s19, 1
    %s21 = scalar_select %p18, %s19, %s20
    %p24 = pneg %p18
    %p25 = scmp.eq.s32.totalorder %s9, 1
    %p26 = por %p24, %p25
    %p27 = scmp.ne.s32.totalorder %s19, %s22
    %p28 = scmp.eq.s32.totalorder %s9, 0
    %p29 = por %p27, %p28
    %p30 = scmp.ne.s32.totalorder %s19, %s22
    %p31 = scmp.eq.s32.totalorder %s14, 1
    %p32 = por %p30, %p31
    %p33 = scmp.ne.s32.totalorder %s22, %s23
    %p34 = scmp.eq.s32.totalorder %s14, 0
    %p35 = por %p33, %p34
    %p36 = scmp.ne.s32.totalorder %s22, %s23
    %p37 = scmp.eq.s32.totalorder %s15, 1
    %p38 = por %p36, %p37
    %p40 = scmp.ne.s32.totalorder %s23, %s39
    %p41 = scmp.eq.s32.totalorder %s15, 0
    %p42 = por %p40, %p41
    %s44 = sadd.s32 %s43, 1
    %p47 = scmp.eq.s32.totalorder %s9, 1
    %p48 = scmp.ne.s32.totalorder %s43, %s45
    %p49 = scmp.eq.s32.totalorder %s9, 0
    %p50 = por %p48, %p49
    %p51 = scmp.ne.s32.totalorder %s43, %s45
    %p52 = scmp.eq.s32.totalorder %s14, 1
    %p53 = por %p51, %p52
    %p54 = scmp.ne.s32.totalorder %s45, %s46
    %p55 = scmp.eq.s32.totalorder %s14, 0
    %p56 = por %p54, %p55
    %p57 = scmp.ne.s32.totalorder %s45, %s46
    %p58 = scmp.eq.s32.totalorder %s15, 1
    %p59 = por %p57, %p58
    %p61 = scmp.ne.s32.totalorder %s46, %s60
    %p62 = scmp.eq.s32.totalorder %s15, 0
    %p63 = por %p61, %p62
    %s65 = sadd.s32 %s64, 1
    %p68 = scmp.eq.s32.totalorder %s9, 1
    %p69 = scmp.ne.s32.totalorder %s64, %s66
    %p70 = scmp.eq.s32.totalorder %s9, 0
    %p71 = por %p69, %p70
    %p72 = scmp.ne.s32.totalorder %s64, %s66
    %p73 = scmp.eq.s32.totalorder %s14, 1
    %p74 = por %p72, %p73
    %p75 = scmp.ne.s32.totalorder %s66, %s67
    %p76 = scmp.eq.s32.totalorder %s14, 0
    %p77 = por %p75, %p76
    %p78 = scmp.ne.s32.totalorder %s66, %s67
    %p79 = scmp.eq.s32.totalorder %s15, 1
    %p80 = por %p78, %p79
    %p82 = scmp.ne.s32.totalorder %s67, %s81
    %p83 = scmp.eq.s32.totalorder %s15, 0
    %p84 = por %p82, %p83
    %s85 = ssub.s32 %s9, %s16
    %p86 = scmp.eq.s32.totalorder %s85, 0
    %s88 = sadd.s32 %s87, 1
    %s89 = scalar_select %p86, %s87, %s88
    %p92 = pneg %p86
    %p93 = scmp.eq.s32.totalorder %s9, 1
    %p94 = por %p92, %p93
    %p95 = scmp.ne.s32.totalorder %s87, %s90
    %p96 = scmp.eq.s32.totalorder %s9, 0
    %p97 = por %p95, %p96
    %p98 = scmp.ne.s32.totalorder %s87, %s90
    %p99 = scmp.eq.s32.totalorder %s14, 1
    %p100 = por %p98, %p99
    %p101 = scmp.ne.s32.totalorder %s90, %s91
    %p102 = scmp.eq.s32.totalorder %s14, 0
    %p103 = por %p101, %p102
    %p104 = scmp.ne.s32.totalorder %s90, %s91
    %p105 = scmp.eq.s32.totalorder %s15, 1
    %p106 = por %p104, %p105
    %p108 = scmp.ne.s32.totalorder %s91, %s107
    %p109 = scmp.eq.s32.totalorder %s15, 0
    %p110 = por %p108, %p109
    %p111 = scmp.le.s32.totalorder 1, %s9
    %p112 = scmp.lt.s32.totalorder %s9, 3
    %p113 = pnand %p111, %p112
    %p114 = pneg %p113
    // Predicated region
    $region9: #{net_forward.4} parent=5 // pred_check
      _
    $region10: #{net_forward.4} parent=5 // pred_check_branch
      %116 = sbr.rel (%p113) target = $region12
    $region11: #{net_forward.4} parent=5 // pred_region
      %s117 = ssub.s32 %s9, 1
      // Predicated region
      $region13: #{net_forward.4} parent=11 // pred_check
        %p118 = pneg %p56
      $region14: #{net_forward.4} parent=11 // pred_check_branch
        %120 = sbr.rel (%p118) target = $region16
      $region15: #{net_forward.4} parent=11 // pred_region
        _
      $region16: #{net_forward.4} parent=11 // pred_fallthru
        _
      // Predicated region
      $region17: #{net_forward.4} parent=11 // pred_check
        %p121 = pneg %p77
      $region18: #{net_forward.4} parent=11 // pred_check_branch
        %123 = sbr.rel (%p121) target = $region20
      $region19: #{net_forward.4} parent=11 // pred_region
        _
      $region20: #{net_forward.4} parent=11 // pred_fallthru
        _
    $region12: #{net_forward.4} parent=5 // pred_fallthru
      _
    %p124 = scmp.lt.s32.totalorder %s9, 2
    // Predicated region
    $region21: #{net_forward.4} parent=5 // pred_check
      %p125 = pneg %p124
    $region22: #{net_forward.4} parent=5 // pred_check_branch
      %127 = sbr.rel (%p125) target = $region24
    $region23: #{net_forward.4} parent=5 // pred_region
      // Predicated region
      $region25: #{net_forward.4} parent=23 // pred_check
        %p128 = pneg %p29
      $region26: #{net_forward.4} parent=23 // pred_check_branch
        %130 = sbr.rel (%p128) target = $region28
      $region27: #{net_forward.4} parent=23 // pred_region
        %p131 = scmp.lt.s32.totalorder %s9, 1
        %s132 = scalar_select %p131, %s9, 1
        %s133 = smul.addr %s132, 392
        %s134 = smul.addr %s133, 8
        %s135 = scalar_lea.vmem %s0, %s134
      $region28: #{net_forward.4} parent=23 // pred_fallthru
        _
    $region24: #{net_forward.4} parent=5 // pred_fallthru
      _
    %p136 = scmp.le.s32.totalorder 1, %s9
    %p137 = scmp.lt.s32.totalorder %s9, 3
    %p138 = pnand %p136, %p137
    %p139 = pneg %p138
    // Predicated region
    $region29: #{net_forward.4} parent=5 // pred_check
      _
    $region30: #{net_forward.4} parent=5 // pred_check_branch
      %141 = sbr.rel (%p138) target = $region32
    $region31: #{net_forward.4} parent=5 // pred_region
      %s142 = ssub.s32 %s9, 1
      %p143 = scmp.lt.s32.totalorder %s14, 1
      %s144 = scalar_select %p143, %s14, 1
      %s145 = smul.addr %s144, 392
      %s146 = smul.addr %s145, 8
      %s147 = scalar_lea.vmem %s0, %s146
      %p148 = pneg %p35
      %p149 = pneg %p32
      %p150 = pneg %p56
      %p151 = pneg %p53
      %p152 = pneg %p77
      %p153 = pneg %p74
      %p154 = pneg %p103
      %p155 = pneg %p100
      %p156 = scmp.lt.s32.totalorder %s14, 1
      %s157 = scalar_select %p156, %s14, 1
      %s158 = smul.addr %s157, 98
      %s159 = smul.addr %s158, 8
      %s160 = scalar_lea.vmem %s3, %s159
      %p161 = scmp.lt.s32.totalorder %s14, 1
      %s162 = scalar_select %p161, %s14, 1
      %s163 = smul.addr %s162, 392
      %s164 = smul.addr %s163, 8
      %s165 = scalar_lea.vmem %s0, %s164
      %p166 = scmp.lt.s32.totalorder %s14, 1
      %s167 = scalar_select %p166, %s14, 1
      %s168 = smul.addr %s167, 98
      %s169 = smul.addr %s168, 8
      %s170 = scalar_lea.vmem %s3, %s169
      %v171 = vld [vmem:[%s165] sm:$0xff]
      %v172 = vld [vmem:[%s165 + $0x8] sm:$0xff]
      %v173 = vld [vmem:[%s165 + $0x10] sm:$0xff]
      %v174 = vld [vmem:[%s165 + $0x18] sm:$0xff]
      %v175 = vld [vmem:[%s165 + $0x20] sm:$0xff]
      %v176 = vld [vmem:[%s165 + $0x28] sm:$0xff]
      %v177 = vld [vmem:[%s165 + $0x30] sm:$0xff]
      %v178 = vld [vmem:[%s165 + $0x38] sm:$0xff]
      %v179 = vld [vmem:[%s165 + $0x40] sm:$0xff]
      %v180 = vld [vmem:[%s165 + $0x48] sm:$0xff]
      %v181 = vld [vmem:[%s165 + $0x50] sm:$0xff]
      %v182 = vld [vmem:[%s165 + $0x58] sm:$0xff]
      %v183 = vld [vmem:[%s165 + $0x60] sm:$0xff]
      %v184 = vld [vmem:[%s165 + $0x68] sm:$0xff]
      %v185 = vld [vmem:[%s165 + $0x70] sm:$0xff]
      %v186 = vld [vmem:[%s165 + $0x78] sm:$0xff]
      %v187 = vld [vmem:[%s165 + $0x80] sm:$0xff]
      %v188 = vld [vmem:[%s165 + $0x88] sm:$0xff]
      %v189 = vld [vmem:[%s165 + $0x90] sm:$0xff]
      %v190 = vld [vmem:[%s165 + $0x98] sm:$0xff]
      %v191 = vld [vmem:[%s165 + $0xa0] sm:$0xff]
      %v192 = vld [vmem:[%s165 + $0xa8] sm:$0xff]
      %v193 = vld [vmem:[%s165 + $0xb0] sm:$0xff]
      %v194 = vld [vmem:[%s165 + $0xb8] sm:$0xff]
      %v195 = vld [vmem:[%s165 + $0xc0] sm:$0xff]
      %v196 = vld [vmem:[%s165 + $0xc8] sm:$0xff]
      %v197 = vld [vmem:[%s165 + $0xd0] sm:$0xff]
      %v198 = vld [vmem:[%s165 + $0xd8] sm:$0xff]
      %v199 = vld [vmem:[%s165 + $0xe0] sm:$0xff]
      %v200 = vld [vmem:[%s165 + $0xe8] sm:$0xff]
      %v201 = vld [vmem:[%s165 + $0xf0] sm:$0xff]
      %v202 = vld [vmem:[%s165 + $0xf8] sm:$0xff]
      %v203 = vld [vmem:[%s165 + $0x100] sm:$0xff]
      %v204 = vld [vmem:[%s165 + $0x108] sm:$0xff]
      %v205 = vld [vmem:[%s165 + $0x110] sm:$0xff]
      %v206 = vld [vmem:[%s165 + $0x118] sm:$0xff]
      %v207 = vld [vmem:[%s165 + $0x120] sm:$0xff]
      %v208 = vld [vmem:[%s165 + $0x128] sm:$0xff]
      %v209 = vld [vmem:[%s165 + $0x130] sm:$0xff]
      %v210 = vld [vmem:[%s165 + $0x138] sm:$0xff]
      %v211 = vld [vmem:[%s165 + $0x140] sm:$0xff]
      %v212 = vld [vmem:[%s165 + $0x148] sm:$0xff]
      %v213 = vld [vmem:[%s165 + $0x150] sm:$0xff]
      %v214 = vld [vmem:[%s165 + $0x158] sm:$0xff]
      %v215 = vld [vmem:[%s165 + $0x160] sm:$0xff]
      %v216 = vld [vmem:[%s165 + $0x168] sm:$0xff]
      %v217 = vld [vmem:[%s165 + $0x170] sm:$0xff]
      %v218 = vld [vmem:[%s165 + $0x178] sm:$0xff]
      %v219 = vld [vmem:[%s165 + $0x180] sm:$0xff]
      %v220 = vld [vmem:[%s165 + $0x188] sm:$0xff]
      %v221 = vld [vmem:[%s165 + $0x190] sm:$0xff]
      %v222 = vld [vmem:[%s165 + $0x198] sm:$0xff]
      %v223 = vld [vmem:[%s165 + $0x1a0] sm:$0xff]
      %v224 = vld [vmem:[%s165 + $0x1a8] sm:$0xff]
      %v225 = vld [vmem:[%s165 + $0x1b0] sm:$0xff]
      %v226 = vld [vmem:[%s165 + $0x1b8] sm:$0xff]
      %v227 = vld [vmem:[%s165 + $0x1c0] sm:$0xff]
      %v228 = vld [vmem:[%s165 + $0x1c8] sm:$0xff]
      %v229 = vld [vmem:[%s165 + $0x1d0] sm:$0xff]
      %v230 = vld [vmem:[%s165 + $0x1d8] sm:$0xff]
      %v231 = vld [vmem:[%s165 + $0x1e0] sm:$0xff]
      %v232 = vld [vmem:[%s165 + $0x1e8] sm:$0xff]
      %v233 = vld [vmem:[%s165 + $0x1f0] sm:$0xff]
      %v234 = vld [vmem:[%s165 + $0x1f8] sm:$0xff]
      %v235 = vld [vmem:[%s165 + $0x200] sm:$0xff]
      %v236 = vld [vmem:[%s165 + $0x208] sm:$0xff]
      %v237 = vld [vmem:[%s165 + $0x210] sm:$0xff]
      %v238 = vld [vmem:[%s165 + $0x218] sm:$0xff]
      %v239 = vld [vmem:[%s165 + $0x220] sm:$0xff]
      %v240 = vld [vmem:[%s165 + $0x228] sm:$0xff]
      %v241 = vld [vmem:[%s165 + $0x230] sm:$0xff]
      %v242 = vld [vmem:[%s165 + $0x238] sm:$0xff]
      %v243 = vld [vmem:[%s165 + $0x240] sm:$0xff]
      %v244 = vld [vmem:[%s165 + $0x248] sm:$0xff]
      %v245 = vld [vmem:[%s165 + $0x250] sm:$0xff]
      %v246 = vld [vmem:[%s165 + $0x258] sm:$0xff]
      %v247 = vld [vmem:[%s165 + $0x260] sm:$0xff]
      %v248 = vld [vmem:[%s165 + $0x268] sm:$0xff]
      %v249 = vld [vmem:[%s165 + $0x270] sm:$0xff]
      %v250 = vld [vmem:[%s165 + $0x278] sm:$0xff]
      %v251 = vld [vmem:[%s165 + $0x280] sm:$0xff]
      %v252 = vld [vmem:[%s165 + $0x288] sm:$0xff]
      %v253 = vld [vmem:[%s165 + $0x290] sm:$0xff]
      %v254 = vld [vmem:[%s165 + $0x298] sm:$0xff]
      %v255 = vld [vmem:[%s165 + $0x2a0] sm:$0xff]
      %v256 = vld [vmem:[%s165 + $0x2a8] sm:$0xff]
      %v257 = vld [vmem:[%s165 + $0x2b0] sm:$0xff]
      %v258 = vld [vmem:[%s165 + $0x2b8] sm:$0xff]
      %v259 = vld [vmem:[%s165 + $0x2c0] sm:$0xff]
      %v260 = vld [vmem:[%s165 + $0x2c8] sm:$0xff]
      %v261 = vld [vmem:[%s165 + $0x2d0] sm:$0xff]
      %v262 = vld [vmem:[%s165 + $0x2d8] sm:$0xff]
      %v263 = vld [vmem:[%s165 + $0x2e0] sm:$0xff]
      %v264 = vld [vmem:[%s165 + $0x2e8] sm:$0xff]
      %v265 = vld [vmem:[%s165 + $0x2f0] sm:$0xff]
      %v266 = vld [vmem:[%s165 + $0x2f8] sm:$0xff]
      %v267 = vld [vmem:[%s165 + $0x300] sm:$0xff]
      %v268 = vld [vmem:[%s165 + $0x308] sm:$0xff]
      %v269 = vld [vmem:[%s165 + $0x310] sm:$0xff]
      %v270 = vld [vmem:[%s165 + $0x318] sm:$0xff]
      %v271 = vld [vmem:[%s165 + $0x320] sm:$0xff]
      %v272 = vld [vmem:[%s165 + $0x328] sm:$0xff]
      %v273 = vld [vmem:[%s165 + $0x330] sm:$0xff]
      %v274 = vld [vmem:[%s165 + $0x338] sm:$0xff]
      %v275 = vld [vmem:[%s165 + $0x340] sm:$0xff]
      %v276 = vld [vmem:[%s165 + $0x348] sm:$0xff]
      %v277 = vld [vmem:[%s165 + $0x350] sm:$0xff]
      %v278 = vld [vmem:[%s165 + $0x358] sm:$0xff]
      %v279 = vld [vmem:[%s165 + $0x360] sm:$0xff]
      %v280 = vld [vmem:[%s165 + $0x368] sm:$0xff]
      %v281 = vld [vmem:[%s165 + $0x370] sm:$0xff]
      %v282 = vld [vmem:[%s165 + $0x378] sm:$0xff]
      %v283 = vld [vmem:[%s165 + $0x380] sm:$0xff]
      %v284 = vld [vmem:[%s165 + $0x388] sm:$0xff]
      %v285 = vld [vmem:[%s165 + $0x390] sm:$0xff]
      %v286 = vld [vmem:[%s165 + $0x398] sm:$0xff]
      %v287 = vld [vmem:[%s165 + $0x3a0] sm:$0xff]
      %v288 = vld [vmem:[%s165 + $0x3a8] sm:$0xff]
      %v289 = vld [vmem:[%s165 + $0x3b0] sm:$0xff]
      %v290 = vld [vmem:[%s165 + $0x3b8] sm:$0xff]
      %v291 = vld [vmem:[%s165 + $0x3c0] sm:$0xff]
      %v292 = vld [vmem:[%s165 + $0x3c8] sm:$0xff]
      %v293 = vld [vmem:[%s165 + $0x3d0] sm:$0xff]
      %v294 = vld [vmem:[%s165 + $0x3d8] sm:$0xff]
      %v295 = vld [vmem:[%s165 + $0x3e0] sm:$0xff]
      %v296 = vld [vmem:[%s165 + $0x3e8] sm:$0xff]
      %v297 = vld [vmem:[%s165 + $0x3f0] sm:$0xff]
      %v298 = vld [vmem:[%s165 + $0x3f8] sm:$0xff]
      %v299 = vld [vmem:[%s165 + $0x400] sm:$0xff]
      %v300 = vld [vmem:[%s165 + $0x408] sm:$0xff]
      %v301 = vld [vmem:[%s165 + $0x410] sm:$0xff]
      %v302 = vld [vmem:[%s165 + $0x418] sm:$0xff]
      %v303 = vld [vmem:[%s165 + $0x420] sm:$0xff]
      %v304 = vld [vmem:[%s165 + $0x428] sm:$0xff]
      %v305 = vld [vmem:[%s165 + $0x430] sm:$0xff]
      %v306 = vld [vmem:[%s165 + $0x438] sm:$0xff]
      %v307 = vld [vmem:[%s165 + $0x440] sm:$0xff]
      %v308 = vld [vmem:[%s165 + $0x448] sm:$0xff]
      %v309 = vld [vmem:[%s165 + $0x450] sm:$0xff]
      %v310 = vld [vmem:[%s165 + $0x458] sm:$0xff]
      %v311 = vld [vmem:[%s165 + $0x460] sm:$0xff]
      %v312 = vld [vmem:[%s165 + $0x468] sm:$0xff]
      %v313 = vld [vmem:[%s165 + $0x470] sm:$0xff]
      %v314 = vld [vmem:[%s165 + $0x478] sm:$0xff]
      %v315 = vld [vmem:[%s165 + $0x480] sm:$0xff]
      %v316 = vld [vmem:[%s165 + $0x488] sm:$0xff]
      %v317 = vld [vmem:[%s165 + $0x490] sm:$0xff]
      %v318 = vld [vmem:[%s165 + $0x498] sm:$0xff]
      %v319 = vld [vmem:[%s165 + $0x4a0] sm:$0xff]
      %v320 = vld [vmem:[%s165 + $0x4a8] sm:$0xff]
      %v321 = vld [vmem:[%s165 + $0x4b0] sm:$0xff]
      %v322 = vld [vmem:[%s165 + $0x4b8] sm:$0xff]
      %v323 = vld [vmem:[%s165 + $0x4c0] sm:$0xff]
      %v324 = vld [vmem:[%s165 + $0x4c8] sm:$0xff]
      %v325 = vld [vmem:[%s165 + $0x4d0] sm:$0xff]
      %v326 = vld [vmem:[%s165 + $0x4d8] sm:$0xff]
      %v327 = vld [vmem:[%s165 + $0x4e0] sm:$0xff]
      %v328 = vld [vmem:[%s165 + $0x4e8] sm:$0xff]
      %v329 = vld [vmem:[%s165 + $0x4f0] sm:$0xff]
      %v330 = vld [vmem:[%s165 + $0x4f8] sm:$0xff]
      %v331 = vld [vmem:[%s165 + $0x500] sm:$0xff]
      %v332 = vld [vmem:[%s165 + $0x508] sm:$0xff]
      %v333 = vld [vmem:[%s165 + $0x510] sm:$0xff]
      %v334 = vld [vmem:[%s165 + $0x518] sm:$0xff]
      %v335 = vld [vmem:[%s165 + $0x520] sm:$0xff]
      %v336 = vld [vmem:[%s165 + $0x528] sm:$0xff]
      %v337 = vld [vmem:[%s165 + $0x530] sm:$0xff]
      %v338 = vld [vmem:[%s165 + $0x538] sm:$0xff]
      %v339 = vld [vmem:[%s165 + $0x540] sm:$0xff]
      %v340 = vld [vmem:[%s165 + $0x548] sm:$0xff]
      %v341 = vld [vmem:[%s165 + $0x550] sm:$0xff]
      %v342 = vld [vmem:[%s165 + $0x558] sm:$0xff]
      %v343 = vld [vmem:[%s165 + $0x560] sm:$0xff]
      %v344 = vld [vmem:[%s165 + $0x568] sm:$0xff]
      %v345 = vld [vmem:[%s165 + $0x570] sm:$0xff]
      %v346 = vld [vmem:[%s165 + $0x578] sm:$0xff]
      %v347 = vld [vmem:[%s165 + $0x580] sm:$0xff]
      %v348 = vld [vmem:[%s165 + $0x588] sm:$0xff]
      %v349 = vld [vmem:[%s165 + $0x590] sm:$0xff]
      %v350 = vld [vmem:[%s165 + $0x598] sm:$0xff]
      %v351 = vld [vmem:[%s165 + $0x5a0] sm:$0xff]
      %v352 = vld [vmem:[%s165 + $0x5a8] sm:$0xff]
      %v353 = vld [vmem:[%s165 + $0x5b0] sm:$0xff]
      %v354 = vld [vmem:[%s165 + $0x5b8] sm:$0xff]
      %v355 = vld [vmem:[%s165 + $0x5c0] sm:$0xff]
      %v356 = vld [vmem:[%s165 + $0x5c8] sm:$0xff]
      %v357 = vld [vmem:[%s165 + $0x5d0] sm:$0xff]
      %v358 = vld [vmem:[%s165 + $0x5d8] sm:$0xff]
      %v359 = vld [vmem:[%s165 + $0x5e0] sm:$0xff]
      %v360 = vld [vmem:[%s165 + $0x5e8] sm:$0xff]
      %v361 = vld [vmem:[%s165 + $0x5f0] sm:$0xff]
      %v362 = vld [vmem:[%s165 + $0x5f8] sm:$0xff]
      %v363 = vld [vmem:[%s165 + $0x600] sm:$0xff]
      %v364 = vld [vmem:[%s165 + $0x608] sm:$0xff]
      %v365 = vld [vmem:[%s165 + $0x610] sm:$0xff]
      %v366 = vld [vmem:[%s165 + $0x618] sm:$0xff]
      %v367 = vld [vmem:[%s165 + $0x620] sm:$0xff]
      %v368 = vld [vmem:[%s165 + $0x628] sm:$0xff]
      %v369 = vld [vmem:[%s165 + $0x630] sm:$0xff]
      %v370 = vld [vmem:[%s165 + $0x638] sm:$0xff]
      %v371 = vld [vmem:[%s165 + $0x640] sm:$0xff]
      %v372 = vld [vmem:[%s165 + $0x648] sm:$0xff]
      %v373 = vld [vmem:[%s165 + $0x650] sm:$0xff]
      %v374 = vld [vmem:[%s165 + $0x658] sm:$0xff]
      %v375 = vld [vmem:[%s165 + $0x660] sm:$0xff]
      %v376 = vld [vmem:[%s165 + $0x668] sm:$0xff]
      %v377 = vld [vmem:[%s165 + $0x670] sm:$0xff]
      %v378 = vld [vmem:[%s165 + $0x678] sm:$0xff]
      %v379 = vld [vmem:[%s165 + $0x680] sm:$0xff]
      %v380 = vld [vmem:[%s165 + $0x688] sm:$0xff]
      %v381 = vld [vmem:[%s165 + $0x690] sm:$0xff]
      %v382 = vld [vmem:[%s165 + $0x698] sm:$0xff]
      %v383 = vld [vmem:[%s165 + $0x6a0] sm:$0xff]
      %v384 = vld [vmem:[%s165 + $0x6a8] sm:$0xff]
      %v385 = vld [vmem:[%s165 + $0x6b0] sm:$0xff]
      %v386 = vld [vmem:[%s165 + $0x6b8] sm:$0xff]
      %v387 = vld [vmem:[%s165 + $0x6c0] sm:$0xff]
      %v388 = vld [vmem:[%s165 + $0x6c8] sm:$0xff]
      %v389 = vld [vmem:[%s165 + $0x6d0] sm:$0xff]
      %v390 = vld [vmem:[%s165 + $0x6d8] sm:$0xff]
      %v391 = vld [vmem:[%s165 + $0x6e0] sm:$0xff]
      %v392 = vld [vmem:[%s165 + $0x6e8] sm:$0xff]
      %v393 = vld [vmem:[%s165 + $0x6f0] sm:$0xff]
      %v394 = vld [vmem:[%s165 + $0x6f8] sm:$0xff]
      %v395 = vld [vmem:[%s165 + $0x700] sm:$0xff]
      %v396 = vld [vmem:[%s165 + $0x708] sm:$0xff]
      %v397 = vld [vmem:[%s165 + $0x710] sm:$0xff]
      %v398 = vld [vmem:[%s165 + $0x718] sm:$0xff]
      %v399 = vld [vmem:[%s165 + $0x720] sm:$0xff]
      %v400 = vld [vmem:[%s165 + $0x728] sm:$0xff]
      %v401 = vld [vmem:[%s165 + $0x730] sm:$0xff]
      %v402 = vld [vmem:[%s165 + $0x738] sm:$0xff]
      %v403 = vld [vmem:[%s165 + $0x740] sm:$0xff]
      %v404 = vld [vmem:[%s165 + $0x748] sm:$0xff]
      %v405 = vld [vmem:[%s165 + $0x750] sm:$0xff]
      %v406 = vld [vmem:[%s165 + $0x758] sm:$0xff]
      %v407 = vld [vmem:[%s165 + $0x760] sm:$0xff]
      %v408 = vld [vmem:[%s165 + $0x768] sm:$0xff]
      %v409 = vld [vmem:[%s165 + $0x770] sm:$0xff]
      %v410 = vld [vmem:[%s165 + $0x778] sm:$0xff]
      %v411 = vld [vmem:[%s165 + $0x780] sm:$0xff]
      %v412 = vld [vmem:[%s165 + $0x788] sm:$0xff]
      %v413 = vld [vmem:[%s165 + $0x790] sm:$0xff]
      %v414 = vld [vmem:[%s165 + $0x798] sm:$0xff]
      %v415 = vld [vmem:[%s165 + $0x7a0] sm:$0xff]
      %v416 = vld [vmem:[%s165 + $0x7a8] sm:$0xff]
      %v417 = vld [vmem:[%s165 + $0x7b0] sm:$0xff]
      %v418 = vld [vmem:[%s165 + $0x7b8] sm:$0xff]
      %v419 = vld [vmem:[%s165 + $0x7c0] sm:$0xff]
      %v420 = vld [vmem:[%s165 + $0x7c8] sm:$0xff]
      %v421 = vld [vmem:[%s165 + $0x7d0] sm:$0xff]
      %v422 = vld [vmem:[%s165 + $0x7d8] sm:$0xff]
      %v423 = vld [vmem:[%s165 + $0x7e0] sm:$0xff]
      %v424 = vld [vmem:[%s165 + $0x7e8] sm:$0xff]
      %v425 = vld [vmem:[%s165 + $0x7f0] sm:$0xff]
      %v426 = vld [vmem:[%s165 + $0x7f8] sm:$0xff]
      %v427 = vld [vmem:[%s165 + $0x800] sm:$0xff]
      %v428 = vld [vmem:[%s165 + $0x808] sm:$0xff]
      %v429 = vld [vmem:[%s165 + $0x810] sm:$0xff]
      %v430 = vld [vmem:[%s165 + $0x818] sm:$0xff]
      %v431 = vld [vmem:[%s165 + $0x820] sm:$0xff]
      %v432 = vld [vmem:[%s165 + $0x828] sm:$0xff]
      %v433 = vld [vmem:[%s165 + $0x830] sm:$0xff]
      %v434 = vld [vmem:[%s165 + $0x838] sm:$0xff]
      %v435 = vld [vmem:[%s165 + $0x840] sm:$0xff]
      %v436 = vld [vmem:[%s165 + $0x848] sm:$0xff]
      %v437 = vld [vmem:[%s165 + $0x850] sm:$0xff]
      %v438 = vld [vmem:[%s165 + $0x858] sm:$0xff]
      %v439 = vld [vmem:[%s165 + $0x860] sm:$0xff]
      %v440 = vld [vmem:[%s165 + $0x868] sm:$0xff]
      %v441 = vld [vmem:[%s165 + $0x870] sm:$0xff]
      %v442 = vld [vmem:[%s165 + $0x878] sm:$0xff]
      %v443 = vld [vmem:[%s165 + $0x880] sm:$0xff]
      %v444 = vld [vmem:[%s165 + $0x888] sm:$0xff]
      %v445 = vld [vmem:[%s165 + $0x890] sm:$0xff]
      %v446 = vld [vmem:[%s165 + $0x898] sm:$0xff]
      %v447 = vld [vmem:[%s165 + $0x8a0] sm:$0xff]
      %v448 = vld [vmem:[%s165 + $0x8a8] sm:$0xff]
      %v449 = vld [vmem:[%s165 + $0x8b0] sm:$0xff]
      %v450 = vld [vmem:[%s165 + $0x8b8] sm:$0xff]
      %v451 = vld [vmem:[%s165 + $0x8c0] sm:$0xff]
      %v452 = vld [vmem:[%s165 + $0x8c8] sm:$0xff]
      %v453 = vld [vmem:[%s165 + $0x8d0] sm:$0xff]
      %v454 = vld [vmem:[%s165 + $0x8d8] sm:$0xff]
      %v455 = vld [vmem:[%s165 + $0x8e0] sm:$0xff]
      %v456 = vld [vmem:[%s165 + $0x8e8] sm:$0xff]
      %v457 = vld [vmem:[%s165 + $0x8f0] sm:$0xff]
      %v458 = vld [vmem:[%s165 + $0x8f8] sm:$0xff]
      %v459 = vld [vmem:[%s165 + $0x900] sm:$0xff]
      %v460 = vld [vmem:[%s165 + $0x908] sm:$0xff]
      %v461 = vld [vmem:[%s165 + $0x910] sm:$0xff]
      %v462 = vld [vmem:[%s165 + $0x918] sm:$0xff]
      %v463 = vld [vmem:[%s165 + $0x920] sm:$0xff]
      %v464 = vld [vmem:[%s165 + $0x928] sm:$0xff]
      %v465 = vld [vmem:[%s165 + $0x930] sm:$0xff]
      %v466 = vld [vmem:[%s165 + $0x938] sm:$0xff]
      %v467 = vld [vmem:[%s165 + $0x940] sm:$0xff]
      %v468 = vld [vmem:[%s165 + $0x948] sm:$0xff]
      %v469 = vld [vmem:[%s165 + $0x950] sm:$0xff]
      %v470 = vld [vmem:[%s165 + $0x958] sm:$0xff]
      %v471 = vld [vmem:[%s165 + $0x960] sm:$0xff]
      %v472 = vld [vmem:[%s165 + $0x968] sm:$0xff]
      %v473 = vld [vmem:[%s165 + $0x970] sm:$0xff]
      %v474 = vld [vmem:[%s165 + $0x978] sm:$0xff]
      %v475 = vld [vmem:[%s165 + $0x980] sm:$0xff]
      %v476 = vld [vmem:[%s165 + $0x988] sm:$0xff]
      %v477 = vld [vmem:[%s165 + $0x990] sm:$0xff]
      %v478 = vld [vmem:[%s165 + $0x998] sm:$0xff]
      %v479 = vld [vmem:[%s165 + $0x9a0] sm:$0xff]
      %v480 = vld [vmem:[%s165 + $0x9a8] sm:$0xff]
      %v481 = vld [vmem:[%s165 + $0x9b0] sm:$0xff]
      %v482 = vld [vmem:[%s165 + $0x9b8] sm:$0xff]
      %v483 = vld [vmem:[%s165 + $0x9c0] sm:$0xff]
      %v484 = vld [vmem:[%s165 + $0x9c8] sm:$0xff]
      %v485 = vld [vmem:[%s165 + $0x9d0] sm:$0xff]
      %v486 = vld [vmem:[%s165 + $0x9d8] sm:$0xff]
      %v487 = vld [vmem:[%s165 + $0x9e0] sm:$0xff]
      %v488 = vld [vmem:[%s165 + $0x9e8] sm:$0xff]
      %v489 = vld [vmem:[%s165 + $0x9f0] sm:$0xff]
      %v490 = vld [vmem:[%s165 + $0x9f8] sm:$0xff]
      %v491 = vld [vmem:[%s165 + $0xa00] sm:$0xff]
      %v492 = vld [vmem:[%s165 + $0xa08] sm:$0xff]
      %v493 = vld [vmem:[%s165 + $0xa10] sm:$0xff]
      %v494 = vld [vmem:[%s165 + $0xa18] sm:$0xff]
      %v495 = vld [vmem:[%s165 + $0xa20] sm:$0xff]
      %v496 = vld [vmem:[%s165 + $0xa28] sm:$0xff]
      %v497 = vld [vmem:[%s165 + $0xa30] sm:$0xff]
      %v498 = vld [vmem:[%s165 + $0xa38] sm:$0xff]
      %v499 = vld [vmem:[%s165 + $0xa40] sm:$0xff]
      %v500 = vld [vmem:[%s165 + $0xa48] sm:$0xff]
      %v501 = vld [vmem:[%s165 + $0xa50] sm:$0xff]
      %v502 = vld [vmem:[%s165 + $0xa58] sm:$0xff]
      %v503 = vld [vmem:[%s165 + $0xa60] sm:$0xff]
      %v504 = vld [vmem:[%s165 + $0xa68] sm:$0xff]
      %v505 = vld [vmem:[%s165 + $0xa70] sm:$0xff]
      %v506 = vld [vmem:[%s165 + $0xa78] sm:$0xff]
      %v507 = vld [vmem:[%s165 + $0xa80] sm:$0xff]
      %v508 = vld [vmem:[%s165 + $0xa88] sm:$0xff]
      %v509 = vld [vmem:[%s165 + $0xa90] sm:$0xff]
      %v510 = vld [vmem:[%s165 + $0xa98] sm:$0xff]
      %v511 = vld [vmem:[%s165 + $0xaa0] sm:$0xff]
      %v512 = vld [vmem:[%s165 + $0xaa8] sm:$0xff]
      %v513 = vld [vmem:[%s165 + $0xab0] sm:$0xff]
      %v514 = vld [vmem:[%s165 + $0xab8] sm:$0xff]
      %v515 = vld [vmem:[%s165 + $0xac0] sm:$0xff]
      %v516 = vld [vmem:[%s165 + $0xac8] sm:$0xff]
      %v517 = vld [vmem:[%s165 + $0xad0] sm:$0xff]
      %v518 = vld [vmem:[%s165 + $0xad8] sm:$0xff]
      %v519 = vld [vmem:[%s165 + $0xae0] sm:$0xff]
      %v520 = vld [vmem:[%s165 + $0xae8] sm:$0xff]
      %v521 = vld [vmem:[%s165 + $0xaf0] sm:$0xff]
      %v522 = vld [vmem:[%s165 + $0xaf8] sm:$0xff]
      %v523 = vld [vmem:[%s165 + $0xb00] sm:$0xff]
      %v524 = vld [vmem:[%s165 + $0xb08] sm:$0xff]
      %v525 = vld [vmem:[%s165 + $0xb10] sm:$0xff]
      %v526 = vld [vmem:[%s165 + $0xb18] sm:$0xff]
      %v527 = vld [vmem:[%s165 + $0xb20] sm:$0xff]
      %v528 = vld [vmem:[%s165 + $0xb28] sm:$0xff]
      %v529 = vld [vmem:[%s165 + $0xb30] sm:$0xff]
      %v530 = vld [vmem:[%s165 + $0xb38] sm:$0xff]
      %v531 = vld [vmem:[%s165 + $0xb40] sm:$0xff]
      %v532 = vld [vmem:[%s165 + $0xb48] sm:$0xff]
      %v533 = vld [vmem:[%s165 + $0xb50] sm:$0xff]
      %v534 = vld [vmem:[%s165 + $0xb58] sm:$0xff]
      %v535 = vld [vmem:[%s165 + $0xb60] sm:$0xff]
      %v536 = vld [vmem:[%s165 + $0xb68] sm:$0xff]
      %v537 = vld [vmem:[%s165 + $0xb70] sm:$0xff]
      %v538 = vld [vmem:[%s165 + $0xb78] sm:$0xff]
      %v539 = vld [vmem:[%s165 + $0xb80] sm:$0xff]
      %v540 = vld [vmem:[%s165 + $0xb88] sm:$0xff]
      %v541 = vld [vmem:[%s165 + $0xb90] sm:$0xff]
      %v542 = vld [vmem:[%s165 + $0xb98] sm:$0xff]
      %v543 = vld [vmem:[%s165 + $0xba0] sm:$0xff]
      %v544 = vld [vmem:[%s165 + $0xba8] sm:$0xff]
      %v545 = vld [vmem:[%s165 + $0xbb0] sm:$0xff]
      %v546 = vld [vmem:[%s165 + $0xbb8] sm:$0xff]
      %v547 = vld [vmem:[%s165 + $0xbc0] sm:$0xff]
      %v548 = vld [vmem:[%s165 + $0xbc8] sm:$0xff]
      %v549 = vld [vmem:[%s165 + $0xbd0] sm:$0xff]
      %v550 = vld [vmem:[%s165 + $0xbd8] sm:$0xff]
      %v551 = vld [vmem:[%s165 + $0xbe0] sm:$0xff]
      %v552 = vld [vmem:[%s165 + $0xbe8] sm:$0xff]
      %v553 = vld [vmem:[%s165 + $0xbf0] sm:$0xff]
      %v554 = vld [vmem:[%s165 + $0xbf8] sm:$0xff]
      %v555 = vld [vmem:[%s165 + $0xc00] sm:$0xff]
      %v556 = vld [vmem:[%s165 + $0xc08] sm:$0xff]
      %v557 = vld [vmem:[%s165 + $0xc10] sm:$0xff]
      %v558 = vld [vmem:[%s165 + $0xc18] sm:$0xff]
      %v559 = vld [vmem:[%s165 + $0xc20] sm:$0xff]
      %v560 = vld [vmem:[%s165 + $0xc28] sm:$0xff]
      %v561 = vld [vmem:[%s165 + $0xc30] sm:$0xff]
      %v562 = vld [vmem:[%s165 + $0xc38] sm:$0xff]
      %v563 = vld [vmem:[%s1] sm:$0xff]
      %v564 = vld [vmem:[%s1 + $0x8] sm:$0xff]
      %v565 = vld [vmem:[%s1 + $0x10] sm:$0xff]
      %v566 = vld [vmem:[%s1 + $0x18] sm:$0xff]
      %v567 = vld [vmem:[%s1 + $0x20] sm:$0xff]
      %v568 = vld [vmem:[%s1 + $0x28] sm:$0xff]
      %v569 = vld [vmem:[%s1 + $0x30] sm:$0xff]
      %v570 = vld [vmem:[%s1 + $0x38] sm:$0xff]
      %v571 = vld [vmem:[%s1 + $0x40] sm:$0xff]
      %v572 = vld [vmem:[%s1 + $0x48] sm:$0x7]
      %vm573 = vcmask 613376
      %v575 = vsel %vm573, %v171, 0
      %v578 = vsel %vm573, %v172, 0
      %v581 = vsel %vm573, %v173, 0
      %v584 = vsel %vm573, %v174, 0
      %v587 = vsel %vm573, %v175, 0
      %v590 = vsel %vm573, %v176, 0
      %v593 = vsel %vm573, %v177, 0
      %v596 = vsel %vm573, %v178, 0
      %v599 = vsel %vm573, %v179, 0
      %v602 = vsel %vm573, %v180, 0
      %v605 = vsel %vm573, %v181, 0
      %v608 = vsel %vm573, %v182, 0
      %v611 = vsel %vm573, %v183, 0
      %v614 = vsel %vm573, %v184, 0
      %v617 = vsel %vm573, %v185, 0
      %v620 = vsel %vm573, %v186, 0
      %v623 = vsel %vm573, %v187, 0
      %v626 = vsel %vm573, %v188, 0
      %v629 = vsel %vm573, %v189, 0
      %v632 = vsel %vm573, %v190, 0
      %v635 = vsel %vm573, %v191, 0
      %v638 = vsel %vm573, %v192, 0
      %v641 = vsel %vm573, %v193, 0
      %v644 = vsel %vm573, %v194, 0
      %v647 = vsel %vm573, %v195, 0
      %v650 = vsel %vm573, %v196, 0
      %v653 = vsel %vm573, %v197, 0
      %v656 = vsel %vm573, %v198, 0
      %v659 = vsel %vm573, %v199, 0
      %v662 = vsel %vm573, %v200, 0
      %v665 = vsel %vm573, %v201, 0
      %v668 = vsel %vm573, %v202, 0
      %v671 = vsel %vm573, %v203, 0
      %v674 = vsel %vm573, %v204, 0
      %v677 = vsel %vm573, %v205, 0
      %v680 = vsel %vm573, %v206, 0
      %v683 = vsel %vm573, %v207, 0
      %v686 = vsel %vm573, %v208, 0
      %v689 = vsel %vm573, %v209, 0
      %v692 = vsel %vm573, %v210, 0
      %v695 = vsel %vm573, %v211, 0
      %v698 = vsel %vm573, %v212, 0
      %v701 = vsel %vm573, %v213, 0
      %v704 = vsel %vm573, %v214, 0
      %v707 = vsel %vm573, %v215, 0
      %v710 = vsel %vm573, %v216, 0
      %v713 = vsel %vm573, %v217, 0
      %v716 = vsel %vm573, %v218, 0
      %v719 = vsel %vm573, %v219, 0
      %v722 = vsel %vm573, %v220, 0
      %v725 = vsel %vm573, %v221, 0
      %v728 = vsel %vm573, %v222, 0
      %v731 = vsel %vm573, %v223, 0
      %v734 = vsel %vm573, %v224, 0
      %v737 = vsel %vm573, %v225, 0
      %v740 = vsel %vm573, %v226, 0
      %v743 = vsel %vm573, %v227, 0
      %v746 = vsel %vm573, %v228, 0
      %v749 = vsel %vm573, %v229, 0
      %v752 = vsel %vm573, %v230, 0
      %v755 = vsel %vm573, %v231, 0
      %v758 = vsel %vm573, %v232, 0
      %v761 = vsel %vm573, %v233, 0
      %v764 = vsel %vm573, %v234, 0
      %v767 = vsel %vm573, %v235, 0
      %v770 = vsel %vm573, %v236, 0
      %v773 = vsel %vm573, %v237, 0
      %v776 = vsel %vm573, %v238, 0
      %v779 = vsel %vm573, %v239, 0
      %v782 = vsel %vm573, %v240, 0
      %v785 = vsel %vm573, %v241, 0
      %v788 = vsel %vm573, %v242, 0
      %v791 = vsel %vm573, %v243, 0
      %v794 = vsel %vm573, %v244, 0
      %v797 = vsel %vm573, %v245, 0
      %v800 = vsel %vm573, %v246, 0
      %v803 = vsel %vm573, %v247, 0
      %v806 = vsel %vm573, %v248, 0
      %v809 = vsel %vm573, %v249, 0
      %v812 = vsel %vm573, %v250, 0
      %v815 = vsel %vm573, %v251, 0
      %v818 = vsel %vm573, %v252, 0
      %v821 = vsel %vm573, %v253, 0
      %v824 = vsel %vm573, %v254, 0
      %v827 = vsel %vm573, %v255, 0
      %v830 = vsel %vm573, %v256, 0
      %v833 = vsel %vm573, %v257, 0
      %v836 = vsel %vm573, %v258, 0
      %v839 = vsel %vm573, %v259, 0
      %v842 = vsel %vm573, %v260, 0
      %v845 = vsel %vm573, %v261, 0
      %v848 = vsel %vm573, %v262, 0
      %v851 = vsel %vm573, %v263, 0
      %v854 = vsel %vm573, %v264, 0
      %v857 = vsel %vm573, %v265, 0
      %v860 = vsel %vm573, %v266, 0
      %v863 = vsel %vm573, %v267, 0
      %v866 = vsel %vm573, %v268, 0
      %v869 = vsel %vm573, %v269, 0
      %v872 = vsel %vm573, %v270, 0
      %v875 = vsel %vm573, %v271, 0
      %v878 = vsel %vm573, %v272, 0
      %v881 = vsel %vm573, %v273, 0
      %v884 = vsel %vm573, %v274, 0
      %v887 = vsel %vm573, %v275, 0
      %v890 = vsel %vm573, %v276, 0
      %v893 = vsel %vm573, %v277, 0
      %v896 = vsel %vm573, %v278, 0
      %v899 = vsel %vm573, %v279, 0
      %v902 = vsel %vm573, %v280, 0
      %v905 = vsel %vm573, %v281, 0
      %v908 = vsel %vm573, %v282, 0
      %v911 = vsel %vm573, %v283, 0
      %v914 = vsel %vm573, %v284, 0
      %v917 = vsel %vm573, %v285, 0
      %v920 = vsel %vm573, %v286, 0
      %v923 = vsel %vm573, %v287, 0
      %v926 = vsel %vm573, %v288, 0
      %v929 = vsel %vm573, %v289, 0
      %v932 = vsel %vm573, %v290, 0
      %v935 = vsel %vm573, %v291, 0
      %v938 = vsel %vm573, %v292, 0
      %v941 = vsel %vm573, %v293, 0
      %v944 = vsel %vm573, %v294, 0
      %v947 = vsel %vm573, %v295, 0
      %v950 = vsel %vm573, %v296, 0
      %v953 = vsel %vm573, %v297, 0
      %v956 = vsel %vm573, %v298, 0
      %v959 = vsel %vm573, %v299, 0
      %v962 = vsel %vm573, %v300, 0
      %v965 = vsel %vm573, %v301, 0
      %v968 = vsel %vm573, %v302, 0
      %v971 = vsel %vm573, %v303, 0
      %v974 = vsel %vm573, %v304, 0
      %v977 = vsel %vm573, %v305, 0
      %v980 = vsel %vm573, %v306, 0
      %v983 = vsel %vm573, %v307, 0
      %v986 = vsel %vm573, %v308, 0
      %v989 = vsel %vm573, %v309, 0
      %v992 = vsel %vm573, %v310, 0
      %v995 = vsel %vm573, %v311, 0
      %v998 = vsel %vm573, %v312, 0
      %v1001 = vsel %vm573, %v313, 0
      %v1004 = vsel %vm573, %v314, 0
      %v1007 = vsel %vm573, %v315, 0
      %v1010 = vsel %vm573, %v316, 0
      %v1013 = vsel %vm573, %v317, 0
      %v1016 = vsel %vm573, %v318, 0
      %v1019 = vsel %vm573, %v319, 0
      %v1022 = vsel %vm573, %v320, 0
      %v1025 = vsel %vm573, %v321, 0
      %v1028 = vsel %vm573, %v322, 0
      %v1031 = vsel %vm573, %v323, 0
      %v1034 = vsel %vm573, %v324, 0
      %v1037 = vsel %vm573, %v325, 0
      %v1040 = vsel %vm573, %v326, 0
      %v1043 = vsel %vm573, %v327, 0
      %v1046 = vsel %vm573, %v328, 0
      %v1049 = vsel %vm573, %v329, 0
      %v1052 = vsel %vm573, %v330, 0
      %v1055 = vsel %vm573, %v331, 0
      %v1058 = vsel %vm573, %v332, 0
      %v1061 = vsel %vm573, %v333, 0
      %v1064 = vsel %vm573, %v334, 0
      %v1067 = vsel %vm573, %v335, 0
      %v1070 = vsel %vm573, %v336, 0
      %v1073 = vsel %vm573, %v337, 0
      %v1076 = vsel %vm573, %v338, 0
      %v1079 = vsel %vm573, %v339, 0
      %v1082 = vsel %vm573, %v340, 0
      %v1085 = vsel %vm573, %v341, 0
      %v1088 = vsel %vm573, %v342, 0
      %v1091 = vsel %vm573, %v343, 0
      %v1094 = vsel %vm573, %v344, 0
      %v1097 = vsel %vm573, %v345, 0
      %v1100 = vsel %vm573, %v346, 0
      %v1103 = vsel %vm573, %v347, 0
      %v1106 = vsel %vm573, %v348, 0
      %v1109 = vsel %vm573, %v349, 0
      %v1112 = vsel %vm573, %v350, 0
      %v1115 = vsel %vm573, %v351, 0
      %v1118 = vsel %vm573, %v352, 0
      %v1121 = vsel %vm573, %v353, 0
      %v1124 = vsel %vm573, %v354, 0
      %v1127 = vsel %vm573, %v355, 0
      %v1130 = vsel %vm573, %v356, 0
      %v1133 = vsel %vm573, %v357, 0
      %v1136 = vsel %vm573, %v358, 0
      %v1139 = vsel %vm573, %v359, 0
      %v1142 = vsel %vm573, %v360, 0
      %v1145 = vsel %vm573, %v361, 0
      %v1148 = vsel %vm573, %v362, 0
      %v1151 = vsel %vm573, %v363, 0
      %v1154 = vsel %vm573, %v364, 0
      %v1157 = vsel %vm573, %v365, 0
      %v1160 = vsel %vm573, %v366, 0
      %v1163 = vsel %vm573, %v367, 0
      %v1166 = vsel %vm573, %v368, 0
      %v1169 = vsel %vm573, %v369, 0
      %v1172 = vsel %vm573, %v370, 0
      %v1175 = vsel %vm573, %v371, 0
      %v1178 = vsel %vm573, %v372, 0
      %v1181 = vsel %vm573, %v373, 0
      %v1184 = vsel %vm573, %v374, 0
      %v1187 = vsel %vm573, %v375, 0
      %v1190 = vsel %vm573, %v376, 0
      %v1193 = vsel %vm573, %v377, 0
      %v1196 = vsel %vm573, %v378, 0
      %v1199 = vsel %vm573, %v379, 0
      %v1202 = vsel %vm573, %v380, 0
      %v1205 = vsel %vm573, %v381, 0
      %v1208 = vsel %vm573, %v382, 0
      %v1211 = vsel %vm573, %v383, 0
      %v1214 = vsel %vm573, %v384, 0
      %v1217 = vsel %vm573, %v385, 0
      %v1220 = vsel %vm573, %v386, 0
      %v1223 = vsel %vm573, %v387, 0
      %v1226 = vsel %vm573, %v388, 0
      %v1229 = vsel %vm573, %v389, 0
      %v1232 = vsel %vm573, %v390, 0
      %v1235 = vsel %vm573, %v391, 0
      %v1238 = vsel %vm573, %v392, 0
      %v1241 = vsel %vm573, %v393, 0
      %v1244 = vsel %vm573, %v394, 0
      %v1247 = vsel %vm573, %v395, 0
      %v1250 = vsel %vm573, %v396, 0
      %v1253 = vsel %vm573, %v397, 0
      %v1256 = vsel %vm573, %v398, 0
      %v1259 = vsel %vm573, %v399, 0
      %v1262 = vsel %vm573, %v400, 0
      %v1265 = vsel %vm573, %v401, 0
      %v1268 = vsel %vm573, %v402, 0
      %v1271 = vsel %vm573, %v403, 0
      %v1274 = vsel %vm573, %v404, 0
      %v1277 = vsel %vm573, %v405, 0
      %v1280 = vsel %vm573, %v406, 0
      %v1283 = vsel %vm573, %v407, 0
      %v1286 = vsel %vm573, %v408, 0
      %v1289 = vsel %vm573, %v409, 0
      %v1292 = vsel %vm573, %v410, 0
      %v1295 = vsel %vm573, %v411, 0
      %v1298 = vsel %vm573, %v412, 0
      %v1301 = vsel %vm573, %v413, 0
      %v1304 = vsel %vm573, %v414, 0
      %v1307 = vsel %vm573, %v415, 0
      %v1310 = vsel %vm573, %v416, 0
      %v1313 = vsel %vm573, %v417, 0
      %v1316 = vsel %vm573, %v418, 0
      %v1319 = vsel %vm573, %v419, 0
      %v1322 = vsel %vm573, %v420, 0
      %v1325 = vsel %vm573, %v421, 0
      %v1328 = vsel %vm573, %v422, 0
      %v1331 = vsel %vm573, %v423, 0
      %v1334 = vsel %vm573, %v424, 0
      %v1337 = vsel %vm573, %v425, 0
      %v1340 = vsel %vm573, %v426, 0
      %v1343 = vsel %vm573, %v427, 0
      %v1346 = vsel %vm573, %v428, 0
      %v1349 = vsel %vm573, %v429, 0
      %v1352 = vsel %vm573, %v430, 0
      %v1355 = vsel %vm573, %v431, 0
      %v1358 = vsel %vm573, %v432, 0
      %v1361 = vsel %vm573, %v433, 0
      %v1364 = vsel %vm573, %v434, 0
      %v1367 = vsel %vm573, %v435, 0
      %v1370 = vsel %vm573, %v436, 0
      %v1373 = vsel %vm573, %v437, 0
      %v1376 = vsel %vm573, %v438, 0
      %v1379 = vsel %vm573, %v439, 0
      %v1382 = vsel %vm573, %v440, 0
      %v1385 = vsel %vm573, %v441, 0
      %v1388 = vsel %vm573, %v442, 0
      %v1391 = vsel %vm573, %v443, 0
      %v1394 = vsel %vm573, %v444, 0
      %v1397 = vsel %vm573, %v445, 0
      %v1400 = vsel %vm573, %v446, 0
      %v1403 = vsel %vm573, %v447, 0
      %v1406 = vsel %vm573, %v448, 0
      %v1409 = vsel %vm573, %v449, 0
      %v1412 = vsel %vm573, %v450, 0
      %v1415 = vsel %vm573, %v451, 0
      %v1418 = vsel %vm573, %v452, 0
      %v1421 = vsel %vm573, %v453, 0
      %v1424 = vsel %vm573, %v454, 0
      %v1427 = vsel %vm573, %v455, 0
      %v1430 = vsel %vm573, %v456, 0
      %v1433 = vsel %vm573, %v457, 0
      %v1436 = vsel %vm573, %v458, 0
      %v1439 = vsel %vm573, %v459, 0
      %v1442 = vsel %vm573, %v460, 0
      %v1445 = vsel %vm573, %v461, 0
      %v1448 = vsel %vm573, %v462, 0
      %v1451 = vsel %vm573, %v463, 0
      %v1454 = vsel %vm573, %v464, 0
      %v1457 = vsel %vm573, %v465, 0
      %v1460 = vsel %vm573, %v466, 0
      %v1463 = vsel %vm573, %v467, 0
      %v1466 = vsel %vm573, %v468, 0
      %v1469 = vsel %vm573, %v469, 0
      %v1472 = vsel %vm573, %v470, 0
      %v1475 = vsel %vm573, %v471, 0
      %v1478 = vsel %vm573, %v472, 0
      %v1481 = vsel %vm573, %v473, 0
      %v1484 = vsel %vm573, %v474, 0
      %v1487 = vsel %vm573, %v475, 0
      %v1490 = vsel %vm573, %v476, 0
      %v1493 = vsel %vm573, %v477, 0
      %v1496 = vsel %vm573, %v478, 0
      %v1499 = vsel %vm573, %v479, 0
      %v1502 = vsel %vm573, %v480, 0
      %v1505 = vsel %vm573, %v481, 0
      %v1508 = vsel %vm573, %v482, 0
      %v1511 = vsel %vm573, %v483, 0
      %v1514 = vsel %vm573, %v484, 0
      %v1517 = vsel %vm573, %v485, 0
      %v1520 = vsel %vm573, %v486, 0
      %v1523 = vsel %vm573, %v487, 0
      %v1526 = vsel %vm573, %v488, 0
      %v1529 = vsel %vm573, %v489, 0
      %v1532 = vsel %vm573, %v490, 0
      %v1535 = vsel %vm573, %v491, 0
      %v1538 = vsel %vm573, %v492, 0
      %v1541 = vsel %vm573, %v493, 0
      %v1544 = vsel %vm573, %v494, 0
      %v1547 = vsel %vm573, %v495, 0
      %v1550 = vsel %vm573, %v496, 0
      %v1553 = vsel %vm573, %v497, 0
      %v1556 = vsel %vm573, %v498, 0
      %v1559 = vsel %vm573, %v499, 0
      %v1562 = vsel %vm573, %v500, 0
      %v1565 = vsel %vm573, %v501, 0
      %v1568 = vsel %vm573, %v502, 0
      %v1571 = vsel %vm573, %v503, 0
      %v1574 = vsel %vm573, %v504, 0
      %v1577 = vsel %vm573, %v505, 0
      %v1580 = vsel %vm573, %v506, 0
      %v1583 = vsel %vm573, %v507, 0
      %v1586 = vsel %vm573, %v508, 0
      %v1589 = vsel %vm573, %v509, 0
      %v1592 = vsel %vm573, %v510, 0
      %v1595 = vsel %vm573, %v511, 0
      %v1598 = vsel %vm573, %v512, 0
      %v1601 = vsel %vm573, %v513, 0
      %v1604 = vsel %vm573, %v514, 0
      %v1607 = vsel %vm573, %v515, 0
      %v1610 = vsel %vm573, %v516, 0
      %v1613 = vsel %vm573, %v517, 0
      %v1616 = vsel %vm573, %v518, 0
      %v1619 = vsel %vm573, %v519, 0
      %v1622 = vsel %vm573, %v520, 0
      %v1625 = vsel %vm573, %v521, 0
      %v1628 = vsel %vm573, %v522, 0
      %v1631 = vsel %vm573, %v523, 0
      %v1634 = vsel %vm573, %v524, 0
      %v1637 = vsel %vm573, %v525, 0
      %v1640 = vsel %vm573, %v526, 0
      %v1643 = vsel %vm573, %v527, 0
      %v1646 = vsel %vm573, %v528, 0
      %v1649 = vsel %vm573, %v529, 0
      %v1652 = vsel %vm573, %v530, 0
      %v1655 = vsel %vm573, %v531, 0
      %v1658 = vsel %vm573, %v532, 0
      %v1661 = vsel %vm573, %v533, 0
      %v1664 = vsel %vm573, %v534, 0
      %v1667 = vsel %vm573, %v535, 0
      %v1670 = vsel %vm573, %v536, 0
      %v1673 = vsel %vm573, %v537, 0
      %v1676 = vsel %vm573, %v538, 0
      %v1679 = vsel %vm573, %v539, 0
      %v1682 = vsel %vm573, %v540, 0
      %v1685 = vsel %vm573, %v541, 0
      %v1688 = vsel %vm573, %v542, 0
      %v1691 = vsel %vm573, %v543, 0
      %v1694 = vsel %vm573, %v544, 0
      %v1697 = vsel %vm573, %v545, 0
      %v1700 = vsel %vm573, %v546, 0
      %v1703 = vsel %vm573, %v547, 0
      %v1706 = vsel %vm573, %v548, 0
      %v1709 = vsel %vm573, %v549, 0
      %v1712 = vsel %vm573, %v550, 0
      %v1715 = vsel %vm573, %v551, 0
      %v1718 = vsel %vm573, %v552, 0
      %v1721 = vsel %vm573, %v553, 0
      %v1724 = vsel %vm573, %v554, 0
      %v1727 = vsel %vm573, %v555, 0
      %v1730 = vsel %vm573, %v556, 0
      %v1733 = vsel %vm573, %v557, 0
      %v1736 = vsel %vm573, %v558, 0
      %v1739 = vsel %vm573, %v559, 0
      %v1742 = vsel %vm573, %v560, 0
      %v1745 = vsel %vm573, %v561, 0
      %v1748 = vsel %vm573, %v562, 0
      %vm1750 = vcmask 1042432
      %v1752 = vsel %vm1750, %v572, 0
      %1754 = vmatprep.subr.mxu0 0.0
      %1755 = vmatpush1.msra.mxu0 %v563
      %1756 = vmatprep.subr.mxu0 0.0
      %1757 = vmatpush1.msra.mxu0 %v564
      %1758 = vmatprep.subr.mxu0 0.0
      %1759 = vmatpush1.msra.mxu0 %v565
      %1760 = vmatprep.subr.mxu0 0.0
      %1761 = vmatpush1.msra.mxu0 %v566
      %1762 = vmatprep.subr.mxu0 0.0
      %1763 = vmatpush1.msra.mxu0 %v567
      %1764 = vmatprep.subr.mxu0 0.0
      %1765 = vmatpush1.msra.mxu0 %v568
      %1766 = vmatprep.subr.mxu0 0.0
      %1767 = vmatpush1.msra.mxu0 %v569
      %1768 = vmatprep.subr.mxu0 0.0
      %1769 = vmatpush1.msra.mxu0 %v570
      %1770 = vmatprep.subr.mxu0 0.0
      %1771 = vmatpush1.msra.mxu0 %v571
      %1772 = vmatprep.subr.mxu0 0.0
      %1773 = vmatpush1.msra.mxu0 %v1752
      %1774 = vmatprep.subr.mxu0 0.0
      %1775 = vmatpush1.msra.mxu0 0.0
      %1776 = vmatprep.subr.mxu0 0.0
      %1777 = vmatpush1.msra.mxu0 0.0
      %1778 = vmatprep.subr.mxu0 0.0
      %1779 = vmatpush1.msra.mxu0 0.0
      %1780 = vmatprep.subr.mxu0 0.0
      %1781 = vmatpush1.msra.mxu0 0.0
      %1782 = vmatprep.subr.mxu0 0.0
      %1783 = vmatpush1.msra.mxu0 0.0
      %1784 = vmatprep.subr.mxu0 0.0
      %1785 = vmatpush1.msra.mxu0 0.0
      %1786 = vmatprep.subr.mxu0 0.0
      %1787 = vmatpush1.msra.mxu0 0.0
      %1788 = vmatprep.subr.mxu0 0.0
      %1789 = vmatpush1.msra.mxu0 0.0
      %1790 = vmatprep.subr.mxu0 0.0
      %1791 = vmatpush1.msra.mxu0 0.0
      %1792 = vmatprep.subr.mxu0 0.0
      %1793 = vmatpush1.msra.mxu0 0.0
      %1794 = vmatprep.subr.mxu0 0.0
      %1795 = vmatpush1.msra.mxu0 0.0
      %1796 = vmatprep.subr.mxu0 0.0
      %1797 = vmatpush1.msra.mxu0 0.0
      %1798 = vmatprep.subr.mxu0 0.0
      %1799 = vmatpush1.msra.mxu0 0.0
      %1800 = vmatprep.subr.mxu0 0.0
      %1801 = vmatpush1.msra.mxu0 0.0
      %1802 = vmatprep.subr.mxu0 0.0
      %1803 = vmatpush1.msra.mxu0 0.0
      %1804 = vmatprep.subr.mxu0 0.0
      %1805 = vmatpush1.msra.mxu0 0.0
      %1806 = vmatprep.subr.mxu0 0.0
      %1807 = vmatpush1.msra.mxu0 0.0
      %1808 = vmatprep.subr.mxu0 0.0
      %1809 = vmatpush1.msra.mxu0 0.0
      %1810 = vmatprep.subr.mxu0 0.0
      %1811 = vmatpush1.msra.mxu0 0.0
      %1812 = vmatprep.subr.mxu0 0.0
      %1813 = vmatpush1.msra.mxu0 0.0
      %1814 = vmatprep.subr.mxu0 0.0
      %1815 = vmatpush1.msra.mxu0 0.0
      %1816 = vmatprep.subr.mxu0 0.0
      %1817 = vmatpush1.msra.mxu0 0.0
      %1818 = vmatprep.mubr.f32.mxu0 0.0
      %1819 = vmatmul.mubr.f32.gmra.mrb[0].mxu0 %v575
      %v1820 = vpop.f32.mrb[0].mxu0
      %v1821 = vadd.f32 0.0, %v1820
      %v1822 = vpop.f32.mrb[0].mxu0
      %1823 = vmatprep.mubr.f32.mxu0 0.0
      %1824 = vmatmul.mubr.f32.gmra.mrb[0].mxu0 %v578
      %v1825 = vpop.f32.mrb[0].mxu0
      %v1826 = vadd.f32 0.0, %v1825
      %v1827 = vpop.f32.mrb[0].mxu0
      %1828 = vmatprep.mubr.f32.mxu0 0.0
      %1829 = vmatmul.mubr.f32.gmra.mrb[0].mxu0 %v581
      %v1830 = vpop.f32.mrb[0].mxu0
      %v1831 = vadd.f32 0.0, %v1830
      %v1832 = vpop.f32.mrb[0].mxu0
      %1833 = vmatprep.mubr.f32.mxu0 0.0
      %1834 = vmatmul.mubr.f32.gmra.mrb[0].mxu0 %v584
      %v1835 = vpop.f32.mrb[0].mxu0
      %v1836 = vadd.f32 0.0, %v1835
      %v1837 = vpop.f32.mrb[0].mxu0
      %1838 = vmatprep.mubr.f32.mxu0 0.0
      %1839 = vmatmul.mubr.f32.gmra.mrb[0].mxu0 %v587
      %v1840 = vpop.f32.mrb[0].mxu0
      %v1841 = vadd.f32 0.0, %v1840
      %v1842 = vpop.f32.mrb[0].mxu0
      %1843 = vmatprep.mubr.f32.mxu0 0.0
      %1844 = vmatmul.mubr.f32.gmra.mrb[0].mxu0 %v590
      %v1845 = vpop.f32.mrb[0].mxu0
      %v1846 = vadd.f32 0.0, %v1845
      %v1847 = vpop.f32.mrb[0].mxu0
      %1848 = vmatprep.mubr.f32.mxu0 0.0
      %1849 = vmatmul.mubr.f32.gmra.mrb[0].mxu0 %v593
      %v1850 = vpop.f32.mrb[0].mxu0
      %v1851 = vadd.f32 0.0, %v1850
      %v1852 = vpop.f32.mrb[0].mxu0
      %1853 = vmatprep.mubr.f32.mxu0 0.0
      %1854 = vmatmul.mubr.f32.gmra.mrb[0].mxu0 %v596
      %v1855 = vpop.f32.mrb[0].mxu0
      %v1856 = vadd.f32 0.0, %v1855
      %v1857 = vpop.f32.mrb[0].mxu0
      %1858 = vmatprep.mubr.f32.mxu0 0.0
      %1859 = vmatmul.mubr.f32.gmra.mrb[0].mxu0 %v599
      %v1860 = vpop.f32.mrb[0].mxu0
      %v1861 = vadd.f32 0.0, %v1860
      %v1862 = vpop.f32.mrb[0].mxu0
      %1863 = vmatprep.mubr.f32.mxu0 0.0
      %1864 = vmatmul.mubr.f32.gmra.mrb[0].mxu0 %v602
      %v1865 = vpop.f32.mrb[0].mxu0
      %v1866 = vadd.f32 0.0, %v1865
      %v1867 = vpop.f32.mrb[0].mxu0
      %1868 = vmatprep.mubr.f32.mxu0 0.0
      %1869 = vmatmul.mubr.f32.gmra.mrb[0].mxu0 %v605
      %v1870 = vpop.f32.mrb[0].mxu0
      %v1871 = vadd.f32 0.0, %v1870
      %v1872 = vpop.f32.mrb[0].mxu0
      %1873 = vmatprep.mubr.f32.mxu0 0.0
      %1874 = vmatmul.mubr.f32.gmra.mrb[0].mxu0 %v608
      %v1875 = vpop.f32.mrb[0].mxu0
      %v1876 = vadd.f32 0.0, %v1875
      %v1877 = vpop.f32.mrb[0].mxu0
      %1878 = vmatprep.mubr.f32.mxu0 0.0
      %1879 = vmatmul.mubr.f32.gmra.mrb[0].mxu0 %v611
      %v1880 = vpop.f32.mrb[0].mxu0
      %v1881 = vadd.f32 0.0, %v1880
      %v1882 = vpop.f32.mrb[0].mxu0
      %1883 = vmatprep.mubr.f32.mxu0 0.0
      %1884 = vmatmul.mubr.f32.gmra.mrb[0].mxu0 %v614
      %v1885 = vpop.f32.mrb[0].mxu0
      %v1886 = vadd.f32 0.0, %v1885
      %v1887 = vpop.f32.mrb[0].mxu0
      %1888 = vmatprep.mubr.f32.mxu0 0.0
      %1889 = vmatmul.mubr.f32.gmra.mrb[0].mxu0 %v617
      %v1890 = vpop.f32.mrb[0].mxu0
      %v1891 = vadd.f32 0.0, %v1890
      %v1892 = vpop.f32.mrb[0].mxu0
      %1893 = vmatprep.mubr.f32.mxu0 0.0
      %1894 = vmatmul.mubr.f32.gmra.mrb[0].mxu0 %v620
      %v1895 = vpop.f32.mrb[0].mxu0
      %v1896 = vadd.f32 0.0, %v1895
      %v1897 = vpop.f32.mrb[0].mxu0
      %1898 = vmatprep.mubr.f32.mxu0 0.0
      %1899 = vmatmul.mubr.f32.gmra.mrb[0].mxu0 %v623
      %v1900 = vpop.f32.mrb[0].mxu0
      %v1901 = vadd.f32 0.0, %v1900
      %v1902 = vpop.f32.mrb[0].mxu0
      %1903 = vmatprep.mubr.f32.mxu0 0.0
      %1904 = vmatmul.mubr.f32.gmra.mrb[0].mxu0 %v626
      %v1905 = vpop.f32.mrb[0].mxu0
      %v1906 = vadd.f32 0.0, %v1905
      %v1907 = vpop.f32.mrb[0].mxu0
      %1908 = vmatprep.mubr.f32.mxu0 0.0
      %1909 = vmatmul.mubr.f32.gmra.mrb[0].mxu0 %v629
      %v1910 = vpop.f32.mrb[0].mxu0
      %v1911 = vadd.f32 0.0, %v1910
      %v1912 = vpop.f32.mrb[0].mxu0
      %1913 = vmatprep.mubr.f32.mxu0 0.0
      %1914 = vmatmul.mubr.f32.gmra.mrb[0].mxu0 %v632
      %v1915 = vpop.f32.mrb[0].mxu0
      %v1916 = vadd.f32 0.0, %v1915
      %v1917 = vpop.f32.mrb[0].mxu0
      %1918 = vmatprep.mubr.f32.mxu0 0.0
      %1919 = vmatmul.mubr.f32.gmra.mrb[0].mxu0 %v635
      %v1920 = vpop.f32.mrb[0].mxu0
      %v1921 = vadd.f32 0.0, %v1920
      %v1922 = vpop.f32.mrb[0].mxu0
      %1923 = vmatprep.mubr.f32.mxu0 0.0
      %1924 = vmatmul.mubr.f32.gmra.mrb[0].mxu0 %v638
      %v1925 = vpop.f32.mrb[0].mxu0
      %v1926 = vadd.f32 0.0, %v1925
      %v1927 = vpop.f32.mrb[0].mxu0
      %1928 = vmatprep.mubr.f32.mxu0 0.0
      %1929 = vmatmul.mubr.f32.gmra.mrb[0].mxu0 %v641
      %v1930 = vpop.f32.mrb[0].mxu0
      %v1931 = vadd.f32 0.0, %v1930
      %v1932 = vpop.f32.mrb[0].mxu0
      %1933 = vmatprep.mubr.f32.mxu0 0.0
      %1934 = vmatmul.mubr.f32.gmra.mrb[0].mxu0 %v644
      %v1935 = vpop.f32.mrb[0].mxu0
      %v1936 = vadd.f32 0.0, %v1935
      %v1937 = vpop.f32.mrb[0].mxu0
      %1938 = vmatprep.mubr.f32.mxu0 0.0
      %1939 = vmatmul.mubr.f32.gmra.mrb[0].mxu0 %v647
      %v1940 = vpop.f32.mrb[0].mxu0
      %v1941 = vadd.f32 0.0, %v1940
      %v1942 = vpop.f32.mrb[0].mxu0
      %1943 = vmatprep.mubr.f32.mxu0 0.0
      %1944 = vmatmul.mubr.f32.gmra.mrb[0].mxu0 %v650
      %v1945 = vpop.f32.mrb[0].mxu0
      %v1946 = vadd.f32 0.0, %v1945
      %v1947 = vpop.f32.mrb[0].mxu0
      %1948 = vmatprep.mubr.f32.mxu0 0.0
      %1949 = vmatmul.mubr.f32.gmra.mrb[0].mxu0 %v653
      %v1950 = vpop.f32.mrb[0].mxu0
      %v1951 = vadd.f32 0.0, %v1950
      %v1952 = vpop.f32.mrb[0].mxu0
      %1953 = vmatprep.mubr.f32.mxu0 0.0
      %1954 = vmatmul.mubr.f32.gmra.mrb[0].mxu0 %v656
      %v1955 = vpop.f32.mrb[0].mxu0
      %v1956 = vadd.f32 0.0, %v1955
      %v1957 = vpop.f32.mrb[0].mxu0
      %1958 = vmatprep.mubr.f32.mxu0 0.0
      %1959 = vmatmul.mubr.f32.gmra.mrb[0].mxu0 %v659
      %v1960 = vpop.f32.mrb[0].mxu0
      %v1961 = vadd.f32 0.0, %v1960
      %v1962 = vpop.f32.mrb[0].mxu0
      %1963 = vmatprep.mubr.f32.mxu0 0.0
      %1964 = vmatmul.mubr.f32.gmra.mrb[0].mxu0 %v662
      %v1965 = vpop.f32.mrb[0].mxu0
      %v1966 = vadd.f32 0.0, %v1965
      %v1967 = vpop.f32.mrb[0].mxu0
      %1968 = vmatprep.mubr.f32.mxu0 0.0
      %1969 = vmatmul.mubr.f32.gmra.mrb[0].mxu0 %v665
      %v1970 = vpop.f32.mrb[0].mxu0
      %v1971 = vadd.f32 0.0, %v1970
      %v1972 = vpop.f32.mrb[0].mxu0
      %1973 = vmatprep.mubr.f32.mxu0 0.0
      %1974 = vmatmul.mubr.f32.gmra.mrb[0].mxu0 %v668
      %v1975 = vpop.f32.mrb[0].mxu0
      %v1976 = vadd.f32 0.0, %v1975
      %v1977 = vpop.f32.mrb[0].mxu0
      %1978 = vmatprep.mubr.f32.mxu0 0.0
      %1979 = vmatmul.mubr.f32.gmra.mrb[0].mxu0 %v671
      %v1980 = vpop.f32.mrb[0].mxu0
      %v1981 = vadd.f32 0.0, %v1980
      %v1982 = vpop.f32.mrb[0].mxu0
      %1983 = vmatprep.mubr.f32.mxu0 0.0
      %1984 = vmatmul.mubr.f32.gmra.mrb[0].mxu0 %v674
      %v1985 = vpop.f32.mrb[0].mxu0
      %v1986 = vadd.f32 0.0, %v1985
      %v1987 = vpop.f32.mrb[0].mxu0
      %1988 = vmatprep.mubr.f32.mxu0 0.0
      %1989 = vmatmul.mubr.f32.gmra.mrb[0].mxu0 %v677
      %v1990 = vpop.f32.mrb[0].mxu0
      %v1991 = vadd.f32 0.0, %v1990
      %v1992 = vpop.f32.mrb[0].mxu0
      %1993 = vmatprep.mubr.f32.mxu0 0.0
      %1994 = vmatmul.mubr.f32.gmra.mrb[0].mxu0 %v680
      %v1995 = vpop.f32.mrb[0].mxu0
      %v1996 = vadd.f32 0.0, %v1995
      %v1997 = vpop.f32.mrb[0].mxu0
      %1998 = vmatprep.mubr.f32.mxu0 0.0
      %1999 = vmatmul.mubr.f32.gmra.mrb[0].mxu0 %v683
      %v2000 = vpop.f32.mrb[0].mxu0
      %v2001 = vadd.f32 0.0, %v2000
      %v2002 = vpop.f32.mrb[0].mxu0
      %2003 = vmatprep.mubr.f32.mxu0 0.0
      %2004 = vmatmul.mubr.f32.gmra.mrb[0].mxu0 %v686
      %v2005 = vpop.f32.mrb[0].mxu0
      %v2006 = vadd.f32 0.0, %v2005
      %v2007 = vpop.f32.mrb[0].mxu0
      %2008 = vmatprep.mubr.f32.mxu0 0.0
      %2009 = vmatmul.mubr.f32.gmra.mrb[0].mxu0 %v689
      %v2010 = vpop.f32.mrb[0].mxu0
      %v2011 = vadd.f32 0.0, %v2010
      %v2012 = vpop.f32.mrb[0].mxu0
      %2013 = vmatprep.mubr.f32.mxu0 0.0
      %2014 = vmatmul.mubr.f32.gmra.mrb[0].mxu0 %v692
      %v2015 = vpop.f32.mrb[0].mxu0
      %v2016 = vadd.f32 0.0, %v2015
      %v2017 = vpop.f32.mrb[0].mxu0
      %2018 = vmatprep.mubr.f32.mxu0 0.0
      %2019 = vmatmul.mubr.f32.gmra.mrb[0].mxu0 %v695
      %v2020 = vpop.f32.mrb[0].mxu0
      %v2021 = vadd.f32 0.0, %v2020
      %v2022 = vpop.f32.mrb[0].mxu0
      %2023 = vmatprep.mubr.f32.mxu0 0.0
      %2024 = vmatmul.mubr.f32.gmra.mrb[0].mxu0 %v698
      %v2025 = vpop.f32.mrb[0].mxu0
      %v2026 = vadd.f32 0.0, %v2025
      %v2027 = vpop.f32.mrb[0].mxu0
      %2028 = vmatprep.mubr.f32.mxu0 0.0
      %2029 = vmatmul.mubr.f32.gmra.mrb[0].mxu0 %v701
      %v2030 = vpop.f32.mrb[0].mxu0
      %v2031 = vadd.f32 0.0, %v2030
      %v2032 = vpop.f32.mrb[0].mxu0
      %2033 = vmatprep.mubr.f32.mxu0 0.0
      %2034 = vmatmul.mubr.f32.gmra.mrb[0].mxu0 %v704
      %v2035 = vpop.f32.mrb[0].mxu0
      %v2036 = vadd.f32 0.0, %v2035
      %v2037 = vpop.f32.mrb[0].mxu0
      %2038 = vmatprep.mubr.f32.mxu0 0.0
      %2039 = vmatmul.mubr.f32.gmra.mrb[0].mxu0 %v707
      %v2040 = vpop.f32.mrb[0].mxu0
      %v2041 = vadd.f32 0.0, %v2040
      %v2042 = vpop.f32.mrb[0].mxu0
      %2043 = vmatprep.mubr.f32.mxu0 0.0
      %2044 = vmatmul.mubr.f32.gmra.mrb[0].mxu0 %v710
      %v2045 = vpop.f32.mrb[0].mxu0
      %v2046 = vadd.f32 0.0, %v2045
      %v2047 = vpop.f32.mrb[0].mxu0
      %2048 = vmatprep.mubr.f32.mxu0 0.0
      %2049 = vmatmul.mubr.f32.gmra.mrb[0].mxu0 %v713
      %v2050 = vpop.f32.mrb[0].mxu0
      %v2051 = vadd.f32 0.0, %v2050
      %v2052 = vpop.f32.mrb[0].mxu0
      %2053 = vmatprep.mubr.f32.mxu0 0.0
      %2054 = vmatmul.mubr.f32.gmra.mrb[0].mxu0 %v716
      %v2055 = vpop.f32.mrb[0].mxu0
      %v2056 = vadd.f32 0.0, %v2055
      %v2057 = vpop.f32.mrb[0].mxu0
      %2058 = vmatprep.mubr.f32.mxu0 0.0
      %2059 = vmatmul.mubr.f32.gmra.mrb[0].mxu0 %v719
      %v2060 = vpop.f32.mrb[0].mxu0
      %v2061 = vadd.f32 0.0, %v2060
      %v2062 = vpop.f32.mrb[0].mxu0
      %2063 = vmatprep.mubr.f32.mxu0 0.0
      %2064 = vmatmul.mubr.f32.gmra.mrb[0].mxu0 %v722
      %v2065 = vpop.f32.mrb[0].mxu0
      %v2066 = vadd.f32 0.0, %v2065
      %v2067 = vpop.f32.mrb[0].mxu0
      %2068 = vmatprep.mubr.f32.mxu0 0.0
      %2069 = vmatmul.mubr.f32.gmra.mrb[0].mxu0 %v725
      %v2070 = vpop.f32.mrb[0].mxu0
      %v2071 = vadd.f32 0.0, %v2070
      %v2072 = vpop.f32.mrb[0].mxu0
      %2073 = vmatprep.mubr.f32.mxu0 0.0
      %2074 = vmatmul.mubr.f32.gmra.mrb[0].mxu0 %v728
      %v2075 = vpop.f32.mrb[0].mxu0
      %v2076 = vadd.f32 0.0, %v2075
      %v2077 = vpop.f32.mrb[0].mxu0
      %2078 = vmatprep.mubr.f32.mxu0 0.0
      %2079 = vmatmul.mubr.f32.gmra.mrb[0].mxu0 %v731
      %v2080 = vpop.f32.mrb[0].mxu0
      %v2081 = vadd.f32 0.0, %v2080
      %v2082 = vpop.f32.mrb[0].mxu0
      %2083 = vmatprep.mubr.f32.mxu0 0.0
      %2084 = vmatmul.mubr.f32.gmra.mrb[0].mxu0 %v734
      %v2085 = vpop.f32.mrb[0].mxu0
      %v2086 = vadd.f32 0.0, %v2085
      %v2087 = vpop.f32.mrb[0].mxu0
      %2088 = vmatprep.mubr.f32.mxu0 0.0
      %2089 = vmatmul.mubr.f32.gmra.mrb[0].mxu0 %v737
      %v2090 = vpop.f32.mrb[0].mxu0
      %v2091 = vadd.f32 0.0, %v2090
      %v2092 = vpop.f32.mrb[0].mxu0
      %2093 = vmatprep.mubr.f32.mxu0 0.0
      %2094 = vmatmul.mubr.f32.gmra.mrb[0].mxu0 %v740
      %v2095 = vpop.f32.mrb[0].mxu0
      %v2096 = vadd.f32 0.0, %v2095
      %v2097 = vpop.f32.mrb[0].mxu0
      %2098 = vmatprep.mubr.f32.mxu0 0.0
      %2099 = vmatmul.mubr.f32.gmra.mrb[0].mxu0 %v743
      %v2100 = vpop.f32.mrb[0].mxu0
      %v2101 = vadd.f32 0.0, %v2100
      %v2102 = vpop.f32.mrb[0].mxu0
      %2103 = vmatprep.mubr.f32.mxu0 0.0
      %2104 = vmatmul.mubr.f32.gmra.mrb[0].mxu0 %v746
      %v2105 = vpop.f32.mrb[0].mxu0
      %v2106 = vadd.f32 0.0, %v2105
      %v2107 = vpop.f32.mrb[0].mxu0
      %2108 = vmatprep.mubr.f32.mxu0 0.0
      %2109 = vmatmul.mubr.f32.gmra.mrb[0].mxu0 %v749
      %v2110 = vpop.f32.mrb[0].mxu0
      %v2111 = vadd.f32 0.0, %v2110
      %v2112 = vpop.f32.mrb[0].mxu0
      %2113 = vmatprep.mubr.f32.mxu0 0.0
      %2114 = vmatmul.mubr.f32.gmra.mrb[0].mxu0 %v752
      %v2115 = vpop.f32.mrb[0].mxu0
      %v2116 = vadd.f32 0.0, %v2115
      %v2117 = vpop.f32.mrb[0].mxu0
      %2118 = vmatprep.mubr.f32.mxu0 0.0
      %2119 = vmatmul.mubr.f32.gmra.mrb[0].mxu0 %v755
      %v2120 = vpop.f32.mrb[0].mxu0
      %v2121 = vadd.f32 0.0, %v2120
      %v2122 = vpop.f32.mrb[0].mxu0
      %2123 = vmatprep.mubr.f32.mxu0 0.0
      %2124 = vmatmul.mubr.f32.gmra.mrb[0].mxu0 %v758
      %v2125 = vpop.f32.mrb[0].mxu0
      %v2126 = vadd.f32 0.0, %v2125
      %v2127 = vpop.f32.mrb[0].mxu0
      %2128 = vmatprep.mubr.f32.mxu0 0.0
      %2129 = vmatmul.mubr.f32.gmra.mrb[0].mxu0 %v761
      %v2130 = vpop.f32.mrb[0].mxu0
      %v2131 = vadd.f32 0.0, %v2130
      %v2132 = vpop.f32.mrb[0].mxu0
      %2133 = vmatprep.mubr.f32.mxu0 0.0
      %2134 = vmatmul.mubr.f32.gmra.mrb[0].mxu0 %v764
      %v2135 = vpop.f32.mrb[0].mxu0
      %v2136 = vadd.f32 0.0, %v2135
      %v2137 = vpop.f32.mrb[0].mxu0
      %2138 = vmatprep.mubr.f32.mxu0 0.0
      %2139 = vmatmul.mubr.f32.gmra.mrb[0].mxu0 %v767
      %v2140 = vpop.f32.mrb[0].mxu0
      %v2141 = vadd.f32 0.0, %v2140
      %v2142 = vpop.f32.mrb[0].mxu0
      %2143 = vmatprep.mubr.f32.mxu0 0.0
      %2144 = vmatmul.mubr.f32.gmra.mrb[0].mxu0 %v770
      %v2145 = vpop.f32.mrb[0].mxu0
      %v2146 = vadd.f32 0.0, %v2145
      %v2147 = vpop.f32.mrb[0].mxu0
      %2148 = vmatprep.mubr.f32.mxu0 0.0
      %2149 = vmatmul.mubr.f32.gmra.mrb[0].mxu0 %v773
      %v2150 = vpop.f32.mrb[0].mxu0
      %v2151 = vadd.f32 0.0, %v2150
      %v2152 = vpop.f32.mrb[0].mxu0
      %2153 = vmatprep.mubr.f32.mxu0 0.0
      %2154 = vmatmul.mubr.f32.gmra.mrb[0].mxu0 %v776
      %v2155 = vpop.f32.mrb[0].mxu0
      %v2156 = vadd.f32 0.0, %v2155
      %v2157 = vpop.f32.mrb[0].mxu0
      %2158 = vmatprep.mubr.f32.mxu0 0.0
      %2159 = vmatmul.mubr.f32.gmra.mrb[0].mxu0 %v779
      %v2160 = vpop.f32.mrb[0].mxu0
      %v2161 = vadd.f32 0.0, %v2160
      %v2162 = vpop.f32.mrb[0].mxu0
      %2163 = vmatprep.mubr.f32.mxu0 0.0
      %2164 = vmatmul.mubr.f32.gmra.mrb[0].mxu0 %v782
      %v2165 = vpop.f32.mrb[0].mxu0
      %v2166 = vadd.f32 0.0, %v2165
      %v2167 = vpop.f32.mrb[0].mxu0
      %2168 = vmatprep.mubr.f32.mxu0 0.0
      %2169 = vmatmul.mubr.f32.gmra.mrb[0].mxu0 %v785
      %v2170 = vpop.f32.mrb[0].mxu0
      %v2171 = vadd.f32 0.0, %v2170
      %v2172 = vpop.f32.mrb[0].mxu0
      %2173 = vmatprep.mubr.f32.mxu0 0.0
      %2174 = vmatmul.mubr.f32.gmra.mrb[0].mxu0 %v788
      %v2175 = vpop.f32.mrb[0].mxu0
      %v2176 = vadd.f32 0.0, %v2175
      %v2177 = vpop.f32.mrb[0].mxu0
      %2178 = vmatprep.mubr.f32.mxu0 0.0
      %2179 = vmatmul.mubr.f32.gmra.mrb[0].mxu0 %v791
      %v2180 = vpop.f32.mrb[0].mxu0
      %v2181 = vadd.f32 0.0, %v2180
      %v2182 = vpop.f32.mrb[0].mxu0
      %2183 = vmatprep.mubr.f32.mxu0 0.0
      %2184 = vmatmul.mubr.f32.gmra.mrb[0].mxu0 %v794
      %v2185 = vpop.f32.mrb[0].mxu0
      %v2186 = vadd.f32 0.0, %v2185
      %v2187 = vpop.f32.mrb[0].mxu0
      %2188 = vmatprep.mubr.f32.mxu0 0.0
      %2189 = vmatmul.mubr.f32.gmra.mrb[0].mxu0 %v797
      %v2190 = vpop.f32.mrb[0].mxu0
      %v2191 = vadd.f32 0.0, %v2190
      %v2192 = vpop.f32.mrb[0].mxu0
      %2193 = vmatprep.mubr.f32.mxu0 0.0
      %2194 = vmatmul.mubr.f32.gmra.mrb[0].mxu0 %v800
      %v2195 = vpop.f32.mrb[0].mxu0
      %v2196 = vadd.f32 0.0, %v2195
      %v2197 = vpop.f32.mrb[0].mxu0
      %2198 = vmatprep.mubr.f32.mxu0 0.0
      %2199 = vmatmul.mubr.f32.gmra.mrb[0].mxu0 %v803
      %v2200 = vpop.f32.mrb[0].mxu0
      %v2201 = vadd.f32 0.0, %v2200
      %v2202 = vpop.f32.mrb[0].mxu0
      %2203 = vmatprep.mubr.f32.mxu0 0.0
      %2204 = vmatmul.mubr.f32.gmra.mrb[0].mxu0 %v806
      %v2205 = vpop.f32.mrb[0].mxu0
      %v2206 = vadd.f32 0.0, %v2205
      %v2207 = vpop.f32.mrb[0].mxu0
      %2208 = vmatprep.mubr.f32.mxu0 0.0
      %2209 = vmatmul.mubr.f32.gmra.mrb[0].mxu0 %v809
      %v2210 = vpop.f32.mrb[0].mxu0
      %v2211 = vadd.f32 0.0, %v2210
      %v2212 = vpop.f32.mrb[0].mxu0
      %2213 = vmatprep.mubr.f32.mxu0 0.0
      %2214 = vmatmul.mubr.f32.gmra.mrb[0].mxu0 %v812
      %v2215 = vpop.f32.mrb[0].mxu0
      %v2216 = vadd.f32 0.0, %v2215
      %v2217 = vpop.f32.mrb[0].mxu0
      %2218 = vmatprep.mubr.f32.mxu0 0.0
      %2219 = vmatmul.mubr.f32.gmra.mrb[0].mxu0 %v815
      %v2220 = vpop.f32.mrb[0].mxu0
      %v2221 = vadd.f32 0.0, %v2220
      %v2222 = vpop.f32.mrb[0].mxu0
      %2223 = vmatprep.mubr.f32.mxu0 0.0
      %2224 = vmatmul.mubr.f32.gmra.mrb[0].mxu0 %v818
      %v2225 = vpop.f32.mrb[0].mxu0
      %v2226 = vadd.f32 0.0, %v2225
      %v2227 = vpop.f32.mrb[0].mxu0
      %2228 = vmatprep.mubr.f32.mxu0 0.0
      %2229 = vmatmul.mubr.f32.gmra.mrb[0].mxu0 %v821
      %v2230 = vpop.f32.mrb[0].mxu0
      %v2231 = vadd.f32 0.0, %v2230
      %v2232 = vpop.f32.mrb[0].mxu0
      %2233 = vmatprep.mubr.f32.mxu0 0.0
      %2234 = vmatmul.mubr.f32.gmra.mrb[0].mxu0 %v824
      %v2235 = vpop.f32.mrb[0].mxu0
      %v2236 = vadd.f32 0.0, %v2235
      %v2237 = vpop.f32.mrb[0].mxu0
      %2238 = vmatprep.mubr.f32.mxu0 0.0
      %2239 = vmatmul.mubr.f32.gmra.mrb[0].mxu0 %v827
      %v2240 = vpop.f32.mrb[0].mxu0
      %v2241 = vadd.f32 0.0, %v2240
      %v2242 = vpop.f32.mrb[0].mxu0
      %2243 = vmatprep.mubr.f32.mxu0 0.0
      %2244 = vmatmul.mubr.f32.gmra.mrb[0].mxu0 %v830
      %v2245 = vpop.f32.mrb[0].mxu0
      %v2246 = vadd.f32 0.0, %v2245
      %v2247 = vpop.f32.mrb[0].mxu0
      %2248 = vmatprep.mubr.f32.mxu0 0.0
      %2249 = vmatmul.mubr.f32.gmra.mrb[0].mxu0 %v833
      %v2250 = vpop.f32.mrb[0].mxu0
      %v2251 = vadd.f32 0.0, %v2250
      %v2252 = vpop.f32.mrb[0].mxu0
      %2253 = vmatprep.mubr.f32.mxu0 0.0
      %2254 = vmatmul.mubr.f32.gmra.mrb[0].mxu0 %v836
      %v2255 = vpop.f32.mrb[0].mxu0
      %v2256 = vadd.f32 0.0, %v2255
      %v2257 = vpop.f32.mrb[0].mxu0
      %2258 = vmatprep.mubr.f32.mxu0 0.0
      %2259 = vmatmul.mubr.f32.gmra.mrb[0].mxu0 %v839
      %v2260 = vpop.f32.mrb[0].mxu0
      %v2261 = vadd.f32 0.0, %v2260
      %v2262 = vpop.f32.mrb[0].mxu0
      %2263 = vmatprep.mubr.f32.mxu0 0.0
      %2264 = vmatmul.mubr.f32.gmra.mrb[0].mxu0 %v842
      %v2265 = vpop.f32.mrb[0].mxu0
      %v2266 = vadd.f32 0.0, %v2265
      %v2267 = vpop.f32.mrb[0].mxu0
      %2268 = vmatprep.mubr.f32.mxu0 0.0
      %2269 = vmatmul.mubr.f32.gmra.mrb[0].mxu0 %v845
      %v2270 = vpop.f32.mrb[0].mxu0
      %v2271 = vadd.f32 0.0, %v2270
      %v2272 = vpop.f32.mrb[0].mxu0
      %2273 = vmatprep.mubr.f32.mxu0 0.0
      %2274 = vmatmul.mubr.f32.gmra.mrb[0].mxu0 %v848
      %v2275 = vpop.f32.mrb[0].mxu0
      %v2276 = vadd.f32 0.0, %v2275
      %v2277 = vpop.f32.mrb[0].mxu0
      %2278 = vmatprep.mubr.f32.mxu0 0.0
      %2279 = vmatmul.mubr.f32.gmra.mrb[0].mxu0 %v851
      %v2280 = vpop.f32.mrb[0].mxu0
      %v2281 = vadd.f32 0.0, %v2280
      %v2282 = vpop.f32.mrb[0].mxu0
      %2283 = vmatprep.mubr.f32.mxu0 0.0
      %2284 = vmatmul.mubr.f32.gmra.mrb[0].mxu0 %v854
      %v2285 = vpop.f32.mrb[0].mxu0
      %v2286 = vadd.f32 0.0, %v2285
      %v2287 = vpop.f32.mrb[0].mxu0
      %2288 = vmatprep.mubr.f32.mxu0 0.0
      %2289 = vmatmul.mubr.f32.gmra.mrb[0].mxu0 %v857
      %v2290 = vpop.f32.mrb[0].mxu0
      %v2291 = vadd.f32 0.0, %v2290
      %v2292 = vpop.f32.mrb[0].mxu0
      %2293 = vmatprep.mubr.f32.mxu0 0.0
      %2294 = vmatmul.mubr.f32.gmra.mrb[0].mxu0 %v860
      %v2295 = vpop.f32.mrb[0].mxu0
      %v2296 = vadd.f32 0.0, %v2295
      %v2297 = vpop.f32.mrb[0].mxu0
      %2298 = vmatprep.mubr.f32.mxu0 0.0
      %2299 = vmatmul.mubr.f32.gmra.mrb[0].mxu0 %v863
      %v2300 = vpop.f32.mrb[0].mxu0
      %v2301 = vadd.f32 0.0, %v2300
      %v2302 = vpop.f32.mrb[0].mxu0
      %2303 = vmatprep.mubr.f32.mxu0 0.0
      %2304 = vmatmul.mubr.f32.gmra.mrb[0].mxu0 %v866
      %v2305 = vpop.f32.mrb[0].mxu0
      %v2306 = vadd.f32 0.0, %v2305
      %v2307 = vpop.f32.mrb[0].mxu0
      %2308 = vmatprep.mubr.f32.mxu0 0.0
      %2309 = vmatmul.mubr.f32.gmra.mrb[0].mxu0 %v869
      %v2310 = vpop.f32.mrb[0].mxu0
      %v2311 = vadd.f32 0.0, %v2310
      %v2312 = vpop.f32.mrb[0].mxu0
      %2313 = vmatprep.mubr.f32.mxu0 0.0
      %2314 = vmatmul.mubr.f32.gmra.mrb[0].mxu0 %v872
      %v2315 = vpop.f32.mrb[0].mxu0
      %v2316 = vadd.f32 0.0, %v2315
      %v2317 = vpop.f32.mrb[0].mxu0
      %2318 = vmatprep.mubr.f32.mxu0 0.0
      %2319 = vmatmul.mubr.f32.gmra.mrb[0].mxu0 %v875
      %v2320 = vpop.f32.mrb[0].mxu0
      %v2321 = vadd.f32 0.0, %v2320
      %v2322 = vpop.f32.mrb[0].mxu0
      %2323 = vmatprep.mubr.f32.mxu0 0.0
      %2324 = vmatmul.mubr.f32.gmra.mrb[0].mxu0 %v878
      %v2325 = vpop.f32.mrb[0].mxu0
      %v2326 = vadd.f32 0.0, %v2325
      %v2327 = vpop.f32.mrb[0].mxu0
      %2328 = vmatprep.mubr.f32.mxu0 0.0
      %2329 = vmatmul.mubr.f32.gmra.mrb[0].mxu0 %v881
      %v2330 = vpop.f32.mrb[0].mxu0
      %v2331 = vadd.f32 0.0, %v2330
      %v2332 = vpop.f32.mrb[0].mxu0
      %2333 = vmatprep.mubr.f32.mxu0 0.0
      %2334 = vmatmul.mubr.f32.gmra.mrb[0].mxu0 %v884
      %v2335 = vpop.f32.mrb[0].mxu0
      %v2336 = vadd.f32 0.0, %v2335
      %v2337 = vpop.f32.mrb[0].mxu0
      %2338 = vmatprep.mubr.f32.mxu0 0.0
      %2339 = vmatmul.mubr.f32.gmra.mrb[0].mxu0 %v887
      %v2340 = vpop.f32.mrb[0].mxu0
      %v2341 = vadd.f32 0.0, %v2340
      %v2342 = vpop.f32.mrb[0].mxu0
      %2343 = vmatprep.mubr.f32.mxu0 0.0
      %2344 = vmatmul.mubr.f32.gmra.mrb[0].mxu0 %v890
      %v2345 = vpop.f32.mrb[0].mxu0
      %v2346 = vadd.f32 0.0, %v2345
      %v2347 = vpop.f32.mrb[0].mxu0
      %2348 = vmatprep.mubr.f32.mxu0 0.0
      %2349 = vmatmul.mubr.f32.gmra.mrb[0].mxu0 %v893
      %v2350 = vpop.f32.mrb[0].mxu0
      %v2351 = vadd.f32 0.0, %v2350
      %v2352 = vpop.f32.mrb[0].mxu0
      %2353 = vmatprep.mubr.f32.mxu0 0.0
      %2354 = vmatmul.mubr.f32.gmra.mrb[0].mxu0 %v896
      %v2355 = vpop.f32.mrb[0].mxu0
      %v2356 = vadd.f32 0.0, %v2355
      %v2357 = vpop.f32.mrb[0].mxu0
      %2358 = vmatprep.mubr.f32.mxu0 0.0
      %2359 = vmatmul.mubr.f32.gmra.mrb[0].mxu0 %v899
      %v2360 = vpop.f32.mrb[0].mxu0
      %v2361 = vadd.f32 0.0, %v2360
      %v2362 = vpop.f32.mrb[0].mxu0
      %2363 = vmatprep.mubr.f32.mxu0 0.0
      %2364 = vmatmul.mubr.f32.gmra.mrb[0].mxu0 %v902
      %v2365 = vpop.f32.mrb[0].mxu0
      %v2366 = vadd.f32 0.0, %v2365
      %v2367 = vpop.f32.mrb[0].mxu0
      %2368 = vmatprep.mubr.f32.mxu0 0.0
      %2369 = vmatmul.mubr.f32.gmra.mrb[0].mxu0 %v905
      %v2370 = vpop.f32.mrb[0].mxu0
      %v2371 = vadd.f32 0.0, %v2370
      %v2372 = vpop.f32.mrb[0].mxu0
      %2373 = vmatprep.mubr.f32.mxu0 0.0
      %2374 = vmatmul.mubr.f32.gmra.mrb[0].mxu0 %v908
      %v2375 = vpop.f32.mrb[0].mxu0
      %v2376 = vadd.f32 0.0, %v2375
      %v2377 = vpop.f32.mrb[0].mxu0
      %2378 = vmatprep.mubr.f32.mxu0 0.0
      %2379 = vmatmul.mubr.f32.gmra.mrb[0].mxu0 %v911
      %v2380 = vpop.f32.mrb[0].mxu0
      %v2381 = vadd.f32 0.0, %v2380
      %v2382 = vpop.f32.mrb[0].mxu0
      %2383 = vmatprep.mubr.f32.mxu0 0.0
      %2384 = vmatmul.mubr.f32.gmra.mrb[0].mxu0 %v914
      %v2385 = vpop.f32.mrb[0].mxu0
      %v2386 = vadd.f32 0.0, %v2385
      %v2387 = vpop.f32.mrb[0].mxu0
      %2388 = vmatprep.mubr.f32.mxu0 0.0
      %2389 = vmatmul.mubr.f32.gmra.mrb[0].mxu0 %v917
      %v2390 = vpop.f32.mrb[0].mxu0
      %v2391 = vadd.f32 0.0, %v2390
      %v2392 = vpop.f32.mrb[0].mxu0
      %2393 = vmatprep.mubr.f32.mxu0 0.0
      %2394 = vmatmul.mubr.f32.gmra.mrb[0].mxu0 %v920
      %v2395 = vpop.f32.mrb[0].mxu0
      %v2396 = vadd.f32 0.0, %v2395
      %v2397 = vpop.f32.mrb[0].mxu0
      %2398 = vmatprep.mubr.f32.mxu0 0.0
      %2399 = vmatmul.mubr.f32.gmra.mrb[0].mxu0 %v923
      %v2400 = vpop.f32.mrb[0].mxu0
      %v2401 = vadd.f32 0.0, %v2400
      %v2402 = vpop.f32.mrb[0].mxu0
      %2403 = vmatprep.mubr.f32.mxu0 0.0
      %2404 = vmatmul.mubr.f32.gmra.mrb[0].mxu0 %v926
      %v2405 = vpop.f32.mrb[0].mxu0
      %v2406 = vadd.f32 0.0, %v2405
      %v2407 = vpop.f32.mrb[0].mxu0
      %2408 = vmatprep.mubr.f32.mxu0 0.0
      %2409 = vmatmul.mubr.f32.gmra.mrb[0].mxu0 %v929
      %v2410 = vpop.f32.mrb[0].mxu0
      %v2411 = vadd.f32 0.0, %v2410
      %v2412 = vpop.f32.mrb[0].mxu0
      %2413 = vmatprep.mubr.f32.mxu0 0.0
      %2414 = vmatmul.mubr.f32.gmra.mrb[0].mxu0 %v932
      %v2415 = vpop.f32.mrb[0].mxu0
      %v2416 = vadd.f32 0.0, %v2415
      %v2417 = vpop.f32.mrb[0].mxu0
      %2418 = vmatprep.mubr.f32.mxu0 0.0
      %2419 = vmatmul.mubr.f32.gmra.mrb[0].mxu0 %v935
      %v2420 = vpop.f32.mrb[0].mxu0
      %v2421 = vadd.f32 0.0, %v2420
      %v2422 = vpop.f32.mrb[0].mxu0
      %2423 = vmatprep.mubr.f32.mxu0 0.0
      %2424 = vmatmul.mubr.f32.gmra.mrb[0].mxu0 %v938
      %v2425 = vpop.f32.mrb[0].mxu0
      %v2426 = vadd.f32 0.0, %v2425
      %v2427 = vpop.f32.mrb[0].mxu0
      %2428 = vmatprep.mubr.f32.mxu0 0.0
      %2429 = vmatmul.mubr.f32.gmra.mrb[0].mxu0 %v941
      %v2430 = vpop.f32.mrb[0].mxu0
      %v2431 = vadd.f32 0.0, %v2430
      %v2432 = vpop.f32.mrb[0].mxu0
      %2433 = vmatprep.mubr.f32.mxu0 0.0
      %2434 = vmatmul.mubr.f32.gmra.mrb[0].mxu0 %v944
      %v2435 = vpop.f32.mrb[0].mxu0
      %v2436 = vadd.f32 0.0, %v2435
      %v2437 = vpop.f32.mrb[0].mxu0
      %2438 = vmatprep.mubr.f32.mxu0 0.0
      %2439 = vmatmul.mubr.f32.gmra.mrb[0].mxu0 %v947
      %v2440 = vpop.f32.mrb[0].mxu0
      %v2441 = vadd.f32 0.0, %v2440
      %v2442 = vpop.f32.mrb[0].mxu0
      %2443 = vmatprep.mubr.f32.mxu0 0.0
      %2444 = vmatmul.mubr.f32.gmra.mrb[0].mxu0 %v950
      %v2445 = vpop.f32.mrb[0].mxu0
      %v2446 = vadd.f32 0.0, %v2445
      %v2447 = vpop.f32.mrb[0].mxu0
      %2448 = vmatprep.mubr.f32.mxu0 0.0
      %2449 = vmatmul.mubr.f32.gmra.mrb[0].mxu0 %v953
      %v2450 = vpop.f32.mrb[0].mxu0
      %v2451 = vadd.f32 0.0, %v2450
      %v2452 = vpop.f32.mrb[0].mxu0
      %2453 = vmatprep.mubr.f32.mxu0 0.0
      %2454 = vmatmul.mubr.f32.gmra.mrb[0].mxu0 %v956
      %v2455 = vpop.f32.mrb[0].mxu0
      %v2456 = vadd.f32 0.0, %v2455
      %v2457 = vpop.f32.mrb[0].mxu0
      %2458 = vmatprep.mubr.f32.mxu0 0.0
      %2459 = vmatmul.mubr.f32.gmra.mrb[0].mxu0 %v959
      %v2460 = vpop.f32.mrb[0].mxu0
      %v2461 = vadd.f32 0.0, %v2460
      %v2462 = vpop.f32.mrb[0].mxu0
      %2463 = vmatprep.mubr.f32.mxu0 0.0
      %2464 = vmatmul.mubr.f32.gmra.mrb[0].mxu0 %v962
      %v2465 = vpop.f32.mrb[0].mxu0
      %v2466 = vadd.f32 0.0, %v2465
      %v2467 = vpop.f32.mrb[0].mxu0
      %2468 = vmatprep.mubr.f32.mxu0 0.0
      %2469 = vmatmul.mubr.f32.gmra.mrb[0].mxu0 %v965
      %v2470 = vpop.f32.mrb[0].mxu0
      %v2471 = vadd.f32 0.0, %v2470
      %v2472 = vpop.f32.mrb[0].mxu0
      %2473 = vmatprep.mubr.f32.mxu0 0.0
      %2474 = vmatmul.mubr.f32.gmra.mrb[0].mxu0 %v968
      %v2475 = vpop.f32.mrb[0].mxu0
      %v2476 = vadd.f32 0.0, %v2475
      %v2477 = vpop.f32.mrb[0].mxu0
      %2478 = vmatprep.mubr.f32.mxu0 0.0
      %2479 = vmatmul.mubr.f32.gmra.mrb[0].mxu0 %v971
      %v2480 = vpop.f32.mrb[0].mxu0
      %v2481 = vadd.f32 0.0, %v2480
      %v2482 = vpop.f32.mrb[0].mxu0
      %2483 = vmatprep.mubr.f32.mxu0 0.0
      %2484 = vmatmul.mubr.f32.gmra.mrb[0].mxu0 %v974
      %v2485 = vpop.f32.mrb[0].mxu0
      %v2486 = vadd.f32 0.0, %v2485
      %v2487 = vpop.f32.mrb[0].mxu0
      %2488 = vmatprep.mubr.f32.mxu0 0.0
      %2489 = vmatmul.mubr.f32.gmra.mrb[0].mxu0 %v977
      %v2490 = vpop.f32.mrb[0].mxu0
      %v2491 = vadd.f32 0.0, %v2490
      %v2492 = vpop.f32.mrb[0].mxu0
      %2493 = vmatprep.mubr.f32.mxu0 0.0
      %2494 = vmatmul.mubr.f32.gmra.mrb[0].mxu0 %v980
      %v2495 = vpop.f32.mrb[0].mxu0
      %v2496 = vadd.f32 0.0, %v2495
      %v2497 = vpop.f32.mrb[0].mxu0
      %2498 = vmatprep.mubr.f32.mxu0 0.0
      %2499 = vmatmul.mubr.f32.gmra.mrb[0].mxu0 %v983
      %v2500 = vpop.f32.mrb[0].mxu0
      %v2501 = vadd.f32 0.0, %v2500
      %v2502 = vpop.f32.mrb[0].mxu0
      %2503 = vmatprep.mubr.f32.mxu0 0.0
      %2504 = vmatmul.mubr.f32.gmra.mrb[0].mxu0 %v986
      %v2505 = vpop.f32.mrb[0].mxu0
      %v2506 = vadd.f32 0.0, %v2505
      %v2507 = vpop.f32.mrb[0].mxu0
      %2508 = vmatprep.mubr.f32.mxu0 0.0
      %2509 = vmatmul.mubr.f32.gmra.mrb[0].mxu0 %v989
      %v2510 = vpop.f32.mrb[0].mxu0
      %v2511 = vadd.f32 0.0, %v2510
      %v2512 = vpop.f32.mrb[0].mxu0
      %2513 = vmatprep.mubr.f32.mxu0 0.0
      %2514 = vmatmul.mubr.f32.gmra.mrb[0].mxu0 %v992
      %v2515 = vpop.f32.mrb[0].mxu0
      %v2516 = vadd.f32 0.0, %v2515
      %v2517 = vpop.f32.mrb[0].mxu0
      %2518 = vmatprep.mubr.f32.mxu0 0.0
      %2519 = vmatmul.mubr.f32.gmra.mrb[0].mxu0 %v995
      %v2520 = vpop.f32.mrb[0].mxu0
      %v2521 = vadd.f32 0.0, %v2520
      %v2522 = vpop.f32.mrb[0].mxu0
      %2523 = vmatprep.mubr.f32.mxu0 0.0
      %2524 = vmatmul.mubr.f32.gmra.mrb[0].mxu0 %v998
      %v2525 = vpop.f32.mrb[0].mxu0
      %v2526 = vadd.f32 0.0, %v2525
      %v2527 = vpop.f32.mrb[0].mxu0
      %2528 = vmatprep.mubr.f32.mxu0 0.0
      %2529 = vmatmul.mubr.f32.gmra.mrb[0].mxu0 %v1001
      %v2530 = vpop.f32.mrb[0].mxu0
      %v2531 = vadd.f32 0.0, %v2530
      %v2532 = vpop.f32.mrb[0].mxu0
      %2533 = vmatprep.mubr.f32.mxu0 0.0
      %2534 = vmatmul.mubr.f32.gmra.mrb[0].mxu0 %v1004
      %v2535 = vpop.f32.mrb[0].mxu0
      %v2536 = vadd.f32 0.0, %v2535
      %v2537 = vpop.f32.mrb[0].mxu0
      %2538 = vmatprep.mubr.f32.mxu0 0.0
      %2539 = vmatmul.mubr.f32.gmra.mrb[0].mxu0 %v1007
      %v2540 = vpop.f32.mrb[0].mxu0
      %v2541 = vadd.f32 0.0, %v2540
      %v2542 = vpop.f32.mrb[0].mxu0
      %2543 = vmatprep.mubr.f32.mxu0 0.0
      %2544 = vmatmul.mubr.f32.gmra.mrb[0].mxu0 %v1010
      %v2545 = vpop.f32.mrb[0].mxu0
      %v2546 = vadd.f32 0.0, %v2545
      %v2547 = vpop.f32.mrb[0].mxu0
      %2548 = vmatprep.mubr.f32.mxu0 0.0
      %2549 = vmatmul.mubr.f32.gmra.mrb[0].mxu0 %v1013
      %v2550 = vpop.f32.mrb[0].mxu0
      %v2551 = vadd.f32 0.0, %v2550
      %v2552 = vpop.f32.mrb[0].mxu0
      %2553 = vmatprep.mubr.f32.mxu0 0.0
      %2554 = vmatmul.mubr.f32.gmra.mrb[0].mxu0 %v1016
      %v2555 = vpop.f32.mrb[0].mxu0
      %v2556 = vadd.f32 0.0, %v2555
      %v2557 = vpop.f32.mrb[0].mxu0
      %2558 = vmatprep.mubr.f32.mxu0 0.0
      %2559 = vmatmul.mubr.f32.gmra.mrb[0].mxu0 %v1019
      %v2560 = vpop.f32.mrb[0].mxu0
      %v2561 = vadd.f32 0.0, %v2560
      %v2562 = vpop.f32.mrb[0].mxu0
      %2563 = vmatprep.mubr.f32.mxu0 0.0
      %2564 = vmatmul.mubr.f32.gmra.mrb[0].mxu0 %v1022
      %v2565 = vpop.f32.mrb[0].mxu0
      %v2566 = vadd.f32 0.0, %v2565
      %v2567 = vpop.f32.mrb[0].mxu0
      %2568 = vmatprep.mubr.f32.mxu0 0.0
      %2569 = vmatmul.mubr.f32.gmra.mrb[0].mxu0 %v1025
      %v2570 = vpop.f32.mrb[0].mxu0
      %v2571 = vadd.f32 0.0, %v2570
      %v2572 = vpop.f32.mrb[0].mxu0
      %2573 = vmatprep.mubr.f32.mxu0 0.0
      %2574 = vmatmul.mubr.f32.gmra.mrb[0].mxu0 %v1028
      %v2575 = vpop.f32.mrb[0].mxu0
      %v2576 = vadd.f32 0.0, %v2575
      %v2577 = vpop.f32.mrb[0].mxu0
      %2578 = vmatprep.mubr.f32.mxu0 0.0
      %2579 = vmatmul.mubr.f32.gmra.mrb[0].mxu0 %v1031
      %v2580 = vpop.f32.mrb[0].mxu0
      %v2581 = vadd.f32 0.0, %v2580
      %v2582 = vpop.f32.mrb[0].mxu0
      %2583 = vmatprep.mubr.f32.mxu0 0.0
      %2584 = vmatmul.mubr.f32.gmra.mrb[0].mxu0 %v1034
      %v2585 = vpop.f32.mrb[0].mxu0
      %v2586 = vadd.f32 0.0, %v2585
      %v2587 = vpop.f32.mrb[0].mxu0
      %2588 = vmatprep.mubr.f32.mxu0 0.0
      %2589 = vmatmul.mubr.f32.gmra.mrb[0].mxu0 %v1037
      %v2590 = vpop.f32.mrb[0].mxu0
      %v2591 = vadd.f32 0.0, %v2590
      %v2592 = vpop.f32.mrb[0].mxu0
      %2593 = vmatprep.mubr.f32.mxu0 0.0
      %2594 = vmatmul.mubr.f32.gmra.mrb[0].mxu0 %v1040
      %v2595 = vpop.f32.mrb[0].mxu0
      %v2596 = vadd.f32 0.0, %v2595
      %v2597 = vpop.f32.mrb[0].mxu0
      %2598 = vmatprep.mubr.f32.mxu0 0.0
      %2599 = vmatmul.mubr.f32.gmra.mrb[0].mxu0 %v1043
      %v2600 = vpop.f32.mrb[0].mxu0
      %v2601 = vadd.f32 0.0, %v2600
      %v2602 = vpop.f32.mrb[0].mxu0
      %2603 = vmatprep.mubr.f32.mxu0 0.0
      %2604 = vmatmul.mubr.f32.gmra.mrb[0].mxu0 %v1046
      %v2605 = vpop.f32.mrb[0].mxu0
      %v2606 = vadd.f32 0.0, %v2605
      %v2607 = vpop.f32.mrb[0].mxu0
      %2608 = vmatprep.mubr.f32.mxu0 0.0
      %2609 = vmatmul.mubr.f32.gmra.mrb[0].mxu0 %v1049
      %v2610 = vpop.f32.mrb[0].mxu0
      %v2611 = vadd.f32 0.0, %v2610
      %v2612 = vpop.f32.mrb[0].mxu0
      %2613 = vmatprep.mubr.f32.mxu0 0.0
      %2614 = vmatmul.mubr.f32.gmra.mrb[0].mxu0 %v1052
      %v2615 = vpop.f32.mrb[0].mxu0
      %v2616 = vadd.f32 0.0, %v2615
      %v2617 = vpop.f32.mrb[0].mxu0
      %2618 = vmatprep.mubr.f32.mxu0 0.0
      %2619 = vmatmul.mubr.f32.gmra.mrb[0].mxu0 %v1055
      %v2620 = vpop.f32.mrb[0].mxu0
      %v2621 = vadd.f32 0.0, %v2620
      %v2622 = vpop.f32.mrb[0].mxu0
      %2623 = vmatprep.mubr.f32.mxu0 0.0
      %2624 = vmatmul.mubr.f32.gmra.mrb[0].mxu0 %v1058
      %v2625 = vpop.f32.mrb[0].mxu0
      %v2626 = vadd.f32 0.0, %v2625
      %v2627 = vpop.f32.mrb[0].mxu0
      %2628 = vmatprep.mubr.f32.mxu0 0.0
      %2629 = vmatmul.mubr.f32.gmra.mrb[0].mxu0 %v1061
      %v2630 = vpop.f32.mrb[0].mxu0
      %v2631 = vadd.f32 0.0, %v2630
      %v2632 = vpop.f32.mrb[0].mxu0
      %2633 = vmatprep.mubr.f32.mxu0 0.0
      %2634 = vmatmul.mubr.f32.gmra.mrb[0].mxu0 %v1064
      %v2635 = vpop.f32.mrb[0].mxu0
      %v2636 = vadd.f32 0.0, %v2635
      %v2637 = vpop.f32.mrb[0].mxu0
      %2638 = vmatprep.mubr.f32.mxu0 0.0
      %2639 = vmatmul.mubr.f32.gmra.mrb[0].mxu0 %v1067
      %v2640 = vpop.f32.mrb[0].mxu0
      %v2641 = vadd.f32 0.0, %v2640
      %v2642 = vpop.f32.mrb[0].mxu0
      %2643 = vmatprep.mubr.f32.mxu0 0.0
      %2644 = vmatmul.mubr.f32.gmra.mrb[0].mxu0 %v1070
      %v2645 = vpop.f32.mrb[0].mxu0
      %v2646 = vadd.f32 0.0, %v2645
      %v2647 = vpop.f32.mrb[0].mxu0
      %2648 = vmatprep.mubr.f32.mxu0 0.0
      %2649 = vmatmul.mubr.f32.gmra.mrb[0].mxu0 %v1073
      %v2650 = vpop.f32.mrb[0].mxu0
      %v2651 = vadd.f32 0.0, %v2650
      %v2652 = vpop.f32.mrb[0].mxu0
      %2653 = vmatprep.mubr.f32.mxu0 0.0
      %2654 = vmatmul.mubr.f32.gmra.mrb[0].mxu0 %v1076
      %v2655 = vpop.f32.mrb[0].mxu0
      %v2656 = vadd.f32 0.0, %v2655
      %v2657 = vpop.f32.mrb[0].mxu0
      %2658 = vmatprep.mubr.f32.mxu0 0.0
      %2659 = vmatmul.mubr.f32.gmra.mrb[0].mxu0 %v1079
      %v2660 = vpop.f32.mrb[0].mxu0
      %v2661 = vadd.f32 0.0, %v2660
      %v2662 = vpop.f32.mrb[0].mxu0
      %2663 = vmatprep.mubr.f32.mxu0 0.0
      %2664 = vmatmul.mubr.f32.gmra.mrb[0].mxu0 %v1082
      %v2665 = vpop.f32.mrb[0].mxu0
      %v2666 = vadd.f32 0.0, %v2665
      %v2667 = vpop.f32.mrb[0].mxu0
      %2668 = vmatprep.mubr.f32.mxu0 0.0
      %2669 = vmatmul.mubr.f32.gmra.mrb[0].mxu0 %v1085
      %v2670 = vpop.f32.mrb[0].mxu0
      %v2671 = vadd.f32 0.0, %v2670
      %v2672 = vpop.f32.mrb[0].mxu0
      %2673 = vmatprep.mubr.f32.mxu0 0.0
      %2674 = vmatmul.mubr.f32.gmra.mrb[0].mxu0 %v1088
      %v2675 = vpop.f32.mrb[0].mxu0
      %v2676 = vadd.f32 0.0, %v2675
      %v2677 = vpop.f32.mrb[0].mxu0
      %2678 = vmatprep.mubr.f32.mxu0 0.0
      %2679 = vmatmul.mubr.f32.gmra.mrb[0].mxu0 %v1091
      %v2680 = vpop.f32.mrb[0].mxu0
      %v2681 = vadd.f32 0.0, %v2680
      %v2682 = vpop.f32.mrb[0].mxu0
      %2683 = vmatprep.mubr.f32.mxu0 0.0
      %2684 = vmatmul.mubr.f32.gmra.mrb[0].mxu0 %v1094
      %v2685 = vpop.f32.mrb[0].mxu0
      %v2686 = vadd.f32 0.0, %v2685
      %v2687 = vpop.f32.mrb[0].mxu0
      %2688 = vmatprep.mubr.f32.mxu0 0.0
      %2689 = vmatmul.mubr.f32.gmra.mrb[0].mxu0 %v1097
      %v2690 = vpop.f32.mrb[0].mxu0
      %v2691 = vadd.f32 0.0, %v2690
      %v2692 = vpop.f32.mrb[0].mxu0
      %2693 = vmatprep.mubr.f32.mxu0 0.0
      %2694 = vmatmul.mubr.f32.gmra.mrb[0].mxu0 %v1100
      %v2695 = vpop.f32.mrb[0].mxu0
      %v2696 = vadd.f32 0.0, %v2695
      %v2697 = vpop.f32.mrb[0].mxu0
      %2698 = vmatprep.mubr.f32.mxu0 0.0
      %2699 = vmatmul.mubr.f32.gmra.mrb[0].mxu0 %v1103
      %v2700 = vpop.f32.mrb[0].mxu0
      %v2701 = vadd.f32 0.0, %v2700
      %v2702 = vpop.f32.mrb[0].mxu0
      %2703 = vmatprep.mubr.f32.mxu0 0.0
      %2704 = vmatmul.mubr.f32.gmra.mrb[0].mxu0 %v1106
      %v2705 = vpop.f32.mrb[0].mxu0
      %v2706 = vadd.f32 0.0, %v2705
      %v2707 = vpop.f32.mrb[0].mxu0
      %2708 = vmatprep.mubr.f32.mxu0 0.0
      %2709 = vmatmul.mubr.f32.gmra.mrb[0].mxu0 %v1109
      %v2710 = vpop.f32.mrb[0].mxu0
      %v2711 = vadd.f32 0.0, %v2710
      %v2712 = vpop.f32.mrb[0].mxu0
      %2713 = vmatprep.mubr.f32.mxu0 0.0
      %2714 = vmatmul.mubr.f32.gmra.mrb[0].mxu0 %v1112
      %v2715 = vpop.f32.mrb[0].mxu0
      %v2716 = vadd.f32 0.0, %v2715
      %v2717 = vpop.f32.mrb[0].mxu0
      %2718 = vmatprep.mubr.f32.mxu0 0.0
      %2719 = vmatmul.mubr.f32.gmra.mrb[0].mxu0 %v1115
      %v2720 = vpop.f32.mrb[0].mxu0
      %v2721 = vadd.f32 0.0, %v2720
      %v2722 = vpop.f32.mrb[0].mxu0
      %2723 = vmatprep.mubr.f32.mxu0 0.0
      %2724 = vmatmul.mubr.f32.gmra.mrb[0].mxu0 %v1118
      %v2725 = vpop.f32.mrb[0].mxu0
      %v2726 = vadd.f32 0.0, %v2725
      %v2727 = vpop.f32.mrb[0].mxu0
      %2728 = vmatprep.mubr.f32.mxu0 0.0
      %2729 = vmatmul.mubr.f32.gmra.mrb[0].mxu0 %v1121
      %v2730 = vpop.f32.mrb[0].mxu0
      %v2731 = vadd.f32 0.0, %v2730
      %v2732 = vpop.f32.mrb[0].mxu0
      %2733 = vmatprep.mubr.f32.mxu0 0.0
      %2734 = vmatmul.mubr.f32.gmra.mrb[0].mxu0 %v1124
      %v2735 = vpop.f32.mrb[0].mxu0
      %v2736 = vadd.f32 0.0, %v2735
      %v2737 = vpop.f32.mrb[0].mxu0
      %2738 = vmatprep.mubr.f32.mxu0 0.0
      %2739 = vmatmul.mubr.f32.gmra.mrb[0].mxu0 %v1127
      %v2740 = vpop.f32.mrb[0].mxu0
      %v2741 = vadd.f32 0.0, %v2740
      %v2742 = vpop.f32.mrb[0].mxu0
      %2743 = vmatprep.mubr.f32.mxu0 0.0
      %2744 = vmatmul.mubr.f32.gmra.mrb[0].mxu0 %v1130
      %v2745 = vpop.f32.mrb[0].mxu0
      %v2746 = vadd.f32 0.0, %v2745
      %v2747 = vpop.f32.mrb[0].mxu0
      %2748 = vmatprep.mubr.f32.mxu0 0.0
      %2749 = vmatmul.mubr.f32.gmra.mrb[0].mxu0 %v1133
      %v2750 = vpop.f32.mrb[0].mxu0
      %v2751 = vadd.f32 0.0, %v2750
      %v2752 = vpop.f32.mrb[0].mxu0
      %2753 = vmatprep.mubr.f32.mxu0 0.0
      %2754 = vmatmul.mubr.f32.gmra.mrb[0].mxu0 %v1136
      %v2755 = vpop.f32.mrb[0].mxu0
      %v2756 = vadd.f32 0.0, %v2755
      %v2757 = vpop.f32.mrb[0].mxu0
      %2758 = vmatprep.mubr.f32.mxu0 0.0
      %2759 = vmatmul.mubr.f32.gmra.mrb[0].mxu0 %v1139
      %v2760 = vpop.f32.mrb[0].mxu0
      %v2761 = vadd.f32 0.0, %v2760
      %v2762 = vpop.f32.mrb[0].mxu0
      %2763 = vmatprep.mubr.f32.mxu0 0.0
      %2764 = vmatmul.mubr.f32.gmra.mrb[0].mxu0 %v1142
      %v2765 = vpop.f32.mrb[0].mxu0
      %v2766 = vadd.f32 0.0, %v2765
      %v2767 = vpop.f32.mrb[0].mxu0
      %2768 = vmatprep.mubr.f32.mxu0 0.0
      %2769 = vmatmul.mubr.f32.gmra.mrb[0].mxu0 %v1145
      %v2770 = vpop.f32.mrb[0].mxu0
      %v2771 = vadd.f32 0.0, %v2770
      %v2772 = vpop.f32.mrb[0].mxu0
      %2773 = vmatprep.mubr.f32.mxu0 0.0
      %2774 = vmatmul.mubr.f32.gmra.mrb[0].mxu0 %v1148
      %v2775 = vpop.f32.mrb[0].mxu0
      %v2776 = vadd.f32 0.0, %v2775
      %v2777 = vpop.f32.mrb[0].mxu0
      %2778 = vmatprep.mubr.f32.mxu0 0.0
      %2779 = vmatmul.mubr.f32.gmra.mrb[0].mxu0 %v1151
      %v2780 = vpop.f32.mrb[0].mxu0
      %v2781 = vadd.f32 0.0, %v2780
      %v2782 = vpop.f32.mrb[0].mxu0
      %2783 = vmatprep.mubr.f32.mxu0 0.0
      %2784 = vmatmul.mubr.f32.gmra.mrb[0].mxu0 %v1154
      %v2785 = vpop.f32.mrb[0].mxu0
      %v2786 = vadd.f32 0.0, %v2785
      %v2787 = vpop.f32.mrb[0].mxu0
      %2788 = vmatprep.mubr.f32.mxu0 0.0
      %2789 = vmatmul.mubr.f32.gmra.mrb[0].mxu0 %v1157
      %v2790 = vpop.f32.mrb[0].mxu0
      %v2791 = vadd.f32 0.0, %v2790
      %v2792 = vpop.f32.mrb[0].mxu0
      %2793 = vmatprep.mubr.f32.mxu0 0.0
      %2794 = vmatmul.mubr.f32.gmra.mrb[0].mxu0 %v1160
      %v2795 = vpop.f32.mrb[0].mxu0
      %v2796 = vadd.f32 0.0, %v2795
      %v2797 = vpop.f32.mrb[0].mxu0
      %2798 = vmatprep.mubr.f32.mxu0 0.0
      %2799 = vmatmul.mubr.f32.gmra.mrb[0].mxu0 %v1163
      %v2800 = vpop.f32.mrb[0].mxu0
      %v2801 = vadd.f32 0.0, %v2800
      %v2802 = vpop.f32.mrb[0].mxu0
      %2803 = vmatprep.mubr.f32.mxu0 0.0
      %2804 = vmatmul.mubr.f32.gmra.mrb[0].mxu0 %v1166
      %v2805 = vpop.f32.mrb[0].mxu0
      %v2806 = vadd.f32 0.0, %v2805
      %v2807 = vpop.f32.mrb[0].mxu0
      %2808 = vmatprep.mubr.f32.mxu0 0.0
      %2809 = vmatmul.mubr.f32.gmra.mrb[0].mxu0 %v1169
      %v2810 = vpop.f32.mrb[0].mxu0
      %v2811 = vadd.f32 0.0, %v2810
      %v2812 = vpop.f32.mrb[0].mxu0
      %2813 = vmatprep.mubr.f32.mxu0 0.0
      %2814 = vmatmul.mubr.f32.gmra.mrb[0].mxu0 %v1172
      %v2815 = vpop.f32.mrb[0].mxu0
      %v2816 = vadd.f32 0.0, %v2815
      %v2817 = vpop.f32.mrb[0].mxu0
      %2818 = vmatprep.mubr.f32.mxu0 0.0
      %2819 = vmatmul.mubr.f32.gmra.mrb[0].mxu0 %v1175
      %v2820 = vpop.f32.mrb[0].mxu0
      %v2821 = vadd.f32 0.0, %v2820
      %v2822 = vpop.f32.mrb[0].mxu0
      %2823 = vmatprep.mubr.f32.mxu0 0.0
      %2824 = vmatmul.mubr.f32.gmra.mrb[0].mxu0 %v1178
      %v2825 = vpop.f32.mrb[0].mxu0
      %v2826 = vadd.f32 0.0, %v2825
      %v2827 = vpop.f32.mrb[0].mxu0
      %2828 = vmatprep.mubr.f32.mxu0 0.0
      %2829 = vmatmul.mubr.f32.gmra.mrb[0].mxu0 %v1181
      %v2830 = vpop.f32.mrb[0].mxu0
      %v2831 = vadd.f32 0.0, %v2830
      %v2832 = vpop.f32.mrb[0].mxu0
      %2833 = vmatprep.mubr.f32.mxu0 0.0
      %2834 = vmatmul.mubr.f32.gmra.mrb[0].mxu0 %v1184
      %v2835 = vpop.f32.mrb[0].mxu0
      %v2836 = vadd.f32 0.0, %v2835
      %v2837 = vpop.f32.mrb[0].mxu0
      %2838 = vmatprep.mubr.f32.mxu0 0.0
      %2839 = vmatmul.mubr.f32.gmra.mrb[0].mxu0 %v1187
      %v2840 = vpop.f32.mrb[0].mxu0
      %v2841 = vadd.f32 0.0, %v2840
      %v2842 = vpop.f32.mrb[0].mxu0
      %2843 = vmatprep.mubr.f32.mxu0 0.0
      %2844 = vmatmul.mubr.f32.gmra.mrb[0].mxu0 %v1190
      %v2845 = vpop.f32.mrb[0].mxu0
      %v2846 = vadd.f32 0.0, %v2845
      %v2847 = vpop.f32.mrb[0].mxu0
      %2848 = vmatprep.mubr.f32.mxu0 0.0
      %2849 = vmatmul.mubr.f32.gmra.mrb[0].mxu0 %v1193
      %v2850 = vpop.f32.mrb[0].mxu0
      %v2851 = vadd.f32 0.0, %v2850
      %v2852 = vpop.f32.mrb[0].mxu0
      %2853 = vmatprep.mubr.f32.mxu0 0.0
      %2854 = vmatmul.mubr.f32.gmra.mrb[0].mxu0 %v1196
      %v2855 = vpop.f32.mrb[0].mxu0
      %v2856 = vadd.f32 0.0, %v2855
      %v2857 = vpop.f32.mrb[0].mxu0
      %2858 = vmatprep.mubr.f32.mxu0 0.0
      %2859 = vmatmul.mubr.f32.gmra.mrb[0].mxu0 %v1199
      %v2860 = vpop.f32.mrb[0].mxu0
      %v2861 = vadd.f32 0.0, %v2860
      %v2862 = vpop.f32.mrb[0].mxu0
      %2863 = vmatprep.mubr.f32.mxu0 0.0
      %2864 = vmatmul.mubr.f32.gmra.mrb[0].mxu0 %v1202
      %v2865 = vpop.f32.mrb[0].mxu0
      %v2866 = vadd.f32 0.0, %v2865
      %v2867 = vpop.f32.mrb[0].mxu0
      %2868 = vmatprep.mubr.f32.mxu0 0.0
      %2869 = vmatmul.mubr.f32.gmra.mrb[0].mxu0 %v1205
      %v2870 = vpop.f32.mrb[0].mxu0
      %v2871 = vadd.f32 0.0, %v2870
      %v2872 = vpop.f32.mrb[0].mxu0
      %2873 = vmatprep.mubr.f32.mxu0 0.0
      %2874 = vmatmul.mubr.f32.gmra.mrb[0].mxu0 %v1208
      %v2875 = vpop.f32.mrb[0].mxu0
      %v2876 = vadd.f32 0.0, %v2875
      %v2877 = vpop.f32.mrb[0].mxu0
      %2878 = vmatprep.mubr.f32.mxu0 0.0
      %2879 = vmatmul.mubr.f32.gmra.mrb[0].mxu0 %v1211
      %v2880 = vpop.f32.mrb[0].mxu0
      %v2881 = vadd.f32 0.0, %v2880
      %v2882 = vpop.f32.mrb[0].mxu0
      %2883 = vmatprep.mubr.f32.mxu0 0.0
      %2884 = vmatmul.mubr.f32.gmra.mrb[0].mxu0 %v1214
      %v2885 = vpop.f32.mrb[0].mxu0
      %v2886 = vadd.f32 0.0, %v2885
      %v2887 = vpop.f32.mrb[0].mxu0
      %2888 = vmatprep.mubr.f32.mxu0 0.0
      %2889 = vmatmul.mubr.f32.gmra.mrb[0].mxu0 %v1217
      %v2890 = vpop.f32.mrb[0].mxu0
      %v2891 = vadd.f32 0.0, %v2890
      %v2892 = vpop.f32.mrb[0].mxu0
      %2893 = vmatprep.mubr.f32.mxu0 0.0
      %2894 = vmatmul.mubr.f32.gmra.mrb[0].mxu0 %v1220
      %v2895 = vpop.f32.mrb[0].mxu0
      %v2896 = vadd.f32 0.0, %v2895
      %v2897 = vpop.f32.mrb[0].mxu0
      %2898 = vmatprep.mubr.f32.mxu0 0.0
      %2899 = vmatmul.mubr.f32.gmra.mrb[0].mxu0 %v1223
      %v2900 = vpop.f32.mrb[0].mxu0
      %v2901 = vadd.f32 0.0, %v2900
      %v2902 = vpop.f32.mrb[0].mxu0
      %2903 = vmatprep.mubr.f32.mxu0 0.0
      %2904 = vmatmul.mubr.f32.gmra.mrb[0].mxu0 %v1226
      %v2905 = vpop.f32.mrb[0].mxu0
      %v2906 = vadd.f32 0.0, %v2905
      %v2907 = vpop.f32.mrb[0].mxu0
      %2908 = vmatprep.mubr.f32.mxu0 0.0
      %2909 = vmatmul.mubr.f32.gmra.mrb[0].mxu0 %v1229
      %v2910 = vpop.f32.mrb[0].mxu0
      %v2911 = vadd.f32 0.0, %v2910
      %v2912 = vpop.f32.mrb[0].mxu0
      %2913 = vmatprep.mubr.f32.mxu0 0.0
      %2914 = vmatmul.mubr.f32.gmra.mrb[0].mxu0 %v1232
      %v2915 = vpop.f32.mrb[0].mxu0
      %v2916 = vadd.f32 0.0, %v2915
      %v2917 = vpop.f32.mrb[0].mxu0
      %2918 = vmatprep.mubr.f32.mxu0 0.0
      %2919 = vmatmul.mubr.f32.gmra.mrb[0].mxu0 %v1235
      %v2920 = vpop.f32.mrb[0].mxu0
      %v2921 = vadd.f32 0.0, %v2920
      %v2922 = vpop.f32.mrb[0].mxu0
      %2923 = vmatprep.mubr.f32.mxu0 0.0
      %2924 = vmatmul.mubr.f32.gmra.mrb[0].mxu0 %v1238
      %v2925 = vpop.f32.mrb[0].mxu0
      %v2926 = vadd.f32 0.0, %v2925
      %v2927 = vpop.f32.mrb[0].mxu0
      %2928 = vmatprep.mubr.f32.mxu0 0.0
      %2929 = vmatmul.mubr.f32.gmra.mrb[0].mxu0 %v1241
      %v2930 = vpop.f32.mrb[0].mxu0
      %v2931 = vadd.f32 0.0, %v2930
      %v2932 = vpop.f32.mrb[0].mxu0
      %2933 = vmatprep.mubr.f32.mxu0 0.0
      %2934 = vmatmul.mubr.f32.gmra.mrb[0].mxu0 %v1244
      %v2935 = vpop.f32.mrb[0].mxu0
      %v2936 = vadd.f32 0.0, %v2935
      %v2937 = vpop.f32.mrb[0].mxu0
      %2938 = vmatprep.mubr.f32.mxu0 0.0
      %2939 = vmatmul.mubr.f32.gmra.mrb[0].mxu0 %v1247
      %v2940 = vpop.f32.mrb[0].mxu0
      %v2941 = vadd.f32 0.0, %v2940
      %v2942 = vpop.f32.mrb[0].mxu0
      %2943 = vmatprep.mubr.f32.mxu0 0.0
      %2944 = vmatmul.mubr.f32.gmra.mrb[0].mxu0 %v1250
      %v2945 = vpop.f32.mrb[0].mxu0
      %v2946 = vadd.f32 0.0, %v2945
      %v2947 = vpop.f32.mrb[0].mxu0
      %2948 = vmatprep.mubr.f32.mxu0 0.0
      %2949 = vmatmul.mubr.f32.gmra.mrb[0].mxu0 %v1253
      %v2950 = vpop.f32.mrb[0].mxu0
      %v2951 = vadd.f32 0.0, %v2950
      %v2952 = vpop.f32.mrb[0].mxu0
      %2953 = vmatprep.mubr.f32.mxu0 0.0
      %2954 = vmatmul.mubr.f32.gmra.mrb[0].mxu0 %v1256
      %v2955 = vpop.f32.mrb[0].mxu0
      %v2956 = vadd.f32 0.0, %v2955
      %v2957 = vpop.f32.mrb[0].mxu0
      %2958 = vmatprep.mubr.f32.mxu0 0.0
      %2959 = vmatmul.mubr.f32.gmra.mrb[0].mxu0 %v1259
      %v2960 = vpop.f32.mrb[0].mxu0
      %v2961 = vadd.f32 0.0, %v2960
      %v2962 = vpop.f32.mrb[0].mxu0
      %2963 = vmatprep.mubr.f32.mxu0 0.0
      %2964 = vmatmul.mubr.f32.gmra.mrb[0].mxu0 %v1262
      %v2965 = vpop.f32.mrb[0].mxu0
      %v2966 = vadd.f32 0.0, %v2965
      %v2967 = vpop.f32.mrb[0].mxu0
      %2968 = vmatprep.mubr.f32.mxu0 0.0
      %2969 = vmatmul.mubr.f32.gmra.mrb[0].mxu0 %v1265
      %v2970 = vpop.f32.mrb[0].mxu0
      %v2971 = vadd.f32 0.0, %v2970
      %v2972 = vpop.f32.mrb[0].mxu0
      %2973 = vmatprep.mubr.f32.mxu0 0.0
      %2974 = vmatmul.mubr.f32.gmra.mrb[0].mxu0 %v1268
      %v2975 = vpop.f32.mrb[0].mxu0
      %v2976 = vadd.f32 0.0, %v2975
      %v2977 = vpop.f32.mrb[0].mxu0
      %2978 = vmatprep.mubr.f32.mxu0 0.0
      %2979 = vmatmul.mubr.f32.gmra.mrb[0].mxu0 %v1271
      %v2980 = vpop.f32.mrb[0].mxu0
      %v2981 = vadd.f32 0.0, %v2980
      %v2982 = vpop.f32.mrb[0].mxu0
      %2983 = vmatprep.mubr.f32.mxu0 0.0
      %2984 = vmatmul.mubr.f32.gmra.mrb[0].mxu0 %v1274
      %v2985 = vpop.f32.mrb[0].mxu0
      %v2986 = vadd.f32 0.0, %v2985
      %v2987 = vpop.f32.mrb[0].mxu0
      %2988 = vmatprep.mubr.f32.mxu0 0.0
      %2989 = vmatmul.mubr.f32.gmra.mrb[0].mxu0 %v1277
      %v2990 = vpop.f32.mrb[0].mxu0
      %v2991 = vadd.f32 0.0, %v2990
      %v2992 = vpop.f32.mrb[0].mxu0
      %2993 = vmatprep.mubr.f32.mxu0 0.0
      %2994 = vmatmul.mubr.f32.gmra.mrb[0].mxu0 %v1280
      %v2995 = vpop.f32.mrb[0].mxu0
      %v2996 = vadd.f32 0.0, %v2995
      %v2997 = vpop.f32.mrb[0].mxu0
      %2998 = vmatprep.mubr.f32.mxu0 0.0
      %2999 = vmatmul.mubr.f32.gmra.mrb[0].mxu0 %v1283
      %v3000 = vpop.f32.mrb[0].mxu0
      %v3001 = vadd.f32 0.0, %v3000
      %v3002 = vpop.f32.mrb[0].mxu0
      %3003 = vmatprep.mubr.f32.mxu0 0.0
      %3004 = vmatmul.mubr.f32.gmra.mrb[0].mxu0 %v1286
      %v3005 = vpop.f32.mrb[0].mxu0
      %v3006 = vadd.f32 0.0, %v3005
      %v3007 = vpop.f32.mrb[0].mxu0
      %3008 = vmatprep.mubr.f32.mxu0 0.0
      %3009 = vmatmul.mubr.f32.gmra.mrb[0].mxu0 %v1289
      %v3010 = vpop.f32.mrb[0].mxu0
      %v3011 = vadd.f32 0.0, %v3010
      %v3012 = vpop.f32.mrb[0].mxu0
      %3013 = vmatprep.mubr.f32.mxu0 0.0
      %3014 = vmatmul.mubr.f32.gmra.mrb[0].mxu0 %v1292
      %v3015 = vpop.f32.mrb[0].mxu0
      %v3016 = vadd.f32 0.0, %v3015
      %v3017 = vpop.f32.mrb[0].mxu0
      %3018 = vmatprep.mubr.f32.mxu0 0.0
      %3019 = vmatmul.mubr.f32.gmra.mrb[0].mxu0 %v1295
      %v3020 = vpop.f32.mrb[0].mxu0
      %v3021 = vadd.f32 0.0, %v3020
      %v3022 = vpop.f32.mrb[0].mxu0
      %3023 = vmatprep.mubr.f32.mxu0 0.0
      %3024 = vmatmul.mubr.f32.gmra.mrb[0].mxu0 %v1298
      %v3025 = vpop.f32.mrb[0].mxu0
      %v3026 = vadd.f32 0.0, %v3025
      %v3027 = vpop.f32.mrb[0].mxu0
      %3028 = vmatprep.mubr.f32.mxu0 0.0
      %3029 = vmatmul.mubr.f32.gmra.mrb[0].mxu0 %v1301
      %v3030 = vpop.f32.mrb[0].mxu0
      %v3031 = vadd.f32 0.0, %v3030
      %v3032 = vpop.f32.mrb[0].mxu0
      %3033 = vmatprep.mubr.f32.mxu0 0.0
      %3034 = vmatmul.mubr.f32.gmra.mrb[0].mxu0 %v1304
      %v3035 = vpop.f32.mrb[0].mxu0
      %v3036 = vadd.f32 0.0, %v3035
      %v3037 = vpop.f32.mrb[0].mxu0
      %3038 = vmatprep.mubr.f32.mxu0 0.0
      %3039 = vmatmul.mubr.f32.gmra.mrb[0].mxu0 %v1307
      %v3040 = vpop.f32.mrb[0].mxu0
      %v3041 = vadd.f32 0.0, %v3040
      %v3042 = vpop.f32.mrb[0].mxu0
      %3043 = vmatprep.mubr.f32.mxu0 0.0
      %3044 = vmatmul.mubr.f32.gmra.mrb[0].mxu0 %v1310
      %v3045 = vpop.f32.mrb[0].mxu0
      %v3046 = vadd.f32 0.0, %v3045
      %v3047 = vpop.f32.mrb[0].mxu0
      %3048 = vmatprep.mubr.f32.mxu0 0.0
      %3049 = vmatmul.mubr.f32.gmra.mrb[0].mxu0 %v1313
      %v3050 = vpop.f32.mrb[0].mxu0
      %v3051 = vadd.f32 0.0, %v3050
      %v3052 = vpop.f32.mrb[0].mxu0
      %3053 = vmatprep.mubr.f32.mxu0 0.0
      %3054 = vmatmul.mubr.f32.gmra.mrb[0].mxu0 %v1316
      %v3055 = vpop.f32.mrb[0].mxu0
      %v3056 = vadd.f32 0.0, %v3055
      %v3057 = vpop.f32.mrb[0].mxu0
      %3058 = vmatprep.mubr.f32.mxu0 0.0
      %3059 = vmatmul.mubr.f32.gmra.mrb[0].mxu0 %v1319
      %v3060 = vpop.f32.mrb[0].mxu0
      %v3061 = vadd.f32 0.0, %v3060
      %v3062 = vpop.f32.mrb[0].mxu0
      %3063 = vmatprep.mubr.f32.mxu0 0.0
      %3064 = vmatmul.mubr.f32.gmra.mrb[0].mxu0 %v1322
      %v3065 = vpop.f32.mrb[0].mxu0
      %v3066 = vadd.f32 0.0, %v3065
      %v3067 = vpop.f32.mrb[0].mxu0
      %3068 = vmatprep.mubr.f32.mxu0 0.0
      %3069 = vmatmul.mubr.f32.gmra.mrb[0].mxu0 %v1325
      %v3070 = vpop.f32.mrb[0].mxu0
      %v3071 = vadd.f32 0.0, %v3070
      %v3072 = vpop.f32.mrb[0].mxu0
      %3073 = vmatprep.mubr.f32.mxu0 0.0
      %3074 = vmatmul.mubr.f32.gmra.mrb[0].mxu0 %v1328
      %v3075 = vpop.f32.mrb[0].mxu0
      %v3076 = vadd.f32 0.0, %v3075
      %v3077 = vpop.f32.mrb[0].mxu0
      %3078 = vmatprep.mubr.f32.mxu0 0.0
      %3079 = vmatmul.mubr.f32.gmra.mrb[0].mxu0 %v1331
      %v3080 = vpop.f32.mrb[0].mxu0
      %v3081 = vadd.f32 0.0, %v3080
      %v3082 = vpop.f32.mrb[0].mxu0
      %3083 = vmatprep.mubr.f32.mxu0 0.0
      %3084 = vmatmul.mubr.f32.gmra.mrb[0].mxu0 %v1334
      %v3085 = vpop.f32.mrb[0].mxu0
      %v3086 = vadd.f32 0.0, %v3085
      %v3087 = vpop.f32.mrb[0].mxu0
      %3088 = vmatprep.mubr.f32.mxu0 0.0
      %3089 = vmatmul.mubr.f32.gmra.mrb[0].mxu0 %v1337
      %v3090 = vpop.f32.mrb[0].mxu0
      %v3091 = vadd.f32 0.0, %v3090
      %v3092 = vpop.f32.mrb[0].mxu0
      %3093 = vmatprep.mubr.f32.mxu0 0.0
      %3094 = vmatmul.mubr.f32.gmra.mrb[0].mxu0 %v1340
      %v3095 = vpop.f32.mrb[0].mxu0
      %v3096 = vadd.f32 0.0, %v3095
      %v3097 = vpop.f32.mrb[0].mxu0
      %3098 = vmatprep.mubr.f32.mxu0 0.0
      %3099 = vmatmul.mubr.f32.gmra.mrb[0].mxu0 %v1343
      %v3100 = vpop.f32.mrb[0].mxu0
      %v3101 = vadd.f32 0.0, %v3100
      %v3102 = vpop.f32.mrb[0].mxu0
      %3103 = vmatprep.mubr.f32.mxu0 0.0
      %3104 = vmatmul.mubr.f32.gmra.mrb[0].mxu0 %v1346
      %v3105 = vpop.f32.mrb[0].mxu0
      %v3106 = vadd.f32 0.0, %v3105
      %v3107 = vpop.f32.mrb[0].mxu0
      %3108 = vmatprep.mubr.f32.mxu0 0.0
      %3109 = vmatmul.mubr.f32.gmra.mrb[0].mxu0 %v1349
      %v3110 = vpop.f32.mrb[0].mxu0
      %v3111 = vadd.f32 0.0, %v3110
      %v3112 = vpop.f32.mrb[0].mxu0
      %3113 = vmatprep.mubr.f32.mxu0 0.0
      %3114 = vmatmul.mubr.f32.gmra.mrb[0].mxu0 %v1352
      %v3115 = vpop.f32.mrb[0].mxu0
      %v3116 = vadd.f32 0.0, %v3115
      %v3117 = vpop.f32.mrb[0].mxu0
      %3118 = vmatprep.mubr.f32.mxu0 0.0
      %3119 = vmatmul.mubr.f32.gmra.mrb[0].mxu0 %v1355
      %v3120 = vpop.f32.mrb[0].mxu0
      %v3121 = vadd.f32 0.0, %v3120
      %v3122 = vpop.f32.mrb[0].mxu0
      %3123 = vmatprep.mubr.f32.mxu0 0.0
      %3124 = vmatmul.mubr.f32.gmra.mrb[0].mxu0 %v1358
      %v3125 = vpop.f32.mrb[0].mxu0
      %v3126 = vadd.f32 0.0, %v3125
      %v3127 = vpop.f32.mrb[0].mxu0
      %3128 = vmatprep.mubr.f32.mxu0 0.0
      %3129 = vmatmul.mubr.f32.gmra.mrb[0].mxu0 %v1361
      %v3130 = vpop.f32.mrb[0].mxu0
      %v3131 = vadd.f32 0.0, %v3130
      %v3132 = vpop.f32.mrb[0].mxu0
      %3133 = vmatprep.mubr.f32.mxu0 0.0
      %3134 = vmatmul.mubr.f32.gmra.mrb[0].mxu0 %v1364
      %v3135 = vpop.f32.mrb[0].mxu0
      %v3136 = vadd.f32 0.0, %v3135
      %v3137 = vpop.f32.mrb[0].mxu0
      %3138 = vmatprep.mubr.f32.mxu0 0.0
      %3139 = vmatmul.mubr.f32.gmra.mrb[0].mxu0 %v1367
      %v3140 = vpop.f32.mrb[0].mxu0
      %v3141 = vadd.f32 0.0, %v3140
      %v3142 = vpop.f32.mrb[0].mxu0
      %3143 = vmatprep.mubr.f32.mxu0 0.0
      %3144 = vmatmul.mubr.f32.gmra.mrb[0].mxu0 %v1370
      %v3145 = vpop.f32.mrb[0].mxu0
      %v3146 = vadd.f32 0.0, %v3145
      %v3147 = vpop.f32.mrb[0].mxu0
      %3148 = vmatprep.mubr.f32.mxu0 0.0
      %3149 = vmatmul.mubr.f32.gmra.mrb[0].mxu0 %v1373
      %v3150 = vpop.f32.mrb[0].mxu0
      %v3151 = vadd.f32 0.0, %v3150
      %v3152 = vpop.f32.mrb[0].mxu0
      %3153 = vmatprep.mubr.f32.mxu0 0.0
      %3154 = vmatmul.mubr.f32.gmra.mrb[0].mxu0 %v1376
      %v3155 = vpop.f32.mrb[0].mxu0
      %v3156 = vadd.f32 0.0, %v3155
      %v3157 = vpop.f32.mrb[0].mxu0
      %3158 = vmatprep.mubr.f32.mxu0 0.0
      %3159 = vmatmul.mubr.f32.gmra.mrb[0].mxu0 %v1379
      %v3160 = vpop.f32.mrb[0].mxu0
      %v3161 = vadd.f32 0.0, %v3160
      %v3162 = vpop.f32.mrb[0].mxu0
      %3163 = vmatprep.mubr.f32.mxu0 0.0
      %3164 = vmatmul.mubr.f32.gmra.mrb[0].mxu0 %v1382
      %v3165 = vpop.f32.mrb[0].mxu0
      %v3166 = vadd.f32 0.0, %v3165
      %v3167 = vpop.f32.mrb[0].mxu0
      %3168 = vmatprep.mubr.f32.mxu0 0.0
      %3169 = vmatmul.mubr.f32.gmra.mrb[0].mxu0 %v1385
      %v3170 = vpop.f32.mrb[0].mxu0
      %v3171 = vadd.f32 0.0, %v3170
      %v3172 = vpop.f32.mrb[0].mxu0
      %3173 = vmatprep.mubr.f32.mxu0 0.0
      %3174 = vmatmul.mubr.f32.gmra.mrb[0].mxu0 %v1388
      %v3175 = vpop.f32.mrb[0].mxu0
      %v3176 = vadd.f32 0.0, %v3175
      %v3177 = vpop.f32.mrb[0].mxu0
      %3178 = vmatprep.mubr.f32.mxu0 0.0
      %3179 = vmatmul.mubr.f32.gmra.mrb[0].mxu0 %v1391
      %v3180 = vpop.f32.mrb[0].mxu0
      %v3181 = vadd.f32 0.0, %v3180
      %v3182 = vpop.f32.mrb[0].mxu0
      %3183 = vmatprep.mubr.f32.mxu0 0.0
      %3184 = vmatmul.mubr.f32.gmra.mrb[0].mxu0 %v1394
      %v3185 = vpop.f32.mrb[0].mxu0
      %v3186 = vadd.f32 0.0, %v3185
      %v3187 = vpop.f32.mrb[0].mxu0
      %3188 = vmatprep.mubr.f32.mxu0 0.0
      %3189 = vmatmul.mubr.f32.gmra.mrb[0].mxu0 %v1397
      %v3190 = vpop.f32.mrb[0].mxu0
      %v3191 = vadd.f32 0.0, %v3190
      %v3192 = vpop.f32.mrb[0].mxu0
      %3193 = vmatprep.mubr.f32.mxu0 0.0
      %3194 = vmatmul.mubr.f32.gmra.mrb[0].mxu0 %v1400
      %v3195 = vpop.f32.mrb[0].mxu0
      %v3196 = vadd.f32 0.0, %v3195
      %v3197 = vpop.f32.mrb[0].mxu0
      %3198 = vmatprep.mubr.f32.mxu0 0.0
      %3199 = vmatmul.mubr.f32.gmra.mrb[0].mxu0 %v1403
      %v3200 = vpop.f32.mrb[0].mxu0
      %v3201 = vadd.f32 0.0, %v3200
      %v3202 = vpop.f32.mrb[0].mxu0
      %3203 = vmatprep.mubr.f32.mxu0 0.0
      %3204 = vmatmul.mubr.f32.gmra.mrb[0].mxu0 %v1406
      %v3205 = vpop.f32.mrb[0].mxu0
      %v3206 = vadd.f32 0.0, %v3205
      %v3207 = vpop.f32.mrb[0].mxu0
      %3208 = vmatprep.mubr.f32.mxu0 0.0
      %3209 = vmatmul.mubr.f32.gmra.mrb[0].mxu0 %v1409
      %v3210 = vpop.f32.mrb[0].mxu0
      %v3211 = vadd.f32 0.0, %v3210
      %v3212 = vpop.f32.mrb[0].mxu0
      %3213 = vmatprep.mubr.f32.mxu0 0.0
      %3214 = vmatmul.mubr.f32.gmra.mrb[0].mxu0 %v1412
      %v3215 = vpop.f32.mrb[0].mxu0
      %v3216 = vadd.f32 0.0, %v3215
      %v3217 = vpop.f32.mrb[0].mxu0
      %3218 = vmatprep.mubr.f32.mxu0 0.0
      %3219 = vmatmul.mubr.f32.gmra.mrb[0].mxu0 %v1415
      %v3220 = vpop.f32.mrb[0].mxu0
      %v3221 = vadd.f32 0.0, %v3220
      %v3222 = vpop.f32.mrb[0].mxu0
      %3223 = vmatprep.mubr.f32.mxu0 0.0
      %3224 = vmatmul.mubr.f32.gmra.mrb[0].mxu0 %v1418
      %v3225 = vpop.f32.mrb[0].mxu0
      %v3226 = vadd.f32 0.0, %v3225
      %v3227 = vpop.f32.mrb[0].mxu0
      %3228 = vmatprep.mubr.f32.mxu0 0.0
      %3229 = vmatmul.mubr.f32.gmra.mrb[0].mxu0 %v1421
      %v3230 = vpop.f32.mrb[0].mxu0
      %v3231 = vadd.f32 0.0, %v3230
      %v3232 = vpop.f32.mrb[0].mxu0
      %3233 = vmatprep.mubr.f32.mxu0 0.0
      %3234 = vmatmul.mubr.f32.gmra.mrb[0].mxu0 %v1424
      %v3235 = vpop.f32.mrb[0].mxu0
      %v3236 = vadd.f32 0.0, %v3235
      %v3237 = vpop.f32.mrb[0].mxu0
      %3238 = vmatprep.mubr.f32.mxu0 0.0
      %3239 = vmatmul.mubr.f32.gmra.mrb[0].mxu0 %v1427
      %v3240 = vpop.f32.mrb[0].mxu0
      %v3241 = vadd.f32 0.0, %v3240
      %v3242 = vpop.f32.mrb[0].mxu0
      %3243 = vmatprep.mubr.f32.mxu0 0.0
      %3244 = vmatmul.mubr.f32.gmra.mrb[0].mxu0 %v1430
      %v3245 = vpop.f32.mrb[0].mxu0
      %v3246 = vadd.f32 0.0, %v3245
      %v3247 = vpop.f32.mrb[0].mxu0
      %3248 = vmatprep.mubr.f32.mxu0 0.0
      %3249 = vmatmul.mubr.f32.gmra.mrb[0].mxu0 %v1433
      %v3250 = vpop.f32.mrb[0].mxu0
      %v3251 = vadd.f32 0.0, %v3250
      %v3252 = vpop.f32.mrb[0].mxu0
      %3253 = vmatprep.mubr.f32.mxu0 0.0
      %3254 = vmatmul.mubr.f32.gmra.mrb[0].mxu0 %v1436
      %v3255 = vpop.f32.mrb[0].mxu0
      %v3256 = vadd.f32 0.0, %v3255
      %v3257 = vpop.f32.mrb[0].mxu0
      %3258 = vmatprep.mubr.f32.mxu0 0.0
      %3259 = vmatmul.mubr.f32.gmra.mrb[0].mxu0 %v1439
      %v3260 = vpop.f32.mrb[0].mxu0
      %v3261 = vadd.f32 0.0, %v3260
      %v3262 = vpop.f32.mrb[0].mxu0
      %3263 = vmatprep.mubr.f32.mxu0 0.0
      %3264 = vmatmul.mubr.f32.gmra.mrb[0].mxu0 %v1442
      %v3265 = vpop.f32.mrb[0].mxu0
      %v3266 = vadd.f32 0.0, %v3265
      %v3267 = vpop.f32.mrb[0].mxu0
      %3268 = vmatprep.mubr.f32.mxu0 0.0
      %3269 = vmatmul.mubr.f32.gmra.mrb[0].mxu0 %v1445
      %v3270 = vpop.f32.mrb[0].mxu0
      %v3271 = vadd.f32 0.0, %v3270
      %v3272 = vpop.f32.mrb[0].mxu0
      %3273 = vmatprep.mubr.f32.mxu0 0.0
      %3274 = vmatmul.mubr.f32.gmra.mrb[0].mxu0 %v1448
      %v3275 = vpop.f32.mrb[0].mxu0
      %v3276 = vadd.f32 0.0, %v3275
      %v3277 = vpop.f32.mrb[0].mxu0
      %3278 = vmatprep.mubr.f32.mxu0 0.0
      %3279 = vmatmul.mubr.f32.gmra.mrb[0].mxu0 %v1451
      %v3280 = vpop.f32.mrb[0].mxu0
      %v3281 = vadd.f32 0.0, %v3280
      %v3282 = vpop.f32.mrb[0].mxu0
      %3283 = vmatprep.mubr.f32.mxu0 0.0
      %3284 = vmatmul.mubr.f32.gmra.mrb[0].mxu0 %v1454
      %v3285 = vpop.f32.mrb[0].mxu0
      %v3286 = vadd.f32 0.0, %v3285
      %v3287 = vpop.f32.mrb[0].mxu0
      %3288 = vmatprep.mubr.f32.mxu0 0.0
      %3289 = vmatmul.mubr.f32.gmra.mrb[0].mxu0 %v1457
      %v3290 = vpop.f32.mrb[0].mxu0
      %v3291 = vadd.f32 0.0, %v3290
      %v3292 = vpop.f32.mrb[0].mxu0
      %3293 = vmatprep.mubr.f32.mxu0 0.0
      %3294 = vmatmul.mubr.f32.gmra.mrb[0].mxu0 %v1460
      %v3295 = vpop.f32.mrb[0].mxu0
      %v3296 = vadd.f32 0.0, %v3295
      %v3297 = vpop.f32.mrb[0].mxu0
      %3298 = vmatprep.mubr.f32.mxu0 0.0
      %3299 = vmatmul.mubr.f32.gmra.mrb[0].mxu0 %v1463
      %v3300 = vpop.f32.mrb[0].mxu0
      %v3301 = vadd.f32 0.0, %v3300
      %v3302 = vpop.f32.mrb[0].mxu0
      %3303 = vmatprep.mubr.f32.mxu0 0.0
      %3304 = vmatmul.mubr.f32.gmra.mrb[0].mxu0 %v1466
      %v3305 = vpop.f32.mrb[0].mxu0
      %v3306 = vadd.f32 0.0, %v3305
      %v3307 = vpop.f32.mrb[0].mxu0
      %3308 = vmatprep.mubr.f32.mxu0 0.0
      %3309 = vmatmul.mubr.f32.gmra.mrb[0].mxu0 %v1469
      %v3310 = vpop.f32.mrb[0].mxu0
      %v3311 = vadd.f32 0.0, %v3310
      %v3312 = vpop.f32.mrb[0].mxu0
      %3313 = vmatprep.mubr.f32.mxu0 0.0
      %3314 = vmatmul.mubr.f32.gmra.mrb[0].mxu0 %v1472
      %v3315 = vpop.f32.mrb[0].mxu0
      %v3316 = vadd.f32 0.0, %v3315
      %v3317 = vpop.f32.mrb[0].mxu0
      %3318 = vmatprep.mubr.f32.mxu0 0.0
      %3319 = vmatmul.mubr.f32.gmra.mrb[0].mxu0 %v1475
      %v3320 = vpop.f32.mrb[0].mxu0
      %v3321 = vadd.f32 0.0, %v3320
      %v3322 = vpop.f32.mrb[0].mxu0
      %3323 = vmatprep.mubr.f32.mxu0 0.0
      %3324 = vmatmul.mubr.f32.gmra.mrb[0].mxu0 %v1478
      %v3325 = vpop.f32.mrb[0].mxu0
      %v3326 = vadd.f32 0.0, %v3325
      %v3327 = vpop.f32.mrb[0].mxu0
      %3328 = vmatprep.mubr.f32.mxu0 0.0
      %3329 = vmatmul.mubr.f32.gmra.mrb[0].mxu0 %v1481
      %v3330 = vpop.f32.mrb[0].mxu0
      %v3331 = vadd.f32 0.0, %v3330
      %v3332 = vpop.f32.mrb[0].mxu0
      %3333 = vmatprep.mubr.f32.mxu0 0.0
      %3334 = vmatmul.mubr.f32.gmra.mrb[0].mxu0 %v1484
      %v3335 = vpop.f32.mrb[0].mxu0
      %v3336 = vadd.f32 0.0, %v3335
      %v3337 = vpop.f32.mrb[0].mxu0
      %3338 = vmatprep.mubr.f32.mxu0 0.0
      %3339 = vmatmul.mubr.f32.gmra.mrb[0].mxu0 %v1487
      %v3340 = vpop.f32.mrb[0].mxu0
      %v3341 = vadd.f32 0.0, %v3340
      %v3342 = vpop.f32.mrb[0].mxu0
      %3343 = vmatprep.mubr.f32.mxu0 0.0
      %3344 = vmatmul.mubr.f32.gmra.mrb[0].mxu0 %v1490
      %v3345 = vpop.f32.mrb[0].mxu0
      %v3346 = vadd.f32 0.0, %v3345
      %v3347 = vpop.f32.mrb[0].mxu0
      %3348 = vmatprep.mubr.f32.mxu0 0.0
      %3349 = vmatmul.mubr.f32.gmra.mrb[0].mxu0 %v1493
      %v3350 = vpop.f32.mrb[0].mxu0
      %v3351 = vadd.f32 0.0, %v3350
      %v3352 = vpop.f32.mrb[0].mxu0
      %3353 = vmatprep.mubr.f32.mxu0 0.0
      %3354 = vmatmul.mubr.f32.gmra.mrb[0].mxu0 %v1496
      %v3355 = vpop.f32.mrb[0].mxu0
      %v3356 = vadd.f32 0.0, %v3355
      %v3357 = vpop.f32.mrb[0].mxu0
      %3358 = vmatprep.mubr.f32.mxu0 0.0
      %3359 = vmatmul.mubr.f32.gmra.mrb[0].mxu0 %v1499
      %v3360 = vpop.f32.mrb[0].mxu0
      %v3361 = vadd.f32 0.0, %v3360
      %v3362 = vpop.f32.mrb[0].mxu0
      %3363 = vmatprep.mubr.f32.mxu0 0.0
      %3364 = vmatmul.mubr.f32.gmra.mrb[0].mxu0 %v1502
      %v3365 = vpop.f32.mrb[0].mxu0
      %v3366 = vadd.f32 0.0, %v3365
      %v3367 = vpop.f32.mrb[0].mxu0
      %3368 = vmatprep.mubr.f32.mxu0 0.0
      %3369 = vmatmul.mubr.f32.gmra.mrb[0].mxu0 %v1505
      %v3370 = vpop.f32.mrb[0].mxu0
      %v3371 = vadd.f32 0.0, %v3370
      %v3372 = vpop.f32.mrb[0].mxu0
      %3373 = vmatprep.mubr.f32.mxu0 0.0
      %3374 = vmatmul.mubr.f32.gmra.mrb[0].mxu0 %v1508
      %v3375 = vpop.f32.mrb[0].mxu0
      %v3376 = vadd.f32 0.0, %v3375
      %v3377 = vpop.f32.mrb[0].mxu0
      %3378 = vmatprep.mubr.f32.mxu0 0.0
      %3379 = vmatmul.mubr.f32.gmra.mrb[0].mxu0 %v1511
      %v3380 = vpop.f32.mrb[0].mxu0
      %v3381 = vadd.f32 0.0, %v3380
      %v3382 = vpop.f32.mrb[0].mxu0
      %3383 = vmatprep.mubr.f32.mxu0 0.0
      %3384 = vmatmul.mubr.f32.gmra.mrb[0].mxu0 %v1514
      %v3385 = vpop.f32.mrb[0].mxu0
      %v3386 = vadd.f32 0.0, %v3385
      %v3387 = vpop.f32.mrb[0].mxu0
      %3388 = vmatprep.mubr.f32.mxu0 0.0
      %3389 = vmatmul.mubr.f32.gmra.mrb[0].mxu0 %v1517
      %v3390 = vpop.f32.mrb[0].mxu0
      %v3391 = vadd.f32 0.0, %v3390
      %v3392 = vpop.f32.mrb[0].mxu0
      %3393 = vmatprep.mubr.f32.mxu0 0.0
      %3394 = vmatmul.mubr.f32.gmra.mrb[0].mxu0 %v1520
      %v3395 = vpop.f32.mrb[0].mxu0
      %v3396 = vadd.f32 0.0, %v3395
      %v3397 = vpop.f32.mrb[0].mxu0
      %3398 = vmatprep.mubr.f32.mxu0 0.0
      %3399 = vmatmul.mubr.f32.gmra.mrb[0].mxu0 %v1523
      %v3400 = vpop.f32.mrb[0].mxu0
      %v3401 = vadd.f32 0.0, %v3400
      %v3402 = vpop.f32.mrb[0].mxu0
      %3403 = vmatprep.mubr.f32.mxu0 0.0
      %3404 = vmatmul.mubr.f32.gmra.mrb[0].mxu0 %v1526
      %v3405 = vpop.f32.mrb[0].mxu0
      %v3406 = vadd.f32 0.0, %v3405
      %v3407 = vpop.f32.mrb[0].mxu0
      %3408 = vmatprep.mubr.f32.mxu0 0.0
      %3409 = vmatmul.mubr.f32.gmra.mrb[0].mxu0 %v1529
      %v3410 = vpop.f32.mrb[0].mxu0
      %v3411 = vadd.f32 0.0, %v3410
      %v3412 = vpop.f32.mrb[0].mxu0
      %3413 = vmatprep.mubr.f32.mxu0 0.0
      %3414 = vmatmul.mubr.f32.gmra.mrb[0].mxu0 %v1532
      %v3415 = vpop.f32.mrb[0].mxu0
      %v3416 = vadd.f32 0.0, %v3415
      %v3417 = vpop.f32.mrb[0].mxu0
      %3418 = vmatprep.mubr.f32.mxu0 0.0
      %3419 = vmatmul.mubr.f32.gmra.mrb[0].mxu0 %v1535
      %v3420 = vpop.f32.mrb[0].mxu0
      %v3421 = vadd.f32 0.0, %v3420
      %v3422 = vpop.f32.mrb[0].mxu0
      %3423 = vmatprep.mubr.f32.mxu0 0.0
      %3424 = vmatmul.mubr.f32.gmra.mrb[0].mxu0 %v1538
      %v3425 = vpop.f32.mrb[0].mxu0
      %v3426 = vadd.f32 0.0, %v3425
      %v3427 = vpop.f32.mrb[0].mxu0
      %3428 = vmatprep.mubr.f32.mxu0 0.0
      %3429 = vmatmul.mubr.f32.gmra.mrb[0].mxu0 %v1541
      %v3430 = vpop.f32.mrb[0].mxu0
      %v3431 = vadd.f32 0.0, %v3430
      %v3432 = vpop.f32.mrb[0].mxu0
      %3433 = vmatprep.mubr.f32.mxu0 0.0
      %3434 = vmatmul.mubr.f32.gmra.mrb[0].mxu0 %v1544
      %v3435 = vpop.f32.mrb[0].mxu0
      %v3436 = vadd.f32 0.0, %v3435
      %v3437 = vpop.f32.mrb[0].mxu0
      %3438 = vmatprep.mubr.f32.mxu0 0.0
      %3439 = vmatmul.mubr.f32.gmra.mrb[0].mxu0 %v1547
      %v3440 = vpop.f32.mrb[0].mxu0
      %v3441 = vadd.f32 0.0, %v3440
      %v3442 = vpop.f32.mrb[0].mxu0
      %3443 = vmatprep.mubr.f32.mxu0 0.0
      %3444 = vmatmul.mubr.f32.gmra.mrb[0].mxu0 %v1550
      %v3445 = vpop.f32.mrb[0].mxu0
      %v3446 = vadd.f32 0.0, %v3445
      %v3447 = vpop.f32.mrb[0].mxu0
      %3448 = vmatprep.mubr.f32.mxu0 0.0
      %3449 = vmatmul.mubr.f32.gmra.mrb[0].mxu0 %v1553
      %v3450 = vpop.f32.mrb[0].mxu0
      %v3451 = vadd.f32 0.0, %v3450
      %v3452 = vpop.f32.mrb[0].mxu0
      %3453 = vmatprep.mubr.f32.mxu0 0.0
      %3454 = vmatmul.mubr.f32.gmra.mrb[0].mxu0 %v1556
      %v3455 = vpop.f32.mrb[0].mxu0
      %v3456 = vadd.f32 0.0, %v3455
      %v3457 = vpop.f32.mrb[0].mxu0
      %3458 = vmatprep.mubr.f32.mxu0 0.0
      %3459 = vmatmul.mubr.f32.gmra.mrb[0].mxu0 %v1559
      %v3460 = vpop.f32.mrb[0].mxu0
      %v3461 = vadd.f32 0.0, %v3460
      %v3462 = vpop.f32.mrb[0].mxu0
      %3463 = vmatprep.mubr.f32.mxu0 0.0
      %3464 = vmatmul.mubr.f32.gmra.mrb[0].mxu0 %v1562
      %v3465 = vpop.f32.mrb[0].mxu0
      %v3466 = vadd.f32 0.0, %v3465
      %v3467 = vpop.f32.mrb[0].mxu0
      %3468 = vmatprep.mubr.f32.mxu0 0.0
      %3469 = vmatmul.mubr.f32.gmra.mrb[0].mxu0 %v1565
      %v3470 = vpop.f32.mrb[0].mxu0
      %v3471 = vadd.f32 0.0, %v3470
      %v3472 = vpop.f32.mrb[0].mxu0
      %3473 = vmatprep.mubr.f32.mxu0 0.0
      %3474 = vmatmul.mubr.f32.gmra.mrb[0].mxu0 %v1568
      %v3475 = vpop.f32.mrb[0].mxu0
      %v3476 = vadd.f32 0.0, %v3475
      %v3477 = vpop.f32.mrb[0].mxu0
      %3478 = vmatprep.mubr.f32.mxu0 0.0
      %3479 = vmatmul.mubr.f32.gmra.mrb[0].mxu0 %v1571
      %v3480 = vpop.f32.mrb[0].mxu0
      %v3481 = vadd.f32 0.0, %v3480
      %v3482 = vpop.f32.mrb[0].mxu0
      %3483 = vmatprep.mubr.f32.mxu0 0.0
      %3484 = vmatmul.mubr.f32.gmra.mrb[0].mxu0 %v1574
      %v3485 = vpop.f32.mrb[0].mxu0
      %v3486 = vadd.f32 0.0, %v3485
      %v3487 = vpop.f32.mrb[0].mxu0
      %3488 = vmatprep.mubr.f32.mxu0 0.0
      %3489 = vmatmul.mubr.f32.gmra.mrb[0].mxu0 %v1577
      %v3490 = vpop.f32.mrb[0].mxu0
      %v3491 = vadd.f32 0.0, %v3490
      %v3492 = vpop.f32.mrb[0].mxu0
      %3493 = vmatprep.mubr.f32.mxu0 0.0
      %3494 = vmatmul.mubr.f32.gmra.mrb[0].mxu0 %v1580
      %v3495 = vpop.f32.mrb[0].mxu0
      %v3496 = vadd.f32 0.0, %v3495
      %v3497 = vpop.f32.mrb[0].mxu0
      %3498 = vmatprep.mubr.f32.mxu0 0.0
      %3499 = vmatmul.mubr.f32.gmra.mrb[0].mxu0 %v1583
      %v3500 = vpop.f32.mrb[0].mxu0
      %v3501 = vadd.f32 0.0, %v3500
      %v3502 = vpop.f32.mrb[0].mxu0
      %3503 = vmatprep.mubr.f32.mxu0 0.0
      %3504 = vmatmul.mubr.f32.gmra.mrb[0].mxu0 %v1586
      %v3505 = vpop.f32.mrb[0].mxu0
      %v3506 = vadd.f32 0.0, %v3505
      %v3507 = vpop.f32.mrb[0].mxu0
      %3508 = vmatprep.mubr.f32.mxu0 0.0
      %3509 = vmatmul.mubr.f32.gmra.mrb[0].mxu0 %v1589
      %v3510 = vpop.f32.mrb[0].mxu0
      %v3511 = vadd.f32 0.0, %v3510
      %v3512 = vpop.f32.mrb[0].mxu0
      %3513 = vmatprep.mubr.f32.mxu0 0.0
      %3514 = vmatmul.mubr.f32.gmra.mrb[0].mxu0 %v1592
      %v3515 = vpop.f32.mrb[0].mxu0
      %v3516 = vadd.f32 0.0, %v3515
      %v3517 = vpop.f32.mrb[0].mxu0
      %3518 = vmatprep.mubr.f32.mxu0 0.0
      %3519 = vmatmul.mubr.f32.gmra.mrb[0].mxu0 %v1595
      %v3520 = vpop.f32.mrb[0].mxu0
      %v3521 = vadd.f32 0.0, %v3520
      %v3522 = vpop.f32.mrb[0].mxu0
      %3523 = vmatprep.mubr.f32.mxu0 0.0
      %3524 = vmatmul.mubr.f32.gmra.mrb[0].mxu0 %v1598
      %v3525 = vpop.f32.mrb[0].mxu0
      %v3526 = vadd.f32 0.0, %v3525
      %v3527 = vpop.f32.mrb[0].mxu0
      %3528 = vmatprep.mubr.f32.mxu0 0.0
      %3529 = vmatmul.mubr.f32.gmra.mrb[0].mxu0 %v1601
      %v3530 = vpop.f32.mrb[0].mxu0
      %v3531 = vadd.f32 0.0, %v3530
      %v3532 = vpop.f32.mrb[0].mxu0
      %3533 = vmatprep.mubr.f32.mxu0 0.0
      %3534 = vmatmul.mubr.f32.gmra.mrb[0].mxu0 %v1604
      %v3535 = vpop.f32.mrb[0].mxu0
      %v3536 = vadd.f32 0.0, %v3535
      %v3537 = vpop.f32.mrb[0].mxu0
      %3538 = vmatprep.mubr.f32.mxu0 0.0
      %3539 = vmatmul.mubr.f32.gmra.mrb[0].mxu0 %v1607
      %v3540 = vpop.f32.mrb[0].mxu0
      %v3541 = vadd.f32 0.0, %v3540
      %v3542 = vpop.f32.mrb[0].mxu0
      %3543 = vmatprep.mubr.f32.mxu0 0.0
      %3544 = vmatmul.mubr.f32.gmra.mrb[0].mxu0 %v1610
      %v3545 = vpop.f32.mrb[0].mxu0
      %v3546 = vadd.f32 0.0, %v3545
      %v3547 = vpop.f32.mrb[0].mxu0
      %3548 = vmatprep.mubr.f32.mxu0 0.0
      %3549 = vmatmul.mubr.f32.gmra.mrb[0].mxu0 %v1613
      %v3550 = vpop.f32.mrb[0].mxu0
      %v3551 = vadd.f32 0.0, %v3550
      %v3552 = vpop.f32.mrb[0].mxu0
      %3553 = vmatprep.mubr.f32.mxu0 0.0
      %3554 = vmatmul.mubr.f32.gmra.mrb[0].mxu0 %v1616
      %v3555 = vpop.f32.mrb[0].mxu0
      %v3556 = vadd.f32 0.0, %v3555
      %v3557 = vpop.f32.mrb[0].mxu0
      %3558 = vmatprep.mubr.f32.mxu0 0.0
      %3559 = vmatmul.mubr.f32.gmra.mrb[0].mxu0 %v1619
      %v3560 = vpop.f32.mrb[0].mxu0
      %v3561 = vadd.f32 0.0, %v3560
      %v3562 = vpop.f32.mrb[0].mxu0
      %3563 = vmatprep.mubr.f32.mxu0 0.0
      %3564 = vmatmul.mubr.f32.gmra.mrb[0].mxu0 %v1622
      %v3565 = vpop.f32.mrb[0].mxu0
      %v3566 = vadd.f32 0.0, %v3565
      %v3567 = vpop.f32.mrb[0].mxu0
      %3568 = vmatprep.mubr.f32.mxu0 0.0
      %3569 = vmatmul.mubr.f32.gmra.mrb[0].mxu0 %v1625
      %v3570 = vpop.f32.mrb[0].mxu0
      %v3571 = vadd.f32 0.0, %v3570
      %v3572 = vpop.f32.mrb[0].mxu0
      %3573 = vmatprep.mubr.f32.mxu0 0.0
      %3574 = vmatmul.mubr.f32.gmra.mrb[0].mxu0 %v1628
      %v3575 = vpop.f32.mrb[0].mxu0
      %v3576 = vadd.f32 0.0, %v3575
      %v3577 = vpop.f32.mrb[0].mxu0
      %3578 = vmatprep.mubr.f32.mxu0 0.0
      %3579 = vmatmul.mubr.f32.gmra.mrb[0].mxu0 %v1631
      %v3580 = vpop.f32.mrb[0].mxu0
      %v3581 = vadd.f32 0.0, %v3580
      %v3582 = vpop.f32.mrb[0].mxu0
      %3583 = vmatprep.mubr.f32.mxu0 0.0
      %3584 = vmatmul.mubr.f32.gmra.mrb[0].mxu0 %v1634
      %v3585 = vpop.f32.mrb[0].mxu0
      %v3586 = vadd.f32 0.0, %v3585
      %v3587 = vpop.f32.mrb[0].mxu0
      %3588 = vmatprep.mubr.f32.mxu0 0.0
      %3589 = vmatmul.mubr.f32.gmra.mrb[0].mxu0 %v1637
      %v3590 = vpop.f32.mrb[0].mxu0
      %v3591 = vadd.f32 0.0, %v3590
      %v3592 = vpop.f32.mrb[0].mxu0
      %3593 = vmatprep.mubr.f32.mxu0 0.0
      %3594 = vmatmul.mubr.f32.gmra.mrb[0].mxu0 %v1640
      %v3595 = vpop.f32.mrb[0].mxu0
      %v3596 = vadd.f32 0.0, %v3595
      %v3597 = vpop.f32.mrb[0].mxu0
      %3598 = vmatprep.mubr.f32.mxu0 0.0
      %3599 = vmatmul.mubr.f32.gmra.mrb[0].mxu0 %v1643
      %v3600 = vpop.f32.mrb[0].mxu0
      %v3601 = vadd.f32 0.0, %v3600
      %v3602 = vpop.f32.mrb[0].mxu0
      %3603 = vmatprep.mubr.f32.mxu0 0.0
      %3604 = vmatmul.mubr.f32.gmra.mrb[0].mxu0 %v1646
      %v3605 = vpop.f32.mrb[0].mxu0
      %v3606 = vadd.f32 0.0, %v3605
      %v3607 = vpop.f32.mrb[0].mxu0
      %3608 = vmatprep.mubr.f32.mxu0 0.0
      %3609 = vmatmul.mubr.f32.gmra.mrb[0].mxu0 %v1649
      %v3610 = vpop.f32.mrb[0].mxu0
      %v3611 = vadd.f32 0.0, %v3610
      %v3612 = vpop.f32.mrb[0].mxu0
      %3613 = vmatprep.mubr.f32.mxu0 0.0
      %3614 = vmatmul.mubr.f32.gmra.mrb[0].mxu0 %v1652
      %v3615 = vpop.f32.mrb[0].mxu0
      %v3616 = vadd.f32 0.0, %v3615
      %v3617 = vpop.f32.mrb[0].mxu0
      %3618 = vmatprep.mubr.f32.mxu0 0.0
      %3619 = vmatmul.mubr.f32.gmra.mrb[0].mxu0 %v1655
      %v3620 = vpop.f32.mrb[0].mxu0
      %v3621 = vadd.f32 0.0, %v3620
      %v3622 = vpop.f32.mrb[0].mxu0
      %3623 = vmatprep.mubr.f32.mxu0 0.0
      %3624 = vmatmul.mubr.f32.gmra.mrb[0].mxu0 %v1658
      %v3625 = vpop.f32.mrb[0].mxu0
      %v3626 = vadd.f32 0.0, %v3625
      %v3627 = vpop.f32.mrb[0].mxu0
      %3628 = vmatprep.mubr.f32.mxu0 0.0
      %3629 = vmatmul.mubr.f32.gmra.mrb[0].mxu0 %v1661
      %v3630 = vpop.f32.mrb[0].mxu0
      %v3631 = vadd.f32 0.0, %v3630
      %v3632 = vpop.f32.mrb[0].mxu0
      %3633 = vmatprep.mubr.f32.mxu0 0.0
      %3634 = vmatmul.mubr.f32.gmra.mrb[0].mxu0 %v1664
      %v3635 = vpop.f32.mrb[0].mxu0
      %v3636 = vadd.f32 0.0, %v3635
      %v3637 = vpop.f32.mrb[0].mxu0
      %3638 = vmatprep.mubr.f32.mxu0 0.0
      %3639 = vmatmul.mubr.f32.gmra.mrb[0].mxu0 %v1667
      %v3640 = vpop.f32.mrb[0].mxu0
      %v3641 = vadd.f32 0.0, %v3640
      %v3642 = vpop.f32.mrb[0].mxu0
      %3643 = vmatprep.mubr.f32.mxu0 0.0
      %3644 = vmatmul.mubr.f32.gmra.mrb[0].mxu0 %v1670
      %v3645 = vpop.f32.mrb[0].mxu0
      %v3646 = vadd.f32 0.0, %v3645
      %v3647 = vpop.f32.mrb[0].mxu0
      %3648 = vmatprep.mubr.f32.mxu0 0.0
      %3649 = vmatmul.mubr.f32.gmra.mrb[0].mxu0 %v1673
      %v3650 = vpop.f32.mrb[0].mxu0
      %v3651 = vadd.f32 0.0, %v3650
      %v3652 = vpop.f32.mrb[0].mxu0
      %3653 = vmatprep.mubr.f32.mxu0 0.0
      %3654 = vmatmul.mubr.f32.gmra.mrb[0].mxu0 %v1676
      %v3655 = vpop.f32.mrb[0].mxu0
      %v3656 = vadd.f32 0.0, %v3655
      %v3657 = vpop.f32.mrb[0].mxu0
      %3658 = vmatprep.mubr.f32.mxu0 0.0
      %3659 = vmatmul.mubr.f32.gmra.mrb[0].mxu0 %v1679
      %v3660 = vpop.f32.mrb[0].mxu0
      %v3661 = vadd.f32 0.0, %v3660
      %v3662 = vpop.f32.mrb[0].mxu0
      %3663 = vmatprep.mubr.f32.mxu0 0.0
      %3664 = vmatmul.mubr.f32.gmra.mrb[0].mxu0 %v1682
      %v3665 = vpop.f32.mrb[0].mxu0
      %v3666 = vadd.f32 0.0, %v3665
      %v3667 = vpop.f32.mrb[0].mxu0
      %3668 = vmatprep.mubr.f32.mxu0 0.0
      %3669 = vmatmul.mubr.f32.gmra.mrb[0].mxu0 %v1685
      %v3670 = vpop.f32.mrb[0].mxu0
      %v3671 = vadd.f32 0.0, %v3670
      %v3672 = vpop.f32.mrb[0].mxu0
      %3673 = vmatprep.mubr.f32.mxu0 0.0
      %3674 = vmatmul.mubr.f32.gmra.mrb[0].mxu0 %v1688
      %v3675 = vpop.f32.mrb[0].mxu0
      %v3676 = vadd.f32 0.0, %v3675
      %v3677 = vpop.f32.mrb[0].mxu0
      %3678 = vmatprep.mubr.f32.mxu0 0.0
      %3679 = vmatmul.mubr.f32.gmra.mrb[0].mxu0 %v1691
      %v3680 = vpop.f32.mrb[0].mxu0
      %v3681 = vadd.f32 0.0, %v3680
      %v3682 = vpop.f32.mrb[0].mxu0
      %3683 = vmatprep.mubr.f32.mxu0 0.0
      %3684 = vmatmul.mubr.f32.gmra.mrb[0].mxu0 %v1694
      %v3685 = vpop.f32.mrb[0].mxu0
      %v3686 = vadd.f32 0.0, %v3685
      %v3687 = vpop.f32.mrb[0].mxu0
      %3688 = vmatprep.mubr.f32.mxu0 0.0
      %3689 = vmatmul.mubr.f32.gmra.mrb[0].mxu0 %v1697
      %v3690 = vpop.f32.mrb[0].mxu0
      %v3691 = vadd.f32 0.0, %v3690
      %v3692 = vpop.f32.mrb[0].mxu0
      %3693 = vmatprep.mubr.f32.mxu0 0.0
      %3694 = vmatmul.mubr.f32.gmra.mrb[0].mxu0 %v1700
      %v3695 = vpop.f32.mrb[0].mxu0
      %v3696 = vadd.f32 0.0, %v3695
      %v3697 = vpop.f32.mrb[0].mxu0
      %3698 = vmatprep.mubr.f32.mxu0 0.0
      %3699 = vmatmul.mubr.f32.gmra.mrb[0].mxu0 %v1703
      %v3700 = vpop.f32.mrb[0].mxu0
      %v3701 = vadd.f32 0.0, %v3700
      %v3702 = vpop.f32.mrb[0].mxu0
      %3703 = vmatprep.mubr.f32.mxu0 0.0
      %3704 = vmatmul.mubr.f32.gmra.mrb[0].mxu0 %v1706
      %v3705 = vpop.f32.mrb[0].mxu0
      %v3706 = vadd.f32 0.0, %v3705
      %v3707 = vpop.f32.mrb[0].mxu0
      %3708 = vmatprep.mubr.f32.mxu0 0.0
      %3709 = vmatmul.mubr.f32.gmra.mrb[0].mxu0 %v1709
      %v3710 = vpop.f32.mrb[0].mxu0
      %v3711 = vadd.f32 0.0, %v3710
      %v3712 = vpop.f32.mrb[0].mxu0
      %3713 = vmatprep.mubr.f32.mxu0 0.0
      %3714 = vmatmul.mubr.f32.gmra.mrb[0].mxu0 %v1712
      %v3715 = vpop.f32.mrb[0].mxu0
      %v3716 = vadd.f32 0.0, %v3715
      %v3717 = vpop.f32.mrb[0].mxu0
      %3718 = vmatprep.mubr.f32.mxu0 0.0
      %3719 = vmatmul.mubr.f32.gmra.mrb[0].mxu0 %v1715
      %v3720 = vpop.f32.mrb[0].mxu0
      %v3721 = vadd.f32 0.0, %v3720
      %v3722 = vpop.f32.mrb[0].mxu0
      %3723 = vmatprep.mubr.f32.mxu0 0.0
      %3724 = vmatmul.mubr.f32.gmra.mrb[0].mxu0 %v1718
      %v3725 = vpop.f32.mrb[0].mxu0
      %v3726 = vadd.f32 0.0, %v3725
      %v3727 = vpop.f32.mrb[0].mxu0
      %3728 = vmatprep.mubr.f32.mxu0 0.0
      %3729 = vmatmul.mubr.f32.gmra.mrb[0].mxu0 %v1721
      %v3730 = vpop.f32.mrb[0].mxu0
      %v3731 = vadd.f32 0.0, %v3730
      %v3732 = vpop.f32.mrb[0].mxu0
      %3733 = vmatprep.mubr.f32.mxu0 0.0
      %3734 = vmatmul.mubr.f32.gmra.mrb[0].mxu0 %v1724
      %v3735 = vpop.f32.mrb[0].mxu0
      %v3736 = vadd.f32 0.0, %v3735
      %v3737 = vpop.f32.mrb[0].mxu0
      %3738 = vmatprep.mubr.f32.mxu0 0.0
      %3739 = vmatmul.mubr.f32.gmra.mrb[0].mxu0 %v1727
      %v3740 = vpop.f32.mrb[0].mxu0
      %v3741 = vadd.f32 0.0, %v3740
      %v3742 = vpop.f32.mrb[0].mxu0
      %3743 = vmatprep.mubr.f32.mxu0 0.0
      %3744 = vmatmul.mubr.f32.gmra.mrb[0].mxu0 %v1730
      %v3745 = vpop.f32.mrb[0].mxu0
      %v3746 = vadd.f32 0.0, %v3745
      %v3747 = vpop.f32.mrb[0].mxu0
      %3748 = vmatprep.mubr.f32.mxu0 0.0
      %3749 = vmatmul.mubr.f32.gmra.mrb[0].mxu0 %v1733
      %v3750 = vpop.f32.mrb[0].mxu0
      %v3751 = vadd.f32 0.0, %v3750
      %v3752 = vpop.f32.mrb[0].mxu0
      %3753 = vmatprep.mubr.f32.mxu0 0.0
      %3754 = vmatmul.mubr.f32.gmra.mrb[0].mxu0 %v1736
      %v3755 = vpop.f32.mrb[0].mxu0
      %v3756 = vadd.f32 0.0, %v3755
      %v3757 = vpop.f32.mrb[0].mxu0
      %3758 = vmatprep.mubr.f32.mxu0 0.0
      %3759 = vmatmul.mubr.f32.gmra.mrb[0].mxu0 %v1739
      %v3760 = vpop.f32.mrb[0].mxu0
      %v3761 = vadd.f32 0.0, %v3760
      %v3762 = vpop.f32.mrb[0].mxu0
      %3763 = vmatprep.mubr.f32.mxu0 0.0
      %3764 = vmatmul.mubr.f32.gmra.mrb[0].mxu0 %v1742
      %v3765 = vpop.f32.mrb[0].mxu0
      %v3766 = vadd.f32 0.0, %v3765
      %v3767 = vpop.f32.mrb[0].mxu0
      %3768 = vmatprep.mubr.f32.mxu0 0.0
      %3769 = vmatmul.mubr.f32.gmra.mrb[0].mxu0 %v1745
      %v3770 = vpop.f32.mrb[0].mxu0
      %v3771 = vadd.f32 0.0, %v3770
      %v3772 = vpop.f32.mrb[0].mxu0
      %3773 = vmatprep.mubr.f32.mxu0 0.0
      %3774 = vmatmul.mubr.f32.gmra.mrb[0].mxu0 %v1748
      %v3775 = vpop.f32.mrb[0].mxu0
      %v3776 = vadd.f32 0.0, %v3775
      %v3777 = vpop.f32.mrb[0].mxu0
      %3778 = vdwg.mxu0
      %v3779 = vmax.f32 %v1821, %v1856
      %v3780 = vmax.f32 %v1826, %v1861
      %v3781 = vmax.f32 %v1831, %v1866
      %v3782 = vmax.f32 %v1836, %v1871
      %v3783 = vmax.f32 %v1841, %v1876
      %v3784 = vmax.f32 %v1846, %v1881
      %v3785 = vmax.f32 %v1851, %v1886
      %v3786 = vmax.f32 %v1891, %v1926
      %v3787 = vmax.f32 %v1896, %v1931
      %v3788 = vmax.f32 %v1901, %v1936
      %v3789 = vmax.f32 %v1906, %v1941
      %v3790 = vmax.f32 %v1911, %v1946
      %v3791 = vmax.f32 %v1916, %v1951
      %v3792 = vmax.f32 %v1921, %v1956
      %v3793 = vmax.f32 %v1961, %v1996
      %v3794 = vmax.f32 %v1966, %v2001
      %v3795 = vmax.f32 %v1971, %v2006
      %v3796 = vmax.f32 %v1976, %v2011
      %v3797 = vmax.f32 %v1981, %v2016
      %v3798 = vmax.f32 %v1986, %v2021
      %v3799 = vmax.f32 %v1991, %v2026
      %v3800 = vmax.f32 %v2031, %v2066
      %v3801 = vmax.f32 %v2036, %v2071
      %v3802 = vmax.f32 %v2041, %v2076
      %v3803 = vmax.f32 %v2046, %v2081
      %v3804 = vmax.f32 %v2051, %v2086
      %v3805 = vmax.f32 %v2056, %v2091
      %v3806 = vmax.f32 %v2061, %v2096
      %v3807 = vmax.f32 %v2101, %v2136
      %v3808 = vmax.f32 %v2106, %v2141
      %v3809 = vmax.f32 %v2111, %v2146
      %v3810 = vmax.f32 %v2116, %v2151
      %v3811 = vmax.f32 %v2121, %v2156
      %v3812 = vmax.f32 %v2126, %v2161
      %v3813 = vmax.f32 %v2131, %v2166
      %v3814 = vmax.f32 %v2171, %v2206
      %v3815 = vmax.f32 %v2176, %v2211
      %v3816 = vmax.f32 %v2181, %v2216
      %v3817 = vmax.f32 %v2186, %v2221
      %v3818 = vmax.f32 %v2191, %v2226
      %v3819 = vmax.f32 %v2196, %v2231
      %v3820 = vmax.f32 %v2201, %v2236
      %v3821 = vmax.f32 %v2241, %v2276
      %v3822 = vmax.f32 %v2246, %v2281
      %v3823 = vmax.f32 %v2251, %v2286
      %v3824 = vmax.f32 %v2256, %v2291
      %v3825 = vmax.f32 %v2261, %v2296
      %v3826 = vmax.f32 %v2266, %v2301
      %v3827 = vmax.f32 %v2271, %v2306
      %v3828 = vmax.f32 %v2311, %v2346
      %v3829 = vmax.f32 %v2316, %v2351
      %v3830 = vmax.f32 %v2321, %v2356
      %v3831 = vmax.f32 %v2326, %v2361
      %v3832 = vmax.f32 %v2331, %v2366
      %v3833 = vmax.f32 %v2336, %v2371
      %v3834 = vmax.f32 %v2341, %v2376
      %v3835 = vmax.f32 %v2381, %v2416
      %v3836 = vmax.f32 %v2386, %v2421
      %v3837 = vmax.f32 %v2391, %v2426
      %v3838 = vmax.f32 %v2396, %v2431
      %v3839 = vmax.f32 %v2401, %v2436
      %v3840 = vmax.f32 %v2406, %v2441
      %v3841 = vmax.f32 %v2411, %v2446
      %v3842 = vmax.f32 %v2451, %v2486
      %v3843 = vmax.f32 %v2456, %v2491
      %v3844 = vmax.f32 %v2461, %v2496
      %v3845 = vmax.f32 %v2466, %v2501
      %v3846 = vmax.f32 %v2471, %v2506
      %v3847 = vmax.f32 %v2476, %v2511
      %v3848 = vmax.f32 %v2481, %v2516
      %v3849 = vmax.f32 %v2521, %v2556
      %v3850 = vmax.f32 %v2526, %v2561
      %v3851 = vmax.f32 %v2531, %v2566
      %v3852 = vmax.f32 %v2536, %v2571
      %v3853 = vmax.f32 %v2541, %v2576
      %v3854 = vmax.f32 %v2546, %v2581
      %v3855 = vmax.f32 %v2551, %v2586
      %v3856 = vmax.f32 %v2591, %v2626
      %v3857 = vmax.f32 %v2596, %v2631
      %v3858 = vmax.f32 %v2601, %v2636
      %v3859 = vmax.f32 %v2606, %v2641
      %v3860 = vmax.f32 %v2611, %v2646
      %v3861 = vmax.f32 %v2616, %v2651
      %v3862 = vmax.f32 %v2621, %v2656
      %v3863 = vmax.f32 %v2661, %v2696
      %v3864 = vmax.f32 %v2666, %v2701
      %v3865 = vmax.f32 %v2671, %v2706
      %v3866 = vmax.f32 %v2676, %v2711
      %v3867 = vmax.f32 %v2681, %v2716
      %v3868 = vmax.f32 %v2686, %v2721
      %v3869 = vmax.f32 %v2691, %v2726
      %v3870 = vmax.f32 %v2731, %v2766
      %v3871 = vmax.f32 %v2736, %v2771
      %v3872 = vmax.f32 %v2741, %v2776
      %v3873 = vmax.f32 %v2746, %v2781
      %v3874 = vmax.f32 %v2751, %v2786
      %v3875 = vmax.f32 %v2756, %v2791
      %v3876 = vmax.f32 %v2761, %v2796
      %v3877 = vmax.f32 %v2801, %v2836
      %v3878 = vmax.f32 %v2806, %v2841
      %v3879 = vmax.f32 %v2811, %v2846
      %v3880 = vmax.f32 %v2816, %v2851
      %v3881 = vmax.f32 %v2821, %v2856
      %v3882 = vmax.f32 %v2826, %v2861
      %v3883 = vmax.f32 %v2831, %v2866
      %v3884 = vmax.f32 %v2871, %v2906
      %v3885 = vmax.f32 %v2876, %v2911
      %v3886 = vmax.f32 %v2881, %v2916
      %v3887 = vmax.f32 %v2886, %v2921
      %v3888 = vmax.f32 %v2891, %v2926
      %v3889 = vmax.f32 %v2896, %v2931
      %v3890 = vmax.f32 %v2901, %v2936
      %v3891 = vmax.f32 %v2941, %v2976
      %v3892 = vmax.f32 %v2946, %v2981
      %v3893 = vmax.f32 %v2951, %v2986
      %v3894 = vmax.f32 %v2956, %v2991
      %v3895 = vmax.f32 %v2961, %v2996
      %v3896 = vmax.f32 %v2966, %v3001
      %v3897 = vmax.f32 %v2971, %v3006
      %v3898 = vmax.f32 %v3011, %v3046
      %v3899 = vmax.f32 %v3016, %v3051
      %v3900 = vmax.f32 %v3021, %v3056
      %v3901 = vmax.f32 %v3026, %v3061
      %v3902 = vmax.f32 %v3031, %v3066
      %v3903 = vmax.f32 %v3036, %v3071
      %v3904 = vmax.f32 %v3041, %v3076
      %v3905 = vmax.f32 %v3081, %v3116
      %v3906 = vmax.f32 %v3086, %v3121
      %v3907 = vmax.f32 %v3091, %v3126
      %v3908 = vmax.f32 %v3096, %v3131
      %v3909 = vmax.f32 %v3101, %v3136
      %v3910 = vmax.f32 %v3106, %v3141
      %v3911 = vmax.f32 %v3111, %v3146
      %v3912 = vmax.f32 %v3151, %v3186
      %v3913 = vmax.f32 %v3156, %v3191
      %v3914 = vmax.f32 %v3161, %v3196
      %v3915 = vmax.f32 %v3166, %v3201
      %v3916 = vmax.f32 %v3171, %v3206
      %v3917 = vmax.f32 %v3176, %v3211
      %v3918 = vmax.f32 %v3181, %v3216
      %v3919 = vmax.f32 %v3221, %v3256
      %v3920 = vmax.f32 %v3226, %v3261
      %v3921 = vmax.f32 %v3231, %v3266
      %v3922 = vmax.f32 %v3236, %v3271
      %v3923 = vmax.f32 %v3241, %v3276
      %v3924 = vmax.f32 %v3246, %v3281
      %v3925 = vmax.f32 %v3251, %v3286
      %v3926 = vmax.f32 %v3291, %v3326
      %v3927 = vmax.f32 %v3296, %v3331
      %v3928 = vmax.f32 %v3301, %v3336
      %v3929 = vmax.f32 %v3306, %v3341
      %v3930 = vmax.f32 %v3311, %v3346
      %v3931 = vmax.f32 %v3316, %v3351
      %v3932 = vmax.f32 %v3321, %v3356
      %v3933 = vmax.f32 %v3361, %v3396
      %v3934 = vmax.f32 %v3366, %v3401
      %v3935 = vmax.f32 %v3371, %v3406
      %v3936 = vmax.f32 %v3376, %v3411
      %v3937 = vmax.f32 %v3381, %v3416
      %v3938 = vmax.f32 %v3386, %v3421
      %v3939 = vmax.f32 %v3391, %v3426
      %v3940 = vmax.f32 %v3431, %v3466
      %v3941 = vmax.f32 %v3436, %v3471
      %v3942 = vmax.f32 %v3441, %v3476
      %v3943 = vmax.f32 %v3446, %v3481
      %v3944 = vmax.f32 %v3451, %v3486
      %v3945 = vmax.f32 %v3456, %v3491
      %v3946 = vmax.f32 %v3461, %v3496
      %v3947 = vmax.f32 %v3501, %v3536
      %v3948 = vmax.f32 %v3506, %v3541
      %v3949 = vmax.f32 %v3511, %v3546
      %v3950 = vmax.f32 %v3516, %v3551
      %v3951 = vmax.f32 %v3521, %v3556
      %v3952 = vmax.f32 %v3526, %v3561
      %v3953 = vmax.f32 %v3531, %v3566
      %v3954 = vmax.f32 %v3571, %v3606
      %v3955 = vmax.f32 %v3576, %v3611
      %v3956 = vmax.f32 %v3581, %v3616
      %v3957 = vmax.f32 %v3586, %v3621
      %v3958 = vmax.f32 %v3591, %v3626
      %v3959 = vmax.f32 %v3596, %v3631
      %v3960 = vmax.f32 %v3601, %v3636
      %v3961 = vmax.f32 %v3641, %v3676
      %v3962 = vmax.f32 %v3646, %v3681
      %v3963 = vmax.f32 %v3651, %v3686
      %v3964 = vmax.f32 %v3656, %v3691
      %v3965 = vmax.f32 %v3661, %v3696
      %v3966 = vmax.f32 %v3666, %v3701
      %v3967 = vmax.f32 %v3671, %v3706
      %v3968 = vmax.f32 %v3711, %v3746
      %v3969 = vmax.f32 %v3716, %v3751
      %v3970 = vmax.f32 %v3721, %v3756
      %v3971 = vmax.f32 %v3726, %v3761
      %v3972 = vmax.f32 %v3731, %v3766
      %v3973 = vmax.f32 %v3736, %v3771
      %v3974 = vmax.f32 %v3741, %v3776
      %vm3975 = vcmask 130048
      %3976 = vst.msk [vmem:[#allocation2] sm:$0xff] %vm3975, %v3779
      %3977 = vst.msk [vmem:[#allocation2 + $0x8] sm:$0xff] %vm3975, %v3780
      %3978 = vst.msk [vmem:[#allocation2 + $0x10] sm:$0xff] %vm3975, %v3781
      %3979 = vst.msk [vmem:[#allocation2 + $0x18] sm:$0xff] %vm3975, %v3782
      %3980 = vst.msk [vmem:[#allocation2 + $0x20] sm:$0xff] %vm3975, %v3783
      %3981 = vst.msk [vmem:[#allocation2 + $0x28] sm:$0xff] %vm3975, %v3784
      %3982 = vst.msk [vmem:[#allocation2 + $0x30] sm:$0xff] %vm3975, %v3785
      %3983 = vst.msk [vmem:[#allocation2 + $0x38] sm:$0xff] %vm3975, %v3786
      %3984 = vst.msk [vmem:[#allocation2 + $0x40] sm:$0xff] %vm3975, %v3787
      %3985 = vst.msk [vmem:[#allocation2 + $0x48] sm:$0xff] %vm3975, %v3788
      %3986 = vst.msk [vmem:[#allocation2 + $0x50] sm:$0xff] %vm3975, %v3789
      %3987 = vst.msk [vmem:[#allocation2 + $0x58] sm:$0xff] %vm3975, %v3790
      %3988 = vst.msk [vmem:[#allocation2 + $0x60] sm:$0xff] %vm3975, %v3791
      %3989 = vst.msk [vmem:[#allocation2 + $0x68] sm:$0xff] %vm3975, %v3792
      %3990 = vst.msk [vmem:[#allocation2 + $0x70] sm:$0xff] %vm3975, %v3793
      %3991 = vst.msk [vmem:[#allocation2 + $0x78] sm:$0xff] %vm3975, %v3794
      %3992 = vst.msk [vmem:[#allocation2 + $0x80] sm:$0xff] %vm3975, %v3795
      %3993 = vst.msk [vmem:[#allocation2 + $0x88] sm:$0xff] %vm3975, %v3796
      %3994 = vst.msk [vmem:[#allocation2 + $0x90] sm:$0xff] %vm3975, %v3797
      %3995 = vst.msk [vmem:[#allocation2 + $0x98] sm:$0xff] %vm3975, %v3798
      %3996 = vst.msk [vmem:[#allocation2 + $0xa0] sm:$0xff] %vm3975, %v3799
      %3997 = vst.msk [vmem:[#allocation2 + $0xa8] sm:$0xff] %vm3975, %v3800
      %3998 = vst.msk [vmem:[#allocation2 + $0xb0] sm:$0xff] %vm3975, %v3801
      %3999 = vst.msk [vmem:[#allocation2 + $0xb8] sm:$0xff] %vm3975, %v3802
      %4000 = vst.msk [vmem:[#allocation2 + $0xc0] sm:$0xff] %vm3975, %v3803
      %4001 = vst.msk [vmem:[#allocation2 + $0xc8] sm:$0xff] %vm3975, %v3804
      %4002 = vst.msk [vmem:[#allocation2 + $0xd0] sm:$0xff] %vm3975, %v3805
      %4003 = vst.msk [vmem:[#allocation2 + $0xd8] sm:$0xff] %vm3975, %v3806
      %4004 = vst.msk [vmem:[#allocation2 + $0xe0] sm:$0xff] %vm3975, %v3807
      %4005 = vst.msk [vmem:[#allocation2 + $0xe8] sm:$0xff] %vm3975, %v3808
      %4006 = vst.msk [vmem:[#allocation2 + $0xf0] sm:$0xff] %vm3975, %v3809
      %4007 = vst.msk [vmem:[#allocation2 + $0xf8] sm:$0xff] %vm3975, %v3810
      %4008 = vst.msk [vmem:[#allocation2 + $0x100] sm:$0xff] %vm3975, %v3811
      %4009 = vst.msk [vmem:[#allocation2 + $0x108] sm:$0xff] %vm3975, %v3812
      %4010 = vst.msk [vmem:[#allocation2 + $0x110] sm:$0xff] %vm3975, %v3813
      %4011 = vst.msk [vmem:[#allocation2 + $0x118] sm:$0xff] %vm3975, %v3814
      %4012 = vst.msk [vmem:[#allocation2 + $0x120] sm:$0xff] %vm3975, %v3815
      %4013 = vst.msk [vmem:[#allocation2 + $0x128] sm:$0xff] %vm3975, %v3816
      %4014 = vst.msk [vmem:[#allocation2 + $0x130] sm:$0xff] %vm3975, %v3817
      %4015 = vst.msk [vmem:[#allocation2 + $0x138] sm:$0xff] %vm3975, %v3818
      %4016 = vst.msk [vmem:[#allocation2 + $0x140] sm:$0xff] %vm3975, %v3819
      %4017 = vst.msk [vmem:[#allocation2 + $0x148] sm:$0xff] %vm3975, %v3820
      %4018 = vst.msk [vmem:[#allocation2 + $0x150] sm:$0xff] %vm3975, %v3821
      %4019 = vst.msk [vmem:[#allocation2 + $0x158] sm:$0xff] %vm3975, %v3822
      %4020 = vst.msk [vmem:[#allocation2 + $0x160] sm:$0xff] %vm3975, %v3823
      %4021 = vst.msk [vmem:[#allocation2 + $0x168] sm:$0xff] %vm3975, %v3824
      %4022 = vst.msk [vmem:[#allocation2 + $0x170] sm:$0xff] %vm3975, %v3825
      %4023 = vst.msk [vmem:[#allocation2 + $0x178] sm:$0xff] %vm3975, %v3826
      %4024 = vst.msk [vmem:[#allocation2 + $0x180] sm:$0xff] %vm3975, %v3827
      %4025 = vst.msk [vmem:[#allocation2 + $0x188] sm:$0xff] %vm3975, %v3828
      %4026 = vst.msk [vmem:[#allocation2 + $0x190] sm:$0xff] %vm3975, %v3829
      %4027 = vst.msk [vmem:[#allocation2 + $0x198] sm:$0xff] %vm3975, %v3830
      %4028 = vst.msk [vmem:[#allocation2 + $0x1a0] sm:$0xff] %vm3975, %v3831
      %4029 = vst.msk [vmem:[#allocation2 + $0x1a8] sm:$0xff] %vm3975, %v3832
      %4030 = vst.msk [vmem:[#allocation2 + $0x1b0] sm:$0xff] %vm3975, %v3833
      %4031 = vst.msk [vmem:[#allocation2 + $0x1b8] sm:$0xff] %vm3975, %v3834
      %4032 = vst.msk [vmem:[#allocation2 + $0x1c0] sm:$0xff] %vm3975, %v3835
      %4033 = vst.msk [vmem:[#allocation2 + $0x1c8] sm:$0xff] %vm3975, %v3836
      %4034 = vst.msk [vmem:[#allocation2 + $0x1d0] sm:$0xff] %vm3975, %v3837
      %4035 = vst.msk [vmem:[#allocation2 + $0x1d8] sm:$0xff] %vm3975, %v3838
      %4036 = vst.msk [vmem:[#allocation2 + $0x1e0] sm:$0xff] %vm3975, %v3839
      %4037 = vst.msk [vmem:[#allocation2 + $0x1e8] sm:$0xff] %vm3975, %v3840
      %4038 = vst.msk [vmem:[#allocation2 + $0x1f0] sm:$0xff] %vm3975, %v3841
      %4039 = vst.msk [vmem:[#allocation2 + $0x1f8] sm:$0xff] %vm3975, %v3842
      %4040 = vst.msk [vmem:[#allocation2 + $0x200] sm:$0xff] %vm3975, %v3843
      %4041 = vst.msk [vmem:[#allocation2 + $0x208] sm:$0xff] %vm3975, %v3844
      %4042 = vst.msk [vmem:[#allocation2 + $0x210] sm:$0xff] %vm3975, %v3845
      %4043 = vst.msk [vmem:[#allocation2 + $0x218] sm:$0xff] %vm3975, %v3846
      %4044 = vst.msk [vmem:[#allocation2 + $0x220] sm:$0xff] %vm3975, %v3847
      %4045 = vst.msk [vmem:[#allocation2 + $0x228] sm:$0xff] %vm3975, %v3848
      %4046 = vst.msk [vmem:[#allocation2 + $0x230] sm:$0xff] %vm3975, %v3849
      %4047 = vst.msk [vmem:[#allocation2 + $0x238] sm:$0xff] %vm3975, %v3850
      %4048 = vst.msk [vmem:[#allocation2 + $0x240] sm:$0xff] %vm3975, %v3851
      %4049 = vst.msk [vmem:[#allocation2 + $0x248] sm:$0xff] %vm3975, %v3852
      %4050 = vst.msk [vmem:[#allocation2 + $0x250] sm:$0xff] %vm3975, %v3853
      %4051 = vst.msk [vmem:[#allocation2 + $0x258] sm:$0xff] %vm3975, %v3854
      %4052 = vst.msk [vmem:[#allocation2 + $0x260] sm:$0xff] %vm3975, %v3855
      %4053 = vst.msk [vmem:[#allocation2 + $0x268] sm:$0xff] %vm3975, %v3856
      %4054 = vst.msk [vmem:[#allocation2 + $0x270] sm:$0xff] %vm3975, %v3857
      %4055 = vst.msk [vmem:[#allocation2 + $0x278] sm:$0xff] %vm3975, %v3858
      %4056 = vst.msk [vmem:[#allocation2 + $0x280] sm:$0xff] %vm3975, %v3859
      %4057 = vst.msk [vmem:[#allocation2 + $0x288] sm:$0xff] %vm3975, %v3860
      %4058 = vst.msk [vmem:[#allocation2 + $0x290] sm:$0xff] %vm3975, %v3861
      %4059 = vst.msk [vmem:[#allocation2 + $0x298] sm:$0xff] %vm3975, %v3862
      %4060 = vst.msk [vmem:[#allocation2 + $0x2a0] sm:$0xff] %vm3975, %v3863
      %4061 = vst.msk [vmem:[#allocation2 + $0x2a8] sm:$0xff] %vm3975, %v3864
      %4062 = vst.msk [vmem:[#allocation2 + $0x2b0] sm:$0xff] %vm3975, %v3865
      %4063 = vst.msk [vmem:[#allocation2 + $0x2b8] sm:$0xff] %vm3975, %v3866
      %4064 = vst.msk [vmem:[#allocation2 + $0x2c0] sm:$0xff] %vm3975, %v3867
      %4065 = vst.msk [vmem:[#allocation2 + $0x2c8] sm:$0xff] %vm3975, %v3868
      %4066 = vst.msk [vmem:[#allocation2 + $0x2d0] sm:$0xff] %vm3975, %v3869
      %4067 = vst.msk [vmem:[#allocation2 + $0x2d8] sm:$0xff] %vm3975, %v3870
      %4068 = vst.msk [vmem:[#allocation2 + $0x2e0] sm:$0xff] %vm3975, %v3871
      %4069 = vst.msk [vmem:[#allocation2 + $0x2e8] sm:$0xff] %vm3975, %v3872
      %4070 = vst.msk [vmem:[#allocation2 + $0x2f0] sm:$0xff] %vm3975, %v3873
      %4071 = vst.msk [vmem:[#allocation2 + $0x2f8] sm:$0xff] %vm3975, %v3874
      %4072 = vst.msk [vmem:[#allocation2 + $0x300] sm:$0xff] %vm3975, %v3875
      %4073 = vst.msk [vmem:[#allocation2 + $0x308] sm:$0xff] %vm3975, %v3876
      %4074 = vst.msk [vmem:[#allocation2 + $0x310] sm:$0xff] %vm3975, %v3877
      %4075 = vst.msk [vmem:[#allocation2 + $0x318] sm:$0xff] %vm3975, %v3878
      %4076 = vst.msk [vmem:[#allocation2 + $0x320] sm:$0xff] %vm3975, %v3879
      %4077 = vst.msk [vmem:[#allocation2 + $0x328] sm:$0xff] %vm3975, %v3880
      %4078 = vst.msk [vmem:[#allocation2 + $0x330] sm:$0xff] %vm3975, %v3881
      %4079 = vst.msk [vmem:[#allocation2 + $0x338] sm:$0xff] %vm3975, %v3882
      %4080 = vst.msk [vmem:[#allocation2 + $0x340] sm:$0xff] %vm3975, %v3883
      %4081 = vst.msk [vmem:[#allocation2 + $0x348] sm:$0xff] %vm3975, %v3884
      %4082 = vst.msk [vmem:[#allocation2 + $0x350] sm:$0xff] %vm3975, %v3885
      %4083 = vst.msk [vmem:[#allocation2 + $0x358] sm:$0xff] %vm3975, %v3886
      %4084 = vst.msk [vmem:[#allocation2 + $0x360] sm:$0xff] %vm3975, %v3887
      %4085 = vst.msk [vmem:[#allocation2 + $0x368] sm:$0xff] %vm3975, %v3888
      %4086 = vst.msk [vmem:[#allocation2 + $0x370] sm:$0xff] %vm3975, %v3889
      %4087 = vst.msk [vmem:[#allocation2 + $0x378] sm:$0xff] %vm3975, %v3890
      %4088 = vst.msk [vmem:[#allocation2 + $0x380] sm:$0xff] %vm3975, %v3891
      %4089 = vst.msk [vmem:[#allocation2 + $0x388] sm:$0xff] %vm3975, %v3892
      %4090 = vst.msk [vmem:[#allocation2 + $0x390] sm:$0xff] %vm3975, %v3893
      %4091 = vst.msk [vmem:[#allocation2 + $0x398] sm:$0xff] %vm3975, %v3894
      %4092 = vst.msk [vmem:[#allocation2 + $0x3a0] sm:$0xff] %vm3975, %v3895
      %4093 = vst.msk [vmem:[#allocation2 + $0x3a8] sm:$0xff] %vm3975, %v3896
      %4094 = vst.msk [vmem:[#allocation2 + $0x3b0] sm:$0xff] %vm3975, %v3897
      %4095 = vst.msk [vmem:[#allocation2 + $0x3b8] sm:$0xff] %vm3975, %v3898
      %4096 = vst.msk [vmem:[#allocation2 + $0x3c0] sm:$0xff] %vm3975, %v3899
      %4097 = vst.msk [vmem:[#allocation2 + $0x3c8] sm:$0xff] %vm3975, %v3900
      %4098 = vst.msk [vmem:[#allocation2 + $0x3d0] sm:$0xff] %vm3975, %v3901
      %4099 = vst.msk [vmem:[#allocation2 + $0x3d8] sm:$0xff] %vm3975, %v3902
      %4100 = vst.msk [vmem:[#allocation2 + $0x3e0] sm:$0xff] %vm3975, %v3903
      %4101 = vst.msk [vmem:[#allocation2 + $0x3e8] sm:$0xff] %vm3975, %v3904
      %4102 = vst.msk [vmem:[#allocation2 + $0x3f0] sm:$0xff] %vm3975, %v3905
      %4103 = vst.msk [vmem:[#allocation2 + $0x3f8] sm:$0xff] %vm3975, %v3906
      %4104 = vst.msk [vmem:[#allocation2 + $0x400] sm:$0xff] %vm3975, %v3907
      %4105 = vst.msk [vmem:[#allocation2 + $0x408] sm:$0xff] %vm3975, %v3908
      %4106 = vst.msk [vmem:[#allocation2 + $0x410] sm:$0xff] %vm3975, %v3909
      %4107 = vst.msk [vmem:[#allocation2 + $0x418] sm:$0xff] %vm3975, %v3910
      %4108 = vst.msk [vmem:[#allocation2 + $0x420] sm:$0xff] %vm3975, %v3911
      %4109 = vst.msk [vmem:[#allocation2 + $0x428] sm:$0xff] %vm3975, %v3912
      %4110 = vst.msk [vmem:[#allocation2 + $0x430] sm:$0xff] %vm3975, %v3913
      %4111 = vst.msk [vmem:[#allocation2 + $0x438] sm:$0xff] %vm3975, %v3914
      %4112 = vst.msk [vmem:[#allocation2 + $0x440] sm:$0xff] %vm3975, %v3915
      %4113 = vst.msk [vmem:[#allocation2 + $0x448] sm:$0xff] %vm3975, %v3916
      %4114 = vst.msk [vmem:[#allocation2 + $0x450] sm:$0xff] %vm3975, %v3917
      %4115 = vst.msk [vmem:[#allocation2 + $0x458] sm:$0xff] %vm3975, %v3918
      %4116 = vst.msk [vmem:[#allocation2 + $0x460] sm:$0xff] %vm3975, %v3919
      %4117 = vst.msk [vmem:[#allocation2 + $0x468] sm:$0xff] %vm3975, %v3920
      %4118 = vst.msk [vmem:[#allocation2 + $0x470] sm:$0xff] %vm3975, %v3921
      %4119 = vst.msk [vmem:[#allocation2 + $0x478] sm:$0xff] %vm3975, %v3922
      %4120 = vst.msk [vmem:[#allocation2 + $0x480] sm:$0xff] %vm3975, %v3923
      %4121 = vst.msk [vmem:[#allocation2 + $0x488] sm:$0xff] %vm3975, %v3924
      %4122 = vst.msk [vmem:[#allocation2 + $0x490] sm:$0xff] %vm3975, %v3925
      %4123 = vst.msk [vmem:[#allocation2 + $0x498] sm:$0xff] %vm3975, %v3926
      %4124 = vst.msk [vmem:[#allocation2 + $0x4a0] sm:$0xff] %vm3975, %v3927
      %4125 = vst.msk [vmem:[#allocation2 + $0x4a8] sm:$0xff] %vm3975, %v3928
      %4126 = vst.msk [vmem:[#allocation2 + $0x4b0] sm:$0xff] %vm3975, %v3929
      %4127 = vst.msk [vmem:[#allocation2 + $0x4b8] sm:$0xff] %vm3975, %v3930
      %4128 = vst.msk [vmem:[#allocation2 + $0x4c0] sm:$0xff] %vm3975, %v3931
      %4129 = vst.msk [vmem:[#allocation2 + $0x4c8] sm:$0xff] %vm3975, %v3932
      %4130 = vst.msk [vmem:[#allocation2 + $0x4d0] sm:$0xff] %vm3975, %v3933
      %4131 = vst.msk [vmem:[#allocation2 + $0x4d8] sm:$0xff] %vm3975, %v3934
      %4132 = vst.msk [vmem:[#allocation2 + $0x4e0] sm:$0xff] %vm3975, %v3935
      %4133 = vst.msk [vmem:[#allocation2 + $0x4e8] sm:$0xff] %vm3975, %v3936
      %4134 = vst.msk [vmem:[#allocation2 + $0x4f0] sm:$0xff] %vm3975, %v3937
      %4135 = vst.msk [vmem:[#allocation2 + $0x4f8] sm:$0xff] %vm3975, %v3938
      %4136 = vst.msk [vmem:[#allocation2 + $0x500] sm:$0xff] %vm3975, %v3939
      %4137 = vst.msk [vmem:[#allocation2 + $0x508] sm:$0xff] %vm3975, %v3940
      %4138 = vst.msk [vmem:[#allocation2 + $0x510] sm:$0xff] %vm3975, %v3941
      %4139 = vst.msk [vmem:[#allocation2 + $0x518] sm:$0xff] %vm3975, %v3942
      %4140 = vst.msk [vmem:[#allocation2 + $0x520] sm:$0xff] %vm3975, %v3943
      %4141 = vst.msk [vmem:[#allocation2 + $0x528] sm:$0xff] %vm3975, %v3944
      %4142 = vst.msk [vmem:[#allocation2 + $0x530] sm:$0xff] %vm3975, %v3945
      %4143 = vst.msk [vmem:[#allocation2 + $0x538] sm:$0xff] %vm3975, %v3946
      %4144 = vst.msk [vmem:[#allocation2 + $0x540] sm:$0xff] %vm3975, %v3947
      %4145 = vst.msk [vmem:[#allocation2 + $0x548] sm:$0xff] %vm3975, %v3948
      %4146 = vst.msk [vmem:[#allocation2 + $0x550] sm:$0xff] %vm3975, %v3949
      %4147 = vst.msk [vmem:[#allocation2 + $0x558] sm:$0xff] %vm3975, %v3950
      %4148 = vst.msk [vmem:[#allocation2 + $0x560] sm:$0xff] %vm3975, %v3951
      %4149 = vst.msk [vmem:[#allocation2 + $0x568] sm:$0xff] %vm3975, %v3952
      %4150 = vst.msk [vmem:[#allocation2 + $0x570] sm:$0xff] %vm3975, %v3953
      %4151 = vst.msk [vmem:[#allocation2 + $0x578] sm:$0xff] %vm3975, %v3954
      %4152 = vst.msk [vmem:[#allocation2 + $0x580] sm:$0xff] %vm3975, %v3955
      %4153 = vst.msk [vmem:[#allocation2 + $0x588] sm:$0xff] %vm3975, %v3956
      %4154 = vst.msk [vmem:[#allocation2 + $0x590] sm:$0xff] %vm3975, %v3957
      %4155 = vst.msk [vmem:[#allocation2 + $0x598] sm:$0xff] %vm3975, %v3958
      %4156 = vst.msk [vmem:[#allocation2 + $0x5a0] sm:$0xff] %vm3975, %v3959
      %4157 = vst.msk [vmem:[#allocation2 + $0x5a8] sm:$0xff] %vm3975, %v3960
      %4158 = vst.msk [vmem:[#allocation2 + $0x5b0] sm:$0xff] %vm3975, %v3961
      %4159 = vst.msk [vmem:[#allocation2 + $0x5b8] sm:$0xff] %vm3975, %v3962
      %4160 = vst.msk [vmem:[#allocation2 + $0x5c0] sm:$0xff] %vm3975, %v3963
      %4161 = vst.msk [vmem:[#allocation2 + $0x5c8] sm:$0xff] %vm3975, %v3964
      %4162 = vst.msk [vmem:[#allocation2 + $0x5d0] sm:$0xff] %vm3975, %v3965
      %4163 = vst.msk [vmem:[#allocation2 + $0x5d8] sm:$0xff] %vm3975, %v3966
      %4164 = vst.msk [vmem:[#allocation2 + $0x5e0] sm:$0xff] %vm3975, %v3967
      %4165 = vst.msk [vmem:[#allocation2 + $0x5e8] sm:$0xff] %vm3975, %v3968
      %4166 = vst.msk [vmem:[#allocation2 + $0x5f0] sm:$0xff] %vm3975, %v3969
      %4167 = vst.msk [vmem:[#allocation2 + $0x5f8] sm:$0xff] %vm3975, %v3970
      %4168 = vst.msk [vmem:[#allocation2 + $0x600] sm:$0xff] %vm3975, %v3971
      %4169 = vst.msk [vmem:[#allocation2 + $0x608] sm:$0xff] %vm3975, %v3972
      %4170 = vst.msk [vmem:[#allocation2 + $0x610] sm:$0xff] %vm3975, %v3973
      %4171 = vst.msk [vmem:[#allocation2 + $0x618] sm:$0xff] %vm3975, %v3974
      %v4172 = vld [vmem:[#allocation2] ss:$2 sm:$0xff]
      %s4173 = scalar_lea.vmem [#allocation2], 16
      %v4174 = vld [vmem:[%s4173] ss:$2 sm:$0xff]
      %s4175 = scalar_lea.vmem [#allocation2], 32
      %v4176 = vld [vmem:[%s4175] ss:$2 sm:$0xff]
      %s4177 = scalar_lea.vmem [#allocation2], 48
      %v4178 = vld [vmem:[%s4177] ss:$2 sm:$0xff]
      %s4179 = scalar_lea.vmem [#allocation2], 64
      %v4180 = vld [vmem:[%s4179] ss:$2 sm:$0xff]
      %s4181 = scalar_lea.vmem [#allocation2], 80
      %v4182 = vld [vmem:[%s4181] ss:$2 sm:$0xff]
      %s4183 = scalar_lea.vmem [#allocation2], 96
      %v4184 = vld [vmem:[%s4183] ss:$2 sm:$0xff]
      %s4185 = scalar_lea.vmem [#allocation2], 112
      %v4186 = vld [vmem:[%s4185] ss:$2 sm:$0xff]
      %s4187 = scalar_lea.vmem [#allocation2], 128
      %v4188 = vld [vmem:[%s4187] ss:$2 sm:$0xff]
      %s4189 = scalar_lea.vmem [#allocation2], 144
      %v4190 = vld [vmem:[%s4189] ss:$2 sm:$0xff]
      %s4191 = scalar_lea.vmem [#allocation2], 160
      %v4192 = vld [vmem:[%s4191] ss:$2 sm:$0xff]
      %s4193 = scalar_lea.vmem [#allocation2], 176
      %v4194 = vld [vmem:[%s4193] ss:$2 sm:$0xff]
      %s4195 = scalar_lea.vmem [#allocation2], 192
      %v4196 = vld [vmem:[%s4195] ss:$2 sm:$0xff]
      %s4197 = scalar_lea.vmem [#allocation2], 208
      %v4198 = vld [vmem:[%s4197] ss:$2 sm:$0xff]
      %s4199 = scalar_lea.vmem [#allocation2], 224
      %v4200 = vld [vmem:[%s4199] ss:$2 sm:$0xff]
      %s4201 = scalar_lea.vmem [#allocation2], 240
      %v4202 = vld [vmem:[%s4201] ss:$2 sm:$0xff]
      %s4203 = scalar_lea.vmem [#allocation2], 256
      %v4204 = vld [vmem:[%s4203] ss:$2 sm:$0xff]
      %s4205 = scalar_lea.vmem [#allocation2], 272
      %v4206 = vld [vmem:[%s4205] ss:$2 sm:$0xff]
      %s4207 = scalar_lea.vmem [#allocation2], 288
      %v4208 = vld [vmem:[%s4207] ss:$2 sm:$0xff]
      %s4209 = scalar_lea.vmem [#allocation2], 304
      %v4210 = vld [vmem:[%s4209] ss:$2 sm:$0xff]
      %s4211 = scalar_lea.vmem [#allocation2], 320
      %v4212 = vld [vmem:[%s4211] ss:$2 sm:$0xff]
      %s4213 = scalar_lea.vmem [#allocation2], 336
      %v4214 = vld [vmem:[%s4213] ss:$2 sm:$0xff]
      %s4215 = scalar_lea.vmem [#allocation2], 352
      %v4216 = vld [vmem:[%s4215] ss:$2 sm:$0xff]
      %s4217 = scalar_lea.vmem [#allocation2], 368
      %v4218 = vld [vmem:[%s4217] ss:$2 sm:$0xff]
      %s4219 = scalar_lea.vmem [#allocation2], 384
      %v4220 = vld [vmem:[%s4219] ss:$2 sm:$0xff]
      %s4221 = scalar_lea.vmem [#allocation2], 400
      %v4222 = vld [vmem:[%s4221] ss:$2 sm:$0xff]
      %s4223 = scalar_lea.vmem [#allocation2], 416
      %v4224 = vld [vmem:[%s4223] ss:$2 sm:$0xff]
      %s4225 = scalar_lea.vmem [#allocation2], 432
      %v4226 = vld [vmem:[%s4225] ss:$2 sm:$0xff]
      %s4227 = scalar_lea.vmem [#allocation2], 448
      %v4228 = vld [vmem:[%s4227] ss:$2 sm:$0xff]
      %s4229 = scalar_lea.vmem [#allocation2], 464
      %v4230 = vld [vmem:[%s4229] ss:$2 sm:$0xff]
      %s4231 = scalar_lea.vmem [#allocation2], 480
      %v4232 = vld [vmem:[%s4231] ss:$2 sm:$0xff]
      %s4233 = scalar_lea.vmem [#allocation2], 496
      %v4234 = vld [vmem:[%s4233] ss:$2 sm:$0xff]
      %s4235 = scalar_lea.vmem [#allocation2], 512
      %v4236 = vld [vmem:[%s4235] ss:$2 sm:$0xff]
      %s4237 = scalar_lea.vmem [#allocation2], 528
      %v4238 = vld [vmem:[%s4237] ss:$2 sm:$0xff]
      %s4239 = scalar_lea.vmem [#allocation2], 544
      %v4240 = vld [vmem:[%s4239] ss:$2 sm:$0xff]
      %s4241 = scalar_lea.vmem [#allocation2], 560
      %v4242 = vld [vmem:[%s4241] ss:$2 sm:$0xff]
      %s4243 = scalar_lea.vmem [#allocation2], 576
      %v4244 = vld [vmem:[%s4243] ss:$2 sm:$0xff]
      %s4245 = scalar_lea.vmem [#allocation2], 592
      %v4246 = vld [vmem:[%s4245] ss:$2 sm:$0xff]
      %s4247 = scalar_lea.vmem [#allocation2], 608
      %v4248 = vld [vmem:[%s4247] ss:$2 sm:$0xff]
      %s4249 = scalar_lea.vmem [#allocation2], 624
      %v4250 = vld [vmem:[%s4249] ss:$2 sm:$0xff]
      %s4251 = scalar_lea.vmem [#allocation2], 640
      %v4252 = vld [vmem:[%s4251] ss:$2 sm:$0xff]
      %s4253 = scalar_lea.vmem [#allocation2], 656
      %v4254 = vld [vmem:[%s4253] ss:$2 sm:$0xff]
      %s4255 = scalar_lea.vmem [#allocation2], 672
      %v4256 = vld [vmem:[%s4255] ss:$2 sm:$0xff]
      %s4257 = scalar_lea.vmem [#allocation2], 688
      %v4258 = vld [vmem:[%s4257] ss:$2 sm:$0xff]
      %s4259 = scalar_lea.vmem [#allocation2], 704
      %v4260 = vld [vmem:[%s4259] ss:$2 sm:$0xff]
      %s4261 = scalar_lea.vmem [#allocation2], 720
      %v4262 = vld [vmem:[%s4261] ss:$2 sm:$0xff]
      %s4263 = scalar_lea.vmem [#allocation2], 736
      %v4264 = vld [vmem:[%s4263] ss:$2 sm:$0xff]
      %s4265 = scalar_lea.vmem [#allocation2], 752
      %v4266 = vld [vmem:[%s4265] ss:$2 sm:$0xff]
      %s4267 = scalar_lea.vmem [#allocation2], 768
      %v4268 = vld [vmem:[%s4267] ss:$2 sm:$0xff]
      %s4269 = scalar_lea.vmem [#allocation2], 784
      %v4270 = vld [vmem:[%s4269] ss:$2 sm:$0xff]
      %s4271 = scalar_lea.vmem [#allocation2], 800
      %v4272 = vld [vmem:[%s4271] ss:$2 sm:$0xff]
      %s4273 = scalar_lea.vmem [#allocation2], 816
      %v4274 = vld [vmem:[%s4273] ss:$2 sm:$0xff]
      %s4275 = scalar_lea.vmem [#allocation2], 832
      %v4276 = vld [vmem:[%s4275] ss:$2 sm:$0xff]
      %s4277 = scalar_lea.vmem [#allocation2], 848
      %v4278 = vld [vmem:[%s4277] ss:$2 sm:$0xff]
      %s4279 = scalar_lea.vmem [#allocation2], 864
      %v4280 = vld [vmem:[%s4279] ss:$2 sm:$0xff]
      %s4281 = scalar_lea.vmem [#allocation2], 880
      %v4282 = vld [vmem:[%s4281] ss:$2 sm:$0xff]
      %s4283 = scalar_lea.vmem [#allocation2], 896
      %v4284 = vld [vmem:[%s4283] ss:$2 sm:$0xff]
      %s4285 = scalar_lea.vmem [#allocation2], 912
      %v4286 = vld [vmem:[%s4285] ss:$2 sm:$0xff]
      %s4287 = scalar_lea.vmem [#allocation2], 928
      %v4288 = vld [vmem:[%s4287] ss:$2 sm:$0xff]
      %s4289 = scalar_lea.vmem [#allocation2], 944
      %v4290 = vld [vmem:[%s4289] ss:$2 sm:$0xff]
      %s4291 = scalar_lea.vmem [#allocation2], 960
      %v4292 = vld [vmem:[%s4291] ss:$2 sm:$0xff]
      %s4293 = scalar_lea.vmem [#allocation2], 976
      %v4294 = vld [vmem:[%s4293] ss:$2 sm:$0xff]
      %s4295 = scalar_lea.vmem [#allocation2], 992
      %v4296 = vld [vmem:[%s4295] ss:$2 sm:$0xff]
      %s4297 = scalar_lea.vmem [#allocation2], 1008
      %v4298 = vld [vmem:[%s4297] ss:$2 sm:$0xff]
      %s4299 = scalar_lea.vmem [#allocation2], 1024
      %v4300 = vld [vmem:[%s4299] ss:$2 sm:$0xff]
      %s4301 = scalar_lea.vmem [#allocation2], 1040
      %v4302 = vld [vmem:[%s4301] ss:$2 sm:$0xff]
      %s4303 = scalar_lea.vmem [#allocation2], 1056
      %v4304 = vld [vmem:[%s4303] ss:$2 sm:$0xff]
      %s4305 = scalar_lea.vmem [#allocation2], 1072
      %v4306 = vld [vmem:[%s4305] ss:$2 sm:$0xff]
      %s4307 = scalar_lea.vmem [#allocation2], 1088
      %v4308 = vld [vmem:[%s4307] ss:$2 sm:$0xff]
      %s4309 = scalar_lea.vmem [#allocation2], 1104
      %v4310 = vld [vmem:[%s4309] ss:$2 sm:$0xff]
      %s4311 = scalar_lea.vmem [#allocation2], 1120
      %v4312 = vld [vmem:[%s4311] ss:$2 sm:$0xff]
      %s4313 = scalar_lea.vmem [#allocation2], 1136
      %v4314 = vld [vmem:[%s4313] ss:$2 sm:$0xff]
      %s4315 = scalar_lea.vmem [#allocation2], 1152
      %v4316 = vld [vmem:[%s4315] ss:$2 sm:$0xff]
      %s4317 = scalar_lea.vmem [#allocation2], 1168
      %v4318 = vld [vmem:[%s4317] ss:$2 sm:$0xff]
      %s4319 = scalar_lea.vmem [#allocation2], 1184
      %v4320 = vld [vmem:[%s4319] ss:$2 sm:$0xff]
      %s4321 = scalar_lea.vmem [#allocation2], 1200
      %v4322 = vld [vmem:[%s4321] ss:$2 sm:$0xff]
      %s4323 = scalar_lea.vmem [#allocation2], 1216
      %v4324 = vld [vmem:[%s4323] ss:$2 sm:$0xff]
      %s4325 = scalar_lea.vmem [#allocation2], 1232
      %v4326 = vld [vmem:[%s4325] ss:$2 sm:$0xff]
      %s4327 = scalar_lea.vmem [#allocation2], 1248
      %v4328 = vld [vmem:[%s4327] ss:$2 sm:$0xff]
      %s4329 = scalar_lea.vmem [#allocation2], 1264
      %v4330 = vld [vmem:[%s4329] ss:$2 sm:$0xff]
      %s4331 = scalar_lea.vmem [#allocation2], 1280
      %v4332 = vld [vmem:[%s4331] ss:$2 sm:$0xff]
      %s4333 = scalar_lea.vmem [#allocation2], 1296
      %v4334 = vld [vmem:[%s4333] ss:$2 sm:$0xff]
      %s4335 = scalar_lea.vmem [#allocation2], 1312
      %v4336 = vld [vmem:[%s4335] ss:$2 sm:$0xff]
      %s4337 = scalar_lea.vmem [#allocation2], 1328
      %v4338 = vld [vmem:[%s4337] ss:$2 sm:$0xff]
      %s4339 = scalar_lea.vmem [#allocation2], 1344
      %v4340 = vld [vmem:[%s4339] ss:$2 sm:$0xff]
      %s4341 = scalar_lea.vmem [#allocation2], 1360
      %v4342 = vld [vmem:[%s4341] ss:$2 sm:$0xff]
      %s4343 = scalar_lea.vmem [#allocation2], 1376
      %v4344 = vld [vmem:[%s4343] ss:$2 sm:$0xff]
      %s4345 = scalar_lea.vmem [#allocation2], 1392
      %v4346 = vld [vmem:[%s4345] ss:$2 sm:$0xff]
      %s4347 = scalar_lea.vmem [#allocation2], 1408
      %v4348 = vld [vmem:[%s4347] ss:$2 sm:$0xff]
      %s4349 = scalar_lea.vmem [#allocation2], 1424
      %v4350 = vld [vmem:[%s4349] ss:$2 sm:$0xff]
      %s4351 = scalar_lea.vmem [#allocation2], 1440
      %v4352 = vld [vmem:[%s4351] ss:$2 sm:$0xff]
      %s4353 = scalar_lea.vmem [#allocation2], 1456
      %v4354 = vld [vmem:[%s4353] ss:$2 sm:$0xff]
      %s4355 = scalar_lea.vmem [#allocation2], 1472
      %v4356 = vld [vmem:[%s4355] ss:$2 sm:$0xff]
      %s4357 = scalar_lea.vmem [#allocation2], 1488
      %v4358 = vld [vmem:[%s4357] ss:$2 sm:$0xff]
      %s4359 = scalar_lea.vmem [#allocation2], 1504
      %v4360 = vld [vmem:[%s4359] ss:$2 sm:$0xff]
      %s4361 = scalar_lea.vmem [#allocation2], 1520
      %v4362 = vld [vmem:[%s4361] ss:$2 sm:$0xff]
      %s4363 = scalar_lea.vmem [#allocation2], 1536
      %v4364 = vld [vmem:[%s4363] ss:$2 sm:$0xff]
      %s4365 = scalar_lea.vmem [#allocation2], 1552
      %v4366 = vld [vmem:[%s4365] ss:$2 sm:$0xff]
      %s4367 = scalar_lea.vmem [#allocation2], 1
      %v4368 = vld [vmem:[%s4367] ss:$2 sm:$0xff]
      %s4369 = scalar_lea.vmem [#allocation2], 17
      %v4370 = vld [vmem:[%s4369] ss:$2 sm:$0xff]
      %s4371 = scalar_lea.vmem [#allocation2], 33
      %v4372 = vld [vmem:[%s4371] ss:$2 sm:$0xff]
      %s4373 = scalar_lea.vmem [#allocation2], 49
      %v4374 = vld [vmem:[%s4373] ss:$2 sm:$0xff]
      %s4375 = scalar_lea.vmem [#allocation2], 65
      %v4376 = vld [vmem:[%s4375] ss:$2 sm:$0xff]
      %s4377 = scalar_lea.vmem [#allocation2], 81
      %v4378 = vld [vmem:[%s4377] ss:$2 sm:$0xff]
      %s4379 = scalar_lea.vmem [#allocation2], 97
      %v4380 = vld [vmem:[%s4379] ss:$2 sm:$0xff]
      %s4381 = scalar_lea.vmem [#allocation2], 113
      %v4382 = vld [vmem:[%s4381] ss:$2 sm:$0xff]
      %s4383 = scalar_lea.vmem [#allocation2], 129
      %v4384 = vld [vmem:[%s4383] ss:$2 sm:$0xff]
      %s4385 = scalar_lea.vmem [#allocation2], 145
      %v4386 = vld [vmem:[%s4385] ss:$2 sm:$0xff]
      %s4387 = scalar_lea.vmem [#allocation2], 161
      %v4388 = vld [vmem:[%s4387] ss:$2 sm:$0xff]
      %s4389 = scalar_lea.vmem [#allocation2], 177
      %v4390 = vld [vmem:[%s4389] ss:$2 sm:$0xff]
      %s4391 = scalar_lea.vmem [#allocation2], 193
      %v4392 = vld [vmem:[%s4391] ss:$2 sm:$0xff]
      %s4393 = scalar_lea.vmem [#allocation2], 209
      %v4394 = vld [vmem:[%s4393] ss:$2 sm:$0xff]
      %s4395 = scalar_lea.vmem [#allocation2], 225
      %v4396 = vld [vmem:[%s4395] ss:$2 sm:$0xff]
      %s4397 = scalar_lea.vmem [#allocation2], 241
      %v4398 = vld [vmem:[%s4397] ss:$2 sm:$0xff]
      %s4399 = scalar_lea.vmem [#allocation2], 257
      %v4400 = vld [vmem:[%s4399] ss:$2 sm:$0xff]
      %s4401 = scalar_lea.vmem [#allocation2], 273
      %v4402 = vld [vmem:[%s4401] ss:$2 sm:$0xff]
      %s4403 = scalar_lea.vmem [#allocation2], 289
      %v4404 = vld [vmem:[%s4403] ss:$2 sm:$0xff]
      %s4405 = scalar_lea.vmem [#allocation2], 305
      %v4406 = vld [vmem:[%s4405] ss:$2 sm:$0xff]
      %s4407 = scalar_lea.vmem [#allocation2], 321
      %v4408 = vld [vmem:[%s4407] ss:$2 sm:$0xff]
      %s4409 = scalar_lea.vmem [#allocation2], 337
      %v4410 = vld [vmem:[%s4409] ss:$2 sm:$0xff]
      %s4411 = scalar_lea.vmem [#allocation2], 353
      %v4412 = vld [vmem:[%s4411] ss:$2 sm:$0xff]
      %s4413 = scalar_lea.vmem [#allocation2], 369
      %v4414 = vld [vmem:[%s4413] ss:$2 sm:$0xff]
      %s4415 = scalar_lea.vmem [#allocation2], 385
      %v4416 = vld [vmem:[%s4415] ss:$2 sm:$0xff]
      %s4417 = scalar_lea.vmem [#allocation2], 401
      %v4418 = vld [vmem:[%s4417] ss:$2 sm:$0xff]
      %s4419 = scalar_lea.vmem [#allocation2], 417
      %v4420 = vld [vmem:[%s4419] ss:$2 sm:$0xff]
      %s4421 = scalar_lea.vmem [#allocation2], 433
      %v4422 = vld [vmem:[%s4421] ss:$2 sm:$0xff]
      %s4423 = scalar_lea.vmem [#allocation2], 449
      %v4424 = vld [vmem:[%s4423] ss:$2 sm:$0xff]
      %s4425 = scalar_lea.vmem [#allocation2], 465
      %v4426 = vld [vmem:[%s4425] ss:$2 sm:$0xff]
      %s4427 = scalar_lea.vmem [#allocation2], 481
      %v4428 = vld [vmem:[%s4427] ss:$2 sm:$0xff]
      %s4429 = scalar_lea.vmem [#allocation2], 497
      %v4430 = vld [vmem:[%s4429] ss:$2 sm:$0xff]
      %s4431 = scalar_lea.vmem [#allocation2], 513
      %v4432 = vld [vmem:[%s4431] ss:$2 sm:$0xff]
      %s4433 = scalar_lea.vmem [#allocation2], 529
      %v4434 = vld [vmem:[%s4433] ss:$2 sm:$0xff]
      %s4435 = scalar_lea.vmem [#allocation2], 545
      %v4436 = vld [vmem:[%s4435] ss:$2 sm:$0xff]
      %s4437 = scalar_lea.vmem [#allocation2], 561
      %v4438 = vld [vmem:[%s4437] ss:$2 sm:$0xff]
      %s4439 = scalar_lea.vmem [#allocation2], 577
      %v4440 = vld [vmem:[%s4439] ss:$2 sm:$0xff]
      %s4441 = scalar_lea.vmem [#allocation2], 593
      %v4442 = vld [vmem:[%s4441] ss:$2 sm:$0xff]
      %s4443 = scalar_lea.vmem [#allocation2], 609
      %v4444 = vld [vmem:[%s4443] ss:$2 sm:$0xff]
      %s4445 = scalar_lea.vmem [#allocation2], 625
      %v4446 = vld [vmem:[%s4445] ss:$2 sm:$0xff]
      %s4447 = scalar_lea.vmem [#allocation2], 641
      %v4448 = vld [vmem:[%s4447] ss:$2 sm:$0xff]
      %s4449 = scalar_lea.vmem [#allocation2], 657
      %v4450 = vld [vmem:[%s4449] ss:$2 sm:$0xff]
      %s4451 = scalar_lea.vmem [#allocation2], 673
      %v4452 = vld [vmem:[%s4451] ss:$2 sm:$0xff]
      %s4453 = scalar_lea.vmem [#allocation2], 689
      %v4454 = vld [vmem:[%s4453] ss:$2 sm:$0xff]
      %s4455 = scalar_lea.vmem [#allocation2], 705
      %v4456 = vld [vmem:[%s4455] ss:$2 sm:$0xff]
      %s4457 = scalar_lea.vmem [#allocation2], 721
      %v4458 = vld [vmem:[%s4457] ss:$2 sm:$0xff]
      %s4459 = scalar_lea.vmem [#allocation2], 737
      %v4460 = vld [vmem:[%s4459] ss:$2 sm:$0xff]
      %s4461 = scalar_lea.vmem [#allocation2], 753
      %v4462 = vld [vmem:[%s4461] ss:$2 sm:$0xff]
      %s4463 = scalar_lea.vmem [#allocation2], 769
      %v4464 = vld [vmem:[%s4463] ss:$2 sm:$0xff]
      %s4465 = scalar_lea.vmem [#allocation2], 785
      %v4466 = vld [vmem:[%s4465] ss:$2 sm:$0xff]
      %s4467 = scalar_lea.vmem [#allocation2], 801
      %v4468 = vld [vmem:[%s4467] ss:$2 sm:$0xff]
      %s4469 = scalar_lea.vmem [#allocation2], 817
      %v4470 = vld [vmem:[%s4469] ss:$2 sm:$0xff]
      %s4471 = scalar_lea.vmem [#allocation2], 833
      %v4472 = vld [vmem:[%s4471] ss:$2 sm:$0xff]
      %s4473 = scalar_lea.vmem [#allocation2], 849
      %v4474 = vld [vmem:[%s4473] ss:$2 sm:$0xff]
      %s4475 = scalar_lea.vmem [#allocation2], 865
      %v4476 = vld [vmem:[%s4475] ss:$2 sm:$0xff]
      %s4477 = scalar_lea.vmem [#allocation2], 881
      %v4478 = vld [vmem:[%s4477] ss:$2 sm:$0xff]
      %s4479 = scalar_lea.vmem [#allocation2], 897
      %v4480 = vld [vmem:[%s4479] ss:$2 sm:$0xff]
      %s4481 = scalar_lea.vmem [#allocation2], 913
      %v4482 = vld [vmem:[%s4481] ss:$2 sm:$0xff]
      %s4483 = scalar_lea.vmem [#allocation2], 929
      %v4484 = vld [vmem:[%s4483] ss:$2 sm:$0xff]
      %s4485 = scalar_lea.vmem [#allocation2], 945
      %v4486 = vld [vmem:[%s4485] ss:$2 sm:$0xff]
      %s4487 = scalar_lea.vmem [#allocation2], 961
      %v4488 = vld [vmem:[%s4487] ss:$2 sm:$0xff]
      %s4489 = scalar_lea.vmem [#allocation2], 977
      %v4490 = vld [vmem:[%s4489] ss:$2 sm:$0xff]
      %s4491 = scalar_lea.vmem [#allocation2], 993
      %v4492 = vld [vmem:[%s4491] ss:$2 sm:$0xff]
      %s4493 = scalar_lea.vmem [#allocation2], 1009
      %v4494 = vld [vmem:[%s4493] ss:$2 sm:$0xff]
      %s4495 = scalar_lea.vmem [#allocation2], 1025
      %v4496 = vld [vmem:[%s4495] ss:$2 sm:$0xff]
      %s4497 = scalar_lea.vmem [#allocation2], 1041
      %v4498 = vld [vmem:[%s4497] ss:$2 sm:$0xff]
      %s4499 = scalar_lea.vmem [#allocation2], 1057
      %v4500 = vld [vmem:[%s4499] ss:$2 sm:$0xff]
      %s4501 = scalar_lea.vmem [#allocation2], 1073
      %v4502 = vld [vmem:[%s4501] ss:$2 sm:$0xff]
      %s4503 = scalar_lea.vmem [#allocation2], 1089
      %v4504 = vld [vmem:[%s4503] ss:$2 sm:$0xff]
      %s4505 = scalar_lea.vmem [#allocation2], 1105
      %v4506 = vld [vmem:[%s4505] ss:$2 sm:$0xff]
      %s4507 = scalar_lea.vmem [#allocation2], 1121
      %v4508 = vld [vmem:[%s4507] ss:$2 sm:$0xff]
      %s4509 = scalar_lea.vmem [#allocation2], 1137
      %v4510 = vld [vmem:[%s4509] ss:$2 sm:$0xff]
      %s4511 = scalar_lea.vmem [#allocation2], 1153
      %v4512 = vld [vmem:[%s4511] ss:$2 sm:$0xff]
      %s4513 = scalar_lea.vmem [#allocation2], 1169
      %v4514 = vld [vmem:[%s4513] ss:$2 sm:$0xff]
      %s4515 = scalar_lea.vmem [#allocation2], 1185
      %v4516 = vld [vmem:[%s4515] ss:$2 sm:$0xff]
      %s4517 = scalar_lea.vmem [#allocation2], 1201
      %v4518 = vld [vmem:[%s4517] ss:$2 sm:$0xff]
      %s4519 = scalar_lea.vmem [#allocation2], 1217
      %v4520 = vld [vmem:[%s4519] ss:$2 sm:$0xff]
      %s4521 = scalar_lea.vmem [#allocation2], 1233
      %v4522 = vld [vmem:[%s4521] ss:$2 sm:$0xff]
      %s4523 = scalar_lea.vmem [#allocation2], 1249
      %v4524 = vld [vmem:[%s4523] ss:$2 sm:$0xff]
      %s4525 = scalar_lea.vmem [#allocation2], 1265
      %v4526 = vld [vmem:[%s4525] ss:$2 sm:$0xff]
      %s4527 = scalar_lea.vmem [#allocation2], 1281
      %v4528 = vld [vmem:[%s4527] ss:$2 sm:$0xff]
      %s4529 = scalar_lea.vmem [#allocation2], 1297
      %v4530 = vld [vmem:[%s4529] ss:$2 sm:$0xff]
      %s4531 = scalar_lea.vmem [#allocation2], 1313
      %v4532 = vld [vmem:[%s4531] ss:$2 sm:$0xff]
      %s4533 = scalar_lea.vmem [#allocation2], 1329
      %v4534 = vld [vmem:[%s4533] ss:$2 sm:$0xff]
      %s4535 = scalar_lea.vmem [#allocation2], 1345
      %v4536 = vld [vmem:[%s4535] ss:$2 sm:$0xff]
      %s4537 = scalar_lea.vmem [#allocation2], 1361
      %v4538 = vld [vmem:[%s4537] ss:$2 sm:$0xff]
      %s4539 = scalar_lea.vmem [#allocation2], 1377
      %v4540 = vld [vmem:[%s4539] ss:$2 sm:$0xff]
      %s4541 = scalar_lea.vmem [#allocation2], 1393
      %v4542 = vld [vmem:[%s4541] ss:$2 sm:$0xff]
      %s4543 = scalar_lea.vmem [#allocation2], 1409
      %v4544 = vld [vmem:[%s4543] ss:$2 sm:$0xff]
      %s4545 = scalar_lea.vmem [#allocation2], 1425
      %v4546 = vld [vmem:[%s4545] ss:$2 sm:$0xff]
      %s4547 = scalar_lea.vmem [#allocation2], 1441
      %v4548 = vld [vmem:[%s4547] ss:$2 sm:$0xff]
      %s4549 = scalar_lea.vmem [#allocation2], 1457
      %v4550 = vld [vmem:[%s4549] ss:$2 sm:$0xff]
      %s4551 = scalar_lea.vmem [#allocation2], 1473
      %v4552 = vld [vmem:[%s4551] ss:$2 sm:$0xff]
      %s4553 = scalar_lea.vmem [#allocation2], 1489
      %v4554 = vld [vmem:[%s4553] ss:$2 sm:$0xff]
      %s4555 = scalar_lea.vmem [#allocation2], 1505
      %v4556 = vld [vmem:[%s4555] ss:$2 sm:$0xff]
      %s4557 = scalar_lea.vmem [#allocation2], 1521
      %v4558 = vld [vmem:[%s4557] ss:$2 sm:$0xff]
      %s4559 = scalar_lea.vmem [#allocation2], 1537
      %v4560 = vld [vmem:[%s4559] ss:$2 sm:$0xff]
      %s4561 = scalar_lea.vmem [#allocation2], 1553
      %v4562 = vld [vmem:[%s4561] ss:$2 sm:$0xff]
      %v4563 = vmax.f32 %v4172, %v4368
      %v4564 = vmax.f32 %v4174, %v4370
      %v4565 = vmax.f32 %v4176, %v4372
      %v4566 = vmax.f32 %v4178, %v4374
      %v4567 = vmax.f32 %v4180, %v4376
      %v4568 = vmax.f32 %v4182, %v4378
      %v4569 = vmax.f32 %v4184, %v4380
      %v4570 = vmax.f32 %v4186, %v4382
      %v4571 = vmax.f32 %v4188, %v4384
      %v4572 = vmax.f32 %v4190, %v4386
      %v4573 = vmax.f32 %v4192, %v4388
      %v4574 = vmax.f32 %v4194, %v4390
      %v4575 = vmax.f32 %v4196, %v4392
      %v4576 = vmax.f32 %v4198, %v4394
      %v4577 = vmax.f32 %v4200, %v4396
      %v4578 = vmax.f32 %v4202, %v4398
      %v4579 = vmax.f32 %v4204, %v4400
      %v4580 = vmax.f32 %v4206, %v4402
      %v4581 = vmax.f32 %v4208, %v4404
      %v4582 = vmax.f32 %v4210, %v4406
      %v4583 = vmax.f32 %v4212, %v4408
      %v4584 = vmax.f32 %v4214, %v4410
      %v4585 = vmax.f32 %v4216, %v4412
      %v4586 = vmax.f32 %v4218, %v4414
      %v4587 = vmax.f32 %v4220, %v4416
      %v4588 = vmax.f32 %v4222, %v4418
      %v4589 = vmax.f32 %v4224, %v4420
      %v4590 = vmax.f32 %v4226, %v4422
      %v4591 = vmax.f32 %v4228, %v4424
      %v4592 = vmax.f32 %v4230, %v4426
      %v4593 = vmax.f32 %v4232, %v4428
      %v4594 = vmax.f32 %v4234, %v4430
      %v4595 = vmax.f32 %v4236, %v4432
      %v4596 = vmax.f32 %v4238, %v4434
      %v4597 = vmax.f32 %v4240, %v4436
      %v4598 = vmax.f32 %v4242, %v4438
      %v4599 = vmax.f32 %v4244, %v4440
      %v4600 = vmax.f32 %v4246, %v4442
      %v4601 = vmax.f32 %v4248, %v4444
      %v4602 = vmax.f32 %v4250, %v4446
      %v4603 = vmax.f32 %v4252, %v4448
      %v4604 = vmax.f32 %v4254, %v4450
      %v4605 = vmax.f32 %v4256, %v4452
      %v4606 = vmax.f32 %v4258, %v4454
      %v4607 = vmax.f32 %v4260, %v4456
      %v4608 = vmax.f32 %v4262, %v4458
      %v4609 = vmax.f32 %v4264, %v4460
      %v4610 = vmax.f32 %v4266, %v4462
      %v4611 = vmax.f32 %v4268, %v4464
      %v4612 = vmax.f32 %v4270, %v4466
      %v4613 = vmax.f32 %v4272, %v4468
      %v4614 = vmax.f32 %v4274, %v4470
      %v4615 = vmax.f32 %v4276, %v4472
      %v4616 = vmax.f32 %v4278, %v4474
      %v4617 = vmax.f32 %v4280, %v4476
      %v4618 = vmax.f32 %v4282, %v4478
      %v4619 = vmax.f32 %v4284, %v4480
      %v4620 = vmax.f32 %v4286, %v4482
      %v4621 = vmax.f32 %v4288, %v4484
      %v4622 = vmax.f32 %v4290, %v4486
      %v4623 = vmax.f32 %v4292, %v4488
      %v4624 = vmax.f32 %v4294, %v4490
      %v4625 = vmax.f32 %v4296, %v4492
      %v4626 = vmax.f32 %v4298, %v4494
      %v4627 = vmax.f32 %v4300, %v4496
      %v4628 = vmax.f32 %v4302, %v4498
      %v4629 = vmax.f32 %v4304, %v4500
      %v4630 = vmax.f32 %v4306, %v4502
      %v4631 = vmax.f32 %v4308, %v4504
      %v4632 = vmax.f32 %v4310, %v4506
      %v4633 = vmax.f32 %v4312, %v4508
      %v4634 = vmax.f32 %v4314, %v4510
      %v4635 = vmax.f32 %v4316, %v4512
      %v4636 = vmax.f32 %v4318, %v4514
      %v4637 = vmax.f32 %v4320, %v4516
      %v4638 = vmax.f32 %v4322, %v4518
      %v4639 = vmax.f32 %v4324, %v4520
      %v4640 = vmax.f32 %v4326, %v4522
      %v4641 = vmax.f32 %v4328, %v4524
      %v4642 = vmax.f32 %v4330, %v4526
      %v4643 = vmax.f32 %v4332, %v4528
      %v4644 = vmax.f32 %v4334, %v4530
      %v4645 = vmax.f32 %v4336, %v4532
      %v4646 = vmax.f32 %v4338, %v4534
      %v4647 = vmax.f32 %v4340, %v4536
      %v4648 = vmax.f32 %v4342, %v4538
      %v4649 = vmax.f32 %v4344, %v4540
      %v4650 = vmax.f32 %v4346, %v4542
      %v4651 = vmax.f32 %v4348, %v4544
      %v4652 = vmax.f32 %v4350, %v4546
      %v4653 = vmax.f32 %v4352, %v4548
      %v4654 = vmax.f32 %v4354, %v4550
      %v4655 = vmax.f32 %v4356, %v4552
      %v4656 = vmax.f32 %v4358, %v4554
      %v4657 = vmax.f32 %v4360, %v4556
      %v4658 = vmax.f32 %v4362, %v4558
      %v4659 = vmax.f32 %v4364, %v4560
      %v4660 = vmax.f32 %v4366, %v4562
      %v4661 = vld [vmem:[%s2] sm:$0x1]
      %v4663 = vlaneseq
      %v4664 = vshrl.u32 %v4663, 7
      %v4665 = vsub.s32 0, %v4664
      %v4666 = vrot.slane %v4661, %v4665
      %v4668 = vadd.f32 %v4563, %v4666
      %v4669 = vadd.f32 %v4564, %v4666
      %v4670 = vadd.f32 %v4565, %v4666
      %v4671 = vadd.f32 %v4566, %v4666
      %v4672 = vadd.f32 %v4567, %v4666
      %v4673 = vadd.f32 %v4568, %v4666
      %v4674 = vadd.f32 %v4569, %v4666
      %v4675 = vadd.f32 %v4570, %v4666
      %v4676 = vadd.f32 %v4571, %v4666
      %v4677 = vadd.f32 %v4572, %v4666
      %v4678 = vadd.f32 %v4573, %v4666
      %v4679 = vadd.f32 %v4574, %v4666
      %v4680 = vadd.f32 %v4575, %v4666
      %v4681 = vadd.f32 %v4576, %v4666
      %v4682 = vadd.f32 %v4577, %v4666
      %v4683 = vadd.f32 %v4578, %v4666
      %v4684 = vadd.f32 %v4579, %v4666
      %v4685 = vadd.f32 %v4580, %v4666
      %v4686 = vadd.f32 %v4581, %v4666
      %v4687 = vadd.f32 %v4582, %v4666
      %v4688 = vadd.f32 %v4583, %v4666
      %v4689 = vadd.f32 %v4584, %v4666
      %v4690 = vadd.f32 %v4585, %v4666
      %v4691 = vadd.f32 %v4586, %v4666
      %v4692 = vadd.f32 %v4587, %v4666
      %v4693 = vadd.f32 %v4588, %v4666
      %v4694 = vadd.f32 %v4589, %v4666
      %v4695 = vadd.f32 %v4590, %v4666
      %v4696 = vadd.f32 %v4591, %v4666
      %v4697 = vadd.f32 %v4592, %v4666
      %v4698 = vadd.f32 %v4593, %v4666
      %v4699 = vadd.f32 %v4594, %v4666
      %v4700 = vadd.f32 %v4595, %v4666
      %v4701 = vadd.f32 %v4596, %v4666
      %v4702 = vadd.f32 %v4597, %v4666
      %v4703 = vadd.f32 %v4598, %v4666
      %v4704 = vadd.f32 %v4599, %v4666
      %v4705 = vadd.f32 %v4600, %v4666
      %v4706 = vadd.f32 %v4601, %v4666
      %v4707 = vadd.f32 %v4602, %v4666
      %v4708 = vadd.f32 %v4603, %v4666
      %v4709 = vadd.f32 %v4604, %v4666
      %v4710 = vadd.f32 %v4605, %v4666
      %v4711 = vadd.f32 %v4606, %v4666
      %v4712 = vadd.f32 %v4607, %v4666
      %v4713 = vadd.f32 %v4608, %v4666
      %v4714 = vadd.f32 %v4609, %v4666
      %v4715 = vadd.f32 %v4610, %v4666
      %v4716 = vadd.f32 %v4611, %v4666
      %v4717 = vadd.f32 %v4612, %v4666
      %v4718 = vadd.f32 %v4613, %v4666
      %v4719 = vadd.f32 %v4614, %v4666
      %v4720 = vadd.f32 %v4615, %v4666
      %v4721 = vadd.f32 %v4616, %v4666
      %v4722 = vadd.f32 %v4617, %v4666
      %v4723 = vadd.f32 %v4618, %v4666
      %v4724 = vadd.f32 %v4619, %v4666
      %v4725 = vadd.f32 %v4620, %v4666
      %v4726 = vadd.f32 %v4621, %v4666
      %v4727 = vadd.f32 %v4622, %v4666
      %v4728 = vadd.f32 %v4623, %v4666
      %v4729 = vadd.f32 %v4624, %v4666
      %v4730 = vadd.f32 %v4625, %v4666
      %v4731 = vadd.f32 %v4626, %v4666
      %v4732 = vadd.f32 %v4627, %v4666
      %v4733 = vadd.f32 %v4628, %v4666
      %v4734 = vadd.f32 %v4629, %v4666
      %v4735 = vadd.f32 %v4630, %v4666
      %v4736 = vadd.f32 %v4631, %v4666
      %v4737 = vadd.f32 %v4632, %v4666
      %v4738 = vadd.f32 %v4633, %v4666
      %v4739 = vadd.f32 %v4634, %v4666
      %v4740 = vadd.f32 %v4635, %v4666
      %v4741 = vadd.f32 %v4636, %v4666
      %v4742 = vadd.f32 %v4637, %v4666
      %v4743 = vadd.f32 %v4638, %v4666
      %v4744 = vadd.f32 %v4639, %v4666
      %v4745 = vadd.f32 %v4640, %v4666
      %v4746 = vadd.f32 %v4641, %v4666
      %v4747 = vadd.f32 %v4642, %v4666
      %v4748 = vadd.f32 %v4643, %v4666
      %v4749 = vadd.f32 %v4644, %v4666
      %v4750 = vadd.f32 %v4645, %v4666
      %v4751 = vadd.f32 %v4646, %v4666
      %v4752 = vadd.f32 %v4647, %v4666
      %v4753 = vadd.f32 %v4648, %v4666
      %v4754 = vadd.f32 %v4649, %v4666
      %v4755 = vadd.f32 %v4650, %v4666
      %v4756 = vadd.f32 %v4651, %v4666
      %v4757 = vadd.f32 %v4652, %v4666
      %v4758 = vadd.f32 %v4653, %v4666
      %v4759 = vadd.f32 %v4654, %v4666
      %v4760 = vadd.f32 %v4655, %v4666
      %v4761 = vadd.f32 %v4656, %v4666
      %v4762 = vadd.f32 %v4657, %v4666
      %v4763 = vadd.f32 %v4658, %v4666
      %v4764 = vadd.f32 %v4659, %v4666
      %v4765 = vadd.f32 %v4660, %v4666
      %v4766 = vmax.f32 %v4668, 0.0
      %v4767 = vmax.f32 %v4669, 0.0
      %v4768 = vmax.f32 %v4670, 0.0
      %v4769 = vmax.f32 %v4671, 0.0
      %v4770 = vmax.f32 %v4672, 0.0
      %v4771 = vmax.f32 %v4673, 0.0
      %v4772 = vmax.f32 %v4674, 0.0
      %v4773 = vmax.f32 %v4675, 0.0
      %v4774 = vmax.f32 %v4676, 0.0
      %v4775 = vmax.f32 %v4677, 0.0
      %v4776 = vmax.f32 %v4678, 0.0
      %v4777 = vmax.f32 %v4679, 0.0
      %v4778 = vmax.f32 %v4680, 0.0
      %v4779 = vmax.f32 %v4681, 0.0
      %v4780 = vmax.f32 %v4682, 0.0
      %v4781 = vmax.f32 %v4683, 0.0
      %v4782 = vmax.f32 %v4684, 0.0
      %v4783 = vmax.f32 %v4685, 0.0
      %v4784 = vmax.f32 %v4686, 0.0
      %v4785 = vmax.f32 %v4687, 0.0
      %v4786 = vmax.f32 %v4688, 0.0
      %v4787 = vmax.f32 %v4689, 0.0
      %v4788 = vmax.f32 %v4690, 0.0
      %v4789 = vmax.f32 %v4691, 0.0
      %v4790 = vmax.f32 %v4692, 0.0
      %v4791 = vmax.f32 %v4693, 0.0
      %v4792 = vmax.f32 %v4694, 0.0
      %v4793 = vmax.f32 %v4695, 0.0
      %v4794 = vmax.f32 %v4696, 0.0
      %v4795 = vmax.f32 %v4697, 0.0
      %v4796 = vmax.f32 %v4698, 0.0
      %v4797 = vmax.f32 %v4699, 0.0
      %v4798 = vmax.f32 %v4700, 0.0
      %v4799 = vmax.f32 %v4701, 0.0
      %v4800 = vmax.f32 %v4702, 0.0
      %v4801 = vmax.f32 %v4703, 0.0
      %v4802 = vmax.f32 %v4704, 0.0
      %v4803 = vmax.f32 %v4705, 0.0
      %v4804 = vmax.f32 %v4706, 0.0
      %v4805 = vmax.f32 %v4707, 0.0
      %v4806 = vmax.f32 %v4708, 0.0
      %v4807 = vmax.f32 %v4709, 0.0
      %v4808 = vmax.f32 %v4710, 0.0
      %v4809 = vmax.f32 %v4711, 0.0
      %v4810 = vmax.f32 %v4712, 0.0
      %v4811 = vmax.f32 %v4713, 0.0
      %v4812 = vmax.f32 %v4714, 0.0
      %v4813 = vmax.f32 %v4715, 0.0
      %v4814 = vmax.f32 %v4716, 0.0
      %v4815 = vmax.f32 %v4717, 0.0
      %v4816 = vmax.f32 %v4718, 0.0
      %v4817 = vmax.f32 %v4719, 0.0
      %v4818 = vmax.f32 %v4720, 0.0
      %v4819 = vmax.f32 %v4721, 0.0
      %v4820 = vmax.f32 %v4722, 0.0
      %v4821 = vmax.f32 %v4723, 0.0
      %v4822 = vmax.f32 %v4724, 0.0
      %v4823 = vmax.f32 %v4725, 0.0
      %v4824 = vmax.f32 %v4726, 0.0
      %v4825 = vmax.f32 %v4727, 0.0
      %v4826 = vmax.f32 %v4728, 0.0
      %v4827 = vmax.f32 %v4729, 0.0
      %v4828 = vmax.f32 %v4730, 0.0
      %v4829 = vmax.f32 %v4731, 0.0
      %v4830 = vmax.f32 %v4732, 0.0
      %v4831 = vmax.f32 %v4733, 0.0
      %v4832 = vmax.f32 %v4734, 0.0
      %v4833 = vmax.f32 %v4735, 0.0
      %v4834 = vmax.f32 %v4736, 0.0
      %v4835 = vmax.f32 %v4737, 0.0
      %v4836 = vmax.f32 %v4738, 0.0
      %v4837 = vmax.f32 %v4739, 0.0
      %v4838 = vmax.f32 %v4740, 0.0
      %v4839 = vmax.f32 %v4741, 0.0
      %v4840 = vmax.f32 %v4742, 0.0
      %v4841 = vmax.f32 %v4743, 0.0
      %v4842 = vmax.f32 %v4744, 0.0
      %v4843 = vmax.f32 %v4745, 0.0
      %v4844 = vmax.f32 %v4746, 0.0
      %v4845 = vmax.f32 %v4747, 0.0
      %v4846 = vmax.f32 %v4748, 0.0
      %v4847 = vmax.f32 %v4749, 0.0
      %v4848 = vmax.f32 %v4750, 0.0
      %v4849 = vmax.f32 %v4751, 0.0
      %v4850 = vmax.f32 %v4752, 0.0
      %v4851 = vmax.f32 %v4753, 0.0
      %v4852 = vmax.f32 %v4754, 0.0
      %v4853 = vmax.f32 %v4755, 0.0
      %v4854 = vmax.f32 %v4756, 0.0
      %v4855 = vmax.f32 %v4757, 0.0
      %v4856 = vmax.f32 %v4758, 0.0
      %v4857 = vmax.f32 %v4759, 0.0
      %v4858 = vmax.f32 %v4760, 0.0
      %v4859 = vmax.f32 %v4761, 0.0
      %v4860 = vmax.f32 %v4762, 0.0
      %v4861 = vmax.f32 %v4763, 0.0
      %v4862 = vmax.f32 %v4764, 0.0
      %v4863 = vmax.f32 %v4765, 0.0
      %4864 = vst.msk [vmem:[%s170] sm:$0xff] %vm3975, %v4766
      %4865 = vst.msk [vmem:[%s170 + $0x8] sm:$0xff] %vm3975, %v4767
      %4866 = vst.msk [vmem:[%s170 + $0x10] sm:$0xff] %vm3975, %v4768
      %4867 = vst.msk [vmem:[%s170 + $0x18] sm:$0xff] %vm3975, %v4769
      %4868 = vst.msk [vmem:[%s170 + $0x20] sm:$0xff] %vm3975, %v4770
      %4869 = vst.msk [vmem:[%s170 + $0x28] sm:$0xff] %vm3975, %v4771
      %4870 = vst.msk [vmem:[%s170 + $0x30] sm:$0xff] %vm3975, %v4772
      %4871 = vst.msk [vmem:[%s170 + $0x38] sm:$0xff] %vm3975, %v4773
      %4872 = vst.msk [vmem:[%s170 + $0x40] sm:$0xff] %vm3975, %v4774
      %4873 = vst.msk [vmem:[%s170 + $0x48] sm:$0xff] %vm3975, %v4775
      %4874 = vst.msk [vmem:[%s170 + $0x50] sm:$0xff] %vm3975, %v4776
      %4875 = vst.msk [vmem:[%s170 + $0x58] sm:$0xff] %vm3975, %v4777
      %4876 = vst.msk [vmem:[%s170 + $0x60] sm:$0xff] %vm3975, %v4778
      %4877 = vst.msk [vmem:[%s170 + $0x68] sm:$0xff] %vm3975, %v4779
      %4878 = vst.msk [vmem:[%s170 + $0x70] sm:$0xff] %vm3975, %v4780
      %4879 = vst.msk [vmem:[%s170 + $0x78] sm:$0xff] %vm3975, %v4781
      %4880 = vst.msk [vmem:[%s170 + $0x80] sm:$0xff] %vm3975, %v4782
      %4881 = vst.msk [vmem:[%s170 + $0x88] sm:$0xff] %vm3975, %v4783
      %4882 = vst.msk [vmem:[%s170 + $0x90] sm:$0xff] %vm3975, %v4784
      %4883 = vst.msk [vmem:[%s170 + $0x98] sm:$0xff] %vm3975, %v4785
      %4884 = vst.msk [vmem:[%s170 + $0xa0] sm:$0xff] %vm3975, %v4786
      %4885 = vst.msk [vmem:[%s170 + $0xa8] sm:$0xff] %vm3975, %v4787
      %4886 = vst.msk [vmem:[%s170 + $0xb0] sm:$0xff] %vm3975, %v4788
      %4887 = vst.msk [vmem:[%s170 + $0xb8] sm:$0xff] %vm3975, %v4789
      %4888 = vst.msk [vmem:[%s170 + $0xc0] sm:$0xff] %vm3975, %v4790
      %4889 = vst.msk [vmem:[%s170 + $0xc8] sm:$0xff] %vm3975, %v4791
      %4890 = vst.msk [vmem:[%s170 + $0xd0] sm:$0xff] %vm3975, %v4792
      %4891 = vst.msk [vmem:[%s170 + $0xd8] sm:$0xff] %vm3975, %v4793
      %4892 = vst.msk [vmem:[%s170 + $0xe0] sm:$0xff] %vm3975, %v4794
      %4893 = vst.msk [vmem:[%s170 + $0xe8] sm:$0xff] %vm3975, %v4795
      %4894 = vst.msk [vmem:[%s170 + $0xf0] sm:$0xff] %vm3975, %v4796
      %4895 = vst.msk [vmem:[%s170 + $0xf8] sm:$0xff] %vm3975, %v4797
      %4896 = vst.msk [vmem:[%s170 + $0x100] sm:$0xff] %vm3975, %v4798
      %4897 = vst.msk [vmem:[%s170 + $0x108] sm:$0xff] %vm3975, %v4799
      %4898 = vst.msk [vmem:[%s170 + $0x110] sm:$0xff] %vm3975, %v4800
      %4899 = vst.msk [vmem:[%s170 + $0x118] sm:$0xff] %vm3975, %v4801
      %4900 = vst.msk [vmem:[%s170 + $0x120] sm:$0xff] %vm3975, %v4802
      %4901 = vst.msk [vmem:[%s170 + $0x128] sm:$0xff] %vm3975, %v4803
      %4902 = vst.msk [vmem:[%s170 + $0x130] sm:$0xff] %vm3975, %v4804
      %4903 = vst.msk [vmem:[%s170 + $0x138] sm:$0xff] %vm3975, %v4805
      %4904 = vst.msk [vmem:[%s170 + $0x140] sm:$0xff] %vm3975, %v4806
      %4905 = vst.msk [vmem:[%s170 + $0x148] sm:$0xff] %vm3975, %v4807
      %4906 = vst.msk [vmem:[%s170 + $0x150] sm:$0xff] %vm3975, %v4808
      %4907 = vst.msk [vmem:[%s170 + $0x158] sm:$0xff] %vm3975, %v4809
      %4908 = vst.msk [vmem:[%s170 + $0x160] sm:$0xff] %vm3975, %v4810
      %4909 = vst.msk [vmem:[%s170 + $0x168] sm:$0xff] %vm3975, %v4811
      %4910 = vst.msk [vmem:[%s170 + $0x170] sm:$0xff] %vm3975, %v4812
      %4911 = vst.msk [vmem:[%s170 + $0x178] sm:$0xff] %vm3975, %v4813
      %4912 = vst.msk [vmem:[%s170 + $0x180] sm:$0xff] %vm3975, %v4814
      %4913 = vst.msk [vmem:[%s170 + $0x188] sm:$0xff] %vm3975, %v4815
      %4914 = vst.msk [vmem:[%s170 + $0x190] sm:$0xff] %vm3975, %v4816
      %4915 = vst.msk [vmem:[%s170 + $0x198] sm:$0xff] %vm3975, %v4817
      %4916 = vst.msk [vmem:[%s170 + $0x1a0] sm:$0xff] %vm3975, %v4818
      %4917 = vst.msk [vmem:[%s170 + $0x1a8] sm:$0xff] %vm3975, %v4819
      %4918 = vst.msk [vmem:[%s170 + $0x1b0] sm:$0xff] %vm3975, %v4820
      %4919 = vst.msk [vmem:[%s170 + $0x1b8] sm:$0xff] %vm3975, %v4821
      %4920 = vst.msk [vmem:[%s170 + $0x1c0] sm:$0xff] %vm3975, %v4822
      %4921 = vst.msk [vmem:[%s170 + $0x1c8] sm:$0xff] %vm3975, %v4823
      %4922 = vst.msk [vmem:[%s170 + $0x1d0] sm:$0xff] %vm3975, %v4824
      %4923 = vst.msk [vmem:[%s170 + $0x1d8] sm:$0xff] %vm3975, %v4825
      %4924 = vst.msk [vmem:[%s170 + $0x1e0] sm:$0xff] %vm3975, %v4826
      %4925 = vst.msk [vmem:[%s170 + $0x1e8] sm:$0xff] %vm3975, %v4827
      %4926 = vst.msk [vmem:[%s170 + $0x1f0] sm:$0xff] %vm3975, %v4828
      %4927 = vst.msk [vmem:[%s170 + $0x1f8] sm:$0xff] %vm3975, %v4829
      %4928 = vst.msk [vmem:[%s170 + $0x200] sm:$0xff] %vm3975, %v4830
      %4929 = vst.msk [vmem:[%s170 + $0x208] sm:$0xff] %vm3975, %v4831
      %4930 = vst.msk [vmem:[%s170 + $0x210] sm:$0xff] %vm3975, %v4832
      %4931 = vst.msk [vmem:[%s170 + $0x218] sm:$0xff] %vm3975, %v4833
      %4932 = vst.msk [vmem:[%s170 + $0x220] sm:$0xff] %vm3975, %v4834
      %4933 = vst.msk [vmem:[%s170 + $0x228] sm:$0xff] %vm3975, %v4835
      %4934 = vst.msk [vmem:[%s170 + $0x230] sm:$0xff] %vm3975, %v4836
      %4935 = vst.msk [vmem:[%s170 + $0x238] sm:$0xff] %vm3975, %v4837
      %4936 = vst.msk [vmem:[%s170 + $0x240] sm:$0xff] %vm3975, %v4838
      %4937 = vst.msk [vmem:[%s170 + $0x248] sm:$0xff] %vm3975, %v4839
      %4938 = vst.msk [vmem:[%s170 + $0x250] sm:$0xff] %vm3975, %v4840
      %4939 = vst.msk [vmem:[%s170 + $0x258] sm:$0xff] %vm3975, %v4841
      %4940 = vst.msk [vmem:[%s170 + $0x260] sm:$0xff] %vm3975, %v4842
      %4941 = vst.msk [vmem:[%s170 + $0x268] sm:$0xff] %vm3975, %v4843
      %4942 = vst.msk [vmem:[%s170 + $0x270] sm:$0xff] %vm3975, %v4844
      %4943 = vst.msk [vmem:[%s170 + $0x278] sm:$0xff] %vm3975, %v4845
      %4944 = vst.msk [vmem:[%s170 + $0x280] sm:$0xff] %vm3975, %v4846
      %4945 = vst.msk [vmem:[%s170 + $0x288] sm:$0xff] %vm3975, %v4847
      %4946 = vst.msk [vmem:[%s170 + $0x290] sm:$0xff] %vm3975, %v4848
      %4947 = vst.msk [vmem:[%s170 + $0x298] sm:$0xff] %vm3975, %v4849
      %4948 = vst.msk [vmem:[%s170 + $0x2a0] sm:$0xff] %vm3975, %v4850
      %4949 = vst.msk [vmem:[%s170 + $0x2a8] sm:$0xff] %vm3975, %v4851
      %4950 = vst.msk [vmem:[%s170 + $0x2b0] sm:$0xff] %vm3975, %v4852
      %4951 = vst.msk [vmem:[%s170 + $0x2b8] sm:$0xff] %vm3975, %v4853
      %4952 = vst.msk [vmem:[%s170 + $0x2c0] sm:$0xff] %vm3975, %v4854
      %4953 = vst.msk [vmem:[%s170 + $0x2c8] sm:$0xff] %vm3975, %v4855
      %4954 = vst.msk [vmem:[%s170 + $0x2d0] sm:$0xff] %vm3975, %v4856
      %4955 = vst.msk [vmem:[%s170 + $0x2d8] sm:$0xff] %vm3975, %v4857
      %4956 = vst.msk [vmem:[%s170 + $0x2e0] sm:$0xff] %vm3975, %v4858
      %4957 = vst.msk [vmem:[%s170 + $0x2e8] sm:$0xff] %vm3975, %v4859
      %4958 = vst.msk [vmem:[%s170 + $0x2f0] sm:$0xff] %vm3975, %v4860
      %4959 = vst.msk [vmem:[%s170 + $0x2f8] sm:$0xff] %vm3975, %v4861
      %4960 = vst.msk [vmem:[%s170 + $0x300] sm:$0xff] %vm3975, %v4862
      %4961 = vst.msk [vmem:[%s170 + $0x308] sm:$0xff] %vm3975, %v4863
      %p4962 = scmp.lt.s32.totalorder %s14, 1
      %s4963 = scalar_select %p4962, %s14, 1
      %s4964 = smul.addr %s4963, 98
      %s4965 = smul.addr %s4964, 8
      %s4966 = scalar_lea.vmem %s3, %s4965
      // Predicated region
      $region33: #{net_forward.4} parent=31 // pred_check
        %p4967 = pneg %p100
      $region34: #{net_forward.4} parent=31 // pred_check_branch
        %4969 = sbr.rel (%p4967) target = $region36
      $region35: #{net_forward.4} parent=31 // pred_region
        _
      $region36: #{net_forward.4} parent=31 // pred_fallthru
        _
    $region32: #{net_forward.4} parent=5 // pred_fallthru
      _
    %p4970 = scmp.le.s32.totalorder 2, %s9
    // Predicated region
    $region37: #{net_forward.4} parent=5 // pred_check
      %p4971 = pneg %p4970
    $region38: #{net_forward.4} parent=5 // pred_check_branch
      %4973 = sbr.rel (%p4971) target = $region40
    $region39: #{net_forward.4} parent=5 // pred_region
      %s4974 = ssub.s32 %s9, 2
      // Predicated region
      $region41: #{net_forward.4} parent=39 // pred_check
        %p4975 = pneg %p106
      $region42: #{net_forward.4} parent=39 // pred_check_branch
        %4977 = sbr.rel (%p4975) target = $region44
      $region43: #{net_forward.4} parent=39 // pred_region
        %p4978 = scmp.lt.s32.totalorder %s15, 1
        %s4979 = scalar_select %p4978, %s15, 1
        %s4980 = smul.addr %s4979, 98
        %s4981 = smul.addr %s4980, 8
        %s4982 = scalar_lea.vmem %s3, %s4981
      $region44: #{net_forward.4} parent=39 // pred_fallthru
        _
    $region40: #{net_forward.4} parent=5 // pred_fallthru
      _
  $region6: #{net_forward.4} parent=0 // loop_footer
    %s13 = sadd.s32 1, %s9
  $region7: #{net_forward.4} parent=0 // loop_footer_branch
    %8 = sbr.rel target = $region3
  $region8: #{net_forward.4} parent=0 // loop_exit
    _

// kernel: net_forward.5
$region0: #{net_forward.5}
  #allocation0 [shape = 'u32[]', space=smem, size = 0x4, offset = 0x4, fixed_abs, tag = 'smem constant byte address 0x4 - core index']
  #allocation1 [shape = 'u32[144,128]{1,0:T(1,128)}', space=vmem, size = 0x12000, scoped, tag = 'internal scratch']
  #allocation2 [shape = 'f32[288,64]{1,0:T(8,128)}', space=vmem, size = 0x24000, scoped, tag = 'scratch operand']
  %s0 = inlined_call_operand.vmem [shape: f32[2,576,400], index: 0, kind: input, shape index: {}]
  %s1 = inlined_call_operand.vmem [shape: f32[400,64], index: 1, kind: input, shape index: {}]
  %s2 = inlined_call_operand.vmem [shape: f32[1,64], index: 2, kind: input, shape index: {}]
  %s3 = inlined_call_operand.vmem [shape: f32[2,144,64], index: 3, kind: output, shape index: {}]
  %s4 = sld [smem:[#allocation0]]
  $region45: #{net_forward.5} parent=0
    _
  %s6 = ssub.s32 1, %s4
  %s7 = scalar_select 0, %s6, %s4
  loop: start=0, step=1, limit=4
  $region2: #{net_forward.5} parent=0 // loop_pre_header
    _
  $region3: #{net_forward.5} parent=0 // loop_header
    %s9 = sphi 0, %s13
    %p10 = scmp.ge.s32.totalorder %s9, 4
    %s19 = sphi 0, %s21
    %s22 = sphi 0, %s19
    %s23 = sphi 0, %s22
    %s39 = sphi 0, %s23
    %s43 = sphi 0, %s43
    %s45 = sphi 0, %s43
    %s46 = sphi 0, %s45
    %s60 = sphi 0, %s46
    %s64 = sphi 0, %s64
    %s66 = sphi 0, %s64
    %s67 = sphi 0, %s66
    %s81 = sphi 0, %s67
    %s87 = sphi 0, %s89
    %s90 = sphi 0, %s87
    %s91 = sphi 0, %s90
    %s107 = sphi 0, %s91
  $region4: #{net_forward.5} parent=0 // loop_header_branch
    %12 = sbr.rel (%p10) target = $region8
  $region5: #{net_forward.5} parent=0 // loop_body
    %s14 = ssub.s32 %s9, 1
    %s15 = ssub.s32 %s9, 2
    %s16 = sadd.s32 %s9, 1
    %s17 = ssub.s32 %s9, %s16
    %p18 = scmp.eq.s32.totalorder %s17, 0
    %s20 = sadd.s32 %s19, 1
    %s21 = scalar_select %p18, %s19, %s20
    %p24 = pneg %p18
    %p25 = scmp.eq.s32.totalorder %s9, 1
    %p26 = por %p24, %p25
    %p27 = scmp.ne.s32.totalorder %s19, %s22
    %p28 = scmp.eq.s32.totalorder %s9, 0
    %p29 = por %p27, %p28
    %p30 = scmp.ne.s32.totalorder %s19, %s22
    %p31 = scmp.eq.s32.totalorder %s14, 1
    %p32 = por %p30, %p31
    %p33 = scmp.ne.s32.totalorder %s22, %s23
    %p34 = scmp.eq.s32.totalorder %s14, 0
    %p35 = por %p33, %p34
    %p36 = scmp.ne.s32.totalorder %s22, %s23
    %p37 = scmp.eq.s32.totalorder %s15, 1
    %p38 = por %p36, %p37
    %p40 = scmp.ne.s32.totalorder %s23, %s39
    %p41 = scmp.eq.s32.totalorder %s15, 0
    %p42 = por %p40, %p41
    %s44 = sadd.s32 %s43, 1
    %p47 = scmp.eq.s32.totalorder %s9, 1
    %p48 = scmp.ne.s32.totalorder %s43, %s45
    %p49 = scmp.eq.s32.totalorder %s9, 0
    %p50 = por %p48, %p49
    %p51 = scmp.ne.s32.totalorder %s43, %s45
    %p52 = scmp.eq.s32.totalorder %s14, 1
    %p53 = por %p51, %p52
    %p54 = scmp.ne.s32.totalorder %s45, %s46
    %p55 = scmp.eq.s32.totalorder %s14, 0
    %p56 = por %p54, %p55
    %p57 = scmp.ne.s32.totalorder %s45, %s46
    %p58 = scmp.eq.s32.totalorder %s15, 1
    %p59 = por %p57, %p58
    %p61 = scmp.ne.s32.totalorder %s46, %s60
    %p62 = scmp.eq.s32.totalorder %s15, 0
    %p63 = por %p61, %p62
    %s65 = sadd.s32 %s64, 1
    %p68 = scmp.eq.s32.totalorder %s9, 1
    %p69 = scmp.ne.s32.totalorder %s64, %s66
    %p70 = scmp.eq.s32.totalorder %s9, 0
    %p71 = por %p69, %p70
    %p72 = scmp.ne.s32.totalorder %s64, %s66
    %p73 = scmp.eq.s32.totalorder %s14, 1
    %p74 = por %p72, %p73
    %p75 = scmp.ne.s32.totalorder %s66, %s67
    %p76 = scmp.eq.s32.totalorder %s14, 0
    %p77 = por %p75, %p76
    %p78 = scmp.ne.s32.totalorder %s66, %s67
    %p79 = scmp.eq.s32.totalorder %s15, 1
    %p80 = por %p78, %p79
    %p82 = scmp.ne.s32.totalorder %s67, %s81
    %p83 = scmp.eq.s32.totalorder %s15, 0
    %p84 = por %p82, %p83
    %s85 = ssub.s32 %s9, %s16
    %p86 = scmp.eq.s32.totalorder %s85, 0
    %s88 = sadd.s32 %s87, 1
    %s89 = scalar_select %p86, %s87, %s88
    %p92 = pneg %p86
    %p93 = scmp.eq.s32.totalorder %s9, 1
    %p94 = por %p92, %p93
    %p95 = scmp.ne.s32.totalorder %s87, %s90
    %p96 = scmp.eq.s32.totalorder %s9, 0
    %p97 = por %p95, %p96
    %p98 = scmp.ne.s32.totalorder %s87, %s90
    %p99 = scmp.eq.s32.totalorder %s14, 1
    %p100 = por %p98, %p99
    %p101 = scmp.ne.s32.totalorder %s90, %s91
    %p102 = scmp.eq.s32.totalorder %s14, 0
    %p103 = por %p101, %p102
    %p104 = scmp.ne.s32.totalorder %s90, %s91
    %p105 = scmp.eq.s32.totalorder %s15, 1
    %p106 = por %p104, %p105
    %p108 = scmp.ne.s32.totalorder %s91, %s107
    %p109 = scmp.eq.s32.totalorder %s15, 0
    %p110 = por %p108, %p109
    %p111 = scmp.le.s32.totalorder 1, %s9
    %p112 = scmp.lt.s32.totalorder %s9, 3
    %p113 = pnand %p111, %p112
    %p114 = pneg %p113
    // Predicated region
    $region9: #{net_forward.5} parent=5 // pred_check
      _
    $region10: #{net_forward.5} parent=5 // pred_check_branch
      %116 = sbr.rel (%p113) target = $region12
    $region11: #{net_forward.5} parent=5 // pred_region
      %s117 = ssub.s32 %s9, 1
      // Predicated region
      $region13: #{net_forward.5} parent=11 // pred_check
        %p118 = pneg %p56
      $region14: #{net_forward.5} parent=11 // pred_check_branch
        %120 = sbr.rel (%p118) target = $region16
      $region15: #{net_forward.5} parent=11 // pred_region
        _
      $region16: #{net_forward.5} parent=11 // pred_fallthru
        _
      // Predicated region
      $region17: #{net_forward.5} parent=11 // pred_check
        %p121 = pneg %p77
      $region18: #{net_forward.5} parent=11 // pred_check_branch
        %123 = sbr.rel (%p121) target = $region20
      $region19: #{net_forward.5} parent=11 // pred_region
        _
      $region20: #{net_forward.5} parent=11 // pred_fallthru
        _
    $region12: #{net_forward.5} parent=5 // pred_fallthru
      _
    %p124 = scmp.lt.s32.totalorder %s9, 2
    // Predicated region
    $region21: #{net_forward.5} parent=5 // pred_check
      %p125 = pneg %p124
    $region22: #{net_forward.5} parent=5 // pred_check_branch
      %127 = sbr.rel (%p125) target = $region24
    $region23: #{net_forward.5} parent=5 // pred_region
      // Predicated region
      $region25: #{net_forward.5} parent=23 // pred_check
        %p128 = pneg %p29
      $region26: #{net_forward.5} parent=23 // pred_check_branch
        %130 = sbr.rel (%p128) target = $region28
      $region27: #{net_forward.5} parent=23 // pred_region
        %p131 = scmp.lt.s32.totalorder %s9, 1
        %s132 = scalar_select %p131, %s9, 1
        %s133 = smul.addr %s132, 288
        %s134 = smul.addr %s133, 8
        %s135 = scalar_lea.vmem %s0, %s134
      $region28: #{net_forward.5} parent=23 // pred_fallthru
        _
    $region24: #{net_forward.5} parent=5 // pred_fallthru
      _
    %p136 = scmp.le.s32.totalorder 1, %s9
    %p137 = scmp.lt.s32.totalorder %s9, 3
    %p138 = pnand %p136, %p137
    %p139 = pneg %p138
    // Predicated region
    $region29: #{net_forward.5} parent=5 // pred_check
      _
    $region30: #{net_forward.5} parent=5 // pred_check_branch
      %141 = sbr.rel (%p138) target = $region32
    $region31: #{net_forward.5} parent=5 // pred_region
      %s142 = ssub.s32 %s9, 1
      %p143 = scmp.lt.s32.totalorder %s14, 1
      %s144 = scalar_select %p143, %s14, 1
      %s145 = smul.addr %s144, 288
      %s146 = smul.addr %s145, 8
      %s147 = scalar_lea.vmem %s0, %s146
      %p148 = pneg %p35
      %p149 = pneg %p32
      %p150 = pneg %p56
      %p151 = pneg %p53
      %p152 = pneg %p77
      %p153 = pneg %p74
      %p154 = pneg %p103
      %p155 = pneg %p100
      %p156 = scmp.lt.s32.totalorder %s14, 1
      %s157 = scalar_select %p156, %s14, 1
      %s158 = smul.addr %s157, 18
      %s159 = smul.addr %s158, 8
      %s160 = scalar_lea.vmem %s3, %s159
      %p161 = scmp.lt.s32.totalorder %s14, 1
      %s162 = scalar_select %p161, %s14, 1
      %s163 = smul.addr %s162, 288
      %s164 = smul.addr %s163, 8
      %s165 = scalar_lea.vmem %s0, %s164
      %p166 = scmp.lt.s32.totalorder %s14, 1
      %s167 = scalar_select %p166, %s14, 1
      %s168 = smul.addr %s167, 18
      %s169 = smul.addr %s168, 8
      %s170 = scalar_lea.vmem %s3, %s169
      %v171 = vld [vmem:[%s165] sm:$0xff]
      %v172 = vld [vmem:[%s165 + $0x8] sm:$0xff]
      %v173 = vld [vmem:[%s165 + $0x10] sm:$0xff]
      %v174 = vld [vmem:[%s165 + $0x18] sm:$0xff]
      %v175 = vld [vmem:[%s165 + $0x20] sm:$0xff]
      %v176 = vld [vmem:[%s165 + $0x28] sm:$0xff]
      %v177 = vld [vmem:[%s165 + $0x30] sm:$0xff]
      %v178 = vld [vmem:[%s165 + $0x38] sm:$0xff]
      %v179 = vld [vmem:[%s165 + $0x40] sm:$0xff]
      %v180 = vld [vmem:[%s165 + $0x48] sm:$0xff]
      %v181 = vld [vmem:[%s165 + $0x50] sm:$0xff]
      %v182 = vld [vmem:[%s165 + $0x58] sm:$0xff]
      %v183 = vld [vmem:[%s165 + $0x60] sm:$0xff]
      %v184 = vld [vmem:[%s165 + $0x68] sm:$0xff]
      %v185 = vld [vmem:[%s165 + $0x70] sm:$0xff]
      %v186 = vld [vmem:[%s165 + $0x78] sm:$0xff]
      %v187 = vld [vmem:[%s165 + $0x80] sm:$0xff]
      %v188 = vld [vmem:[%s165 + $0x88] sm:$0xff]
      %v189 = vld [vmem:[%s165 + $0x90] sm:$0xff]
      %v190 = vld [vmem:[%s165 + $0x98] sm:$0xff]
      %v191 = vld [vmem:[%s165 + $0xa0] sm:$0xff]
      %v192 = vld [vmem:[%s165 + $0xa8] sm:$0xff]
      %v193 = vld [vmem:[%s165 + $0xb0] sm:$0xff]
      %v194 = vld [vmem:[%s165 + $0xb8] sm:$0xff]
      %v195 = vld [vmem:[%s165 + $0xc0] sm:$0xff]
      %v196 = vld [vmem:[%s165 + $0xc8] sm:$0xff]
      %v197 = vld [vmem:[%s165 + $0xd0] sm:$0xff]
      %v198 = vld [vmem:[%s165 + $0xd8] sm:$0xff]
      %v199 = vld [vmem:[%s165 + $0xe0] sm:$0xff]
      %v200 = vld [vmem:[%s165 + $0xe8] sm:$0xff]
      %v201 = vld [vmem:[%s165 + $0xf0] sm:$0xff]
      %v202 = vld [vmem:[%s165 + $0xf8] sm:$0xff]
      %v203 = vld [vmem:[%s165 + $0x100] sm:$0xff]
      %v204 = vld [vmem:[%s165 + $0x108] sm:$0xff]
      %v205 = vld [vmem:[%s165 + $0x110] sm:$0xff]
      %v206 = vld [vmem:[%s165 + $0x118] sm:$0xff]
      %v207 = vld [vmem:[%s165 + $0x120] sm:$0xff]
      %v208 = vld [vmem:[%s165 + $0x128] sm:$0xff]
      %v209 = vld [vmem:[%s165 + $0x130] sm:$0xff]
      %v210 = vld [vmem:[%s165 + $0x138] sm:$0xff]
      %v211 = vld [vmem:[%s165 + $0x140] sm:$0xff]
      %v212 = vld [vmem:[%s165 + $0x148] sm:$0xff]
      %v213 = vld [vmem:[%s165 + $0x150] sm:$0xff]
      %v214 = vld [vmem:[%s165 + $0x158] sm:$0xff]
      %v215 = vld [vmem:[%s165 + $0x160] sm:$0xff]
      %v216 = vld [vmem:[%s165 + $0x168] sm:$0xff]
      %v217 = vld [vmem:[%s165 + $0x170] sm:$0xff]
      %v218 = vld [vmem:[%s165 + $0x178] sm:$0xff]
      %v219 = vld [vmem:[%s165 + $0x180] sm:$0xff]
      %v220 = vld [vmem:[%s165 + $0x188] sm:$0xff]
      %v221 = vld [vmem:[%s165 + $0x190] sm:$0xff]
      %v222 = vld [vmem:[%s165 + $0x198] sm:$0xff]
      %v223 = vld [vmem:[%s165 + $0x1a0] sm:$0xff]
      %v224 = vld [vmem:[%s165 + $0x1a8] sm:$0xff]
      %v225 = vld [vmem:[%s165 + $0x1b0] sm:$0xff]
      %v226 = vld [vmem:[%s165 + $0x1b8] sm:$0xff]
      %v227 = vld [vmem:[%s165 + $0x1c0] sm:$0xff]
      %v228 = vld [vmem:[%s165 + $0x1c8] sm:$0xff]
      %v229 = vld [vmem:[%s165 + $0x1d0] sm:$0xff]
      %v230 = vld [vmem:[%s165 + $0x1d8] sm:$0xff]
      %v231 = vld [vmem:[%s165 + $0x1e0] sm:$0xff]
      %v232 = vld [vmem:[%s165 + $0x1e8] sm:$0xff]
      %v233 = vld [vmem:[%s165 + $0x1f0] sm:$0xff]
      %v234 = vld [vmem:[%s165 + $0x1f8] sm:$0xff]
      %v235 = vld [vmem:[%s165 + $0x200] sm:$0xff]
      %v236 = vld [vmem:[%s165 + $0x208] sm:$0xff]
      %v237 = vld [vmem:[%s165 + $0x210] sm:$0xff]
      %v238 = vld [vmem:[%s165 + $0x218] sm:$0xff]
      %v239 = vld [vmem:[%s165 + $0x220] sm:$0xff]
      %v240 = vld [vmem:[%s165 + $0x228] sm:$0xff]
      %v241 = vld [vmem:[%s165 + $0x230] sm:$0xff]
      %v242 = vld [vmem:[%s165 + $0x238] sm:$0xff]
      %v243 = vld [vmem:[%s165 + $0x240] sm:$0xff]
      %v244 = vld [vmem:[%s165 + $0x248] sm:$0xff]
      %v245 = vld [vmem:[%s165 + $0x250] sm:$0xff]
      %v246 = vld [vmem:[%s165 + $0x258] sm:$0xff]
      %v247 = vld [vmem:[%s165 + $0x260] sm:$0xff]
      %v248 = vld [vmem:[%s165 + $0x268] sm:$0xff]
      %v249 = vld [vmem:[%s165 + $0x270] sm:$0xff]
      %v250 = vld [vmem:[%s165 + $0x278] sm:$0xff]
      %v251 = vld [vmem:[%s165 + $0x280] sm:$0xff]
      %v252 = vld [vmem:[%s165 + $0x288] sm:$0xff]
      %v253 = vld [vmem:[%s165 + $0x290] sm:$0xff]
      %v254 = vld [vmem:[%s165 + $0x298] sm:$0xff]
      %v255 = vld [vmem:[%s165 + $0x2a0] sm:$0xff]
      %v256 = vld [vmem:[%s165 + $0x2a8] sm:$0xff]
      %v257 = vld [vmem:[%s165 + $0x2b0] sm:$0xff]
      %v258 = vld [vmem:[%s165 + $0x2b8] sm:$0xff]
      %v259 = vld [vmem:[%s165 + $0x2c0] sm:$0xff]
      %v260 = vld [vmem:[%s165 + $0x2c8] sm:$0xff]
      %v261 = vld [vmem:[%s165 + $0x2d0] sm:$0xff]
      %v262 = vld [vmem:[%s165 + $0x2d8] sm:$0xff]
      %v263 = vld [vmem:[%s165 + $0x2e0] sm:$0xff]
      %v264 = vld [vmem:[%s165 + $0x2e8] sm:$0xff]
      %v265 = vld [vmem:[%s165 + $0x2f0] sm:$0xff]
      %v266 = vld [vmem:[%s165 + $0x2f8] sm:$0xff]
      %v267 = vld [vmem:[%s165 + $0x300] sm:$0xff]
      %v268 = vld [vmem:[%s165 + $0x308] sm:$0xff]
      %v269 = vld [vmem:[%s165 + $0x310] sm:$0xff]
      %v270 = vld [vmem:[%s165 + $0x318] sm:$0xff]
      %v271 = vld [vmem:[%s165 + $0x320] sm:$0xff]
      %v272 = vld [vmem:[%s165 + $0x328] sm:$0xff]
      %v273 = vld [vmem:[%s165 + $0x330] sm:$0xff]
      %v274 = vld [vmem:[%s165 + $0x338] sm:$0xff]
      %v275 = vld [vmem:[%s165 + $0x340] sm:$0xff]
      %v276 = vld [vmem:[%s165 + $0x348] sm:$0xff]
      %v277 = vld [vmem:[%s165 + $0x350] sm:$0xff]
      %v278 = vld [vmem:[%s165 + $0x358] sm:$0xff]
      %v279 = vld [vmem:[%s165 + $0x360] sm:$0xff]
      %v280 = vld [vmem:[%s165 + $0x368] sm:$0xff]
      %v281 = vld [vmem:[%s165 + $0x370] sm:$0xff]
      %v282 = vld [vmem:[%s165 + $0x378] sm:$0xff]
      %v283 = vld [vmem:[%s165 + $0x380] sm:$0xff]
      %v284 = vld [vmem:[%s165 + $0x388] sm:$0xff]
      %v285 = vld [vmem:[%s165 + $0x390] sm:$0xff]
      %v286 = vld [vmem:[%s165 + $0x398] sm:$0xff]
      %v287 = vld [vmem:[%s165 + $0x3a0] sm:$0xff]
      %v288 = vld [vmem:[%s165 + $0x3a8] sm:$0xff]
      %v289 = vld [vmem:[%s165 + $0x3b0] sm:$0xff]
      %v290 = vld [vmem:[%s165 + $0x3b8] sm:$0xff]
      %v291 = vld [vmem:[%s165 + $0x3c0] sm:$0xff]
      %v292 = vld [vmem:[%s165 + $0x3c8] sm:$0xff]
      %v293 = vld [vmem:[%s165 + $0x3d0] sm:$0xff]
      %v294 = vld [vmem:[%s165 + $0x3d8] sm:$0xff]
      %v295 = vld [vmem:[%s165 + $0x3e0] sm:$0xff]
      %v296 = vld [vmem:[%s165 + $0x3e8] sm:$0xff]
      %v297 = vld [vmem:[%s165 + $0x3f0] sm:$0xff]
      %v298 = vld [vmem:[%s165 + $0x3f8] sm:$0xff]
      %v299 = vld [vmem:[%s165 + $0x400] sm:$0xff]
      %v300 = vld [vmem:[%s165 + $0x408] sm:$0xff]
      %v301 = vld [vmem:[%s165 + $0x410] sm:$0xff]
      %v302 = vld [vmem:[%s165 + $0x418] sm:$0xff]
      %v303 = vld [vmem:[%s165 + $0x420] sm:$0xff]
      %v304 = vld [vmem:[%s165 + $0x428] sm:$0xff]
      %v305 = vld [vmem:[%s165 + $0x430] sm:$0xff]
      %v306 = vld [vmem:[%s165 + $0x438] sm:$0xff]
      %v307 = vld [vmem:[%s165 + $0x440] sm:$0xff]
      %v308 = vld [vmem:[%s165 + $0x448] sm:$0xff]
      %v309 = vld [vmem:[%s165 + $0x450] sm:$0xff]
      %v310 = vld [vmem:[%s165 + $0x458] sm:$0xff]
      %v311 = vld [vmem:[%s165 + $0x460] sm:$0xff]
      %v312 = vld [vmem:[%s165 + $0x468] sm:$0xff]
      %v313 = vld [vmem:[%s165 + $0x470] sm:$0xff]
      %v314 = vld [vmem:[%s165 + $0x478] sm:$0xff]
      %v315 = vld [vmem:[%s165 + $0x480] sm:$0xff]
      %v316 = vld [vmem:[%s165 + $0x488] sm:$0xff]
      %v317 = vld [vmem:[%s165 + $0x490] sm:$0xff]
      %v318 = vld [vmem:[%s165 + $0x498] sm:$0xff]
      %v319 = vld [vmem:[%s165 + $0x4a0] sm:$0xff]
      %v320 = vld [vmem:[%s165 + $0x4a8] sm:$0xff]
      %v321 = vld [vmem:[%s165 + $0x4b0] sm:$0xff]
      %v322 = vld [vmem:[%s165 + $0x4b8] sm:$0xff]
      %v323 = vld [vmem:[%s165 + $0x4c0] sm:$0xff]
      %v324 = vld [vmem:[%s165 + $0x4c8] sm:$0xff]
      %v325 = vld [vmem:[%s165 + $0x4d0] sm:$0xff]
      %v326 = vld [vmem:[%s165 + $0x4d8] sm:$0xff]
      %v327 = vld [vmem:[%s165 + $0x4e0] sm:$0xff]
      %v328 = vld [vmem:[%s165 + $0x4e8] sm:$0xff]
      %v329 = vld [vmem:[%s165 + $0x4f0] sm:$0xff]
      %v330 = vld [vmem:[%s165 + $0x4f8] sm:$0xff]
      %v331 = vld [vmem:[%s165 + $0x500] sm:$0xff]
      %v332 = vld [vmem:[%s165 + $0x508] sm:$0xff]
      %v333 = vld [vmem:[%s165 + $0x510] sm:$0xff]
      %v334 = vld [vmem:[%s165 + $0x518] sm:$0xff]
      %v335 = vld [vmem:[%s165 + $0x520] sm:$0xff]
      %v336 = vld [vmem:[%s165 + $0x528] sm:$0xff]
      %v337 = vld [vmem:[%s165 + $0x530] sm:$0xff]
      %v338 = vld [vmem:[%s165 + $0x538] sm:$0xff]
      %v339 = vld [vmem:[%s165 + $0x540] sm:$0xff]
      %v340 = vld [vmem:[%s165 + $0x548] sm:$0xff]
      %v341 = vld [vmem:[%s165 + $0x550] sm:$0xff]
      %v342 = vld [vmem:[%s165 + $0x558] sm:$0xff]
      %v343 = vld [vmem:[%s165 + $0x560] sm:$0xff]
      %v344 = vld [vmem:[%s165 + $0x568] sm:$0xff]
      %v345 = vld [vmem:[%s165 + $0x570] sm:$0xff]
      %v346 = vld [vmem:[%s165 + $0x578] sm:$0xff]
      %v347 = vld [vmem:[%s165 + $0x580] sm:$0xff]
      %v348 = vld [vmem:[%s165 + $0x588] sm:$0xff]
      %v349 = vld [vmem:[%s165 + $0x590] sm:$0xff]
      %v350 = vld [vmem:[%s165 + $0x598] sm:$0xff]
      %v351 = vld [vmem:[%s165 + $0x5a0] sm:$0xff]
      %v352 = vld [vmem:[%s165 + $0x5a8] sm:$0xff]
      %v353 = vld [vmem:[%s165 + $0x5b0] sm:$0xff]
      %v354 = vld [vmem:[%s165 + $0x5b8] sm:$0xff]
      %v355 = vld [vmem:[%s165 + $0x5c0] sm:$0xff]
      %v356 = vld [vmem:[%s165 + $0x5c8] sm:$0xff]
      %v357 = vld [vmem:[%s165 + $0x5d0] sm:$0xff]
      %v358 = vld [vmem:[%s165 + $0x5d8] sm:$0xff]
      %v359 = vld [vmem:[%s165 + $0x5e0] sm:$0xff]
      %v360 = vld [vmem:[%s165 + $0x5e8] sm:$0xff]
      %v361 = vld [vmem:[%s165 + $0x5f0] sm:$0xff]
      %v362 = vld [vmem:[%s165 + $0x5f8] sm:$0xff]
      %v363 = vld [vmem:[%s165 + $0x600] sm:$0xff]
      %v364 = vld [vmem:[%s165 + $0x608] sm:$0xff]
      %v365 = vld [vmem:[%s165 + $0x610] sm:$0xff]
      %v366 = vld [vmem:[%s165 + $0x618] sm:$0xff]
      %v367 = vld [vmem:[%s165 + $0x620] sm:$0xff]
      %v368 = vld [vmem:[%s165 + $0x628] sm:$0xff]
      %v369 = vld [vmem:[%s165 + $0x630] sm:$0xff]
      %v370 = vld [vmem:[%s165 + $0x638] sm:$0xff]
      %v371 = vld [vmem:[%s165 + $0x640] sm:$0xff]
      %v372 = vld [vmem:[%s165 + $0x648] sm:$0xff]
      %v373 = vld [vmem:[%s165 + $0x650] sm:$0xff]
      %v374 = vld [vmem:[%s165 + $0x658] sm:$0xff]
      %v375 = vld [vmem:[%s165 + $0x660] sm:$0xff]
      %v376 = vld [vmem:[%s165 + $0x668] sm:$0xff]
      %v377 = vld [vmem:[%s165 + $0x670] sm:$0xff]
      %v378 = vld [vmem:[%s165 + $0x678] sm:$0xff]
      %v379 = vld [vmem:[%s165 + $0x680] sm:$0xff]
      %v380 = vld [vmem:[%s165 + $0x688] sm:$0xff]
      %v381 = vld [vmem:[%s165 + $0x690] sm:$0xff]
      %v382 = vld [vmem:[%s165 + $0x698] sm:$0xff]
      %v383 = vld [vmem:[%s165 + $0x6a0] sm:$0xff]
      %v384 = vld [vmem:[%s165 + $0x6a8] sm:$0xff]
      %v385 = vld [vmem:[%s165 + $0x6b0] sm:$0xff]
      %v386 = vld [vmem:[%s165 + $0x6b8] sm:$0xff]
      %v387 = vld [vmem:[%s165 + $0x6c0] sm:$0xff]
      %v388 = vld [vmem:[%s165 + $0x6c8] sm:$0xff]
      %v389 = vld [vmem:[%s165 + $0x6d0] sm:$0xff]
      %v390 = vld [vmem:[%s165 + $0x6d8] sm:$0xff]
      %v391 = vld [vmem:[%s165 + $0x6e0] sm:$0xff]
      %v392 = vld [vmem:[%s165 + $0x6e8] sm:$0xff]
      %v393 = vld [vmem:[%s165 + $0x6f0] sm:$0xff]
      %v394 = vld [vmem:[%s165 + $0x6f8] sm:$0xff]
      %v395 = vld [vmem:[%s165 + $0x700] sm:$0xff]
      %v396 = vld [vmem:[%s165 + $0x708] sm:$0xff]
      %v397 = vld [vmem:[%s165 + $0x710] sm:$0xff]
      %v398 = vld [vmem:[%s165 + $0x718] sm:$0xff]
      %v399 = vld [vmem:[%s165 + $0x720] sm:$0xff]
      %v400 = vld [vmem:[%s165 + $0x728] sm:$0xff]
      %v401 = vld [vmem:[%s165 + $0x730] sm:$0xff]
      %v402 = vld [vmem:[%s165 + $0x738] sm:$0xff]
      %v403 = vld [vmem:[%s165 + $0x740] sm:$0xff]
      %v404 = vld [vmem:[%s165 + $0x748] sm:$0xff]
      %v405 = vld [vmem:[%s165 + $0x750] sm:$0xff]
      %v406 = vld [vmem:[%s165 + $0x758] sm:$0xff]
      %v407 = vld [vmem:[%s165 + $0x760] sm:$0xff]
      %v408 = vld [vmem:[%s165 + $0x768] sm:$0xff]
      %v409 = vld [vmem:[%s165 + $0x770] sm:$0xff]
      %v410 = vld [vmem:[%s165 + $0x778] sm:$0xff]
      %v411 = vld [vmem:[%s165 + $0x780] sm:$0xff]
      %v412 = vld [vmem:[%s165 + $0x788] sm:$0xff]
      %v413 = vld [vmem:[%s165 + $0x790] sm:$0xff]
      %v414 = vld [vmem:[%s165 + $0x798] sm:$0xff]
      %v415 = vld [vmem:[%s165 + $0x7a0] sm:$0xff]
      %v416 = vld [vmem:[%s165 + $0x7a8] sm:$0xff]
      %v417 = vld [vmem:[%s165 + $0x7b0] sm:$0xff]
      %v418 = vld [vmem:[%s165 + $0x7b8] sm:$0xff]
      %v419 = vld [vmem:[%s165 + $0x7c0] sm:$0xff]
      %v420 = vld [vmem:[%s165 + $0x7c8] sm:$0xff]
      %v421 = vld [vmem:[%s165 + $0x7d0] sm:$0xff]
      %v422 = vld [vmem:[%s165 + $0x7d8] sm:$0xff]
      %v423 = vld [vmem:[%s165 + $0x7e0] sm:$0xff]
      %v424 = vld [vmem:[%s165 + $0x7e8] sm:$0xff]
      %v425 = vld [vmem:[%s165 + $0x7f0] sm:$0xff]
      %v426 = vld [vmem:[%s165 + $0x7f8] sm:$0xff]
      %v427 = vld [vmem:[%s165 + $0x800] sm:$0xff]
      %v428 = vld [vmem:[%s165 + $0x808] sm:$0xff]
      %v429 = vld [vmem:[%s165 + $0x810] sm:$0xff]
      %v430 = vld [vmem:[%s165 + $0x818] sm:$0xff]
      %v431 = vld [vmem:[%s165 + $0x820] sm:$0xff]
      %v432 = vld [vmem:[%s165 + $0x828] sm:$0xff]
      %v433 = vld [vmem:[%s165 + $0x830] sm:$0xff]
      %v434 = vld [vmem:[%s165 + $0x838] sm:$0xff]
      %v435 = vld [vmem:[%s165 + $0x840] sm:$0xff]
      %v436 = vld [vmem:[%s165 + $0x848] sm:$0xff]
      %v437 = vld [vmem:[%s165 + $0x850] sm:$0xff]
      %v438 = vld [vmem:[%s165 + $0x858] sm:$0xff]
      %v439 = vld [vmem:[%s165 + $0x860] sm:$0xff]
      %v440 = vld [vmem:[%s165 + $0x868] sm:$0xff]
      %v441 = vld [vmem:[%s165 + $0x870] sm:$0xff]
      %v442 = vld [vmem:[%s165 + $0x878] sm:$0xff]
      %v443 = vld [vmem:[%s165 + $0x880] sm:$0xff]
      %v444 = vld [vmem:[%s165 + $0x888] sm:$0xff]
      %v445 = vld [vmem:[%s165 + $0x890] sm:$0xff]
      %v446 = vld [vmem:[%s165 + $0x898] sm:$0xff]
      %v447 = vld [vmem:[%s165 + $0x8a0] sm:$0xff]
      %v448 = vld [vmem:[%s165 + $0x8a8] sm:$0xff]
      %v449 = vld [vmem:[%s165 + $0x8b0] sm:$0xff]
      %v450 = vld [vmem:[%s165 + $0x8b8] sm:$0xff]
      %v451 = vld [vmem:[%s165 + $0x8c0] sm:$0xff]
      %v452 = vld [vmem:[%s165 + $0x8c8] sm:$0xff]
      %v453 = vld [vmem:[%s165 + $0x8d0] sm:$0xff]
      %v454 = vld [vmem:[%s165 + $0x8d8] sm:$0xff]
      %v455 = vld [vmem:[%s165 + $0x8e0] sm:$0xff]
      %v456 = vld [vmem:[%s165 + $0x8e8] sm:$0xff]
      %v457 = vld [vmem:[%s165 + $0x8f0] sm:$0xff]
      %v458 = vld [vmem:[%s165 + $0x8f8] sm:$0xff]
      %v459 = vld [vmem:[%s1] sm:$0xff]
      %v460 = vld [vmem:[%s1 + $0x8] sm:$0xff]
      %v461 = vld [vmem:[%s1 + $0x10] sm:$0xff]
      %v462 = vld [vmem:[%s1 + $0x18] sm:$0xff]
      %v463 = vld [vmem:[%s1 + $0x20] sm:$0xff]
      %v464 = vld [vmem:[%s1 + $0x28] sm:$0xff]
      %v465 = vld [vmem:[%s1 + $0x30] sm:$0xff]
      %v466 = vld [vmem:[%s1 + $0x38] sm:$0xff]
      %v467 = vld [vmem:[%s1 + $0x40] sm:$0xff]
      %v468 = vld [vmem:[%s1 + $0x48] sm:$0xff]
      %v469 = vld [vmem:[%s1 + $0x50] sm:$0xff]
      %v470 = vld [vmem:[%s1 + $0x58] sm:$0xff]
      %v471 = vld [vmem:[%s1 + $0x60] sm:$0xff]
      %v472 = vld [vmem:[%s1 + $0x68] sm:$0xff]
      %v473 = vld [vmem:[%s1 + $0x70] sm:$0xff]
      %v474 = vld [vmem:[%s1 + $0x78] sm:$0xff]
      %v475 = vld [vmem:[%s1 + $0x80] sm:$0xff]
      %v476 = vld [vmem:[%s1 + $0x88] sm:$0xff]
      %v477 = vld [vmem:[%s1 + $0x90] sm:$0xff]
      %v478 = vld [vmem:[%s1 + $0x98] sm:$0xff]
      %v479 = vld [vmem:[%s1 + $0xa0] sm:$0xff]
      %v480 = vld [vmem:[%s1 + $0xa8] sm:$0xff]
      %v481 = vld [vmem:[%s1 + $0xb0] sm:$0xff]
      %v482 = vld [vmem:[%s1 + $0xb8] sm:$0xff]
      %v483 = vld [vmem:[%s1 + $0xc0] sm:$0xff]
      %v484 = vld [vmem:[%s1 + $0xc8] sm:$0xff]
      %v485 = vld [vmem:[%s1 + $0xd0] sm:$0xff]
      %v486 = vld [vmem:[%s1 + $0xd8] sm:$0xff]
      %v487 = vld [vmem:[%s1 + $0xe0] sm:$0xff]
      %v488 = vld [vmem:[%s1 + $0xe8] sm:$0xff]
      %v489 = vld [vmem:[%s1 + $0xf0] sm:$0xff]
      %v490 = vld [vmem:[%s1 + $0xf8] sm:$0xff]
      %v491 = vld [vmem:[%s1 + $0x100] sm:$0xff]
      %v492 = vld [vmem:[%s1 + $0x108] sm:$0xff]
      %v493 = vld [vmem:[%s1 + $0x110] sm:$0xff]
      %v494 = vld [vmem:[%s1 + $0x118] sm:$0xff]
      %v495 = vld [vmem:[%s1 + $0x120] sm:$0xff]
      %v496 = vld [vmem:[%s1 + $0x128] sm:$0xff]
      %v497 = vld [vmem:[%s1 + $0x130] sm:$0xff]
      %v498 = vld [vmem:[%s1 + $0x138] sm:$0xff]
      %v499 = vld [vmem:[%s1 + $0x140] sm:$0xff]
      %v500 = vld [vmem:[%s1 + $0x148] sm:$0xff]
      %v501 = vld [vmem:[%s1 + $0x150] sm:$0xff]
      %v502 = vld [vmem:[%s1 + $0x158] sm:$0xff]
      %v503 = vld [vmem:[%s1 + $0x160] sm:$0xff]
      %v504 = vld [vmem:[%s1 + $0x168] sm:$0xff]
      %v505 = vld [vmem:[%s1 + $0x170] sm:$0xff]
      %v506 = vld [vmem:[%s1 + $0x178] sm:$0xff]
      %v507 = vld [vmem:[%s1 + $0x180] sm:$0xff]
      %v508 = vld [vmem:[%s1 + $0x188] sm:$0xff]
      %vm509 = vcmask 130048
      %v511 = vsel %vm509, %v174, 0
      %v514 = vsel %vm509, %v178, 0
      %v517 = vsel %vm509, %v182, 0
      %v520 = vsel %vm509, %v186, 0
      %v523 = vsel %vm509, %v190, 0
      %v526 = vsel %vm509, %v194, 0
      %v529 = vsel %vm509, %v198, 0
      %v532 = vsel %vm509, %v202, 0
      %v535 = vsel %vm509, %v206, 0
      %v538 = vsel %vm509, %v210, 0
      %v541 = vsel %vm509, %v214, 0
      %v544 = vsel %vm509, %v218, 0
      %v547 = vsel %vm509, %v222, 0
      %v550 = vsel %vm509, %v226, 0
      %v553 = vsel %vm509, %v230, 0
      %v556 = vsel %vm509, %v234, 0
      %v559 = vsel %vm509, %v238, 0
      %v562 = vsel %vm509, %v242, 0
      %v565 = vsel %vm509, %v246, 0
      %v568 = vsel %vm509, %v250, 0
      %v571 = vsel %vm509, %v254, 0
      %v574 = vsel %vm509, %v258, 0
      %v577 = vsel %vm509, %v262, 0
      %v580 = vsel %vm509, %v266, 0
      %v583 = vsel %vm509, %v270, 0
      %v586 = vsel %vm509, %v274, 0
      %v589 = vsel %vm509, %v278, 0
      %v592 = vsel %vm509, %v282, 0
      %v595 = vsel %vm509, %v286, 0
      %v598 = vsel %vm509, %v290, 0
      %v601 = vsel %vm509, %v294, 0
      %v604 = vsel %vm509, %v298, 0
      %v607 = vsel %vm509, %v302, 0
      %v610 = vsel %vm509, %v306, 0
      %v613 = vsel %vm509, %v310, 0
      %v616 = vsel %vm509, %v314, 0
      %v619 = vsel %vm509, %v318, 0
      %v622 = vsel %vm509, %v322, 0
      %v625 = vsel %vm509, %v326, 0
      %v628 = vsel %vm509, %v330, 0
      %v631 = vsel %vm509, %v334, 0
      %v634 = vsel %vm509, %v338, 0
      %v637 = vsel %vm509, %v342, 0
      %v640 = vsel %vm509, %v346, 0
      %v643 = vsel %vm509, %v350, 0
      %v646 = vsel %vm509, %v354, 0
      %v649 = vsel %vm509, %v358, 0
      %v652 = vsel %vm509, %v362, 0
      %v655 = vsel %vm509, %v366, 0
      %v658 = vsel %vm509, %v370, 0
      %v661 = vsel %vm509, %v374, 0
      %v664 = vsel %vm509, %v378, 0
      %v667 = vsel %vm509, %v382, 0
      %v670 = vsel %vm509, %v386, 0
      %v673 = vsel %vm509, %v390, 0
      %v676 = vsel %vm509, %v394, 0
      %v679 = vsel %vm509, %v398, 0
      %v682 = vsel %vm509, %v402, 0
      %v685 = vsel %vm509, %v406, 0
      %v688 = vsel %vm509, %v410, 0
      %v691 = vsel %vm509, %v414, 0
      %v694 = vsel %vm509, %v418, 0
      %v697 = vsel %vm509, %v422, 0
      %v700 = vsel %vm509, %v426, 0
      %v703 = vsel %vm509, %v430, 0
      %v706 = vsel %vm509, %v434, 0
      %v709 = vsel %vm509, %v438, 0
      %v712 = vsel %vm509, %v442, 0
      %v715 = vsel %vm509, %v446, 0
      %v718 = vsel %vm509, %v450, 0
      %v721 = vsel %vm509, %v454, 0
      %v724 = vsel %vm509, %v458, 0
      %726 = vmatprep.subr.mxu0 0.0
      %727 = vmatpush1.msra.mxu0 %v459
      %728 = vmatprep.subr.mxu0 0.0
      %729 = vmatpush1.msra.mxu0 %v460
      %730 = vmatprep.subr.mxu0 0.0
      %731 = vmatpush1.msra.mxu0 %v461
      %732 = vmatprep.subr.mxu0 0.0
      %733 = vmatpush1.msra.mxu0 %v462
      %734 = vmatprep.subr.mxu0 0.0
      %735 = vmatpush1.msra.mxu0 %v463
      %736 = vmatprep.subr.mxu0 0.0
      %737 = vmatpush1.msra.mxu0 %v464
      %738 = vmatprep.subr.mxu0 0.0
      %739 = vmatpush1.msra.mxu0 %v465
      %740 = vmatprep.subr.mxu0 0.0
      %741 = vmatpush1.msra.mxu0 %v466
      %742 = vmatprep.subr.mxu0 0.0
      %743 = vmatpush1.msra.mxu0 %v467
      %744 = vmatprep.subr.mxu0 0.0
      %745 = vmatpush1.msra.mxu0 %v468
      %746 = vmatprep.subr.mxu0 0.0
      %747 = vmatpush1.msra.mxu0 %v469
      %748 = vmatprep.subr.mxu0 0.0
      %749 = vmatpush1.msra.mxu0 %v470
      %750 = vmatprep.subr.mxu0 0.0
      %751 = vmatpush1.msra.mxu0 %v471
      %752 = vmatprep.subr.mxu0 0.0
      %753 = vmatpush1.msra.mxu0 %v472
      %754 = vmatprep.subr.mxu0 0.0
      %755 = vmatpush1.msra.mxu0 %v473
      %756 = vmatprep.subr.mxu0 0.0
      %757 = vmatpush1.msra.mxu0 %v474
      %758 = vmatprep.subr.mxu0 0.0
      %759 = vmatpush1.msra.mxu0 %v475
      %760 = vmatprep.subr.mxu0 0.0
      %761 = vmatpush1.msra.mxu0 %v476
      %762 = vmatprep.subr.mxu0 0.0
      %763 = vmatpush1.msra.mxu0 %v477
      %764 = vmatprep.subr.mxu0 0.0
      %765 = vmatpush1.msra.mxu0 %v478
      %766 = vmatprep.subr.mxu0 0.0
      %767 = vmatpush1.msra.mxu0 %v479
      %768 = vmatprep.subr.mxu0 0.0
      %769 = vmatpush1.msra.mxu0 %v480
      %770 = vmatprep.subr.mxu0 0.0
      %771 = vmatpush1.msra.mxu0 %v481
      %772 = vmatprep.subr.mxu0 0.0
      %773 = vmatpush1.msra.mxu0 %v482
      %774 = vmatprep.subr.mxu0 0.0
      %775 = vmatpush1.msra.mxu0 %v483
      %776 = vmatprep.subr.mxu0 0.0
      %777 = vmatpush1.msra.mxu0 %v484
      %778 = vmatprep.subr.mxu0 0.0
      %779 = vmatpush1.msra.mxu0 %v485
      %780 = vmatprep.subr.mxu0 0.0
      %781 = vmatpush1.msra.mxu0 %v486
      %782 = vmatprep.subr.mxu0 0.0
      %783 = vmatpush1.msra.mxu0 %v487
      %784 = vmatprep.subr.mxu0 0.0
      %785 = vmatpush1.msra.mxu0 %v488
      %786 = vmatprep.subr.mxu0 0.0
      %787 = vmatpush1.msra.mxu0 %v489
      %788 = vmatprep.subr.mxu0 0.0
      %789 = vmatpush1.msra.mxu0 %v490
      %790 = vmatprep.mubr.f32.mxu0 %v172
      %791 = vmatmul.mubr.f32.gmra.mrb[0].mxu0 %v171
      %v792 = vpop.f32.mrb[0].mxu0
      %v793 = vadd.f32 0.0, %v792
      %v794 = vpop.f32.mrb[0].mxu0
      %795 = vmatprep.mubr.f32.mxu0 %v176
      %796 = vmatmul.mubr.f32.gmra.mrb[0].mxu0 %v175
      %v797 = vpop.f32.mrb[0].mxu0
      %v798 = vadd.f32 0.0, %v797
      %v799 = vpop.f32.mrb[0].mxu0
      %800 = vmatprep.mubr.f32.mxu0 %v180
      %801 = vmatmul.mubr.f32.gmra.mrb[0].mxu0 %v179
      %v802 = vpop.f32.mrb[0].mxu0
      %v803 = vadd.f32 0.0, %v802
      %v804 = vpop.f32.mrb[0].mxu0
      %805 = vmatprep.mubr.f32.mxu0 %v184
      %806 = vmatmul.mubr.f32.gmra.mrb[0].mxu0 %v183
      %v807 = vpop.f32.mrb[0].mxu0
      %v808 = vadd.f32 0.0, %v807
      %v809 = vpop.f32.mrb[0].mxu0
      %810 = vmatprep.mubr.f32.mxu0 %v188
      %811 = vmatmul.mubr.f32.gmra.mrb[0].mxu0 %v187
      %v812 = vpop.f32.mrb[0].mxu0
      %v813 = vadd.f32 0.0, %v812
      %v814 = vpop.f32.mrb[0].mxu0
      %815 = vmatprep.mubr.f32.mxu0 %v192
      %816 = vmatmul.mubr.f32.gmra.mrb[0].mxu0 %v191
      %v817 = vpop.f32.mrb[0].mxu0
      %v818 = vadd.f32 0.0, %v817
      %v819 = vpop.f32.mrb[0].mxu0
      %820 = vmatprep.mubr.f32.mxu0 %v196
      %821 = vmatmul.mubr.f32.gmra.mrb[0].mxu0 %v195
      %v822 = vpop.f32.mrb[0].mxu0
      %v823 = vadd.f32 0.0, %v822
      %v824 = vpop.f32.mrb[0].mxu0
      %825 = vmatprep.mubr.f32.mxu0 %v200
      %826 = vmatmul.mubr.f32.gmra.mrb[0].mxu0 %v199
      %v827 = vpop.f32.mrb[0].mxu0
      %v828 = vadd.f32 0.0, %v827
      %v829 = vpop.f32.mrb[0].mxu0
      %830 = vmatprep.mubr.f32.mxu0 %v204
      %831 = vmatmul.mubr.f32.gmra.mrb[0].mxu0 %v203
      %v832 = vpop.f32.mrb[0].mxu0
      %v833 = vadd.f32 0.0, %v832
      %v834 = vpop.f32.mrb[0].mxu0
      %835 = vmatprep.mubr.f32.mxu0 %v208
      %836 = vmatmul.mubr.f32.gmra.mrb[0].mxu0 %v207
      %v837 = vpop.f32.mrb[0].mxu0
      %v838 = vadd.f32 0.0, %v837
      %v839 = vpop.f32.mrb[0].mxu0
      %840 = vmatprep.mubr.f32.mxu0 %v212
      %841 = vmatmul.mubr.f32.gmra.mrb[0].mxu0 %v211
      %v842 = vpop.f32.mrb[0].mxu0
      %v843 = vadd.f32 0.0, %v842
      %v844 = vpop.f32.mrb[0].mxu0
      %845 = vmatprep.mubr.f32.mxu0 %v216
      %846 = vmatmul.mubr.f32.gmra.mrb[0].mxu0 %v215
      %v847 = vpop.f32.mrb[0].mxu0
      %v848 = vadd.f32 0.0, %v847
      %v849 = vpop.f32.mrb[0].mxu0
      %850 = vmatprep.mubr.f32.mxu0 %v220
      %851 = vmatmul.mubr.f32.gmra.mrb[0].mxu0 %v219
      %v852 = vpop.f32.mrb[0].mxu0
      %v853 = vadd.f32 0.0, %v852
      %v854 = vpop.f32.mrb[0].mxu0
      %855 = vmatprep.mubr.f32.mxu0 %v224
      %856 = vmatmul.mubr.f32.gmra.mrb[0].mxu0 %v223
      %v857 = vpop.f32.mrb[0].mxu0
      %v858 = vadd.f32 0.0, %v857
      %v859 = vpop.f32.mrb[0].mxu0
      %860 = vmatprep.mubr.f32.mxu0 %v228
      %861 = vmatmul.mubr.f32.gmra.mrb[0].mxu0 %v227
      %v862 = vpop.f32.mrb[0].mxu0
      %v863 = vadd.f32 0.0, %v862
      %v864 = vpop.f32.mrb[0].mxu0
      %865 = vmatprep.mubr.f32.mxu0 %v232
      %866 = vmatmul.mubr.f32.gmra.mrb[0].mxu0 %v231
      %v867 = vpop.f32.mrb[0].mxu0
      %v868 = vadd.f32 0.0, %v867
      %v869 = vpop.f32.mrb[0].mxu0
      %870 = vmatprep.mubr.f32.mxu0 %v236
      %871 = vmatmul.mubr.f32.gmra.mrb[0].mxu0 %v235
      %v872 = vpop.f32.mrb[0].mxu0
      %v873 = vadd.f32 0.0, %v872
      %v874 = vpop.f32.mrb[0].mxu0
      %875 = vmatprep.mubr.f32.mxu0 %v240
      %876 = vmatmul.mubr.f32.gmra.mrb[0].mxu0 %v239
      %v877 = vpop.f32.mrb[0].mxu0
      %v878 = vadd.f32 0.0, %v877
      %v879 = vpop.f32.mrb[0].mxu0
      %880 = vmatprep.mubr.f32.mxu0 %v244
      %881 = vmatmul.mubr.f32.gmra.mrb[0].mxu0 %v243
      %v882 = vpop.f32.mrb[0].mxu0
      %v883 = vadd.f32 0.0, %v882
      %v884 = vpop.f32.mrb[0].mxu0
      %885 = vmatprep.mubr.f32.mxu0 %v248
      %886 = vmatmul.mubr.f32.gmra.mrb[0].mxu0 %v247
      %v887 = vpop.f32.mrb[0].mxu0
      %v888 = vadd.f32 0.0, %v887
      %v889 = vpop.f32.mrb[0].mxu0
      %890 = vmatprep.mubr.f32.mxu0 %v252
      %891 = vmatmul.mubr.f32.gmra.mrb[0].mxu0 %v251
      %v892 = vpop.f32.mrb[0].mxu0
      %v893 = vadd.f32 0.0, %v892
      %v894 = vpop.f32.mrb[0].mxu0
      %895 = vmatprep.mubr.f32.mxu0 %v256
      %896 = vmatmul.mubr.f32.gmra.mrb[0].mxu0 %v255
      %v897 = vpop.f32.mrb[0].mxu0
      %v898 = vadd.f32 0.0, %v897
      %v899 = vpop.f32.mrb[0].mxu0
      %900 = vmatprep.mubr.f32.mxu0 %v260
      %901 = vmatmul.mubr.f32.gmra.mrb[0].mxu0 %v259
      %v902 = vpop.f32.mrb[0].mxu0
      %v903 = vadd.f32 0.0, %v902
      %v904 = vpop.f32.mrb[0].mxu0
      %905 = vmatprep.mubr.f32.mxu0 %v264
      %906 = vmatmul.mubr.f32.gmra.mrb[0].mxu0 %v263
      %v907 = vpop.f32.mrb[0].mxu0
      %v908 = vadd.f32 0.0, %v907
      %v909 = vpop.f32.mrb[0].mxu0
      %910 = vmatprep.mubr.f32.mxu0 %v268
      %911 = vmatmul.mubr.f32.gmra.mrb[0].mxu0 %v267
      %v912 = vpop.f32.mrb[0].mxu0
      %v913 = vadd.f32 0.0, %v912
      %v914 = vpop.f32.mrb[0].mxu0
      %915 = vmatprep.mubr.f32.mxu0 %v272
      %916 = vmatmul.mubr.f32.gmra.mrb[0].mxu0 %v271
      %v917 = vpop.f32.mrb[0].mxu0
      %v918 = vadd.f32 0.0, %v917
      %v919 = vpop.f32.mrb[0].mxu0
      %920 = vmatprep.mubr.f32.mxu0 %v276
      %921 = vmatmul.mubr.f32.gmra.mrb[0].mxu0 %v275
      %v922 = vpop.f32.mrb[0].mxu0
      %v923 = vadd.f32 0.0, %v922
      %v924 = vpop.f32.mrb[0].mxu0
      %925 = vmatprep.mubr.f32.mxu0 %v280
      %926 = vmatmul.mubr.f32.gmra.mrb[0].mxu0 %v279
      %v927 = vpop.f32.mrb[0].mxu0
      %v928 = vadd.f32 0.0, %v927
      %v929 = vpop.f32.mrb[0].mxu0
      %930 = vmatprep.mubr.f32.mxu0 %v284
      %931 = vmatmul.mubr.f32.gmra.mrb[0].mxu0 %v283
      %v932 = vpop.f32.mrb[0].mxu0
      %v933 = vadd.f32 0.0, %v932
      %v934 = vpop.f32.mrb[0].mxu0
      %935 = vmatprep.mubr.f32.mxu0 %v288
      %936 = vmatmul.mubr.f32.gmra.mrb[0].mxu0 %v287
      %v937 = vpop.f32.mrb[0].mxu0
      %v938 = vadd.f32 0.0, %v937
      %v939 = vpop.f32.mrb[0].mxu0
      %940 = vmatprep.mubr.f32.mxu0 %v292
      %941 = vmatmul.mubr.f32.gmra.mrb[0].mxu0 %v291
      %v942 = vpop.f32.mrb[0].mxu0
      %v943 = vadd.f32 0.0, %v942
      %v944 = vpop.f32.mrb[0].mxu0
      %945 = vmatprep.mubr.f32.mxu0 %v296
      %946 = vmatmul.mubr.f32.gmra.mrb[0].mxu0 %v295
      %v947 = vpop.f32.mrb[0].mxu0
      %v948 = vadd.f32 0.0, %v947
      %v949 = vpop.f32.mrb[0].mxu0
      %950 = vmatprep.mubr.f32.mxu0 %v300
      %951 = vmatmul.mubr.f32.gmra.mrb[0].mxu0 %v299
      %v952 = vpop.f32.mrb[0].mxu0
      %v953 = vadd.f32 0.0, %v952
      %v954 = vpop.f32.mrb[0].mxu0
      %955 = vmatprep.mubr.f32.mxu0 %v304
      %956 = vmatmul.mubr.f32.gmra.mrb[0].mxu0 %v303
      %v957 = vpop.f32.mrb[0].mxu0
      %v958 = vadd.f32 0.0, %v957
      %v959 = vpop.f32.mrb[0].mxu0
      %960 = vmatprep.mubr.f32.mxu0 %v308
      %961 = vmatmul.mubr.f32.gmra.mrb[0].mxu0 %v307
      %v962 = vpop.f32.mrb[0].mxu0
      %v963 = vadd.f32 0.0, %v962
      %v964 = vpop.f32.mrb[0].mxu0
      %965 = vmatprep.mubr.f32.mxu0 %v312
      %966 = vmatmul.mubr.f32.gmra.mrb[0].mxu0 %v311
      %v967 = vpop.f32.mrb[0].mxu0
      %v968 = vadd.f32 0.0, %v967
      %v969 = vpop.f32.mrb[0].mxu0
      %970 = vmatprep.mubr.f32.mxu0 %v316
      %971 = vmatmul.mubr.f32.gmra.mrb[0].mxu0 %v315
      %v972 = vpop.f32.mrb[0].mxu0
      %v973 = vadd.f32 0.0, %v972
      %v974 = vpop.f32.mrb[0].mxu0
      %975 = vmatprep.mubr.f32.mxu0 %v320
      %976 = vmatmul.mubr.f32.gmra.mrb[0].mxu0 %v319
      %v977 = vpop.f32.mrb[0].mxu0
      %v978 = vadd.f32 0.0, %v977
      %v979 = vpop.f32.mrb[0].mxu0
      %980 = vmatprep.mubr.f32.mxu0 %v324
      %981 = vmatmul.mubr.f32.gmra.mrb[0].mxu0 %v323
      %v982 = vpop.f32.mrb[0].mxu0
      %v983 = vadd.f32 0.0, %v982
      %v984 = vpop.f32.mrb[0].mxu0
      %985 = vmatprep.mubr.f32.mxu0 %v328
      %986 = vmatmul.mubr.f32.gmra.mrb[0].mxu0 %v327
      %v987 = vpop.f32.mrb[0].mxu0
      %v988 = vadd.f32 0.0, %v987
      %v989 = vpop.f32.mrb[0].mxu0
      %990 = vmatprep.mubr.f32.mxu0 %v332
      %991 = vmatmul.mubr.f32.gmra.mrb[0].mxu0 %v331
      %v992 = vpop.f32.mrb[0].mxu0
      %v993 = vadd.f32 0.0, %v992
      %v994 = vpop.f32.mrb[0].mxu0
      %995 = vmatprep.mubr.f32.mxu0 %v336
      %996 = vmatmul.mubr.f32.gmra.mrb[0].mxu0 %v335
      %v997 = vpop.f32.mrb[0].mxu0
      %v998 = vadd.f32 0.0, %v997
      %v999 = vpop.f32.mrb[0].mxu0
      %1000 = vmatprep.mubr.f32.mxu0 %v340
      %1001 = vmatmul.mubr.f32.gmra.mrb[0].mxu0 %v339
      %v1002 = vpop.f32.mrb[0].mxu0
      %v1003 = vadd.f32 0.0, %v1002
      %v1004 = vpop.f32.mrb[0].mxu0
      %1005 = vmatprep.mubr.f32.mxu0 %v344
      %1006 = vmatmul.mubr.f32.gmra.mrb[0].mxu0 %v343
      %v1007 = vpop.f32.mrb[0].mxu0
      %v1008 = vadd.f32 0.0, %v1007
      %v1009 = vpop.f32.mrb[0].mxu0
      %1010 = vmatprep.mubr.f32.mxu0 %v348
      %1011 = vmatmul.mubr.f32.gmra.mrb[0].mxu0 %v347
      %v1012 = vpop.f32.mrb[0].mxu0
      %v1013 = vadd.f32 0.0, %v1012
      %v1014 = vpop.f32.mrb[0].mxu0
      %1015 = vmatprep.mubr.f32.mxu0 %v352
      %1016 = vmatmul.mubr.f32.gmra.mrb[0].mxu0 %v351
      %v1017 = vpop.f32.mrb[0].mxu0
      %v1018 = vadd.f32 0.0, %v1017
      %v1019 = vpop.f32.mrb[0].mxu0
      %1020 = vmatprep.mubr.f32.mxu0 %v356
      %1021 = vmatmul.mubr.f32.gmra.mrb[0].mxu0 %v355
      %v1022 = vpop.f32.mrb[0].mxu0
      %v1023 = vadd.f32 0.0, %v1022
      %v1024 = vpop.f32.mrb[0].mxu0
      %1025 = vmatprep.mubr.f32.mxu0 %v360
      %1026 = vmatmul.mubr.f32.gmra.mrb[0].mxu0 %v359
      %v1027 = vpop.f32.mrb[0].mxu0
      %v1028 = vadd.f32 0.0, %v1027
      %v1029 = vpop.f32.mrb[0].mxu0
      %1030 = vmatprep.mubr.f32.mxu0 %v364
      %1031 = vmatmul.mubr.f32.gmra.mrb[0].mxu0 %v363
      %v1032 = vpop.f32.mrb[0].mxu0
      %v1033 = vadd.f32 0.0, %v1032
      %v1034 = vpop.f32.mrb[0].mxu0
      %1035 = vmatprep.mubr.f32.mxu0 %v368
      %1036 = vmatmul.mubr.f32.gmra.mrb[0].mxu0 %v367
      %v1037 = vpop.f32.mrb[0].mxu0
      %v1038 = vadd.f32 0.0, %v1037
      %v1039 = vpop.f32.mrb[0].mxu0
      %1040 = vmatprep.mubr.f32.mxu0 %v372
      %1041 = vmatmul.mubr.f32.gmra.mrb[0].mxu0 %v371
      %v1042 = vpop.f32.mrb[0].mxu0
      %v1043 = vadd.f32 0.0, %v1042
      %v1044 = vpop.f32.mrb[0].mxu0
      %1045 = vmatprep.mubr.f32.mxu0 %v376
      %1046 = vmatmul.mubr.f32.gmra.mrb[0].mxu0 %v375
      %v1047 = vpop.f32.mrb[0].mxu0
      %v1048 = vadd.f32 0.0, %v1047
      %v1049 = vpop.f32.mrb[0].mxu0
      %1050 = vmatprep.mubr.f32.mxu0 %v380
      %1051 = vmatmul.mubr.f32.gmra.mrb[0].mxu0 %v379
      %v1052 = vpop.f32.mrb[0].mxu0
      %v1053 = vadd.f32 0.0, %v1052
      %v1054 = vpop.f32.mrb[0].mxu0
      %1055 = vmatprep.mubr.f32.mxu0 %v384
      %1056 = vmatmul.mubr.f32.gmra.mrb[0].mxu0 %v383
      %v1057 = vpop.f32.mrb[0].mxu0
      %v1058 = vadd.f32 0.0, %v1057
      %v1059 = vpop.f32.mrb[0].mxu0
      %1060 = vmatprep.mubr.f32.mxu0 %v388
      %1061 = vmatmul.mubr.f32.gmra.mrb[0].mxu0 %v387
      %v1062 = vpop.f32.mrb[0].mxu0
      %v1063 = vadd.f32 0.0, %v1062
      %v1064 = vpop.f32.mrb[0].mxu0
      %1065 = vmatprep.mubr.f32.mxu0 %v392
      %1066 = vmatmul.mubr.f32.gmra.mrb[0].mxu0 %v391
      %v1067 = vpop.f32.mrb[0].mxu0
      %v1068 = vadd.f32 0.0, %v1067
      %v1069 = vpop.f32.mrb[0].mxu0
      %1070 = vmatprep.mubr.f32.mxu0 %v396
      %1071 = vmatmul.mubr.f32.gmra.mrb[0].mxu0 %v395
      %v1072 = vpop.f32.mrb[0].mxu0
      %v1073 = vadd.f32 0.0, %v1072
      %v1074 = vpop.f32.mrb[0].mxu0
      %1075 = vmatprep.mubr.f32.mxu0 %v400
      %1076 = vmatmul.mubr.f32.gmra.mrb[0].mxu0 %v399
      %v1077 = vpop.f32.mrb[0].mxu0
      %v1078 = vadd.f32 0.0, %v1077
      %v1079 = vpop.f32.mrb[0].mxu0
      %1080 = vmatprep.mubr.f32.mxu0 %v404
      %1081 = vmatmul.mubr.f32.gmra.mrb[0].mxu0 %v403
      %v1082 = vpop.f32.mrb[0].mxu0
      %v1083 = vadd.f32 0.0, %v1082
      %v1084 = vpop.f32.mrb[0].mxu0
      %1085 = vmatprep.mubr.f32.mxu0 %v408
      %1086 = vmatmul.mubr.f32.gmra.mrb[0].mxu0 %v407
      %v1087 = vpop.f32.mrb[0].mxu0
      %v1088 = vadd.f32 0.0, %v1087
      %v1089 = vpop.f32.mrb[0].mxu0
      %1090 = vmatprep.mubr.f32.mxu0 %v412
      %1091 = vmatmul.mubr.f32.gmra.mrb[0].mxu0 %v411
      %v1092 = vpop.f32.mrb[0].mxu0
      %v1093 = vadd.f32 0.0, %v1092
      %v1094 = vpop.f32.mrb[0].mxu0
      %1095 = vmatprep.mubr.f32.mxu0 %v416
      %1096 = vmatmul.mubr.f32.gmra.mrb[0].mxu0 %v415
      %v1097 = vpop.f32.mrb[0].mxu0
      %v1098 = vadd.f32 0.0, %v1097
      %v1099 = vpop.f32.mrb[0].mxu0
      %1100 = vmatprep.mubr.f32.mxu0 %v420
      %1101 = vmatmul.mubr.f32.gmra.mrb[0].mxu0 %v419
      %v1102 = vpop.f32.mrb[0].mxu0
      %v1103 = vadd.f32 0.0, %v1102
      %v1104 = vpop.f32.mrb[0].mxu0
      %1105 = vmatprep.mubr.f32.mxu0 %v424
      %1106 = vmatmul.mubr.f32.gmra.mrb[0].mxu0 %v423
      %v1107 = vpop.f32.mrb[0].mxu0
      %v1108 = vadd.f32 0.0, %v1107
      %v1109 = vpop.f32.mrb[0].mxu0
      %1110 = vmatprep.mubr.f32.mxu0 %v428
      %1111 = vmatmul.mubr.f32.gmra.mrb[0].mxu0 %v427
      %v1112 = vpop.f32.mrb[0].mxu0
      %v1113 = vadd.f32 0.0, %v1112
      %v1114 = vpop.f32.mrb[0].mxu0
      %1115 = vmatprep.mubr.f32.mxu0 %v432
      %1116 = vmatmul.mubr.f32.gmra.mrb[0].mxu0 %v431
      %v1117 = vpop.f32.mrb[0].mxu0
      %v1118 = vadd.f32 0.0, %v1117
      %v1119 = vpop.f32.mrb[0].mxu0
      %1120 = vmatprep.mubr.f32.mxu0 %v436
      %1121 = vmatmul.mubr.f32.gmra.mrb[0].mxu0 %v435
      %v1122 = vpop.f32.mrb[0].mxu0
      %v1123 = vadd.f32 0.0, %v1122
      %v1124 = vpop.f32.mrb[0].mxu0
      %1125 = vmatprep.mubr.f32.mxu0 %v440
      %1126 = vmatmul.mubr.f32.gmra.mrb[0].mxu0 %v439
      %v1127 = vpop.f32.mrb[0].mxu0
      %v1128 = vadd.f32 0.0, %v1127
      %v1129 = vpop.f32.mrb[0].mxu0
      %1130 = vmatprep.mubr.f32.mxu0 %v444
      %1131 = vmatmul.mubr.f32.gmra.mrb[0].mxu0 %v443
      %v1132 = vpop.f32.mrb[0].mxu0
      %v1133 = vadd.f32 0.0, %v1132
      %v1134 = vpop.f32.mrb[0].mxu0
      %1135 = vmatprep.mubr.f32.mxu0 %v448
      %1136 = vmatmul.mubr.f32.gmra.mrb[0].mxu0 %v447
      %v1137 = vpop.f32.mrb[0].mxu0
      %v1138 = vadd.f32 0.0, %v1137
      %v1139 = vpop.f32.mrb[0].mxu0
      %1140 = vmatprep.mubr.f32.mxu0 %v452
      %1141 = vmatmul.mubr.f32.gmra.mrb[0].mxu0 %v451
      %v1142 = vpop.f32.mrb[0].mxu0
      %v1143 = vadd.f32 0.0, %v1142
      %v1144 = vpop.f32.mrb[0].mxu0
      %1145 = vmatprep.mubr.f32.mxu0 %v456
      %1146 = vmatmul.mubr.f32.gmra.mrb[0].mxu0 %v455
      %v1147 = vpop.f32.mrb[0].mxu0
      %v1148 = vadd.f32 0.0, %v1147
      %v1149 = vpop.f32.mrb[0].mxu0
      %1150 = vdwg.mxu0
      %1151 = vmatprep.subr.mxu0 0.0
      %1152 = vmatpush1.msra.mxu0 %v491
      %1153 = vmatprep.subr.mxu0 0.0
      %1154 = vmatpush1.msra.mxu0 %v492
      %1155 = vmatprep.subr.mxu0 0.0
      %1156 = vmatpush1.msra.mxu0 %v493
      %1157 = vmatprep.subr.mxu0 0.0
      %1158 = vmatpush1.msra.mxu0 %v494
      %1159 = vmatprep.subr.mxu0 0.0
      %1160 = vmatpush1.msra.mxu0 %v495
      %1161 = vmatprep.subr.mxu0 0.0
      %1162 = vmatpush1.msra.mxu0 %v496
      %1163 = vmatprep.subr.mxu0 0.0
      %1164 = vmatpush1.msra.mxu0 %v497
      %1165 = vmatprep.subr.mxu0 0.0
      %1166 = vmatpush1.msra.mxu0 %v498
      %1167 = vmatprep.subr.mxu0 0.0
      %1168 = vmatpush1.msra.mxu0 %v499
      %1169 = vmatprep.subr.mxu0 0.0
      %1170 = vmatpush1.msra.mxu0 %v500
      %1171 = vmatprep.subr.mxu0 0.0
      %1172 = vmatpush1.msra.mxu0 %v501
      %1173 = vmatprep.subr.mxu0 0.0
      %1174 = vmatpush1.msra.mxu0 %v502
      %1175 = vmatprep.subr.mxu0 0.0
      %1176 = vmatpush1.msra.mxu0 %v503
      %1177 = vmatprep.subr.mxu0 0.0
      %1178 = vmatpush1.msra.mxu0 %v504
      %1179 = vmatprep.subr.mxu0 0.0
      %1180 = vmatpush1.msra.mxu0 %v505
      %1181 = vmatprep.subr.mxu0 0.0
      %1182 = vmatpush1.msra.mxu0 %v506
      %1183 = vmatprep.subr.mxu0 0.0
      %1184 = vmatpush1.msra.mxu0 %v507
      %1185 = vmatprep.subr.mxu0 0.0
      %1186 = vmatpush1.msra.mxu0 %v508
      %1187 = vmatprep.subr.mxu0 0.0
      %1188 = vmatpush1.msra.mxu0 0.0
      %1189 = vmatprep.subr.mxu0 0.0
      %1190 = vmatpush1.msra.mxu0 0.0
      %1191 = vmatprep.subr.mxu0 0.0
      %1192 = vmatpush1.msra.mxu0 0.0
      %1193 = vmatprep.subr.mxu0 0.0
      %1194 = vmatpush1.msra.mxu0 0.0
      %1195 = vmatprep.subr.mxu0 0.0
      %1196 = vmatpush1.msra.mxu0 0.0
      %1197 = vmatprep.subr.mxu0 0.0
      %1198 = vmatpush1.msra.mxu0 0.0
      %1199 = vmatprep.subr.mxu0 0.0
      %1200 = vmatpush1.msra.mxu0 0.0
      %1201 = vmatprep.subr.mxu0 0.0
      %1202 = vmatpush1.msra.mxu0 0.0
      %1203 = vmatprep.subr.mxu0 0.0
      %1204 = vmatpush1.msra.mxu0 0.0
      %1205 = vmatprep.subr.mxu0 0.0
      %1206 = vmatpush1.msra.mxu0 0.0
      %1207 = vmatprep.subr.mxu0 0.0
      %1208 = vmatpush1.msra.mxu0 0.0
      %1209 = vmatprep.subr.mxu0 0.0
      %1210 = vmatpush1.msra.mxu0 0.0
      %1211 = vmatprep.subr.mxu0 0.0
      %1212 = vmatpush1.msra.mxu0 0.0
      %1213 = vmatprep.subr.mxu0 0.0
      %1214 = vmatpush1.msra.mxu0 0.0
      %1215 = vmatprep.mubr.f32.mxu0 %v511
      %1216 = vmatmul.mubr.f32.gmra.mrb[0].mxu0 %v173
      %v1217 = vpop.f32.mrb[0].mxu0
      %v1218 = vadd.f32 %v793, %v1217
      %v1219 = vpop.f32.mrb[0].mxu0
      %1220 = vmatprep.mubr.f32.mxu0 %v514
      %1221 = vmatmul.mubr.f32.gmra.mrb[0].mxu0 %v177
      %v1222 = vpop.f32.mrb[0].mxu0
      %v1223 = vadd.f32 %v798, %v1222
      %v1224 = vpop.f32.mrb[0].mxu0
      %1225 = vmatprep.mubr.f32.mxu0 %v517
      %1226 = vmatmul.mubr.f32.gmra.mrb[0].mxu0 %v181
      %v1227 = vpop.f32.mrb[0].mxu0
      %v1228 = vadd.f32 %v803, %v1227
      %v1229 = vpop.f32.mrb[0].mxu0
      %1230 = vmatprep.mubr.f32.mxu0 %v520
      %1231 = vmatmul.mubr.f32.gmra.mrb[0].mxu0 %v185
      %v1232 = vpop.f32.mrb[0].mxu0
      %v1233 = vadd.f32 %v808, %v1232
      %v1234 = vpop.f32.mrb[0].mxu0
      %1235 = vmatprep.mubr.f32.mxu0 %v523
      %1236 = vmatmul.mubr.f32.gmra.mrb[0].mxu0 %v189
      %v1237 = vpop.f32.mrb[0].mxu0
      %v1238 = vadd.f32 %v813, %v1237
      %v1239 = vpop.f32.mrb[0].mxu0
      %1240 = vmatprep.mubr.f32.mxu0 %v526
      %1241 = vmatmul.mubr.f32.gmra.mrb[0].mxu0 %v193
      %v1242 = vpop.f32.mrb[0].mxu0
      %v1243 = vadd.f32 %v818, %v1242
      %v1244 = vpop.f32.mrb[0].mxu0
      %1245 = vmatprep.mubr.f32.mxu0 %v529
      %1246 = vmatmul.mubr.f32.gmra.mrb[0].mxu0 %v197
      %v1247 = vpop.f32.mrb[0].mxu0
      %v1248 = vadd.f32 %v823, %v1247
      %v1249 = vpop.f32.mrb[0].mxu0
      %1250 = vmatprep.mubr.f32.mxu0 %v532
      %1251 = vmatmul.mubr.f32.gmra.mrb[0].mxu0 %v201
      %v1252 = vpop.f32.mrb[0].mxu0
      %v1253 = vadd.f32 %v828, %v1252
      %v1254 = vpop.f32.mrb[0].mxu0
      %1255 = vmatprep.mubr.f32.mxu0 %v535
      %1256 = vmatmul.mubr.f32.gmra.mrb[0].mxu0 %v205
      %v1257 = vpop.f32.mrb[0].mxu0
      %v1258 = vadd.f32 %v833, %v1257
      %v1259 = vpop.f32.mrb[0].mxu0
      %1260 = vmatprep.mubr.f32.mxu0 %v538
      %1261 = vmatmul.mubr.f32.gmra.mrb[0].mxu0 %v209
      %v1262 = vpop.f32.mrb[0].mxu0
      %v1263 = vadd.f32 %v838, %v1262
      %v1264 = vpop.f32.mrb[0].mxu0
      %1265 = vmatprep.mubr.f32.mxu0 %v541
      %1266 = vmatmul.mubr.f32.gmra.mrb[0].mxu0 %v213
      %v1267 = vpop.f32.mrb[0].mxu0
      %v1268 = vadd.f32 %v843, %v1267
      %v1269 = vpop.f32.mrb[0].mxu0
      %1270 = vmatprep.mubr.f32.mxu0 %v544
      %1271 = vmatmul.mubr.f32.gmra.mrb[0].mxu0 %v217
      %v1272 = vpop.f32.mrb[0].mxu0
      %v1273 = vadd.f32 %v848, %v1272
      %v1274 = vpop.f32.mrb[0].mxu0
      %1275 = vmatprep.mubr.f32.mxu0 %v547
      %1276 = vmatmul.mubr.f32.gmra.mrb[0].mxu0 %v221
      %v1277 = vpop.f32.mrb[0].mxu0
      %v1278 = vadd.f32 %v853, %v1277
      %v1279 = vpop.f32.mrb[0].mxu0
      %1280 = vmatprep.mubr.f32.mxu0 %v550
      %1281 = vmatmul.mubr.f32.gmra.mrb[0].mxu0 %v225
      %v1282 = vpop.f32.mrb[0].mxu0
      %v1283 = vadd.f32 %v858, %v1282
      %v1284 = vpop.f32.mrb[0].mxu0
      %1285 = vmatprep.mubr.f32.mxu0 %v553
      %1286 = vmatmul.mubr.f32.gmra.mrb[0].mxu0 %v229
      %v1287 = vpop.f32.mrb[0].mxu0
      %v1288 = vadd.f32 %v863, %v1287
      %v1289 = vpop.f32.mrb[0].mxu0
      %1290 = vmatprep.mubr.f32.mxu0 %v556
      %1291 = vmatmul.mubr.f32.gmra.mrb[0].mxu0 %v233
      %v1292 = vpop.f32.mrb[0].mxu0
      %v1293 = vadd.f32 %v868, %v1292
      %v1294 = vpop.f32.mrb[0].mxu0
      %1295 = vmatprep.mubr.f32.mxu0 %v559
      %1296 = vmatmul.mubr.f32.gmra.mrb[0].mxu0 %v237
      %v1297 = vpop.f32.mrb[0].mxu0
      %v1298 = vadd.f32 %v873, %v1297
      %v1299 = vpop.f32.mrb[0].mxu0
      %1300 = vmatprep.mubr.f32.mxu0 %v562
      %1301 = vmatmul.mubr.f32.gmra.mrb[0].mxu0 %v241
      %v1302 = vpop.f32.mrb[0].mxu0
      %v1303 = vadd.f32 %v878, %v1302
      %v1304 = vpop.f32.mrb[0].mxu0
      %1305 = vmatprep.mubr.f32.mxu0 %v565
      %1306 = vmatmul.mubr.f32.gmra.mrb[0].mxu0 %v245
      %v1307 = vpop.f32.mrb[0].mxu0
      %v1308 = vadd.f32 %v883, %v1307
      %v1309 = vpop.f32.mrb[0].mxu0
      %1310 = vmatprep.mubr.f32.mxu0 %v568
      %1311 = vmatmul.mubr.f32.gmra.mrb[0].mxu0 %v249
      %v1312 = vpop.f32.mrb[0].mxu0
      %v1313 = vadd.f32 %v888, %v1312
      %v1314 = vpop.f32.mrb[0].mxu0
      %1315 = vmatprep.mubr.f32.mxu0 %v571
      %1316 = vmatmul.mubr.f32.gmra.mrb[0].mxu0 %v253
      %v1317 = vpop.f32.mrb[0].mxu0
      %v1318 = vadd.f32 %v893, %v1317
      %v1319 = vpop.f32.mrb[0].mxu0
      %1320 = vmatprep.mubr.f32.mxu0 %v574
      %1321 = vmatmul.mubr.f32.gmra.mrb[0].mxu0 %v257
      %v1322 = vpop.f32.mrb[0].mxu0
      %v1323 = vadd.f32 %v898, %v1322
      %v1324 = vpop.f32.mrb[0].mxu0
      %1325 = vmatprep.mubr.f32.mxu0 %v577
      %1326 = vmatmul.mubr.f32.gmra.mrb[0].mxu0 %v261
      %v1327 = vpop.f32.mrb[0].mxu0
      %v1328 = vadd.f32 %v903, %v1327
      %v1329 = vpop.f32.mrb[0].mxu0
      %1330 = vmatprep.mubr.f32.mxu0 %v580
      %1331 = vmatmul.mubr.f32.gmra.mrb[0].mxu0 %v265
      %v1332 = vpop.f32.mrb[0].mxu0
      %v1333 = vadd.f32 %v908, %v1332
      %v1334 = vpop.f32.mrb[0].mxu0
      %1335 = vmatprep.mubr.f32.mxu0 %v583
      %1336 = vmatmul.mubr.f32.gmra.mrb[0].mxu0 %v269
      %v1337 = vpop.f32.mrb[0].mxu0
      %v1338 = vadd.f32 %v913, %v1337
      %v1339 = vpop.f32.mrb[0].mxu0
      %1340 = vmatprep.mubr.f32.mxu0 %v586
      %1341 = vmatmul.mubr.f32.gmra.mrb[0].mxu0 %v273
      %v1342 = vpop.f32.mrb[0].mxu0
      %v1343 = vadd.f32 %v918, %v1342
      %v1344 = vpop.f32.mrb[0].mxu0
      %1345 = vmatprep.mubr.f32.mxu0 %v589
      %1346 = vmatmul.mubr.f32.gmra.mrb[0].mxu0 %v277
      %v1347 = vpop.f32.mrb[0].mxu0
      %v1348 = vadd.f32 %v923, %v1347
      %v1349 = vpop.f32.mrb[0].mxu0
      %1350 = vmatprep.mubr.f32.mxu0 %v592
      %1351 = vmatmul.mubr.f32.gmra.mrb[0].mxu0 %v281
      %v1352 = vpop.f32.mrb[0].mxu0
      %v1353 = vadd.f32 %v928, %v1352
      %v1354 = vpop.f32.mrb[0].mxu0
      %1355 = vmatprep.mubr.f32.mxu0 %v595
      %1356 = vmatmul.mubr.f32.gmra.mrb[0].mxu0 %v285
      %v1357 = vpop.f32.mrb[0].mxu0
      %v1358 = vadd.f32 %v933, %v1357
      %v1359 = vpop.f32.mrb[0].mxu0
      %1360 = vmatprep.mubr.f32.mxu0 %v598
      %1361 = vmatmul.mubr.f32.gmra.mrb[0].mxu0 %v289
      %v1362 = vpop.f32.mrb[0].mxu0
      %v1363 = vadd.f32 %v938, %v1362
      %v1364 = vpop.f32.mrb[0].mxu0
      %1365 = vmatprep.mubr.f32.mxu0 %v601
      %1366 = vmatmul.mubr.f32.gmra.mrb[0].mxu0 %v293
      %v1367 = vpop.f32.mrb[0].mxu0
      %v1368 = vadd.f32 %v943, %v1367
      %v1369 = vpop.f32.mrb[0].mxu0
      %1370 = vmatprep.mubr.f32.mxu0 %v604
      %1371 = vmatmul.mubr.f32.gmra.mrb[0].mxu0 %v297
      %v1372 = vpop.f32.mrb[0].mxu0
      %v1373 = vadd.f32 %v948, %v1372
      %v1374 = vpop.f32.mrb[0].mxu0
      %1375 = vmatprep.mubr.f32.mxu0 %v607
      %1376 = vmatmul.mubr.f32.gmra.mrb[0].mxu0 %v301
      %v1377 = vpop.f32.mrb[0].mxu0
      %v1378 = vadd.f32 %v953, %v1377
      %v1379 = vpop.f32.mrb[0].mxu0
      %1380 = vmatprep.mubr.f32.mxu0 %v610
      %1381 = vmatmul.mubr.f32.gmra.mrb[0].mxu0 %v305
      %v1382 = vpop.f32.mrb[0].mxu0
      %v1383 = vadd.f32 %v958, %v1382
      %v1384 = vpop.f32.mrb[0].mxu0
      %1385 = vmatprep.mubr.f32.mxu0 %v613
      %1386 = vmatmul.mubr.f32.gmra.mrb[0].mxu0 %v309
      %v1387 = vpop.f32.mrb[0].mxu0
      %v1388 = vadd.f32 %v963, %v1387
      %v1389 = vpop.f32.mrb[0].mxu0
      %1390 = vmatprep.mubr.f32.mxu0 %v616
      %1391 = vmatmul.mubr.f32.gmra.mrb[0].mxu0 %v313
      %v1392 = vpop.f32.mrb[0].mxu0
      %v1393 = vadd.f32 %v968, %v1392
      %v1394 = vpop.f32.mrb[0].mxu0
      %1395 = vmatprep.mubr.f32.mxu0 %v619
      %1396 = vmatmul.mubr.f32.gmra.mrb[0].mxu0 %v317
      %v1397 = vpop.f32.mrb[0].mxu0
      %v1398 = vadd.f32 %v973, %v1397
      %v1399 = vpop.f32.mrb[0].mxu0
      %1400 = vmatprep.mubr.f32.mxu0 %v622
      %1401 = vmatmul.mubr.f32.gmra.mrb[0].mxu0 %v321
      %v1402 = vpop.f32.mrb[0].mxu0
      %v1403 = vadd.f32 %v978, %v1402
      %v1404 = vpop.f32.mrb[0].mxu0
      %1405 = vmatprep.mubr.f32.mxu0 %v625
      %1406 = vmatmul.mubr.f32.gmra.mrb[0].mxu0 %v325
      %v1407 = vpop.f32.mrb[0].mxu0
      %v1408 = vadd.f32 %v983, %v1407
      %v1409 = vpop.f32.mrb[0].mxu0
      %1410 = vmatprep.mubr.f32.mxu0 %v628
      %1411 = vmatmul.mubr.f32.gmra.mrb[0].mxu0 %v329
      %v1412 = vpop.f32.mrb[0].mxu0
      %v1413 = vadd.f32 %v988, %v1412
      %v1414 = vpop.f32.mrb[0].mxu0
      %1415 = vmatprep.mubr.f32.mxu0 %v631
      %1416 = vmatmul.mubr.f32.gmra.mrb[0].mxu0 %v333
      %v1417 = vpop.f32.mrb[0].mxu0
      %v1418 = vadd.f32 %v993, %v1417
      %v1419 = vpop.f32.mrb[0].mxu0
      %1420 = vmatprep.mubr.f32.mxu0 %v634
      %1421 = vmatmul.mubr.f32.gmra.mrb[0].mxu0 %v337
      %v1422 = vpop.f32.mrb[0].mxu0
      %v1423 = vadd.f32 %v998, %v1422
      %v1424 = vpop.f32.mrb[0].mxu0
      %1425 = vmatprep.mubr.f32.mxu0 %v637
      %1426 = vmatmul.mubr.f32.gmra.mrb[0].mxu0 %v341
      %v1427 = vpop.f32.mrb[0].mxu0
      %v1428 = vadd.f32 %v1003, %v1427
      %v1429 = vpop.f32.mrb[0].mxu0
      %1430 = vmatprep.mubr.f32.mxu0 %v640
      %1431 = vmatmul.mubr.f32.gmra.mrb[0].mxu0 %v345
      %v1432 = vpop.f32.mrb[0].mxu0
      %v1433 = vadd.f32 %v1008, %v1432
      %v1434 = vpop.f32.mrb[0].mxu0
      %1435 = vmatprep.mubr.f32.mxu0 %v643
      %1436 = vmatmul.mubr.f32.gmra.mrb[0].mxu0 %v349
      %v1437 = vpop.f32.mrb[0].mxu0
      %v1438 = vadd.f32 %v1013, %v1437
      %v1439 = vpop.f32.mrb[0].mxu0
      %1440 = vmatprep.mubr.f32.mxu0 %v646
      %1441 = vmatmul.mubr.f32.gmra.mrb[0].mxu0 %v353
      %v1442 = vpop.f32.mrb[0].mxu0
      %v1443 = vadd.f32 %v1018, %v1442
      %v1444 = vpop.f32.mrb[0].mxu0
      %1445 = vmatprep.mubr.f32.mxu0 %v649
      %1446 = vmatmul.mubr.f32.gmra.mrb[0].mxu0 %v357
      %v1447 = vpop.f32.mrb[0].mxu0
      %v1448 = vadd.f32 %v1023, %v1447
      %v1449 = vpop.f32.mrb[0].mxu0
      %1450 = vmatprep.mubr.f32.mxu0 %v652
      %1451 = vmatmul.mubr.f32.gmra.mrb[0].mxu0 %v361
      %v1452 = vpop.f32.mrb[0].mxu0
      %v1453 = vadd.f32 %v1028, %v1452
      %v1454 = vpop.f32.mrb[0].mxu0
      %1455 = vmatprep.mubr.f32.mxu0 %v655
      %1456 = vmatmul.mubr.f32.gmra.mrb[0].mxu0 %v365
      %v1457 = vpop.f32.mrb[0].mxu0
      %v1458 = vadd.f32 %v1033, %v1457
      %v1459 = vpop.f32.mrb[0].mxu0
      %1460 = vmatprep.mubr.f32.mxu0 %v658
      %1461 = vmatmul.mubr.f32.gmra.mrb[0].mxu0 %v369
      %v1462 = vpop.f32.mrb[0].mxu0
      %v1463 = vadd.f32 %v1038, %v1462
      %v1464 = vpop.f32.mrb[0].mxu0
      %1465 = vmatprep.mubr.f32.mxu0 %v661
      %1466 = vmatmul.mubr.f32.gmra.mrb[0].mxu0 %v373
      %v1467 = vpop.f32.mrb[0].mxu0
      %v1468 = vadd.f32 %v1043, %v1467
      %v1469 = vpop.f32.mrb[0].mxu0
      %1470 = vmatprep.mubr.f32.mxu0 %v664
      %1471 = vmatmul.mubr.f32.gmra.mrb[0].mxu0 %v377
      %v1472 = vpop.f32.mrb[0].mxu0
      %v1473 = vadd.f32 %v1048, %v1472
      %v1474 = vpop.f32.mrb[0].mxu0
      %1475 = vmatprep.mubr.f32.mxu0 %v667
      %1476 = vmatmul.mubr.f32.gmra.mrb[0].mxu0 %v381
      %v1477 = vpop.f32.mrb[0].mxu0
      %v1478 = vadd.f32 %v1053, %v1477
      %v1479 = vpop.f32.mrb[0].mxu0
      %1480 = vmatprep.mubr.f32.mxu0 %v670
      %1481 = vmatmul.mubr.f32.gmra.mrb[0].mxu0 %v385
      %v1482 = vpop.f32.mrb[0].mxu0
      %v1483 = vadd.f32 %v1058, %v1482
      %v1484 = vpop.f32.mrb[0].mxu0
      %1485 = vmatprep.mubr.f32.mxu0 %v673
      %1486 = vmatmul.mubr.f32.gmra.mrb[0].mxu0 %v389
      %v1487 = vpop.f32.mrb[0].mxu0
      %v1488 = vadd.f32 %v1063, %v1487
      %v1489 = vpop.f32.mrb[0].mxu0
      %1490 = vmatprep.mubr.f32.mxu0 %v676
      %1491 = vmatmul.mubr.f32.gmra.mrb[0].mxu0 %v393
      %v1492 = vpop.f32.mrb[0].mxu0
      %v1493 = vadd.f32 %v1068, %v1492
      %v1494 = vpop.f32.mrb[0].mxu0
      %1495 = vmatprep.mubr.f32.mxu0 %v679
      %1496 = vmatmul.mubr.f32.gmra.mrb[0].mxu0 %v397
      %v1497 = vpop.f32.mrb[0].mxu0
      %v1498 = vadd.f32 %v1073, %v1497
      %v1499 = vpop.f32.mrb[0].mxu0
      %1500 = vmatprep.mubr.f32.mxu0 %v682
      %1501 = vmatmul.mubr.f32.gmra.mrb[0].mxu0 %v401
      %v1502 = vpop.f32.mrb[0].mxu0
      %v1503 = vadd.f32 %v1078, %v1502
      %v1504 = vpop.f32.mrb[0].mxu0
      %1505 = vmatprep.mubr.f32.mxu0 %v685
      %1506 = vmatmul.mubr.f32.gmra.mrb[0].mxu0 %v405
      %v1507 = vpop.f32.mrb[0].mxu0
      %v1508 = vadd.f32 %v1083, %v1507
      %v1509 = vpop.f32.mrb[0].mxu0
      %1510 = vmatprep.mubr.f32.mxu0 %v688
      %1511 = vmatmul.mubr.f32.gmra.mrb[0].mxu0 %v409
      %v1512 = vpop.f32.mrb[0].mxu0
      %v1513 = vadd.f32 %v1088, %v1512
      %v1514 = vpop.f32.mrb[0].mxu0
      %1515 = vmatprep.mubr.f32.mxu0 %v691
      %1516 = vmatmul.mubr.f32.gmra.mrb[0].mxu0 %v413
      %v1517 = vpop.f32.mrb[0].mxu0
      %v1518 = vadd.f32 %v1093, %v1517
      %v1519 = vpop.f32.mrb[0].mxu0
      %1520 = vmatprep.mubr.f32.mxu0 %v694
      %1521 = vmatmul.mubr.f32.gmra.mrb[0].mxu0 %v417
      %v1522 = vpop.f32.mrb[0].mxu0
      %v1523 = vadd.f32 %v1098, %v1522
      %v1524 = vpop.f32.mrb[0].mxu0
      %1525 = vmatprep.mubr.f32.mxu0 %v697
      %1526 = vmatmul.mubr.f32.gmra.mrb[0].mxu0 %v421
      %v1527 = vpop.f32.mrb[0].mxu0
      %v1528 = vadd.f32 %v1103, %v1527
      %v1529 = vpop.f32.mrb[0].mxu0
      %1530 = vmatprep.mubr.f32.mxu0 %v700
      %1531 = vmatmul.mubr.f32.gmra.mrb[0].mxu0 %v425
      %v1532 = vpop.f32.mrb[0].mxu0
      %v1533 = vadd.f32 %v1108, %v1532
      %v1534 = vpop.f32.mrb[0].mxu0
      %1535 = vmatprep.mubr.f32.mxu0 %v703
      %1536 = vmatmul.mubr.f32.gmra.mrb[0].mxu0 %v429
      %v1537 = vpop.f32.mrb[0].mxu0
      %v1538 = vadd.f32 %v1113, %v1537
      %v1539 = vpop.f32.mrb[0].mxu0
      %1540 = vmatprep.mubr.f32.mxu0 %v706
      %1541 = vmatmul.mubr.f32.gmra.mrb[0].mxu0 %v433
      %v1542 = vpop.f32.mrb[0].mxu0
      %v1543 = vadd.f32 %v1118, %v1542
      %v1544 = vpop.f32.mrb[0].mxu0
      %1545 = vmatprep.mubr.f32.mxu0 %v709
      %1546 = vmatmul.mubr.f32.gmra.mrb[0].mxu0 %v437
      %v1547 = vpop.f32.mrb[0].mxu0
      %v1548 = vadd.f32 %v1123, %v1547
      %v1549 = vpop.f32.mrb[0].mxu0
      %1550 = vmatprep.mubr.f32.mxu0 %v712
      %1551 = vmatmul.mubr.f32.gmra.mrb[0].mxu0 %v441
      %v1552 = vpop.f32.mrb[0].mxu0
      %v1553 = vadd.f32 %v1128, %v1552
      %v1554 = vpop.f32.mrb[0].mxu0
      %1555 = vmatprep.mubr.f32.mxu0 %v715
      %1556 = vmatmul.mubr.f32.gmra.mrb[0].mxu0 %v445
      %v1557 = vpop.f32.mrb[0].mxu0
      %v1558 = vadd.f32 %v1133, %v1557
      %v1559 = vpop.f32.mrb[0].mxu0
      %1560 = vmatprep.mubr.f32.mxu0 %v718
      %1561 = vmatmul.mubr.f32.gmra.mrb[0].mxu0 %v449
      %v1562 = vpop.f32.mrb[0].mxu0
      %v1563 = vadd.f32 %v1138, %v1562
      %v1564 = vpop.f32.mrb[0].mxu0
      %1565 = vmatprep.mubr.f32.mxu0 %v721
      %1566 = vmatmul.mubr.f32.gmra.mrb[0].mxu0 %v453
      %v1567 = vpop.f32.mrb[0].mxu0
      %v1568 = vadd.f32 %v1143, %v1567
      %v1569 = vpop.f32.mrb[0].mxu0
      %1570 = vmatprep.mubr.f32.mxu0 %v724
      %1571 = vmatmul.mubr.f32.gmra.mrb[0].mxu0 %v457
      %v1572 = vpop.f32.mrb[0].mxu0
      %v1573 = vadd.f32 %v1148, %v1572
      %v1574 = vpop.f32.mrb[0].mxu0
      %1575 = vdwg.mxu0
      %v1576 = vmax.f32 %v1218, %v1233
      %v1577 = vmax.f32 %v1223, %v1238
      %v1578 = vmax.f32 %v1228, %v1243
      %v1579 = vmax.f32 %v1248, %v1263
      %v1580 = vmax.f32 %v1253, %v1268
      %v1581 = vmax.f32 %v1258, %v1273
      %v1582 = vmax.f32 %v1278, %v1293
      %v1583 = vmax.f32 %v1283, %v1298
      %v1584 = vmax.f32 %v1288, %v1303
      %v1585 = vmax.f32 %v1308, %v1323
      %v1586 = vmax.f32 %v1313, %v1328
      %v1587 = vmax.f32 %v1318, %v1333
      %v1588 = vmax.f32 %v1338, %v1353
      %v1589 = vmax.f32 %v1343, %v1358
      %v1590 = vmax.f32 %v1348, %v1363
      %v1591 = vmax.f32 %v1368, %v1383
      %v1592 = vmax.f32 %v1373, %v1388
      %v1593 = vmax.f32 %v1378, %v1393
      %v1594 = vmax.f32 %v1398, %v1413
      %v1595 = vmax.f32 %v1403, %v1418
      %v1596 = vmax.f32 %v1408, %v1423
      %v1597 = vmax.f32 %v1428, %v1443
      %v1598 = vmax.f32 %v1433, %v1448
      %v1599 = vmax.f32 %v1438, %v1453
      %v1600 = vmax.f32 %v1458, %v1473
      %v1601 = vmax.f32 %v1463, %v1478
      %v1602 = vmax.f32 %v1468, %v1483
      %v1603 = vmax.f32 %v1488, %v1503
      %v1604 = vmax.f32 %v1493, %v1508
      %v1605 = vmax.f32 %v1498, %v1513
      %v1606 = vmax.f32 %v1518, %v1533
      %v1607 = vmax.f32 %v1523, %v1538
      %v1608 = vmax.f32 %v1528, %v1543
      %v1609 = vmax.f32 %v1548, %v1563
      %v1610 = vmax.f32 %v1553, %v1568
      %v1611 = vmax.f32 %v1558, %v1573
      %vm1612 = vcmask 523264
      %1613 = vst.msk [vmem:[#allocation2] sm:$0xff] %vm1612, %v1576
      %1614 = vst.msk [vmem:[#allocation2 + $0x8] sm:$0xff] %vm1612, %v1577
      %1615 = vst.msk [vmem:[#allocation2 + $0x10] sm:$0xff] %vm1612, %v1578
      %1616 = vst.msk [vmem:[#allocation2 + $0x18] sm:$0xff] %vm1612, %v1579
      %1617 = vst.msk [vmem:[#allocation2 + $0x20] sm:$0xff] %vm1612, %v1580
      %1618 = vst.msk [vmem:[#allocation2 + $0x28] sm:$0xff] %vm1612, %v1581
      %1619 = vst.msk [vmem:[#allocation2 + $0x30] sm:$0xff] %vm1612, %v1582
      %1620 = vst.msk [vmem:[#allocation2 + $0x38] sm:$0xff] %vm1612, %v1583
      %1621 = vst.msk [vmem:[#allocation2 + $0x40] sm:$0xff] %vm1612, %v1584
      %1622 = vst.msk [vmem:[#allocation2 + $0x48] sm:$0xff] %vm1612, %v1585
      %1623 = vst.msk [vmem:[#allocation2 + $0x50] sm:$0xff] %vm1612, %v1586
      %1624 = vst.msk [vmem:[#allocation2 + $0x58] sm:$0xff] %vm1612, %v1587
      %1625 = vst.msk [vmem:[#allocation2 + $0x60] sm:$0xff] %vm1612, %v1588
      %1626 = vst.msk [vmem:[#allocation2 + $0x68] sm:$0xff] %vm1612, %v1589
      %1627 = vst.msk [vmem:[#allocation2 + $0x70] sm:$0xff] %vm1612, %v1590
      %1628 = vst.msk [vmem:[#allocation2 + $0x78] sm:$0xff] %vm1612, %v1591
      %1629 = vst.msk [vmem:[#allocation2 + $0x80] sm:$0xff] %vm1612, %v1592
      %1630 = vst.msk [vmem:[#allocation2 + $0x88] sm:$0xff] %vm1612, %v1593
      %1631 = vst.msk [vmem:[#allocation2 + $0x90] sm:$0xff] %vm1612, %v1594
      %1632 = vst.msk [vmem:[#allocation2 + $0x98] sm:$0xff] %vm1612, %v1595
      %1633 = vst.msk [vmem:[#allocation2 + $0xa0] sm:$0xff] %vm1612, %v1596
      %1634 = vst.msk [vmem:[#allocation2 + $0xa8] sm:$0xff] %vm1612, %v1597
      %1635 = vst.msk [vmem:[#allocation2 + $0xb0] sm:$0xff] %vm1612, %v1598
      %1636 = vst.msk [vmem:[#allocation2 + $0xb8] sm:$0xff] %vm1612, %v1599
      %1637 = vst.msk [vmem:[#allocation2 + $0xc0] sm:$0xff] %vm1612, %v1600
      %1638 = vst.msk [vmem:[#allocation2 + $0xc8] sm:$0xff] %vm1612, %v1601
      %1639 = vst.msk [vmem:[#allocation2 + $0xd0] sm:$0xff] %vm1612, %v1602
      %1640 = vst.msk [vmem:[#allocation2 + $0xd8] sm:$0xff] %vm1612, %v1603
      %1641 = vst.msk [vmem:[#allocation2 + $0xe0] sm:$0xff] %vm1612, %v1604
      %1642 = vst.msk [vmem:[#allocation2 + $0xe8] sm:$0xff] %vm1612, %v1605
      %1643 = vst.msk [vmem:[#allocation2 + $0xf0] sm:$0xff] %vm1612, %v1606
      %1644 = vst.msk [vmem:[#allocation2 + $0xf8] sm:$0xff] %vm1612, %v1607
      %1645 = vst.msk [vmem:[#allocation2 + $0x100] sm:$0xff] %vm1612, %v1608
      %1646 = vst.msk [vmem:[#allocation2 + $0x108] sm:$0xff] %vm1612, %v1609
      %1647 = vst.msk [vmem:[#allocation2 + $0x110] sm:$0xff] %vm1612, %v1610
      %1648 = vst.msk [vmem:[#allocation2 + $0x118] sm:$0xff] %vm1612, %v1611
      %v1649 = vld [vmem:[#allocation2] ss:$2 sm:$0xff]
      %s1650 = scalar_lea.vmem [#allocation2], 16
      %v1651 = vld [vmem:[%s1650] ss:$2 sm:$0xff]
      %s1652 = scalar_lea.vmem [#allocation2], 32
      %v1653 = vld [vmem:[%s1652] ss:$2 sm:$0xff]
      %s1654 = scalar_lea.vmem [#allocation2], 48
      %v1655 = vld [vmem:[%s1654] ss:$2 sm:$0xff]
      %s1656 = scalar_lea.vmem [#allocation2], 64
      %v1657 = vld [vmem:[%s1656] ss:$2 sm:$0xff]
      %s1658 = scalar_lea.vmem [#allocation2], 80
      %v1659 = vld [vmem:[%s1658] ss:$2 sm:$0xff]
      %s1660 = scalar_lea.vmem [#allocation2], 96
      %v1661 = vld [vmem:[%s1660] ss:$2 sm:$0xff]
      %s1662 = scalar_lea.vmem [#allocation2], 112
      %v1663 = vld [vmem:[%s1662] ss:$2 sm:$0xff]
      %s1664 = scalar_lea.vmem [#allocation2], 128
      %v1665 = vld [vmem:[%s1664] ss:$2 sm:$0xff]
      %s1666 = scalar_lea.vmem [#allocation2], 144
      %v1667 = vld [vmem:[%s1666] ss:$2 sm:$0xff]
      %s1668 = scalar_lea.vmem [#allocation2], 160
      %v1669 = vld [vmem:[%s1668] ss:$2 sm:$0xff]
      %s1670 = scalar_lea.vmem [#allocation2], 176
      %v1671 = vld [vmem:[%s1670] ss:$2 sm:$0xff]
      %s1672 = scalar_lea.vmem [#allocation2], 192
      %v1673 = vld [vmem:[%s1672] ss:$2 sm:$0xff]
      %s1674 = scalar_lea.vmem [#allocation2], 208
      %v1675 = vld [vmem:[%s1674] ss:$2 sm:$0xff]
      %s1676 = scalar_lea.vmem [#allocation2], 224
      %v1677 = vld [vmem:[%s1676] ss:$2 sm:$0xff]
      %s1678 = scalar_lea.vmem [#allocation2], 240
      %v1679 = vld [vmem:[%s1678] ss:$2 sm:$0xff]
      %s1680 = scalar_lea.vmem [#allocation2], 256
      %v1681 = vld [vmem:[%s1680] ss:$2 sm:$0xff]
      %s1682 = scalar_lea.vmem [#allocation2], 272
      %v1683 = vld [vmem:[%s1682] ss:$2 sm:$0xff]
      %s1684 = scalar_lea.vmem [#allocation2], 1
      %v1685 = vld [vmem:[%s1684] ss:$2 sm:$0xff]
      %s1686 = scalar_lea.vmem [#allocation2], 17
      %v1687 = vld [vmem:[%s1686] ss:$2 sm:$0xff]
      %s1688 = scalar_lea.vmem [#allocation2], 33
      %v1689 = vld [vmem:[%s1688] ss:$2 sm:$0xff]
      %s1690 = scalar_lea.vmem [#allocation2], 49
      %v1691 = vld [vmem:[%s1690] ss:$2 sm:$0xff]
      %s1692 = scalar_lea.vmem [#allocation2], 65
      %v1693 = vld [vmem:[%s1692] ss:$2 sm:$0xff]
      %s1694 = scalar_lea.vmem [#allocation2], 81
      %v1695 = vld [vmem:[%s1694] ss:$2 sm:$0xff]
      %s1696 = scalar_lea.vmem [#allocation2], 97
      %v1697 = vld [vmem:[%s1696] ss:$2 sm:$0xff]
      %s1698 = scalar_lea.vmem [#allocation2], 113
      %v1699 = vld [vmem:[%s1698] ss:$2 sm:$0xff]
      %s1700 = scalar_lea.vmem [#allocation2], 129
      %v1701 = vld [vmem:[%s1700] ss:$2 sm:$0xff]
      %s1702 = scalar_lea.vmem [#allocation2], 145
      %v1703 = vld [vmem:[%s1702] ss:$2 sm:$0xff]
      %s1704 = scalar_lea.vmem [#allocation2], 161
      %v1705 = vld [vmem:[%s1704] ss:$2 sm:$0xff]
      %s1706 = scalar_lea.vmem [#allocation2], 177
      %v1707 = vld [vmem:[%s1706] ss:$2 sm:$0xff]
      %s1708 = scalar_lea.vmem [#allocation2], 193
      %v1709 = vld [vmem:[%s1708] ss:$2 sm:$0xff]
      %s1710 = scalar_lea.vmem [#allocation2], 209
      %v1711 = vld [vmem:[%s1710] ss:$2 sm:$0xff]
      %s1712 = scalar_lea.vmem [#allocation2], 225
      %v1713 = vld [vmem:[%s1712] ss:$2 sm:$0xff]
      %s1714 = scalar_lea.vmem [#allocation2], 241
      %v1715 = vld [vmem:[%s1714] ss:$2 sm:$0xff]
      %s1716 = scalar_lea.vmem [#allocation2], 257
      %v1717 = vld [vmem:[%s1716] ss:$2 sm:$0xff]
      %s1718 = scalar_lea.vmem [#allocation2], 273
      %v1719 = vld [vmem:[%s1718] ss:$2 sm:$0xff]
      %v1720 = vmax.f32 %v1649, %v1685
      %v1721 = vmax.f32 %v1651, %v1687
      %v1722 = vmax.f32 %v1653, %v1689
      %v1723 = vmax.f32 %v1655, %v1691
      %v1724 = vmax.f32 %v1657, %v1693
      %v1725 = vmax.f32 %v1659, %v1695
      %v1726 = vmax.f32 %v1661, %v1697
      %v1727 = vmax.f32 %v1663, %v1699
      %v1728 = vmax.f32 %v1665, %v1701
      %v1729 = vmax.f32 %v1667, %v1703
      %v1730 = vmax.f32 %v1669, %v1705
      %v1731 = vmax.f32 %v1671, %v1707
      %v1732 = vmax.f32 %v1673, %v1709
      %v1733 = vmax.f32 %v1675, %v1711
      %v1734 = vmax.f32 %v1677, %v1713
      %v1735 = vmax.f32 %v1679, %v1715
      %v1736 = vmax.f32 %v1681, %v1717
      %v1737 = vmax.f32 %v1683, %v1719
      %v1738 = vld [vmem:[%s2] sm:$0x1]
      %v1740 = vlaneseq
      %v1741 = vshrl.u32 %v1740, 7
      %v1742 = vsub.s32 0, %v1741
      %v1743 = vrot.slane %v1738, %v1742
      %v1745 = vadd.f32 %v1720, %v1743
      %v1746 = vadd.f32 %v1721, %v1743
      %v1747 = vadd.f32 %v1722, %v1743
      %v1748 = vadd.f32 %v1723, %v1743
      %v1749 = vadd.f32 %v1724, %v1743
      %v1750 = vadd.f32 %v1725, %v1743
      %v1751 = vadd.f32 %v1726, %v1743
      %v1752 = vadd.f32 %v1727, %v1743
      %v1753 = vadd.f32 %v1728, %v1743
      %v1754 = vadd.f32 %v1729, %v1743
      %v1755 = vadd.f32 %v1730, %v1743
      %v1756 = vadd.f32 %v1731, %v1743
      %v1757 = vadd.f32 %v1732, %v1743
      %v1758 = vadd.f32 %v1733, %v1743
      %v1759 = vadd.f32 %v1734, %v1743
      %v1760 = vadd.f32 %v1735, %v1743
      %v1761 = vadd.f32 %v1736, %v1743
      %v1762 = vadd.f32 %v1737, %v1743
      %v1763 = vmax.f32 %v1745, 0.0
      %v1764 = vmax.f32 %v1746, 0.0
      %v1765 = vmax.f32 %v1747, 0.0
      %v1766 = vmax.f32 %v1748, 0.0
      %v1767 = vmax.f32 %v1749, 0.0
      %v1768 = vmax.f32 %v1750, 0.0
      %v1769 = vmax.f32 %v1751, 0.0
      %v1770 = vmax.f32 %v1752, 0.0
      %v1771 = vmax.f32 %v1753, 0.0
      %v1772 = vmax.f32 %v1754, 0.0
      %v1773 = vmax.f32 %v1755, 0.0
      %v1774 = vmax.f32 %v1756, 0.0
      %v1775 = vmax.f32 %v1757, 0.0
      %v1776 = vmax.f32 %v1758, 0.0
      %v1777 = vmax.f32 %v1759, 0.0
      %v1778 = vmax.f32 %v1760, 0.0
      %v1779 = vmax.f32 %v1761, 0.0
      %v1780 = vmax.f32 %v1762, 0.0
      %1781 = vst.msk [vmem:[%s170] sm:$0xff] %vm1612, %v1763
      %1782 = vst.msk [vmem:[%s170 + $0x8] sm:$0xff] %vm1612, %v1764
      %1783 = vst.msk [vmem:[%s170 + $0x10] sm:$0xff] %vm1612, %v1765
      %1784 = vst.msk [vmem:[%s170 + $0x18] sm:$0xff] %vm1612, %v1766
      %1785 = vst.msk [vmem:[%s170 + $0x20] sm:$0xff] %vm1612, %v1767
      %1786 = vst.msk [vmem:[%s170 + $0x28] sm:$0xff] %vm1612, %v1768
      %1787 = vst.msk [vmem:[%s170 + $0x30] sm:$0xff] %vm1612, %v1769
      %1788 = vst.msk [vmem:[%s170 + $0x38] sm:$0xff] %vm1612, %v1770
      %1789 = vst.msk [vmem:[%s170 + $0x40] sm:$0xff] %vm1612, %v1771
      %1790 = vst.msk [vmem:[%s170 + $0x48] sm:$0xff] %vm1612, %v1772
      %1791 = vst.msk [vmem:[%s170 + $0x50] sm:$0xff] %vm1612, %v1773
      %1792 = vst.msk [vmem:[%s170 + $0x58] sm:$0xff] %vm1612, %v1774
      %1793 = vst.msk [vmem:[%s170 + $0x60] sm:$0xff] %vm1612, %v1775
      %1794 = vst.msk [vmem:[%s170 + $0x68] sm:$0xff] %vm1612, %v1776
      %1795 = vst.msk [vmem:[%s170 + $0x70] sm:$0xff] %vm1612, %v1777
      %1796 = vst.msk [vmem:[%s170 + $0x78] sm:$0xff] %vm1612, %v1778
      %1797 = vst.msk [vmem:[%s170 + $0x80] sm:$0xff] %vm1612, %v1779
      %1798 = vst.msk [vmem:[%s170 + $0x88] sm:$0xff] %vm1612, %v1780
      %p1799 = scmp.lt.s32.totalorder %s14, 1
      %s1800 = scalar_select %p1799, %s14, 1
      %s1801 = smul.addr %s1800, 18
      %s1802 = smul.addr %s1801, 8
      %s1803 = scalar_lea.vmem %s3, %s1802
      // Predicated region
      $region33: #{net_forward.5} parent=31 // pred_check
        %p1804 = pneg %p100
      $region34: #{net_forward.5} parent=31 // pred_check_branch
        %1806 = sbr.rel (%p1804) target = $region36
      $region35: #{net_forward.5} parent=31 // pred_region
        _
      $region36: #{net_forward.5} parent=31 // pred_fallthru
        _
    $region32: #{net_forward.5} parent=5 // pred_fallthru
      _
    %p1807 = scmp.le.s32.totalorder 2, %s9
    // Predicated region
    $region37: #{net_forward.5} parent=5 // pred_check
      %p1808 = pneg %p1807
    $region38: #{net_forward.5} parent=5 // pred_check_branch
      %1810 = sbr.rel (%p1808) target = $region40
    $region39: #{net_forward.5} parent=5 // pred_region
      %s1811 = ssub.s32 %s9, 2
      // Predicated region
      $region41: #{net_forward.5} parent=39 // pred_check
        %p1812 = pneg %p106
      $region42: #{net_forward.5} parent=39 // pred_check_branch
        %1814 = sbr.rel (%p1812) target = $region44
      $region43: #{net_forward.5} parent=39 // pred_region
        %p1815 = scmp.lt.s32.totalorder %s15, 1
        %s1816 = scalar_select %p1815, %s15, 1
        %s1817 = smul.addr %s1816, 18
        %s1818 = smul.addr %s1817, 8
        %s1819 = scalar_lea.vmem %s3, %s1818
      $region44: #{net_forward.5} parent=39 // pred_fallthru
        _
    $region40: #{net_forward.5} parent=5 // pred_fallthru
      _
  $region6: #{net_forward.5} parent=0 // loop_footer
    %s13 = sadd.s32 1, %s9
  $region7: #{net_forward.5} parent=0 // loop_footer_branch
    %8 = sbr.rel target = $region3
  $region8: #{net_forward.5} parent=0 // loop_exit
    _

// kernel: net_forward.6
$region0: #{net_forward.6}
  #allocation0 [shape = 'u32[]', space=smem, size = 0x4, offset = 0x4, fixed_abs, tag = 'smem constant byte address 0x4 - core index']
  #allocation1 [shape = 'u32[144,128]{1,0:T(1,128)}', space=vmem, size = 0x12000, scoped, tag = 'internal scratch']
  #allocation2 [shape = 'f32[32,128]{1,0:T(8,128)}', space=vmem, size = 0x4000, scoped, tag = 'scratch operand']
  %s0 = inlined_call_operand.vmem [shape: f32[2,64,1600], index: 0, kind: input, shape index: {}]
  %s1 = inlined_call_operand.vmem [shape: f32[1600,128], index: 1, kind: input, shape index: {}]
  %s2 = inlined_call_operand.vmem [shape: f32[1,128], index: 2, kind: input, shape index: {}]
  %s3 = inlined_call_operand.vmem [shape: f32[2,16,128], index: 3, kind: output, shape index: {}]
  %s4 = sld [smem:[#allocation0]]
  $region45: #{net_forward.6} parent=0
    _
  %s6 = ssub.s32 1, %s4
  %s7 = scalar_select 0, %s6, %s4
  loop: start=0, step=1, limit=4
  $region2: #{net_forward.6} parent=0 // loop_pre_header
    _
  $region3: #{net_forward.6} parent=0 // loop_header
    %s9 = sphi 0, %s13
    %p10 = scmp.ge.s32.totalorder %s9, 4
    %s19 = sphi 0, %s21
    %s22 = sphi 0, %s19
    %s23 = sphi 0, %s22
    %s39 = sphi 0, %s23
    %s43 = sphi 0, %s43
    %s45 = sphi 0, %s43
    %s46 = sphi 0, %s45
    %s60 = sphi 0, %s46
    %s64 = sphi 0, %s64
    %s66 = sphi 0, %s64
    %s67 = sphi 0, %s66
    %s81 = sphi 0, %s67
    %s87 = sphi 0, %s89
    %s90 = sphi 0, %s87
    %s91 = sphi 0, %s90
    %s107 = sphi 0, %s91
  $region4: #{net_forward.6} parent=0 // loop_header_branch
    %12 = sbr.rel (%p10) target = $region8
  $region5: #{net_forward.6} parent=0 // loop_body
    %s14 = ssub.s32 %s9, 1
    %s15 = ssub.s32 %s9, 2
    %s16 = sadd.s32 %s9, 1
    %s17 = ssub.s32 %s9, %s16
    %p18 = scmp.eq.s32.totalorder %s17, 0
    %s20 = sadd.s32 %s19, 1
    %s21 = scalar_select %p18, %s19, %s20
    %p24 = pneg %p18
    %p25 = scmp.eq.s32.totalorder %s9, 1
    %p26 = por %p24, %p25
    %p27 = scmp.ne.s32.totalorder %s19, %s22
    %p28 = scmp.eq.s32.totalorder %s9, 0
    %p29 = por %p27, %p28
    %p30 = scmp.ne.s32.totalorder %s19, %s22
    %p31 = scmp.eq.s32.totalorder %s14, 1
    %p32 = por %p30, %p31
    %p33 = scmp.ne.s32.totalorder %s22, %s23
    %p34 = scmp.eq.s32.totalorder %s14, 0
    %p35 = por %p33, %p34
    %p36 = scmp.ne.s32.totalorder %s22, %s23
    %p37 = scmp.eq.s32.totalorder %s15, 1
    %p38 = por %p36, %p37
    %p40 = scmp.ne.s32.totalorder %s23, %s39
    %p41 = scmp.eq.s32.totalorder %s15, 0
    %p42 = por %p40, %p41
    %s44 = sadd.s32 %s43, 1
    %p47 = scmp.eq.s32.totalorder %s9, 1
    %p48 = scmp.ne.s32.totalorder %s43, %s45
    %p49 = scmp.eq.s32.totalorder %s9, 0
    %p50 = por %p48, %p49
    %p51 = scmp.ne.s32.totalorder %s43, %s45
    %p52 = scmp.eq.s32.totalorder %s14, 1
    %p53 = por %p51, %p52
    %p54 = scmp.ne.s32.totalorder %s45, %s46
    %p55 = scmp.eq.s32.totalorder %s14, 0
    %p56 = por %p54, %p55
    %p57 = scmp.ne.s32.totalorder %s45, %s46
    %p58 = scmp.eq.s32.totalorder %s15, 1
    %p59 = por %p57, %p58
    %p61 = scmp.ne.s32.totalorder %s46, %s60
    %p62 = scmp.eq.s32.totalorder %s15, 0
    %p63 = por %p61, %p62
    %s65 = sadd.s32 %s64, 1
    %p68 = scmp.eq.s32.totalorder %s9, 1
    %p69 = scmp.ne.s32.totalorder %s64, %s66
    %p70 = scmp.eq.s32.totalorder %s9, 0
    %p71 = por %p69, %p70
    %p72 = scmp.ne.s32.totalorder %s64, %s66
    %p73 = scmp.eq.s32.totalorder %s14, 1
    %p74 = por %p72, %p73
    %p75 = scmp.ne.s32.totalorder %s66, %s67
    %p76 = scmp.eq.s32.totalorder %s14, 0
    %p77 = por %p75, %p76
    %p78 = scmp.ne.s32.totalorder %s66, %s67
    %p79 = scmp.eq.s32.totalorder %s15, 1
    %p80 = por %p78, %p79
    %p82 = scmp.ne.s32.totalorder %s67, %s81
    %p83 = scmp.eq.s32.totalorder %s15, 0
    %p84 = por %p82, %p83
    %s85 = ssub.s32 %s9, %s16
    %p86 = scmp.eq.s32.totalorder %s85, 0
    %s88 = sadd.s32 %s87, 1
    %s89 = scalar_select %p86, %s87, %s88
    %p92 = pneg %p86
    %p93 = scmp.eq.s32.totalorder %s9, 1
    %p94 = por %p92, %p93
    %p95 = scmp.ne.s32.totalorder %s87, %s90
    %p96 = scmp.eq.s32.totalorder %s9, 0
    %p97 = por %p95, %p96
    %p98 = scmp.ne.s32.totalorder %s87, %s90
    %p99 = scmp.eq.s32.totalorder %s14, 1
    %p100 = por %p98, %p99
    %p101 = scmp.ne.s32.totalorder %s90, %s91
    %p102 = scmp.eq.s32.totalorder %s14, 0
    %p103 = por %p101, %p102
    %p104 = scmp.ne.s32.totalorder %s90, %s91
    %p105 = scmp.eq.s32.totalorder %s15, 1
    %p106 = por %p104, %p105
    %p108 = scmp.ne.s32.totalorder %s91, %s107
    %p109 = scmp.eq.s32.totalorder %s15, 0
    %p110 = por %p108, %p109
    %p111 = scmp.le.s32.totalorder 1, %s9
    %p112 = scmp.lt.s32.totalorder %s9, 3
    %p113 = pnand %p111, %p112
    %p114 = pneg %p113
    // Predicated region
    $region9: #{net_forward.6} parent=5 // pred_check
      _
    $region10: #{net_forward.6} parent=5 // pred_check_branch
      %116 = sbr.rel (%p113) target = $region12
    $region11: #{net_forward.6} parent=5 // pred_region
      %s117 = ssub.s32 %s9, 1
      // Predicated region
      $region13: #{net_forward.6} parent=11 // pred_check
        %p118 = pneg %p56
      $region14: #{net_forward.6} parent=11 // pred_check_branch
        %120 = sbr.rel (%p118) target = $region16
      $region15: #{net_forward.6} parent=11 // pred_region
        _
      $region16: #{net_forward.6} parent=11 // pred_fallthru
        _
      // Predicated region
      $region17: #{net_forward.6} parent=11 // pred_check
        %p121 = pneg %p77
      $region18: #{net_forward.6} parent=11 // pred_check_branch
        %123 = sbr.rel (%p121) target = $region20
      $region19: #{net_forward.6} parent=11 // pred_region
        _
      $region20: #{net_forward.6} parent=11 // pred_fallthru
        _
    $region12: #{net_forward.6} parent=5 // pred_fallthru
      _
    %p124 = scmp.lt.s32.totalorder %s9, 2
    // Predicated region
    $region21: #{net_forward.6} parent=5 // pred_check
      %p125 = pneg %p124
    $region22: #{net_forward.6} parent=5 // pred_check_branch
      %127 = sbr.rel (%p125) target = $region24
    $region23: #{net_forward.6} parent=5 // pred_region
      // Predicated region
      $region25: #{net_forward.6} parent=23 // pred_check
        %p128 = pneg %p29
      $region26: #{net_forward.6} parent=23 // pred_check_branch
        %130 = sbr.rel (%p128) target = $region28
      $region27: #{net_forward.6} parent=23 // pred_region
        %p131 = scmp.lt.s32.totalorder %s9, 1
        %s132 = scalar_select %p131, %s9, 1
        %s133 = smul.addr %s132, 104
        %s134 = smul.addr %s133, 8
        %s135 = scalar_lea.vmem %s0, %s134
      $region28: #{net_forward.6} parent=23 // pred_fallthru
        _
    $region24: #{net_forward.6} parent=5 // pred_fallthru
      _
    %p136 = scmp.le.s32.totalorder 1, %s9
    %p137 = scmp.lt.s32.totalorder %s9, 3
    %p138 = pnand %p136, %p137
    %p139 = pneg %p138
    // Predicated region
    $region29: #{net_forward.6} parent=5 // pred_check
      _
    $region30: #{net_forward.6} parent=5 // pred_check_branch
      %141 = sbr.rel (%p138) target = $region32
    $region31: #{net_forward.6} parent=5 // pred_region
      %s142 = ssub.s32 %s9, 1
      %p143 = scmp.lt.s32.totalorder %s14, 1
      %s144 = scalar_select %p143, %s14, 1
      %s145 = smul.addr %s144, 104
      %s146 = smul.addr %s145, 8
      %s147 = scalar_lea.vmem %s0, %s146
      %p148 = pneg %p35
      %p149 = pneg %p32
      %p150 = pneg %p56
      %p151 = pneg %p53
      %p152 = pneg %p77
      %p153 = pneg %p74
      %p154 = pneg %p103
      %p155 = pneg %p100
      %p156 = scmp.lt.s32.totalorder %s14, 1
      %s157 = scalar_select %p156, %s14, 1
      %s158 = smul.addr %s157, 2
      %s159 = smul.addr %s158, 8
      %s160 = scalar_lea.vmem %s3, %s159
      %p161 = scmp.lt.s32.totalorder %s14, 1
      %s162 = scalar_select %p161, %s14, 1
      %s163 = smul.addr %s162, 104
      %s164 = smul.addr %s163, 8
      %s165 = scalar_lea.vmem %s0, %s164
      %p166 = scmp.lt.s32.totalorder %s14, 1
      %s167 = scalar_select %p166, %s14, 1
      %s168 = smul.addr %s167, 2
      %s169 = smul.addr %s168, 8
      %s170 = scalar_lea.vmem %s3, %s169
      %v171 = vld [vmem:[%s165] sm:$0xff]
      %v172 = vld [vmem:[%s165 + $0x8] sm:$0xff]
      %v173 = vld [vmem:[%s165 + $0x10] sm:$0xff]
      %v174 = vld [vmem:[%s165 + $0x18] sm:$0xff]
      %v175 = vld [vmem:[%s165 + $0x20] sm:$0xff]
      %v176 = vld [vmem:[%s165 + $0x28] sm:$0xff]
      %v177 = vld [vmem:[%s165 + $0x30] sm:$0xff]
      %v178 = vld [vmem:[%s165 + $0x38] sm:$0xff]
      %v179 = vld [vmem:[%s165 + $0x40] sm:$0xff]
      %v180 = vld [vmem:[%s165 + $0x48] sm:$0xff]
      %v181 = vld [vmem:[%s165 + $0x50] sm:$0xff]
      %v182 = vld [vmem:[%s165 + $0x58] sm:$0xff]
      %v183 = vld [vmem:[%s165 + $0x60] sm:$0xff]
      %v184 = vld [vmem:[%s165 + $0x68] sm:$0xff]
      %v185 = vld [vmem:[%s165 + $0x70] sm:$0xff]
      %v186 = vld [vmem:[%s165 + $0x78] sm:$0xff]
      %v187 = vld [vmem:[%s165 + $0x80] sm:$0xff]
      %v188 = vld [vmem:[%s165 + $0x88] sm:$0xff]
      %v189 = vld [vmem:[%s165 + $0x90] sm:$0xff]
      %v190 = vld [vmem:[%s165 + $0x98] sm:$0xff]
      %v191 = vld [vmem:[%s165 + $0xa0] sm:$0xff]
      %v192 = vld [vmem:[%s165 + $0xa8] sm:$0xff]
      %v193 = vld [vmem:[%s165 + $0xb0] sm:$0xff]
      %v194 = vld [vmem:[%s165 + $0xb8] sm:$0xff]
      %v195 = vld [vmem:[%s165 + $0xc0] sm:$0xff]
      %v196 = vld [vmem:[%s165 + $0xc8] sm:$0xff]
      %v197 = vld [vmem:[%s165 + $0xd0] sm:$0xff]
      %v198 = vld [vmem:[%s165 + $0xd8] sm:$0xff]
      %v199 = vld [vmem:[%s165 + $0xe0] sm:$0xff]
      %v200 = vld [vmem:[%s165 + $0xe8] sm:$0xff]
      %v201 = vld [vmem:[%s165 + $0xf0] sm:$0xff]
      %v202 = vld [vmem:[%s165 + $0xf8] sm:$0xff]
      %v203 = vld [vmem:[%s165 + $0x100] sm:$0xff]
      %v204 = vld [vmem:[%s165 + $0x108] sm:$0xff]
      %v205 = vld [vmem:[%s165 + $0x110] sm:$0xff]
      %v206 = vld [vmem:[%s165 + $0x118] sm:$0xff]
      %v207 = vld [vmem:[%s165 + $0x120] sm:$0xff]
      %v208 = vld [vmem:[%s165 + $0x128] sm:$0xff]
      %v209 = vld [vmem:[%s165 + $0x130] sm:$0xff]
      %v210 = vld [vmem:[%s165 + $0x138] sm:$0xff]
      %v211 = vld [vmem:[%s165 + $0x140] sm:$0xff]
      %v212 = vld [vmem:[%s165 + $0x148] sm:$0xff]
      %v213 = vld [vmem:[%s165 + $0x150] sm:$0xff]
      %v214 = vld [vmem:[%s165 + $0x158] sm:$0xff]
      %v215 = vld [vmem:[%s165 + $0x160] sm:$0xff]
      %v216 = vld [vmem:[%s165 + $0x168] sm:$0xff]
      %v217 = vld [vmem:[%s165 + $0x170] sm:$0xff]
      %v218 = vld [vmem:[%s165 + $0x178] sm:$0xff]
      %v219 = vld [vmem:[%s165 + $0x180] sm:$0xff]
      %v220 = vld [vmem:[%s165 + $0x188] sm:$0xff]
      %v221 = vld [vmem:[%s165 + $0x190] sm:$0xff]
      %v222 = vld [vmem:[%s165 + $0x198] sm:$0xff]
      %v223 = vld [vmem:[%s165 + $0x1a0] sm:$0xff]
      %v224 = vld [vmem:[%s165 + $0x1a8] sm:$0xff]
      %v225 = vld [vmem:[%s165 + $0x1b0] sm:$0xff]
      %v226 = vld [vmem:[%s165 + $0x1b8] sm:$0xff]
      %v227 = vld [vmem:[%s165 + $0x1c0] sm:$0xff]
      %v228 = vld [vmem:[%s165 + $0x1c8] sm:$0xff]
      %v229 = vld [vmem:[%s165 + $0x1d0] sm:$0xff]
      %v230 = vld [vmem:[%s165 + $0x1d8] sm:$0xff]
      %v231 = vld [vmem:[%s165 + $0x1e0] sm:$0xff]
      %v232 = vld [vmem:[%s165 + $0x1e8] sm:$0xff]
      %v233 = vld [vmem:[%s165 + $0x1f0] sm:$0xff]
      %v234 = vld [vmem:[%s165 + $0x1f8] sm:$0xff]
      %v235 = vld [vmem:[%s165 + $0x200] sm:$0xff]
      %v236 = vld [vmem:[%s165 + $0x208] sm:$0xff]
      %v237 = vld [vmem:[%s165 + $0x210] sm:$0xff]
      %v238 = vld [vmem:[%s165 + $0x218] sm:$0xff]
      %v239 = vld [vmem:[%s165 + $0x220] sm:$0xff]
      %v240 = vld [vmem:[%s165 + $0x228] sm:$0xff]
      %v241 = vld [vmem:[%s165 + $0x230] sm:$0xff]
      %v242 = vld [vmem:[%s165 + $0x238] sm:$0xff]
      %v243 = vld [vmem:[%s165 + $0x240] sm:$0xff]
      %v244 = vld [vmem:[%s165 + $0x248] sm:$0xff]
      %v245 = vld [vmem:[%s165 + $0x250] sm:$0xff]
      %v246 = vld [vmem:[%s165 + $0x258] sm:$0xff]
      %v247 = vld [vmem:[%s165 + $0x260] sm:$0xff]
      %v248 = vld [vmem:[%s165 + $0x268] sm:$0xff]
      %v249 = vld [vmem:[%s165 + $0x270] sm:$0xff]
      %v250 = vld [vmem:[%s165 + $0x278] sm:$0xff]
      %v251 = vld [vmem:[%s165 + $0x280] sm:$0xff]
      %v252 = vld [vmem:[%s165 + $0x288] sm:$0xff]
      %v253 = vld [vmem:[%s165 + $0x290] sm:$0xff]
      %v254 = vld [vmem:[%s165 + $0x298] sm:$0xff]
      %v255 = vld [vmem:[%s165 + $0x2a0] sm:$0xff]
      %v256 = vld [vmem:[%s165 + $0x2a8] sm:$0xff]
      %v257 = vld [vmem:[%s165 + $0x2b0] sm:$0xff]
      %v258 = vld [vmem:[%s165 + $0x2b8] sm:$0xff]
      %v259 = vld [vmem:[%s165 + $0x2c0] sm:$0xff]
      %v260 = vld [vmem:[%s165 + $0x2c8] sm:$0xff]
      %v261 = vld [vmem:[%s165 + $0x2d0] sm:$0xff]
      %v262 = vld [vmem:[%s165 + $0x2d8] sm:$0xff]
      %v263 = vld [vmem:[%s165 + $0x2e0] sm:$0xff]
      %v264 = vld [vmem:[%s165 + $0x2e8] sm:$0xff]
      %v265 = vld [vmem:[%s165 + $0x2f0] sm:$0xff]
      %v266 = vld [vmem:[%s165 + $0x2f8] sm:$0xff]
      %v267 = vld [vmem:[%s165 + $0x300] sm:$0xff]
      %v268 = vld [vmem:[%s165 + $0x308] sm:$0xff]
      %v269 = vld [vmem:[%s165 + $0x310] sm:$0xff]
      %v270 = vld [vmem:[%s165 + $0x318] sm:$0xff]
      %v271 = vld [vmem:[%s165 + $0x320] sm:$0xff]
      %v272 = vld [vmem:[%s165 + $0x328] sm:$0xff]
      %v273 = vld [vmem:[%s165 + $0x330] sm:$0xff]
      %v274 = vld [vmem:[%s165 + $0x338] sm:$0xff]
      %v275 = vld [vmem:[%s1] sm:$0xff]
      %v276 = vld [vmem:[%s1 + $0x8] sm:$0xff]
      %v277 = vld [vmem:[%s1 + $0x10] sm:$0xff]
      %v278 = vld [vmem:[%s1 + $0x18] sm:$0xff]
      %v279 = vld [vmem:[%s1 + $0x20] sm:$0xff]
      %v280 = vld [vmem:[%s1 + $0x28] sm:$0xff]
      %v281 = vld [vmem:[%s1 + $0x30] sm:$0xff]
      %v282 = vld [vmem:[%s1 + $0x38] sm:$0xff]
      %v283 = vld [vmem:[%s1 + $0x40] sm:$0xff]
      %v284 = vld [vmem:[%s1 + $0x48] sm:$0xff]
      %v285 = vld [vmem:[%s1 + $0x50] sm:$0xff]
      %v286 = vld [vmem:[%s1 + $0x58] sm:$0xff]
      %v287 = vld [vmem:[%s1 + $0x60] sm:$0xff]
      %v288 = vld [vmem:[%s1 + $0x68] sm:$0xff]
      %v289 = vld [vmem:[%s1 + $0x70] sm:$0xff]
      %v290 = vld [vmem:[%s1 + $0x78] sm:$0xff]
      %v291 = vld [vmem:[%s1 + $0x80] sm:$0xff]
      %v292 = vld [vmem:[%s1 + $0x88] sm:$0xff]
      %v293 = vld [vmem:[%s1 + $0x90] sm:$0xff]
      %v294 = vld [vmem:[%s1 + $0x98] sm:$0xff]
      %v295 = vld [vmem:[%s1 + $0xa0] sm:$0xff]
      %v296 = vld [vmem:[%s1 + $0xa8] sm:$0xff]
      %v297 = vld [vmem:[%s1 + $0xb0] sm:$0xff]
      %v298 = vld [vmem:[%s1 + $0xb8] sm:$0xff]
      %v299 = vld [vmem:[%s1 + $0xc0] sm:$0xff]
      %v300 = vld [vmem:[%s1 + $0xc8] sm:$0xff]
      %v301 = vld [vmem:[%s1 + $0xd0] sm:$0xff]
      %v302 = vld [vmem:[%s1 + $0xd8] sm:$0xff]
      %v303 = vld [vmem:[%s1 + $0xe0] sm:$0xff]
      %v304 = vld [vmem:[%s1 + $0xe8] sm:$0xff]
      %v305 = vld [vmem:[%s1 + $0xf0] sm:$0xff]
      %v306 = vld [vmem:[%s1 + $0xf8] sm:$0xff]
      %v307 = vld [vmem:[%s1 + $0x100] sm:$0xff]
      %v308 = vld [vmem:[%s1 + $0x108] sm:$0xff]
      %v309 = vld [vmem:[%s1 + $0x110] sm:$0xff]
      %v310 = vld [vmem:[%s1 + $0x118] sm:$0xff]
      %v311 = vld [vmem:[%s1 + $0x120] sm:$0xff]
      %v312 = vld [vmem:[%s1 + $0x128] sm:$0xff]
      %v313 = vld [vmem:[%s1 + $0x130] sm:$0xff]
      %v314 = vld [vmem:[%s1 + $0x138] sm:$0xff]
      %v315 = vld [vmem:[%s1 + $0x140] sm:$0xff]
      %v316 = vld [vmem:[%s1 + $0x148] sm:$0xff]
      %v317 = vld [vmem:[%s1 + $0x150] sm:$0xff]
      %v318 = vld [vmem:[%s1 + $0x158] sm:$0xff]
      %v319 = vld [vmem:[%s1 + $0x160] sm:$0xff]
      %v320 = vld [vmem:[%s1 + $0x168] sm:$0xff]
      %v321 = vld [vmem:[%s1 + $0x170] sm:$0xff]
      %v322 = vld [vmem:[%s1 + $0x178] sm:$0xff]
      %v323 = vld [vmem:[%s1 + $0x180] sm:$0xff]
      %v324 = vld [vmem:[%s1 + $0x188] sm:$0xff]
      %v325 = vld [vmem:[%s1 + $0x190] sm:$0xff]
      %v326 = vld [vmem:[%s1 + $0x198] sm:$0xff]
      %v327 = vld [vmem:[%s1 + $0x1a0] sm:$0xff]
      %v328 = vld [vmem:[%s1 + $0x1a8] sm:$0xff]
      %v329 = vld [vmem:[%s1 + $0x1b0] sm:$0xff]
      %v330 = vld [vmem:[%s1 + $0x1b8] sm:$0xff]
      %v331 = vld [vmem:[%s1 + $0x1c0] sm:$0xff]
      %v332 = vld [vmem:[%s1 + $0x1c8] sm:$0xff]
      %v333 = vld [vmem:[%s1 + $0x1d0] sm:$0xff]
      %v334 = vld [vmem:[%s1 + $0x1d8] sm:$0xff]
      %v335 = vld [vmem:[%s1 + $0x1e0] sm:$0xff]
      %v336 = vld [vmem:[%s1 + $0x1e8] sm:$0xff]
      %v337 = vld [vmem:[%s1 + $0x1f0] sm:$0xff]
      %v338 = vld [vmem:[%s1 + $0x1f8] sm:$0xff]
      %v339 = vld [vmem:[%s1 + $0x200] sm:$0xff]
      %v340 = vld [vmem:[%s1 + $0x208] sm:$0xff]
      %v341 = vld [vmem:[%s1 + $0x210] sm:$0xff]
      %v342 = vld [vmem:[%s1 + $0x218] sm:$0xff]
      %v343 = vld [vmem:[%s1 + $0x220] sm:$0xff]
      %v344 = vld [vmem:[%s1 + $0x228] sm:$0xff]
      %v345 = vld [vmem:[%s1 + $0x230] sm:$0xff]
      %v346 = vld [vmem:[%s1 + $0x238] sm:$0xff]
      %v347 = vld [vmem:[%s1 + $0x240] sm:$0xff]
      %v348 = vld [vmem:[%s1 + $0x248] sm:$0xff]
      %v349 = vld [vmem:[%s1 + $0x250] sm:$0xff]
      %v350 = vld [vmem:[%s1 + $0x258] sm:$0xff]
      %v351 = vld [vmem:[%s1 + $0x260] sm:$0xff]
      %v352 = vld [vmem:[%s1 + $0x268] sm:$0xff]
      %v353 = vld [vmem:[%s1 + $0x270] sm:$0xff]
      %v354 = vld [vmem:[%s1 + $0x278] sm:$0xff]
      %v355 = vld [vmem:[%s1 + $0x280] sm:$0xff]
      %v356 = vld [vmem:[%s1 + $0x288] sm:$0xff]
      %v357 = vld [vmem:[%s1 + $0x290] sm:$0xff]
      %v358 = vld [vmem:[%s1 + $0x298] sm:$0xff]
      %v359 = vld [vmem:[%s1 + $0x2a0] sm:$0xff]
      %v360 = vld [vmem:[%s1 + $0x2a8] sm:$0xff]
      %v361 = vld [vmem:[%s1 + $0x2b0] sm:$0xff]
      %v362 = vld [vmem:[%s1 + $0x2b8] sm:$0xff]
      %v363 = vld [vmem:[%s1 + $0x2c0] sm:$0xff]
      %v364 = vld [vmem:[%s1 + $0x2c8] sm:$0xff]
      %v365 = vld [vmem:[%s1 + $0x2d0] sm:$0xff]
      %v366 = vld [vmem:[%s1 + $0x2d8] sm:$0xff]
      %v367 = vld [vmem:[%s1 + $0x2e0] sm:$0xff]
      %v368 = vld [vmem:[%s1 + $0x2e8] sm:$0xff]
      %v369 = vld [vmem:[%s1 + $0x2f0] sm:$0xff]
      %v370 = vld [vmem:[%s1 + $0x2f8] sm:$0xff]
      %v371 = vld [vmem:[%s1 + $0x300] sm:$0xff]
      %v372 = vld [vmem:[%s1 + $0x308] sm:$0xff]
      %v373 = vld [vmem:[%s1 + $0x310] sm:$0xff]
      %v374 = vld [vmem:[%s1 + $0x318] sm:$0xff]
      %v375 = vld [vmem:[%s1 + $0x320] sm:$0xff]
      %v376 = vld [vmem:[%s1 + $0x328] sm:$0xff]
      %v377 = vld [vmem:[%s1 + $0x330] sm:$0xff]
      %v378 = vld [vmem:[%s1 + $0x338] sm:$0xff]
      %v379 = vld [vmem:[%s1 + $0x340] sm:$0xff]
      %v380 = vld [vmem:[%s1 + $0x348] sm:$0xff]
      %v381 = vld [vmem:[%s1 + $0x350] sm:$0xff]
      %v382 = vld [vmem:[%s1 + $0x358] sm:$0xff]
      %v383 = vld [vmem:[%s1 + $0x360] sm:$0xff]
      %v384 = vld [vmem:[%s1 + $0x368] sm:$0xff]
      %v385 = vld [vmem:[%s1 + $0x370] sm:$0xff]
      %v386 = vld [vmem:[%s1 + $0x378] sm:$0xff]
      %v387 = vld [vmem:[%s1 + $0x380] sm:$0xff]
      %v388 = vld [vmem:[%s1 + $0x388] sm:$0xff]
      %v389 = vld [vmem:[%s1 + $0x390] sm:$0xff]
      %v390 = vld [vmem:[%s1 + $0x398] sm:$0xff]
      %v391 = vld [vmem:[%s1 + $0x3a0] sm:$0xff]
      %v392 = vld [vmem:[%s1 + $0x3a8] sm:$0xff]
      %v393 = vld [vmem:[%s1 + $0x3b0] sm:$0xff]
      %v394 = vld [vmem:[%s1 + $0x3b8] sm:$0xff]
      %v395 = vld [vmem:[%s1 + $0x3c0] sm:$0xff]
      %v396 = vld [vmem:[%s1 + $0x3c8] sm:$0xff]
      %v397 = vld [vmem:[%s1 + $0x3d0] sm:$0xff]
      %v398 = vld [vmem:[%s1 + $0x3d8] sm:$0xff]
      %v399 = vld [vmem:[%s1 + $0x3e0] sm:$0xff]
      %v400 = vld [vmem:[%s1 + $0x3e8] sm:$0xff]
      %v401 = vld [vmem:[%s1 + $0x3f0] sm:$0xff]
      %v402 = vld [vmem:[%s1 + $0x3f8] sm:$0xff]
      %v403 = vld [vmem:[%s1 + $0x400] sm:$0xff]
      %v404 = vld [vmem:[%s1 + $0x408] sm:$0xff]
      %v405 = vld [vmem:[%s1 + $0x410] sm:$0xff]
      %v406 = vld [vmem:[%s1 + $0x418] sm:$0xff]
      %v407 = vld [vmem:[%s1 + $0x420] sm:$0xff]
      %v408 = vld [vmem:[%s1 + $0x428] sm:$0xff]
      %v409 = vld [vmem:[%s1 + $0x430] sm:$0xff]
      %v410 = vld [vmem:[%s1 + $0x438] sm:$0xff]
      %v411 = vld [vmem:[%s1 + $0x440] sm:$0xff]
      %v412 = vld [vmem:[%s1 + $0x448] sm:$0xff]
      %v413 = vld [vmem:[%s1 + $0x450] sm:$0xff]
      %v414 = vld [vmem:[%s1 + $0x458] sm:$0xff]
      %v415 = vld [vmem:[%s1 + $0x460] sm:$0xff]
      %v416 = vld [vmem:[%s1 + $0x468] sm:$0xff]
      %v417 = vld [vmem:[%s1 + $0x470] sm:$0xff]
      %v418 = vld [vmem:[%s1 + $0x478] sm:$0xff]
      %v419 = vld [vmem:[%s1 + $0x480] sm:$0xff]
      %v420 = vld [vmem:[%s1 + $0x488] sm:$0xff]
      %v421 = vld [vmem:[%s1 + $0x490] sm:$0xff]
      %v422 = vld [vmem:[%s1 + $0x498] sm:$0xff]
      %v423 = vld [vmem:[%s1 + $0x4a0] sm:$0xff]
      %v424 = vld [vmem:[%s1 + $0x4a8] sm:$0xff]
      %v425 = vld [vmem:[%s1 + $0x4b0] sm:$0xff]
      %v426 = vld [vmem:[%s1 + $0x4b8] sm:$0xff]
      %v427 = vld [vmem:[%s1 + $0x4c0] sm:$0xff]
      %v428 = vld [vmem:[%s1 + $0x4c8] sm:$0xff]
      %v429 = vld [vmem:[%s1 + $0x4d0] sm:$0xff]
      %v430 = vld [vmem:[%s1 + $0x4d8] sm:$0xff]
      %v431 = vld [vmem:[%s1 + $0x4e0] sm:$0xff]
      %v432 = vld [vmem:[%s1 + $0x4e8] sm:$0xff]
      %v433 = vld [vmem:[%s1 + $0x4f0] sm:$0xff]
      %v434 = vld [vmem:[%s1 + $0x4f8] sm:$0xff]
      %v435 = vld [vmem:[%s1 + $0x500] sm:$0xff]
      %v436 = vld [vmem:[%s1 + $0x508] sm:$0xff]
      %v437 = vld [vmem:[%s1 + $0x510] sm:$0xff]
      %v438 = vld [vmem:[%s1 + $0x518] sm:$0xff]
      %v439 = vld [vmem:[%s1 + $0x520] sm:$0xff]
      %v440 = vld [vmem:[%s1 + $0x528] sm:$0xff]
      %v441 = vld [vmem:[%s1 + $0x530] sm:$0xff]
      %v442 = vld [vmem:[%s1 + $0x538] sm:$0xff]
      %v443 = vld [vmem:[%s1 + $0x540] sm:$0xff]
      %v444 = vld [vmem:[%s1 + $0x548] sm:$0xff]
      %v445 = vld [vmem:[%s1 + $0x550] sm:$0xff]
      %v446 = vld [vmem:[%s1 + $0x558] sm:$0xff]
      %v447 = vld [vmem:[%s1 + $0x560] sm:$0xff]
      %v448 = vld [vmem:[%s1 + $0x568] sm:$0xff]
      %v449 = vld [vmem:[%s1 + $0x570] sm:$0xff]
      %v450 = vld [vmem:[%s1 + $0x578] sm:$0xff]
      %v451 = vld [vmem:[%s1 + $0x580] sm:$0xff]
      %v452 = vld [vmem:[%s1 + $0x588] sm:$0xff]
      %v453 = vld [vmem:[%s1 + $0x590] sm:$0xff]
      %v454 = vld [vmem:[%s1 + $0x598] sm:$0xff]
      %v455 = vld [vmem:[%s1 + $0x5a0] sm:$0xff]
      %v456 = vld [vmem:[%s1 + $0x5a8] sm:$0xff]
      %v457 = vld [vmem:[%s1 + $0x5b0] sm:$0xff]
      %v458 = vld [vmem:[%s1 + $0x5b8] sm:$0xff]
      %v459 = vld [vmem:[%s1 + $0x5c0] sm:$0xff]
      %v460 = vld [vmem:[%s1 + $0x5c8] sm:$0xff]
      %v461 = vld [vmem:[%s1 + $0x5d0] sm:$0xff]
      %v462 = vld [vmem:[%s1 + $0x5d8] sm:$0xff]
      %v463 = vld [vmem:[%s1 + $0x5e0] sm:$0xff]
      %v464 = vld [vmem:[%s1 + $0x5e8] sm:$0xff]
      %v465 = vld [vmem:[%s1 + $0x5f0] sm:$0xff]
      %v466 = vld [vmem:[%s1 + $0x5f8] sm:$0xff]
      %v467 = vld [vmem:[%s1 + $0x600] sm:$0xff]
      %v468 = vld [vmem:[%s1 + $0x608] sm:$0xff]
      %v469 = vld [vmem:[%s1 + $0x610] sm:$0xff]
      %v470 = vld [vmem:[%s1 + $0x618] sm:$0xff]
      %v471 = vld [vmem:[%s1 + $0x620] sm:$0xff]
      %v472 = vld [vmem:[%s1 + $0x628] sm:$0xff]
      %v473 = vld [vmem:[%s1 + $0x630] sm:$0xff]
      %v474 = vld [vmem:[%s1 + $0x638] sm:$0xff]
      %vm475 = vcmask 523264
      %v477 = vsel %vm475, %v183, 0
      %v480 = vsel %vm475, %v196, 0
      %v483 = vsel %vm475, %v209, 0
      %v486 = vsel %vm475, %v222, 0
      %v489 = vsel %vm475, %v235, 0
      %v492 = vsel %vm475, %v248, 0
      %v495 = vsel %vm475, %v261, 0
      %v498 = vsel %vm475, %v274, 0
      %500 = vmatprep.subr.mxu0 0.0
      %501 = vmatpush1.msra.mxu0 %v275
      %502 = vmatprep.subr.mxu0 0.0
      %503 = vmatpush1.msra.mxu0 %v276
      %504 = vmatprep.subr.mxu0 0.0
      %505 = vmatpush1.msra.mxu0 %v277
      %506 = vmatprep.subr.mxu0 0.0
      %507 = vmatpush1.msra.mxu0 %v278
      %508 = vmatprep.subr.mxu0 0.0
      %509 = vmatpush1.msra.mxu0 %v279
      %510 = vmatprep.subr.mxu0 0.0
      %511 = vmatpush1.msra.mxu0 %v280
      %512 = vmatprep.subr.mxu0 0.0
      %513 = vmatpush1.msra.mxu0 %v281
      %514 = vmatprep.subr.mxu0 0.0
      %515 = vmatpush1.msra.mxu0 %v282
      %516 = vmatprep.subr.mxu0 0.0
      %517 = vmatpush1.msra.mxu0 %v283
      %518 = vmatprep.subr.mxu0 0.0
      %519 = vmatpush1.msra.mxu0 %v284
      %520 = vmatprep.subr.mxu0 0.0
      %521 = vmatpush1.msra.mxu0 %v285
      %522 = vmatprep.subr.mxu0 0.0
      %523 = vmatpush1.msra.mxu0 %v286
      %524 = vmatprep.subr.mxu0 0.0
      %525 = vmatpush1.msra.mxu0 %v287
      %526 = vmatprep.subr.mxu0 0.0
      %527 = vmatpush1.msra.mxu0 %v288
      %528 = vmatprep.subr.mxu0 0.0
      %529 = vmatpush1.msra.mxu0 %v289
      %530 = vmatprep.subr.mxu0 0.0
      %531 = vmatpush1.msra.mxu0 %v290
      %532 = vmatprep.subr.mxu0 0.0
      %533 = vmatpush1.msra.mxu0 %v291
      %534 = vmatprep.subr.mxu0 0.0
      %535 = vmatpush1.msra.mxu0 %v292
      %536 = vmatprep.subr.mxu0 0.0
      %537 = vmatpush1.msra.mxu0 %v293
      %538 = vmatprep.subr.mxu0 0.0
      %539 = vmatpush1.msra.mxu0 %v294
      %540 = vmatprep.subr.mxu0 0.0
      %541 = vmatpush1.msra.mxu0 %v295
      %542 = vmatprep.subr.mxu0 0.0
      %543 = vmatpush1.msra.mxu0 %v296
      %544 = vmatprep.subr.mxu0 0.0
      %545 = vmatpush1.msra.mxu0 %v297
      %546 = vmatprep.subr.mxu0 0.0
      %547 = vmatpush1.msra.mxu0 %v298
      %548 = vmatprep.subr.mxu0 0.0
      %549 = vmatpush1.msra.mxu0 %v299
      %550 = vmatprep.subr.mxu0 0.0
      %551 = vmatpush1.msra.mxu0 %v300
      %552 = vmatprep.subr.mxu0 0.0
      %553 = vmatpush1.msra.mxu0 %v301
      %554 = vmatprep.subr.mxu0 0.0
      %555 = vmatpush1.msra.mxu0 %v302
      %556 = vmatprep.subr.mxu0 0.0
      %557 = vmatpush1.msra.mxu0 %v303
      %558 = vmatprep.subr.mxu0 0.0
      %559 = vmatpush1.msra.mxu0 %v304
      %560 = vmatprep.subr.mxu0 0.0
      %561 = vmatpush1.msra.mxu0 %v305
      %562 = vmatprep.subr.mxu0 0.0
      %563 = vmatpush1.msra.mxu0 %v306
      %564 = vmatprep.mubr.f32.mxu0 %v172
      %565 = vmatmul.mubr.f32.gmra.mrb[0].mxu0 %v171
      %v566 = vpop.f32.mrb[0].mxu0
      %v567 = vadd.f32 0.0, %v566
      %v568 = vpop.f32.mrb[0].mxu0
      %569 = vmatprep.mubr.f32.mxu0 %v185
      %570 = vmatmul.mubr.f32.gmra.mrb[0].mxu0 %v184
      %v571 = vpop.f32.mrb[0].mxu0
      %v572 = vadd.f32 0.0, %v571
      %v573 = vpop.f32.mrb[0].mxu0
      %574 = vmatprep.mubr.f32.mxu0 %v198
      %575 = vmatmul.mubr.f32.gmra.mrb[0].mxu0 %v197
      %v576 = vpop.f32.mrb[0].mxu0
      %v577 = vadd.f32 0.0, %v576
      %v578 = vpop.f32.mrb[0].mxu0
      %579 = vmatprep.mubr.f32.mxu0 %v211
      %580 = vmatmul.mubr.f32.gmra.mrb[0].mxu0 %v210
      %v581 = vpop.f32.mrb[0].mxu0
      %v582 = vadd.f32 0.0, %v581
      %v583 = vpop.f32.mrb[0].mxu0
      %584 = vmatprep.mubr.f32.mxu0 %v224
      %585 = vmatmul.mubr.f32.gmra.mrb[0].mxu0 %v223
      %v586 = vpop.f32.mrb[0].mxu0
      %v587 = vadd.f32 0.0, %v586
      %v588 = vpop.f32.mrb[0].mxu0
      %589 = vmatprep.mubr.f32.mxu0 %v237
      %590 = vmatmul.mubr.f32.gmra.mrb[0].mxu0 %v236
      %v591 = vpop.f32.mrb[0].mxu0
      %v592 = vadd.f32 0.0, %v591
      %v593 = vpop.f32.mrb[0].mxu0
      %594 = vmatprep.mubr.f32.mxu0 %v250
      %595 = vmatmul.mubr.f32.gmra.mrb[0].mxu0 %v249
      %v596 = vpop.f32.mrb[0].mxu0
      %v597 = vadd.f32 0.0, %v596
      %v598 = vpop.f32.mrb[0].mxu0
      %599 = vmatprep.mubr.f32.mxu0 %v263
      %600 = vmatmul.mubr.f32.gmra.mrb[0].mxu0 %v262
      %v601 = vpop.f32.mrb[0].mxu0
      %v602 = vadd.f32 0.0, %v601
      %v603 = vpop.f32.mrb[0].mxu0
      %604 = vdwg.mxu0
      %605 = vmatprep.subr.mxu0 0.0
      %606 = vmatpush1.msra.mxu0 %v307
      %607 = vmatprep.subr.mxu0 0.0
      %608 = vmatpush1.msra.mxu0 %v308
      %609 = vmatprep.subr.mxu0 0.0
      %610 = vmatpush1.msra.mxu0 %v309
      %611 = vmatprep.subr.mxu0 0.0
      %612 = vmatpush1.msra.mxu0 %v310
      %613 = vmatprep.subr.mxu0 0.0
      %614 = vmatpush1.msra.mxu0 %v311
      %615 = vmatprep.subr.mxu0 0.0
      %616 = vmatpush1.msra.mxu0 %v312
      %617 = vmatprep.subr.mxu0 0.0
      %618 = vmatpush1.msra.mxu0 %v313
      %619 = vmatprep.subr.mxu0 0.0
      %620 = vmatpush1.msra.mxu0 %v314
      %621 = vmatprep.subr.mxu0 0.0
      %622 = vmatpush1.msra.mxu0 %v315
      %623 = vmatprep.subr.mxu0 0.0
      %624 = vmatpush1.msra.mxu0 %v316
      %625 = vmatprep.subr.mxu0 0.0
      %626 = vmatpush1.msra.mxu0 %v317
      %627 = vmatprep.subr.mxu0 0.0
      %628 = vmatpush1.msra.mxu0 %v318
      %629 = vmatprep.subr.mxu0 0.0
      %630 = vmatpush1.msra.mxu0 %v319
      %631 = vmatprep.subr.mxu0 0.0
      %632 = vmatpush1.msra.mxu0 %v320
      %633 = vmatprep.subr.mxu0 0.0
      %634 = vmatpush1.msra.mxu0 %v321
      %635 = vmatprep.subr.mxu0 0.0
      %636 = vmatpush1.msra.mxu0 %v322
      %637 = vmatprep.subr.mxu0 0.0
      %638 = vmatpush1.msra.mxu0 %v323
      %639 = vmatprep.subr.mxu0 0.0
      %640 = vmatpush1.msra.mxu0 %v324
      %641 = vmatprep.subr.mxu0 0.0
      %642 = vmatpush1.msra.mxu0 %v325
      %643 = vmatprep.subr.mxu0 0.0
      %644 = vmatpush1.msra.mxu0 %v326
      %645 = vmatprep.subr.mxu0 0.0
      %646 = vmatpush1.msra.mxu0 %v327
      %647 = vmatprep.subr.mxu0 0.0
      %648 = vmatpush1.msra.mxu0 %v328
      %649 = vmatprep.subr.mxu0 0.0
      %650 = vmatpush1.msra.mxu0 %v329
      %651 = vmatprep.subr.mxu0 0.0
      %652 = vmatpush1.msra.mxu0 %v330
      %653 = vmatprep.subr.mxu0 0.0
      %654 = vmatpush1.msra.mxu0 %v331
      %655 = vmatprep.subr.mxu0 0.0
      %656 = vmatpush1.msra.mxu0 %v332
      %657 = vmatprep.subr.mxu0 0.0
      %658 = vmatpush1.msra.mxu0 %v333
      %659 = vmatprep.subr.mxu0 0.0
      %660 = vmatpush1.msra.mxu0 %v334
      %661 = vmatprep.subr.mxu0 0.0
      %662 = vmatpush1.msra.mxu0 %v335
      %663 = vmatprep.subr.mxu0 0.0
      %664 = vmatpush1.msra.mxu0 %v336
      %665 = vmatprep.subr.mxu0 0.0
      %666 = vmatpush1.msra.mxu0 %v337
      %667 = vmatprep.subr.mxu0 0.0
      %668 = vmatpush1.msra.mxu0 %v338
      %669 = vmatprep.mubr.f32.mxu0 %v174
      %670 = vmatmul.mubr.f32.gmra.mrb[0].mxu0 %v173
      %v671 = vpop.f32.mrb[0].mxu0
      %v672 = vadd.f32 %v567, %v671
      %v673 = vpop.f32.mrb[0].mxu0
      %674 = vmatprep.mubr.f32.mxu0 %v187
      %675 = vmatmul.mubr.f32.gmra.mrb[0].mxu0 %v186
      %v676 = vpop.f32.mrb[0].mxu0
      %v677 = vadd.f32 %v572, %v676
      %v678 = vpop.f32.mrb[0].mxu0
      %679 = vmatprep.mubr.f32.mxu0 %v200
      %680 = vmatmul.mubr.f32.gmra.mrb[0].mxu0 %v199
      %v681 = vpop.f32.mrb[0].mxu0
      %v682 = vadd.f32 %v577, %v681
      %v683 = vpop.f32.mrb[0].mxu0
      %684 = vmatprep.mubr.f32.mxu0 %v213
      %685 = vmatmul.mubr.f32.gmra.mrb[0].mxu0 %v212
      %v686 = vpop.f32.mrb[0].mxu0
      %v687 = vadd.f32 %v582, %v686
      %v688 = vpop.f32.mrb[0].mxu0
      %689 = vmatprep.mubr.f32.mxu0 %v226
      %690 = vmatmul.mubr.f32.gmra.mrb[0].mxu0 %v225
      %v691 = vpop.f32.mrb[0].mxu0
      %v692 = vadd.f32 %v587, %v691
      %v693 = vpop.f32.mrb[0].mxu0
      %694 = vmatprep.mubr.f32.mxu0 %v239
      %695 = vmatmul.mubr.f32.gmra.mrb[0].mxu0 %v238
      %v696 = vpop.f32.mrb[0].mxu0
      %v697 = vadd.f32 %v592, %v696
      %v698 = vpop.f32.mrb[0].mxu0
      %699 = vmatprep.mubr.f32.mxu0 %v252
      %700 = vmatmul.mubr.f32.gmra.mrb[0].mxu0 %v251
      %v701 = vpop.f32.mrb[0].mxu0
      %v702 = vadd.f32 %v597, %v701
      %v703 = vpop.f32.mrb[0].mxu0
      %704 = vmatprep.mubr.f32.mxu0 %v265
      %705 = vmatmul.mubr.f32.gmra.mrb[0].mxu0 %v264
      %v706 = vpop.f32.mrb[0].mxu0
      %v707 = vadd.f32 %v602, %v706
      %v708 = vpop.f32.mrb[0].mxu0
      %709 = vdwg.mxu0
      %710 = vmatprep.subr.mxu0 0.0
      %711 = vmatpush1.msra.mxu0 %v339
      %712 = vmatprep.subr.mxu0 0.0
      %713 = vmatpush1.msra.mxu0 %v340
      %714 = vmatprep.subr.mxu0 0.0
      %715 = vmatpush1.msra.mxu0 %v341
      %716 = vmatprep.subr.mxu0 0.0
      %717 = vmatpush1.msra.mxu0 %v342
      %718 = vmatprep.subr.mxu0 0.0
      %719 = vmatpush1.msra.mxu0 %v343
      %720 = vmatprep.subr.mxu0 0.0
      %721 = vmatpush1.msra.mxu0 %v344
      %722 = vmatprep.subr.mxu0 0.0
      %723 = vmatpush1.msra.mxu0 %v345
      %724 = vmatprep.subr.mxu0 0.0
      %725 = vmatpush1.msra.mxu0 %v346
      %726 = vmatprep.subr.mxu0 0.0
      %727 = vmatpush1.msra.mxu0 %v347
      %728 = vmatprep.subr.mxu0 0.0
      %729 = vmatpush1.msra.mxu0 %v348
      %730 = vmatprep.subr.mxu0 0.0
      %731 = vmatpush1.msra.mxu0 %v349
      %732 = vmatprep.subr.mxu0 0.0
      %733 = vmatpush1.msra.mxu0 %v350
      %734 = vmatprep.subr.mxu0 0.0
      %735 = vmatpush1.msra.mxu0 %v351
      %736 = vmatprep.subr.mxu0 0.0
      %737 = vmatpush1.msra.mxu0 %v352
      %738 = vmatprep.subr.mxu0 0.0
      %739 = vmatpush1.msra.mxu0 %v353
      %740 = vmatprep.subr.mxu0 0.0
      %741 = vmatpush1.msra.mxu0 %v354
      %742 = vmatprep.subr.mxu0 0.0
      %743 = vmatpush1.msra.mxu0 %v355
      %744 = vmatprep.subr.mxu0 0.0
      %745 = vmatpush1.msra.mxu0 %v356
      %746 = vmatprep.subr.mxu0 0.0
      %747 = vmatpush1.msra.mxu0 %v357
      %748 = vmatprep.subr.mxu0 0.0
      %749 = vmatpush1.msra.mxu0 %v358
      %750 = vmatprep.subr.mxu0 0.0
      %751 = vmatpush1.msra.mxu0 %v359
      %752 = vmatprep.subr.mxu0 0.0
      %753 = vmatpush1.msra.mxu0 %v360
      %754 = vmatprep.subr.mxu0 0.0
      %755 = vmatpush1.msra.mxu0 %v361
      %756 = vmatprep.subr.mxu0 0.0
      %757 = vmatpush1.msra.mxu0 %v362
      %758 = vmatprep.subr.mxu0 0.0
      %759 = vmatpush1.msra.mxu0 %v363
      %760 = vmatprep.subr.mxu0 0.0
      %761 = vmatpush1.msra.mxu0 %v364
      %762 = vmatprep.subr.mxu0 0.0
      %763 = vmatpush1.msra.mxu0 %v365
      %764 = vmatprep.subr.mxu0 0.0
      %765 = vmatpush1.msra.mxu0 %v366
      %766 = vmatprep.subr.mxu0 0.0
      %767 = vmatpush1.msra.mxu0 %v367
      %768 = vmatprep.subr.mxu0 0.0
      %769 = vmatpush1.msra.mxu0 %v368
      %770 = vmatprep.subr.mxu0 0.0
      %771 = vmatpush1.msra.mxu0 %v369
      %772 = vmatprep.subr.mxu0 0.0
      %773 = vmatpush1.msra.mxu0 %v370
      %774 = vmatprep.mubr.f32.mxu0 %v176
      %775 = vmatmul.mubr.f32.gmra.mrb[0].mxu0 %v175
      %v776 = vpop.f32.mrb[0].mxu0
      %v777 = vadd.f32 %v672, %v776
      %v778 = vpop.f32.mrb[0].mxu0
      %779 = vmatprep.mubr.f32.mxu0 %v189
      %780 = vmatmul.mubr.f32.gmra.mrb[0].mxu0 %v188
      %v781 = vpop.f32.mrb[0].mxu0
      %v782 = vadd.f32 %v677, %v781
      %v783 = vpop.f32.mrb[0].mxu0
      %784 = vmatprep.mubr.f32.mxu0 %v202
      %785 = vmatmul.mubr.f32.gmra.mrb[0].mxu0 %v201
      %v786 = vpop.f32.mrb[0].mxu0
      %v787 = vadd.f32 %v682, %v786
      %v788 = vpop.f32.mrb[0].mxu0
      %789 = vmatprep.mubr.f32.mxu0 %v215
      %790 = vmatmul.mubr.f32.gmra.mrb[0].mxu0 %v214
      %v791 = vpop.f32.mrb[0].mxu0
      %v792 = vadd.f32 %v687, %v791
      %v793 = vpop.f32.mrb[0].mxu0
      %794 = vmatprep.mubr.f32.mxu0 %v228
      %795 = vmatmul.mubr.f32.gmra.mrb[0].mxu0 %v227
      %v796 = vpop.f32.mrb[0].mxu0
      %v797 = vadd.f32 %v692, %v796
      %v798 = vpop.f32.mrb[0].mxu0
      %799 = vmatprep.mubr.f32.mxu0 %v241
      %800 = vmatmul.mubr.f32.gmra.mrb[0].mxu0 %v240
      %v801 = vpop.f32.mrb[0].mxu0
      %v802 = vadd.f32 %v697, %v801
      %v803 = vpop.f32.mrb[0].mxu0
      %804 = vmatprep.mubr.f32.mxu0 %v254
      %805 = vmatmul.mubr.f32.gmra.mrb[0].mxu0 %v253
      %v806 = vpop.f32.mrb[0].mxu0
      %v807 = vadd.f32 %v702, %v806
      %v808 = vpop.f32.mrb[0].mxu0
      %809 = vmatprep.mubr.f32.mxu0 %v267
      %810 = vmatmul.mubr.f32.gmra.mrb[0].mxu0 %v266
      %v811 = vpop.f32.mrb[0].mxu0
      %v812 = vadd.f32 %v707, %v811
      %v813 = vpop.f32.mrb[0].mxu0
      %814 = vdwg.mxu0
      %815 = vmatprep.subr.mxu0 0.0
      %816 = vmatpush1.msra.mxu0 %v371
      %817 = vmatprep.subr.mxu0 0.0
      %818 = vmatpush1.msra.mxu0 %v372
      %819 = vmatprep.subr.mxu0 0.0
      %820 = vmatpush1.msra.mxu0 %v373
      %821 = vmatprep.subr.mxu0 0.0
      %822 = vmatpush1.msra.mxu0 %v374
      %823 = vmatprep.subr.mxu0 0.0
      %824 = vmatpush1.msra.mxu0 %v375
      %825 = vmatprep.subr.mxu0 0.0
      %826 = vmatpush1.msra.mxu0 %v376
      %827 = vmatprep.subr.mxu0 0.0
      %828 = vmatpush1.msra.mxu0 %v377
      %829 = vmatprep.subr.mxu0 0.0
      %830 = vmatpush1.msra.mxu0 %v378
      %831 = vmatprep.subr.mxu0 0.0
      %832 = vmatpush1.msra.mxu0 %v379
      %833 = vmatprep.subr.mxu0 0.0
      %834 = vmatpush1.msra.mxu0 %v380
      %835 = vmatprep.subr.mxu0 0.0
      %836 = vmatpush1.msra.mxu0 %v381
      %837 = vmatprep.subr.mxu0 0.0
      %838 = vmatpush1.msra.mxu0 %v382
      %839 = vmatprep.subr.mxu0 0.0
      %840 = vmatpush1.msra.mxu0 %v383
      %841 = vmatprep.subr.mxu0 0.0
      %842 = vmatpush1.msra.mxu0 %v384
      %843 = vmatprep.subr.mxu0 0.0
      %844 = vmatpush1.msra.mxu0 %v385
      %845 = vmatprep.subr.mxu0 0.0
      %846 = vmatpush1.msra.mxu0 %v386
      %847 = vmatprep.subr.mxu0 0.0
      %848 = vmatpush1.msra.mxu0 %v387
      %849 = vmatprep.subr.mxu0 0.0
      %850 = vmatpush1.msra.mxu0 %v388
      %851 = vmatprep.subr.mxu0 0.0
      %852 = vmatpush1.msra.mxu0 %v389
      %853 = vmatprep.subr.mxu0 0.0
      %854 = vmatpush1.msra.mxu0 %v390
      %855 = vmatprep.subr.mxu0 0.0
      %856 = vmatpush1.msra.mxu0 %v391
      %857 = vmatprep.subr.mxu0 0.0
      %858 = vmatpush1.msra.mxu0 %v392
      %859 = vmatprep.subr.mxu0 0.0
      %860 = vmatpush1.msra.mxu0 %v393
      %861 = vmatprep.subr.mxu0 0.0
      %862 = vmatpush1.msra.mxu0 %v394
      %863 = vmatprep.subr.mxu0 0.0
      %864 = vmatpush1.msra.mxu0 %v395
      %865 = vmatprep.subr.mxu0 0.0
      %866 = vmatpush1.msra.mxu0 %v396
      %867 = vmatprep.subr.mxu0 0.0
      %868 = vmatpush1.msra.mxu0 %v397
      %869 = vmatprep.subr.mxu0 0.0
      %870 = vmatpush1.msra.mxu0 %v398
      %871 = vmatprep.subr.mxu0 0.0
      %872 = vmatpush1.msra.mxu0 %v399
      %873 = vmatprep.subr.mxu0 0.0
      %874 = vmatpush1.msra.mxu0 %v400
      %875 = vmatprep.subr.mxu0 0.0
      %876 = vmatpush1.msra.mxu0 %v401
      %877 = vmatprep.subr.mxu0 0.0
      %878 = vmatpush1.msra.mxu0 %v402
      %879 = vmatprep.mubr.f32.mxu0 %v178
      %880 = vmatmul.mubr.f32.gmra.mrb[0].mxu0 %v177
      %v881 = vpop.f32.mrb[0].mxu0
      %v882 = vadd.f32 %v777, %v881
      %v883 = vpop.f32.mrb[0].mxu0
      %884 = vmatprep.mubr.f32.mxu0 %v191
      %885 = vmatmul.mubr.f32.gmra.mrb[0].mxu0 %v190
      %v886 = vpop.f32.mrb[0].mxu0
      %v887 = vadd.f32 %v782, %v886
      %v888 = vpop.f32.mrb[0].mxu0
      %889 = vmatprep.mubr.f32.mxu0 %v204
      %890 = vmatmul.mubr.f32.gmra.mrb[0].mxu0 %v203
      %v891 = vpop.f32.mrb[0].mxu0
      %v892 = vadd.f32 %v787, %v891
      %v893 = vpop.f32.mrb[0].mxu0
      %894 = vmatprep.mubr.f32.mxu0 %v217
      %895 = vmatmul.mubr.f32.gmra.mrb[0].mxu0 %v216
      %v896 = vpop.f32.mrb[0].mxu0
      %v897 = vadd.f32 %v792, %v896
      %v898 = vpop.f32.mrb[0].mxu0
      %899 = vmatprep.mubr.f32.mxu0 %v230
      %900 = vmatmul.mubr.f32.gmra.mrb[0].mxu0 %v229
      %v901 = vpop.f32.mrb[0].mxu0
      %v902 = vadd.f32 %v797, %v901
      %v903 = vpop.f32.mrb[0].mxu0
      %904 = vmatprep.mubr.f32.mxu0 %v243
      %905 = vmatmul.mubr.f32.gmra.mrb[0].mxu0 %v242
      %v906 = vpop.f32.mrb[0].mxu0
      %v907 = vadd.f32 %v802, %v906
      %v908 = vpop.f32.mrb[0].mxu0
      %909 = vmatprep.mubr.f32.mxu0 %v256
      %910 = vmatmul.mubr.f32.gmra.mrb[0].mxu0 %v255
      %v911 = vpop.f32.mrb[0].mxu0
      %v912 = vadd.f32 %v807, %v911
      %v913 = vpop.f32.mrb[0].mxu0
      %914 = vmatprep.mubr.f32.mxu0 %v269
      %915 = vmatmul.mubr.f32.gmra.mrb[0].mxu0 %v268
      %v916 = vpop.f32.mrb[0].mxu0
      %v917 = vadd.f32 %v812, %v916
      %v918 = vpop.f32.mrb[0].mxu0
      %919 = vdwg.mxu0
      %920 = vmatprep.subr.mxu0 0.0
      %921 = vmatpush1.msra.mxu0 %v403
      %922 = vmatprep.subr.mxu0 0.0
      %923 = vmatpush1.msra.mxu0 %v404
      %924 = vmatprep.subr.mxu0 0.0
      %925 = vmatpush1.msra.mxu0 %v405
      %926 = vmatprep.subr.mxu0 0.0
      %927 = vmatpush1.msra.mxu0 %v406
      %928 = vmatprep.subr.mxu0 0.0
      %929 = vmatpush1.msra.mxu0 %v407
      %930 = vmatprep.subr.mxu0 0.0
      %931 = vmatpush1.msra.mxu0 %v408
      %932 = vmatprep.subr.mxu0 0.0
      %933 = vmatpush1.msra.mxu0 %v409
      %934 = vmatprep.subr.mxu0 0.0
      %935 = vmatpush1.msra.mxu0 %v410
      %936 = vmatprep.subr.mxu0 0.0
      %937 = vmatpush1.msra.mxu0 %v411
      %938 = vmatprep.subr.mxu0 0.0
      %939 = vmatpush1.msra.mxu0 %v412
      %940 = vmatprep.subr.mxu0 0.0
      %941 = vmatpush1.msra.mxu0 %v413
      %942 = vmatprep.subr.mxu0 0.0
      %943 = vmatpush1.msra.mxu0 %v414
      %944 = vmatprep.subr.mxu0 0.0
      %945 = vmatpush1.msra.mxu0 %v415
      %946 = vmatprep.subr.mxu0 0.0
      %947 = vmatpush1.msra.mxu0 %v416
      %948 = vmatprep.subr.mxu0 0.0
      %949 = vmatpush1.msra.mxu0 %v417
      %950 = vmatprep.subr.mxu0 0.0
      %951 = vmatpush1.msra.mxu0 %v418
      %952 = vmatprep.subr.mxu0 0.0
      %953 = vmatpush1.msra.mxu0 %v419
      %954 = vmatprep.subr.mxu0 0.0
      %955 = vmatpush1.msra.mxu0 %v420
      %956 = vmatprep.subr.mxu0 0.0
      %957 = vmatpush1.msra.mxu0 %v421
      %958 = vmatprep.subr.mxu0 0.0
      %959 = vmatpush1.msra.mxu0 %v422
      %960 = vmatprep.subr.mxu0 0.0
      %961 = vmatpush1.msra.mxu0 %v423
      %962 = vmatprep.subr.mxu0 0.0
      %963 = vmatpush1.msra.mxu0 %v424
      %964 = vmatprep.subr.mxu0 0.0
      %965 = vmatpush1.msra.mxu0 %v425
      %966 = vmatprep.subr.mxu0 0.0
      %967 = vmatpush1.msra.mxu0 %v426
      %968 = vmatprep.subr.mxu0 0.0
      %969 = vmatpush1.msra.mxu0 %v427
      %970 = vmatprep.subr.mxu0 0.0
      %971 = vmatpush1.msra.mxu0 %v428
      %972 = vmatprep.subr.mxu0 0.0
      %973 = vmatpush1.msra.mxu0 %v429
      %974 = vmatprep.subr.mxu0 0.0
      %975 = vmatpush1.msra.mxu0 %v430
      %976 = vmatprep.subr.mxu0 0.0
      %977 = vmatpush1.msra.mxu0 %v431
      %978 = vmatprep.subr.mxu0 0.0
      %979 = vmatpush1.msra.mxu0 %v432
      %980 = vmatprep.subr.mxu0 0.0
      %981 = vmatpush1.msra.mxu0 %v433
      %982 = vmatprep.subr.mxu0 0.0
      %983 = vmatpush1.msra.mxu0 %v434
      %984 = vmatprep.mubr.f32.mxu0 %v180
      %985 = vmatmul.mubr.f32.gmra.mrb[0].mxu0 %v179
      %v986 = vpop.f32.mrb[0].mxu0
      %v987 = vadd.f32 %v882, %v986
      %v988 = vpop.f32.mrb[0].mxu0
      %989 = vmatprep.mubr.f32.mxu0 %v193
      %990 = vmatmul.mubr.f32.gmra.mrb[0].mxu0 %v192
      %v991 = vpop.f32.mrb[0].mxu0
      %v992 = vadd.f32 %v887, %v991
      %v993 = vpop.f32.mrb[0].mxu0
      %994 = vmatprep.mubr.f32.mxu0 %v206
      %995 = vmatmul.mubr.f32.gmra.mrb[0].mxu0 %v205
      %v996 = vpop.f32.mrb[0].mxu0
      %v997 = vadd.f32 %v892, %v996
      %v998 = vpop.f32.mrb[0].mxu0
      %999 = vmatprep.mubr.f32.mxu0 %v219
      %1000 = vmatmul.mubr.f32.gmra.mrb[0].mxu0 %v218
      %v1001 = vpop.f32.mrb[0].mxu0
      %v1002 = vadd.f32 %v897, %v1001
      %v1003 = vpop.f32.mrb[0].mxu0
      %1004 = vmatprep.mubr.f32.mxu0 %v232
      %1005 = vmatmul.mubr.f32.gmra.mrb[0].mxu0 %v231
      %v1006 = vpop.f32.mrb[0].mxu0
      %v1007 = vadd.f32 %v902, %v1006
      %v1008 = vpop.f32.mrb[0].mxu0
      %1009 = vmatprep.mubr.f32.mxu0 %v245
      %1010 = vmatmul.mubr.f32.gmra.mrb[0].mxu0 %v244
      %v1011 = vpop.f32.mrb[0].mxu0
      %v1012 = vadd.f32 %v907, %v1011
      %v1013 = vpop.f32.mrb[0].mxu0
      %1014 = vmatprep.mubr.f32.mxu0 %v258
      %1015 = vmatmul.mubr.f32.gmra.mrb[0].mxu0 %v257
      %v1016 = vpop.f32.mrb[0].mxu0
      %v1017 = vadd.f32 %v912, %v1016
      %v1018 = vpop.f32.mrb[0].mxu0
      %1019 = vmatprep.mubr.f32.mxu0 %v271
      %1020 = vmatmul.mubr.f32.gmra.mrb[0].mxu0 %v270
      %v1021 = vpop.f32.mrb[0].mxu0
      %v1022 = vadd.f32 %v917, %v1021
      %v1023 = vpop.f32.mrb[0].mxu0
      %1024 = vdwg.mxu0
      %1025 = vmatprep.subr.mxu0 0.0
      %1026 = vmatpush1.msra.mxu0 %v435
      %1027 = vmatprep.subr.mxu0 0.0
      %1028 = vmatpush1.msra.mxu0 %v436
      %1029 = vmatprep.subr.mxu0 0.0
      %1030 = vmatpush1.msra.mxu0 %v437
      %1031 = vmatprep.subr.mxu0 0.0
      %1032 = vmatpush1.msra.mxu0 %v438
      %1033 = vmatprep.subr.mxu0 0.0
      %1034 = vmatpush1.msra.mxu0 %v439
      %1035 = vmatprep.subr.mxu0 0.0
      %1036 = vmatpush1.msra.mxu0 %v440
      %1037 = vmatprep.subr.mxu0 0.0
      %1038 = vmatpush1.msra.mxu0 %v441
      %1039 = vmatprep.subr.mxu0 0.0
      %1040 = vmatpush1.msra.mxu0 %v442
      %1041 = vmatprep.subr.mxu0 0.0
      %1042 = vmatpush1.msra.mxu0 %v443
      %1043 = vmatprep.subr.mxu0 0.0
      %1044 = vmatpush1.msra.mxu0 %v444
      %1045 = vmatprep.subr.mxu0 0.0
      %1046 = vmatpush1.msra.mxu0 %v445
      %1047 = vmatprep.subr.mxu0 0.0
      %1048 = vmatpush1.msra.mxu0 %v446
      %1049 = vmatprep.subr.mxu0 0.0
      %1050 = vmatpush1.msra.mxu0 %v447
      %1051 = vmatprep.subr.mxu0 0.0
      %1052 = vmatpush1.msra.mxu0 %v448
      %1053 = vmatprep.subr.mxu0 0.0
      %1054 = vmatpush1.msra.mxu0 %v449
      %1055 = vmatprep.subr.mxu0 0.0
      %1056 = vmatpush1.msra.mxu0 %v450
      %1057 = vmatprep.subr.mxu0 0.0
      %1058 = vmatpush1.msra.mxu0 %v451
      %1059 = vmatprep.subr.mxu0 0.0
      %1060 = vmatpush1.msra.mxu0 %v452
      %1061 = vmatprep.subr.mxu0 0.0
      %1062 = vmatpush1.msra.mxu0 %v453
      %1063 = vmatprep.subr.mxu0 0.0
      %1064 = vmatpush1.msra.mxu0 %v454
      %1065 = vmatprep.subr.mxu0 0.0
      %1066 = vmatpush1.msra.mxu0 %v455
      %1067 = vmatprep.subr.mxu0 0.0
      %1068 = vmatpush1.msra.mxu0 %v456
      %1069 = vmatprep.subr.mxu0 0.0
      %1070 = vmatpush1.msra.mxu0 %v457
      %1071 = vmatprep.subr.mxu0 0.0
      %1072 = vmatpush1.msra.mxu0 %v458
      %1073 = vmatprep.subr.mxu0 0.0
      %1074 = vmatpush1.msra.mxu0 %v459
      %1075 = vmatprep.subr.mxu0 0.0
      %1076 = vmatpush1.msra.mxu0 %v460
      %1077 = vmatprep.subr.mxu0 0.0
      %1078 = vmatpush1.msra.mxu0 %v461
      %1079 = vmatprep.subr.mxu0 0.0
      %1080 = vmatpush1.msra.mxu0 %v462
      %1081 = vmatprep.subr.mxu0 0.0
      %1082 = vmatpush1.msra.mxu0 %v463
      %1083 = vmatprep.subr.mxu0 0.0
      %1084 = vmatpush1.msra.mxu0 %v464
      %1085 = vmatprep.subr.mxu0 0.0
      %1086 = vmatpush1.msra.mxu0 %v465
      %1087 = vmatprep.subr.mxu0 0.0
      %1088 = vmatpush1.msra.mxu0 %v466
      %1089 = vmatprep.mubr.f32.mxu0 %v182
      %1090 = vmatmul.mubr.f32.gmra.mrb[0].mxu0 %v181
      %v1091 = vpop.f32.mrb[0].mxu0
      %v1092 = vadd.f32 %v987, %v1091
      %v1093 = vpop.f32.mrb[0].mxu0
      %1094 = vmatprep.mubr.f32.mxu0 %v195
      %1095 = vmatmul.mubr.f32.gmra.mrb[0].mxu0 %v194
      %v1096 = vpop.f32.mrb[0].mxu0
      %v1097 = vadd.f32 %v992, %v1096
      %v1098 = vpop.f32.mrb[0].mxu0
      %1099 = vmatprep.mubr.f32.mxu0 %v208
      %1100 = vmatmul.mubr.f32.gmra.mrb[0].mxu0 %v207
      %v1101 = vpop.f32.mrb[0].mxu0
      %v1102 = vadd.f32 %v997, %v1101
      %v1103 = vpop.f32.mrb[0].mxu0
      %1104 = vmatprep.mubr.f32.mxu0 %v221
      %1105 = vmatmul.mubr.f32.gmra.mrb[0].mxu0 %v220
      %v1106 = vpop.f32.mrb[0].mxu0
      %v1107 = vadd.f32 %v1002, %v1106
      %v1108 = vpop.f32.mrb[0].mxu0
      %1109 = vmatprep.mubr.f32.mxu0 %v234
      %1110 = vmatmul.mubr.f32.gmra.mrb[0].mxu0 %v233
      %v1111 = vpop.f32.mrb[0].mxu0
      %v1112 = vadd.f32 %v1007, %v1111
      %v1113 = vpop.f32.mrb[0].mxu0
      %1114 = vmatprep.mubr.f32.mxu0 %v247
      %1115 = vmatmul.mubr.f32.gmra.mrb[0].mxu0 %v246
      %v1116 = vpop.f32.mrb[0].mxu0
      %v1117 = vadd.f32 %v1012, %v1116
      %v1118 = vpop.f32.mrb[0].mxu0
      %1119 = vmatprep.mubr.f32.mxu0 %v260
      %1120 = vmatmul.mubr.f32.gmra.mrb[0].mxu0 %v259
      %v1121 = vpop.f32.mrb[0].mxu0
      %v1122 = vadd.f32 %v1017, %v1121
      %v1123 = vpop.f32.mrb[0].mxu0
      %1124 = vmatprep.mubr.f32.mxu0 %v273
      %1125 = vmatmul.mubr.f32.gmra.mrb[0].mxu0 %v272
      %v1126 = vpop.f32.mrb[0].mxu0
      %v1127 = vadd.f32 %v1022, %v1126
      %v1128 = vpop.f32.mrb[0].mxu0
      %1129 = vdwg.mxu0
      %1130 = vmatprep.subr.mxu0 0.0
      %1131 = vmatpush1.msra.mxu0 %v467
      %1132 = vmatprep.subr.mxu0 0.0
      %1133 = vmatpush1.msra.mxu0 %v468
      %1134 = vmatprep.subr.mxu0 0.0
      %1135 = vmatpush1.msra.mxu0 %v469
      %1136 = vmatprep.subr.mxu0 0.0
      %1137 = vmatpush1.msra.mxu0 %v470
      %1138 = vmatprep.subr.mxu0 0.0
      %1139 = vmatpush1.msra.mxu0 %v471
      %1140 = vmatprep.subr.mxu0 0.0
      %1141 = vmatpush1.msra.mxu0 %v472
      %1142 = vmatprep.subr.mxu0 0.0
      %1143 = vmatpush1.msra.mxu0 %v473
      %1144 = vmatprep.subr.mxu0 0.0
      %1145 = vmatpush1.msra.mxu0 %v474
      %1146 = vmatprep.subr.mxu0 0.0
      %1147 = vmatpush1.msra.mxu0 0.0
      %1148 = vmatprep.subr.mxu0 0.0
      %1149 = vmatpush1.msra.mxu0 0.0
      %1150 = vmatprep.subr.mxu0 0.0
      %1151 = vmatpush1.msra.mxu0 0.0
      %1152 = vmatprep.subr.mxu0 0.0
      %1153 = vmatpush1.msra.mxu0 0.0
      %1154 = vmatprep.subr.mxu0 0.0
      %1155 = vmatpush1.msra.mxu0 0.0
      %1156 = vmatprep.subr.mxu0 0.0
      %1157 = vmatpush1.msra.mxu0 0.0
      %1158 = vmatprep.subr.mxu0 0.0
      %1159 = vmatpush1.msra.mxu0 0.0
      %1160 = vmatprep.subr.mxu0 0.0
      %1161 = vmatpush1.msra.mxu0 0.0
      %1162 = vmatprep.subr.mxu0 0.0
      %1163 = vmatpush1.msra.mxu0 0.0
      %1164 = vmatprep.subr.mxu0 0.0
      %1165 = vmatpush1.msra.mxu0 0.0
      %1166 = vmatprep.subr.mxu0 0.0
      %1167 = vmatpush1.msra.mxu0 0.0
      %1168 = vmatprep.subr.mxu0 0.0
      %1169 = vmatpush1.msra.mxu0 0.0
      %1170 = vmatprep.subr.mxu0 0.0
      %1171 = vmatpush1.msra.mxu0 0.0
      %1172 = vmatprep.subr.mxu0 0.0
      %1173 = vmatpush1.msra.mxu0 0.0
      %1174 = vmatprep.subr.mxu0 0.0
      %1175 = vmatpush1.msra.mxu0 0.0
      %1176 = vmatprep.subr.mxu0 0.0
      %1177 = vmatpush1.msra.mxu0 0.0
      %1178 = vmatprep.subr.mxu0 0.0
      %1179 = vmatpush1.msra.mxu0 0.0
      %1180 = vmatprep.subr.mxu0 0.0
      %1181 = vmatpush1.msra.mxu0 0.0
      %1182 = vmatprep.subr.mxu0 0.0
      %1183 = vmatpush1.msra.mxu0 0.0
      %1184 = vmatprep.subr.mxu0 0.0
      %1185 = vmatpush1.msra.mxu0 0.0
      %1186 = vmatprep.subr.mxu0 0.0
      %1187 = vmatpush1.msra.mxu0 0.0
      %1188 = vmatprep.subr.mxu0 0.0
      %1189 = vmatpush1.msra.mxu0 0.0
      %1190 = vmatprep.subr.mxu0 0.0
      %1191 = vmatpush1.msra.mxu0 0.0
      %1192 = vmatprep.subr.mxu0 0.0
      %1193 = vmatpush1.msra.mxu0 0.0
      %1194 = vmatprep.mubr.f32.mxu0 0.0
      %1195 = vmatmul.mubr.f32.gmra.mrb[0].mxu0 %v477
      %v1196 = vpop.f32.mrb[0].mxu0
      %v1197 = vadd.f32 %v1092, %v1196
      %v1198 = vpop.f32.mrb[0].mxu0
      %1199 = vmatprep.mubr.f32.mxu0 0.0
      %1200 = vmatmul.mubr.f32.gmra.mrb[0].mxu0 %v480
      %v1201 = vpop.f32.mrb[0].mxu0
      %v1202 = vadd.f32 %v1097, %v1201
      %v1203 = vpop.f32.mrb[0].mxu0
      %1204 = vmatprep.mubr.f32.mxu0 0.0
      %1205 = vmatmul.mubr.f32.gmra.mrb[0].mxu0 %v483
      %v1206 = vpop.f32.mrb[0].mxu0
      %v1207 = vadd.f32 %v1102, %v1206
      %v1208 = vpop.f32.mrb[0].mxu0
      %1209 = vmatprep.mubr.f32.mxu0 0.0
      %1210 = vmatmul.mubr.f32.gmra.mrb[0].mxu0 %v486
      %v1211 = vpop.f32.mrb[0].mxu0
      %v1212 = vadd.f32 %v1107, %v1211
      %v1213 = vpop.f32.mrb[0].mxu0
      %1214 = vmatprep.mubr.f32.mxu0 0.0
      %1215 = vmatmul.mubr.f32.gmra.mrb[0].mxu0 %v489
      %v1216 = vpop.f32.mrb[0].mxu0
      %v1217 = vadd.f32 %v1112, %v1216
      %v1218 = vpop.f32.mrb[0].mxu0
      %1219 = vmatprep.mubr.f32.mxu0 0.0
      %1220 = vmatmul.mubr.f32.gmra.mrb[0].mxu0 %v492
      %v1221 = vpop.f32.mrb[0].mxu0
      %v1222 = vadd.f32 %v1117, %v1221
      %v1223 = vpop.f32.mrb[0].mxu0
      %1224 = vmatprep.mubr.f32.mxu0 0.0
      %1225 = vmatmul.mubr.f32.gmra.mrb[0].mxu0 %v495
      %v1226 = vpop.f32.mrb[0].mxu0
      %v1227 = vadd.f32 %v1122, %v1226
      %v1228 = vpop.f32.mrb[0].mxu0
      %1229 = vmatprep.mubr.f32.mxu0 0.0
      %1230 = vmatmul.mubr.f32.gmra.mrb[0].mxu0 %v498
      %v1231 = vpop.f32.mrb[0].mxu0
      %v1232 = vadd.f32 %v1127, %v1231
      %v1233 = vpop.f32.mrb[0].mxu0
      %1234 = vdwg.mxu0
      %v1235 = vmax.f32 %v1197, %v1202
      %v1236 = vmax.f32 %v1207, %v1212
      %v1237 = vmax.f32 %v1217, %v1222
      %v1238 = vmax.f32 %v1227, %v1232
      %1239 = vst [vmem:[#allocation2] sm:$0xff] %v1235
      %1240 = vst [vmem:[#allocation2 + $0x8] sm:$0xff] %v1236
      %1241 = vst [vmem:[#allocation2 + $0x10] sm:$0xff] %v1237
      %1242 = vst [vmem:[#allocation2 + $0x18] sm:$0xff] %v1238
      %v1243 = vld [vmem:[#allocation2] ss:$2 sm:$0xff]
      %s1244 = scalar_lea.vmem [#allocation2], 16
      %v1245 = vld [vmem:[%s1244] ss:$2 sm:$0xff]
      %s1246 = scalar_lea.vmem [#allocation2], 1
      %v1247 = vld [vmem:[%s1246] ss:$2 sm:$0xff]
      %s1248 = scalar_lea.vmem [#allocation2], 17
      %v1249 = vld [vmem:[%s1248] ss:$2 sm:$0xff]
      %v1250 = vmax.f32 %v1243, %v1247
      %v1251 = vmax.f32 %v1245, %v1249
      %v1252 = vld [vmem:[%s2] sm:$0x1]
      %v1254 = vlaneseq
      %v1255 = vshrl.u32 %v1254, 7
      %v1256 = vsub.s32 0, %v1255
      %v1257 = vrot.slane %v1252, %v1256
      %v1259 = vadd.f32 %v1250, %v1257
      %v1260 = vadd.f32 %v1251, %v1257
      %v1261 = vmax.f32 %v1259, 0.0
      %v1262 = vmax.f32 %v1260, 0.0
      %1263 = vst [vmem:[%s170] sm:$0xff] %v1261
      %1264 = vst [vmem:[%s170 + $0x8] sm:$0xff] %v1262
      %p1265 = scmp.lt.s32.totalorder %s14, 1
      %s1266 = scalar_select %p1265, %s14, 1
      %s1267 = smul.addr %s1266, 2
      %s1268 = smul.addr %s1267, 8
      %s1269 = scalar_lea.vmem %s3, %s1268
      // Predicated region
      $region33: #{net_forward.6} parent=31 // pred_check
        %p1270 = pneg %p100
      $region34: #{net_forward.6} parent=31 // pred_check_branch
        %1272 = sbr.rel (%p1270) target = $region36
      $region35: #{net_forward.6} parent=31 // pred_region
        _
      $region36: #{net_forward.6} parent=31 // pred_fallthru
        _
    $region32: #{net_forward.6} parent=5 // pred_fallthru
      _
    %p1273 = scmp.le.s32.totalorder 2, %s9
    // Predicated region
    $region37: #{net_forward.6} parent=5 // pred_check
      %p1274 = pneg %p1273
    $region38: #{net_forward.6} parent=5 // pred_check_branch
      %1276 = sbr.rel (%p1274) target = $region40
    $region39: #{net_forward.6} parent=5 // pred_region
      %s1277 = ssub.s32 %s9, 2
      // Predicated region
      $region41: #{net_forward.6} parent=39 // pred_check
        %p1278 = pneg %p106
      $region42: #{net_forward.6} parent=39 // pred_check_branch
        %1280 = sbr.rel (%p1278) target = $region44
      $region43: #{net_forward.6} parent=39 // pred_region
        %p1281 = scmp.lt.s32.totalorder %s15, 1
        %s1282 = scalar_select %p1281, %s15, 1
        %s1283 = smul.addr %s1282, 2
        %s1284 = smul.addr %s1283, 8
        %s1285 = scalar_lea.vmem %s3, %s1284
      $region44: #{net_forward.6} parent=39 // pred_fallthru
        _
    $region40: #{net_forward.6} parent=5 // pred_fallthru
      _
  $region6: #{net_forward.6} parent=0 // loop_footer
    %s13 = sadd.s32 1, %s9
  $region7: #{net_forward.6} parent=0 // loop_footer_branch
    %8 = sbr.rel target = $region3
  $region8: #{net_forward.6} parent=0 // loop_exit
    _

// kernel: net_forward.7
$region0: #{net_forward.7}
  #allocation0 [shape = 'u32[]', space=smem, size = 0x4, offset = 0x4, fixed_abs, tag = 'smem constant byte address 0x4 - core index']
  #allocation1 [shape = 'u32[144,128]{1,0:T(1,128)}', space=vmem, size = 0x12000, scoped, tag = 'internal scratch']
  %s0 = inlined_call_operand.vmem [shape: f32[2,2048], index: 0, kind: input, shape index: {}]
  %s1 = inlined_call_operand.vmem [shape: f32[2048,64], index: 1, kind: input, shape index: {}]
  %s2 = inlined_call_operand.vmem [shape: f32[1,64], index: 2, kind: input, shape index: {}]
  %s3 = inlined_call_operand.vmem [shape: f32[64,20], index: 3, kind: input, shape index: {}]
  %s4 = inlined_call_operand.vmem [shape: f32[1,20], index: 4, kind: input, shape index: {}]
  %s5 = inlined_call_operand.hbm [shape: f32[2,20], index: 5, kind: output, shape index: {}]
  %s6 = sld [smem:[#allocation0]]
  $region30: #{net_forward.7} parent=0
    _
  %s8 = ssub.s32 1, %s6
  %s9 = scalar_select 0, %s8, %s6
  $region1: #{net_forward.7} parent=0
    #allocation2 [shape = 'u8[1024]{0}', space=vmem, size = 0x400, scoped, tag = 'output window, operand 0, single buffered']
    #allocation3 [shape = 's32[1]{0}', space=sflag, size = 0x4, scoped, tag = 'scoped memory for net_forward.7']
    %10 = vsyncpa [#allocation3], 0
    // Predicated region
    $region2: #{net_forward.7} parent=1 // pred_check
      _
    $region3: #{net_forward.7} parent=1 // pred_check_branch
      %12 = sbr.rel (0) target = $region5
    $region4: #{net_forward.7} parent=1 // pred_region
      _
    $region5: #{net_forward.7} parent=1 // pred_fallthru
      _
    // Predicated region
    $region6: #{net_forward.7} parent=1 // pred_check
      _
    $region7: #{net_forward.7} parent=1 // pred_check_branch
      %14 = sbr.rel (0) target = $region9
    $region8: #{net_forward.7} parent=1 // pred_region
      _
    $region9: #{net_forward.7} parent=1 // pred_fallthru
      _
    // Predicated region
    $region10: #{net_forward.7} parent=1 // pred_check
      _
    $region11: #{net_forward.7} parent=1 // pred_check_branch
      %16 = sbr.rel (0) target = $region13
    $region12: #{net_forward.7} parent=1 // pred_region
      _
    $region13: #{net_forward.7} parent=1 // pred_fallthru
      _
    // Predicated region
    $region14: #{net_forward.7} parent=1 // pred_check
      _
    $region15: #{net_forward.7} parent=1 // pred_check_branch
      %18 = sbr.rel (0) target = $region17
    $region16: #{net_forward.7} parent=1 // pred_region
      _
    $region17: #{net_forward.7} parent=1 // pred_fallthru
      _
    // Predicated region
    $region18: #{net_forward.7} parent=1 // pred_check
      _
    $region19: #{net_forward.7} parent=1 // pred_check_branch
      %20 = sbr.rel (0) target = $region21
    $region20: #{net_forward.7} parent=1 // pred_region
      _
    $region21: #{net_forward.7} parent=1 // pred_fallthru
      _
    %v21 = vld [vmem:[%s0] sm:$0xff]
    %v22 = vld [vmem:[%s0 + $0x8] sm:$0xff]
    %v23 = vld [vmem:[%s0 + $0x10] sm:$0xff]
    %v24 = vld [vmem:[%s0 + $0x18] sm:$0xff]
    %v25 = vld [vmem:[%s1] sm:$0xff]
    %v26 = vld [vmem:[%s1 + $0x8] sm:$0xff]
    %v27 = vld [vmem:[%s1 + $0x10] sm:$0xff]
    %v28 = vld [vmem:[%s1 + $0x18] sm:$0xff]
    %v29 = vld [vmem:[%s1 + $0x20] sm:$0xff]
    %v30 = vld [vmem:[%s1 + $0x28] sm:$0xff]
    %v31 = vld [vmem:[%s1 + $0x30] sm:$0xff]
    %v32 = vld [vmem:[%s1 + $0x38] sm:$0xff]
    %v33 = vld [vmem:[%s1 + $0x40] sm:$0xff]
    %v34 = vld [vmem:[%s1 + $0x48] sm:$0xff]
    %v35 = vld [vmem:[%s1 + $0x50] sm:$0xff]
    %v36 = vld [vmem:[%s1 + $0x58] sm:$0xff]
    %v37 = vld [vmem:[%s1 + $0x60] sm:$0xff]
    %v38 = vld [vmem:[%s1 + $0x68] sm:$0xff]
    %v39 = vld [vmem:[%s1 + $0x70] sm:$0xff]
    %v40 = vld [vmem:[%s1 + $0x78] sm:$0xff]
    %v41 = vld [vmem:[%s1 + $0x80] sm:$0xff]
    %v42 = vld [vmem:[%s1 + $0x88] sm:$0xff]
    %v43 = vld [vmem:[%s1 + $0x90] sm:$0xff]
    %v44 = vld [vmem:[%s1 + $0x98] sm:$0xff]
    %v45 = vld [vmem:[%s1 + $0xa0] sm:$0xff]
    %v46 = vld [vmem:[%s1 + $0xa8] sm:$0xff]
    %v47 = vld [vmem:[%s1 + $0xb0] sm:$0xff]
    %v48 = vld [vmem:[%s1 + $0xb8] sm:$0xff]
    %v49 = vld [vmem:[%s1 + $0xc0] sm:$0xff]
    %v50 = vld [vmem:[%s1 + $0xc8] sm:$0xff]
    %v51 = vld [vmem:[%s1 + $0xd0] sm:$0xff]
    %v52 = vld [vmem:[%s1 + $0xd8] sm:$0xff]
    %v53 = vld [vmem:[%s1 + $0xe0] sm:$0xff]
    %v54 = vld [vmem:[%s1 + $0xe8] sm:$0xff]
    %v55 = vld [vmem:[%s1 + $0xf0] sm:$0xff]
    %v56 = vld [vmem:[%s1 + $0xf8] sm:$0xff]
    %v57 = vld [vmem:[%s1 + $0x100] sm:$0xff]
    %v58 = vld [vmem:[%s1 + $0x108] sm:$0xff]
    %v59 = vld [vmem:[%s1 + $0x110] sm:$0xff]
    %v60 = vld [vmem:[%s1 + $0x118] sm:$0xff]
    %v61 = vld [vmem:[%s1 + $0x120] sm:$0xff]
    %v62 = vld [vmem:[%s1 + $0x128] sm:$0xff]
    %v63 = vld [vmem:[%s1 + $0x130] sm:$0xff]
    %v64 = vld [vmem:[%s1 + $0x138] sm:$0xff]
    %v65 = vld [vmem:[%s1 + $0x140] sm:$0xff]
    %v66 = vld [vmem:[%s1 + $0x148] sm:$0xff]
    %v67 = vld [vmem:[%s1 + $0x150] sm:$0xff]
    %v68 = vld [vmem:[%s1 + $0x158] sm:$0xff]
    %v69 = vld [vmem:[%s1 + $0x160] sm:$0xff]
    %v70 = vld [vmem:[%s1 + $0x168] sm:$0xff]
    %v71 = vld [vmem:[%s1 + $0x170] sm:$0xff]
    %v72 = vld [vmem:[%s1 + $0x178] sm:$0xff]
    %v73 = vld [vmem:[%s1 + $0x180] sm:$0xff]
    %v74 = vld [vmem:[%s1 + $0x188] sm:$0xff]
    %v75 = vld [vmem:[%s1 + $0x190] sm:$0xff]
    %v76 = vld [vmem:[%s1 + $0x198] sm:$0xff]
    %v77 = vld [vmem:[%s1 + $0x1a0] sm:$0xff]
    %v78 = vld [vmem:[%s1 + $0x1a8] sm:$0xff]
    %v79 = vld [vmem:[%s1 + $0x1b0] sm:$0xff]
    %v80 = vld [vmem:[%s1 + $0x1b8] sm:$0xff]
    %v81 = vld [vmem:[%s1 + $0x1c0] sm:$0xff]
    %v82 = vld [vmem:[%s1 + $0x1c8] sm:$0xff]
    %v83 = vld [vmem:[%s1 + $0x1d0] sm:$0xff]
    %v84 = vld [vmem:[%s1 + $0x1d8] sm:$0xff]
    %v85 = vld [vmem:[%s1 + $0x1e0] sm:$0xff]
    %v86 = vld [vmem:[%s1 + $0x1e8] sm:$0xff]
    %v87 = vld [vmem:[%s1 + $0x1f0] sm:$0xff]
    %v88 = vld [vmem:[%s1 + $0x1f8] sm:$0xff]
    %v89 = vld [vmem:[%s1 + $0x200] sm:$0xff]
    %v90 = vld [vmem:[%s1 + $0x208] sm:$0xff]
    %v91 = vld [vmem:[%s1 + $0x210] sm:$0xff]
    %v92 = vld [vmem:[%s1 + $0x218] sm:$0xff]
    %v93 = vld [vmem:[%s1 + $0x220] sm:$0xff]
    %v94 = vld [vmem:[%s1 + $0x228] sm:$0xff]
    %v95 = vld [vmem:[%s1 + $0x230] sm:$0xff]
    %v96 = vld [vmem:[%s1 + $0x238] sm:$0xff]
    %v97 = vld [vmem:[%s1 + $0x240] sm:$0xff]
    %v98 = vld [vmem:[%s1 + $0x248] sm:$0xff]
    %v99 = vld [vmem:[%s1 + $0x250] sm:$0xff]
    %v100 = vld [vmem:[%s1 + $0x258] sm:$0xff]
    %v101 = vld [vmem:[%s1 + $0x260] sm:$0xff]
    %v102 = vld [vmem:[%s1 + $0x268] sm:$0xff]
    %v103 = vld [vmem:[%s1 + $0x270] sm:$0xff]
    %v104 = vld [vmem:[%s1 + $0x278] sm:$0xff]
    %v105 = vld [vmem:[%s1 + $0x280] sm:$0xff]
    %v106 = vld [vmem:[%s1 + $0x288] sm:$0xff]
    %v107 = vld [vmem:[%s1 + $0x290] sm:$0xff]
    %v108 = vld [vmem:[%s1 + $0x298] sm:$0xff]
    %v109 = vld [vmem:[%s1 + $0x2a0] sm:$0xff]
    %v110 = vld [vmem:[%s1 + $0x2a8] sm:$0xff]
    %v111 = vld [vmem:[%s1 + $0x2b0] sm:$0xff]
    %v112 = vld [vmem:[%s1 + $0x2b8] sm:$0xff]
    %v113 = vld [vmem:[%s1 + $0x2c0] sm:$0xff]
    %v114 = vld [vmem:[%s1 + $0x2c8] sm:$0xff]
    %v115 = vld [vmem:[%s1 + $0x2d0] sm:$0xff]
    %v116 = vld [vmem:[%s1 + $0x2d8] sm:$0xff]
    %v117 = vld [vmem:[%s1 + $0x2e0] sm:$0xff]
    %v118 = vld [vmem:[%s1 + $0x2e8] sm:$0xff]
    %v119 = vld [vmem:[%s1 + $0x2f0] sm:$0xff]
    %v120 = vld [vmem:[%s1 + $0x2f8] sm:$0xff]
    %v121 = vld [vmem:[%s1 + $0x300] sm:$0xff]
    %v122 = vld [vmem:[%s1 + $0x308] sm:$0xff]
    %v123 = vld [vmem:[%s1 + $0x310] sm:$0xff]
    %v124 = vld [vmem:[%s1 + $0x318] sm:$0xff]
    %v125 = vld [vmem:[%s1 + $0x320] sm:$0xff]
    %v126 = vld [vmem:[%s1 + $0x328] sm:$0xff]
    %v127 = vld [vmem:[%s1 + $0x330] sm:$0xff]
    %v128 = vld [vmem:[%s1 + $0x338] sm:$0xff]
    %v129 = vld [vmem:[%s1 + $0x340] sm:$0xff]
    %v130 = vld [vmem:[%s1 + $0x348] sm:$0xff]
    %v131 = vld [vmem:[%s1 + $0x350] sm:$0xff]
    %v132 = vld [vmem:[%s1 + $0x358] sm:$0xff]
    %v133 = vld [vmem:[%s1 + $0x360] sm:$0xff]
    %v134 = vld [vmem:[%s1 + $0x368] sm:$0xff]
    %v135 = vld [vmem:[%s1 + $0x370] sm:$0xff]
    %v136 = vld [vmem:[%s1 + $0x378] sm:$0xff]
    %v137 = vld [vmem:[%s1 + $0x380] sm:$0xff]
    %v138 = vld [vmem:[%s1 + $0x388] sm:$0xff]
    %v139 = vld [vmem:[%s1 + $0x390] sm:$0xff]
    %v140 = vld [vmem:[%s1 + $0x398] sm:$0xff]
    %v141 = vld [vmem:[%s1 + $0x3a0] sm:$0xff]
    %v142 = vld [vmem:[%s1 + $0x3a8] sm:$0xff]
    %v143 = vld [vmem:[%s1 + $0x3b0] sm:$0xff]
    %v144 = vld [vmem:[%s1 + $0x3b8] sm:$0xff]
    %v145 = vld [vmem:[%s1 + $0x3c0] sm:$0xff]
    %v146 = vld [vmem:[%s1 + $0x3c8] sm:$0xff]
    %v147 = vld [vmem:[%s1 + $0x3d0] sm:$0xff]
    %v148 = vld [vmem:[%s1 + $0x3d8] sm:$0xff]
    %v149 = vld [vmem:[%s1 + $0x3e0] sm:$0xff]
    %v150 = vld [vmem:[%s1 + $0x3e8] sm:$0xff]
    %v151 = vld [vmem:[%s1 + $0x3f0] sm:$0xff]
    %v152 = vld [vmem:[%s1 + $0x3f8] sm:$0xff]
    %v153 = vld [vmem:[%s1 + $0x400] sm:$0xff]
    %v154 = vld [vmem:[%s1 + $0x408] sm:$0xff]
    %v155 = vld [vmem:[%s1 + $0x410] sm:$0xff]
    %v156 = vld [vmem:[%s1 + $0x418] sm:$0xff]
    %v157 = vld [vmem:[%s1 + $0x420] sm:$0xff]
    %v158 = vld [vmem:[%s1 + $0x428] sm:$0xff]
    %v159 = vld [vmem:[%s1 + $0x430] sm:$0xff]
    %v160 = vld [vmem:[%s1 + $0x438] sm:$0xff]
    %v161 = vld [vmem:[%s1 + $0x440] sm:$0xff]
    %v162 = vld [vmem:[%s1 + $0x448] sm:$0xff]
    %v163 = vld [vmem:[%s1 + $0x450] sm:$0xff]
    %v164 = vld [vmem:[%s1 + $0x458] sm:$0xff]
    %v165 = vld [vmem:[%s1 + $0x460] sm:$0xff]
    %v166 = vld [vmem:[%s1 + $0x468] sm:$0xff]
    %v167 = vld [vmem:[%s1 + $0x470] sm:$0xff]
    %v168 = vld [vmem:[%s1 + $0x478] sm:$0xff]
    %v169 = vld [vmem:[%s1 + $0x480] sm:$0xff]
    %v170 = vld [vmem:[%s1 + $0x488] sm:$0xff]
    %v171 = vld [vmem:[%s1 + $0x490] sm:$0xff]
    %v172 = vld [vmem:[%s1 + $0x498] sm:$0xff]
    %v173 = vld [vmem:[%s1 + $0x4a0] sm:$0xff]
    %v174 = vld [vmem:[%s1 + $0x4a8] sm:$0xff]
    %v175 = vld [vmem:[%s1 + $0x4b0] sm:$0xff]
    %v176 = vld [vmem:[%s1 + $0x4b8] sm:$0xff]
    %v177 = vld [vmem:[%s1 + $0x4c0] sm:$0xff]
    %v178 = vld [vmem:[%s1 + $0x4c8] sm:$0xff]
    %v179 = vld [vmem:[%s1 + $0x4d0] sm:$0xff]
    %v180 = vld [vmem:[%s1 + $0x4d8] sm:$0xff]
    %v181 = vld [vmem:[%s1 + $0x4e0] sm:$0xff]
    %v182 = vld [vmem:[%s1 + $0x4e8] sm:$0xff]
    %v183 = vld [vmem:[%s1 + $0x4f0] sm:$0xff]
    %v184 = vld [vmem:[%s1 + $0x4f8] sm:$0xff]
    %v185 = vld [vmem:[%s1 + $0x500] sm:$0xff]
    %v186 = vld [vmem:[%s1 + $0x508] sm:$0xff]
    %v187 = vld [vmem:[%s1 + $0x510] sm:$0xff]
    %v188 = vld [vmem:[%s1 + $0x518] sm:$0xff]
    %v189 = vld [vmem:[%s1 + $0x520] sm:$0xff]
    %v190 = vld [vmem:[%s1 + $0x528] sm:$0xff]
    %v191 = vld [vmem:[%s1 + $0x530] sm:$0xff]
    %v192 = vld [vmem:[%s1 + $0x538] sm:$0xff]
    %v193 = vld [vmem:[%s1 + $0x540] sm:$0xff]
    %v194 = vld [vmem:[%s1 + $0x548] sm:$0xff]
    %v195 = vld [vmem:[%s1 + $0x550] sm:$0xff]
    %v196 = vld [vmem:[%s1 + $0x558] sm:$0xff]
    %v197 = vld [vmem:[%s1 + $0x560] sm:$0xff]
    %v198 = vld [vmem:[%s1 + $0x568] sm:$0xff]
    %v199 = vld [vmem:[%s1 + $0x570] sm:$0xff]
    %v200 = vld [vmem:[%s1 + $0x578] sm:$0xff]
    %v201 = vld [vmem:[%s1 + $0x580] sm:$0xff]
    %v202 = vld [vmem:[%s1 + $0x588] sm:$0xff]
    %v203 = vld [vmem:[%s1 + $0x590] sm:$0xff]
    %v204 = vld [vmem:[%s1 + $0x598] sm:$0xff]
    %v205 = vld [vmem:[%s1 + $0x5a0] sm:$0xff]
    %v206 = vld [vmem:[%s1 + $0x5a8] sm:$0xff]
    %v207 = vld [vmem:[%s1 + $0x5b0] sm:$0xff]
    %v208 = vld [vmem:[%s1 + $0x5b8] sm:$0xff]
    %v209 = vld [vmem:[%s1 + $0x5c0] sm:$0xff]
    %v210 = vld [vmem:[%s1 + $0x5c8] sm:$0xff]
    %v211 = vld [vmem:[%s1 + $0x5d0] sm:$0xff]
    %v212 = vld [vmem:[%s1 + $0x5d8] sm:$0xff]
    %v213 = vld [vmem:[%s1 + $0x5e0] sm:$0xff]
    %v214 = vld [vmem:[%s1 + $0x5e8] sm:$0xff]
    %v215 = vld [vmem:[%s1 + $0x5f0] sm:$0xff]
    %v216 = vld [vmem:[%s1 + $0x5f8] sm:$0xff]
    %v217 = vld [vmem:[%s1 + $0x600] sm:$0xff]
    %v218 = vld [vmem:[%s1 + $0x608] sm:$0xff]
    %v219 = vld [vmem:[%s1 + $0x610] sm:$0xff]
    %v220 = vld [vmem:[%s1 + $0x618] sm:$0xff]
    %v221 = vld [vmem:[%s1 + $0x620] sm:$0xff]
    %v222 = vld [vmem:[%s1 + $0x628] sm:$0xff]
    %v223 = vld [vmem:[%s1 + $0x630] sm:$0xff]
    %v224 = vld [vmem:[%s1 + $0x638] sm:$0xff]
    %v225 = vld [vmem:[%s1 + $0x640] sm:$0xff]
    %v226 = vld [vmem:[%s1 + $0x648] sm:$0xff]
    %v227 = vld [vmem:[%s1 + $0x650] sm:$0xff]
    %v228 = vld [vmem:[%s1 + $0x658] sm:$0xff]
    %v229 = vld [vmem:[%s1 + $0x660] sm:$0xff]
    %v230 = vld [vmem:[%s1 + $0x668] sm:$0xff]
    %v231 = vld [vmem:[%s1 + $0x670] sm:$0xff]
    %v232 = vld [vmem:[%s1 + $0x678] sm:$0xff]
    %v233 = vld [vmem:[%s1 + $0x680] sm:$0xff]
    %v234 = vld [vmem:[%s1 + $0x688] sm:$0xff]
    %v235 = vld [vmem:[%s1 + $0x690] sm:$0xff]
    %v236 = vld [vmem:[%s1 + $0x698] sm:$0xff]
    %v237 = vld [vmem:[%s1 + $0x6a0] sm:$0xff]
    %v238 = vld [vmem:[%s1 + $0x6a8] sm:$0xff]
    %v239 = vld [vmem:[%s1 + $0x6b0] sm:$0xff]
    %v240 = vld [vmem:[%s1 + $0x6b8] sm:$0xff]
    %v241 = vld [vmem:[%s1 + $0x6c0] sm:$0xff]
    %v242 = vld [vmem:[%s1 + $0x6c8] sm:$0xff]
    %v243 = vld [vmem:[%s1 + $0x6d0] sm:$0xff]
    %v244 = vld [vmem:[%s1 + $0x6d8] sm:$0xff]
    %v245 = vld [vmem:[%s1 + $0x6e0] sm:$0xff]
    %v246 = vld [vmem:[%s1 + $0x6e8] sm:$0xff]
    %v247 = vld [vmem:[%s1 + $0x6f0] sm:$0xff]
    %v248 = vld [vmem:[%s1 + $0x6f8] sm:$0xff]
    %v249 = vld [vmem:[%s1 + $0x700] sm:$0xff]
    %v250 = vld [vmem:[%s1 + $0x708] sm:$0xff]
    %v251 = vld [vmem:[%s1 + $0x710] sm:$0xff]
    %v252 = vld [vmem:[%s1 + $0x718] sm:$0xff]
    %v253 = vld [vmem:[%s1 + $0x720] sm:$0xff]
    %v254 = vld [vmem:[%s1 + $0x728] sm:$0xff]
    %v255 = vld [vmem:[%s1 + $0x730] sm:$0xff]
    %v256 = vld [vmem:[%s1 + $0x738] sm:$0xff]
    %v257 = vld [vmem:[%s1 + $0x740] sm:$0xff]
    %v258 = vld [vmem:[%s1 + $0x748] sm:$0xff]
    %v259 = vld [vmem:[%s1 + $0x750] sm:$0xff]
    %v260 = vld [vmem:[%s1 + $0x758] sm:$0xff]
    %v261 = vld [vmem:[%s1 + $0x760] sm:$0xff]
    %v262 = vld [vmem:[%s1 + $0x768] sm:$0xff]
    %v263 = vld [vmem:[%s1 + $0x770] sm:$0xff]
    %v264 = vld [vmem:[%s1 + $0x778] sm:$0xff]
    %v265 = vld [vmem:[%s1 + $0x780] sm:$0xff]
    %v266 = vld [vmem:[%s1 + $0x788] sm:$0xff]
    %v267 = vld [vmem:[%s1 + $0x790] sm:$0xff]
    %v268 = vld [vmem:[%s1 + $0x798] sm:$0xff]
    %v269 = vld [vmem:[%s1 + $0x7a0] sm:$0xff]
    %v270 = vld [vmem:[%s1 + $0x7a8] sm:$0xff]
    %v271 = vld [vmem:[%s1 + $0x7b0] sm:$0xff]
    %v272 = vld [vmem:[%s1 + $0x7b8] sm:$0xff]
    %v273 = vld [vmem:[%s1 + $0x7c0] sm:$0xff]
    %v274 = vld [vmem:[%s1 + $0x7c8] sm:$0xff]
    %v275 = vld [vmem:[%s1 + $0x7d0] sm:$0xff]
    %v276 = vld [vmem:[%s1 + $0x7d8] sm:$0xff]
    %v277 = vld [vmem:[%s1 + $0x7e0] sm:$0xff]
    %v278 = vld [vmem:[%s1 + $0x7e8] sm:$0xff]
    %v279 = vld [vmem:[%s1 + $0x7f0] sm:$0xff]
    %v280 = vld [vmem:[%s1 + $0x7f8] sm:$0xff]
    %v281 = vld [vmem:[%s2] sm:$0x1]
    %v283 = vlaneseq
    %v284 = vshrl.u32 %v283, 7
    %v285 = vsub.s32 0, %v284
    %v286 = vrot.slane %v281, %v285
    %v292 = vcombine.high %v21, %v21
    %v294 = vunpack.c.l.s4 1983009808
    %v295 = vunpack.c.0.s8 %v294
    %v296 = vlaneseq
    %v297 = vshrl.u32 %v296, 7
    %v298 = vsub.s32 %v295, %v297
    %v299 = vrot.slane %v21, %v298
    %v301 = vunpack.c.l.s4 1983009808
    %v302 = vunpack.c.0.s8 %v301
    %v303 = vlaneseq
    %v304 = vshrl.u32 %v303, 7
    %v305 = vsub.s32 %v302, %v304
    %v306 = vrot.slane %v292, %v305
    %v307 = vcombine.high %v299, %v299
    %v308 = vcombine.high %v306, %v306
    %v309 = vcombine.high %v22, %v22
    %v311 = vunpack.c.l.s4 1983009808
    %v312 = vunpack.c.0.s8 %v311
    %v313 = vlaneseq
    %v314 = vshrl.u32 %v313, 7
    %v315 = vsub.s32 %v312, %v314
    %v316 = vrot.slane %v22, %v315
    %v318 = vunpack.c.l.s4 1983009808
    %v319 = vunpack.c.0.s8 %v318
    %v320 = vlaneseq
    %v321 = vshrl.u32 %v320, 7
    %v322 = vsub.s32 %v319, %v321
    %v323 = vrot.slane %v309, %v322
    %v324 = vcombine.high %v316, %v316
    %v325 = vcombine.high %v323, %v323
    %v326 = vcombine.high %v23, %v23
    %v328 = vunpack.c.l.s4 1983009808
    %v329 = vunpack.c.0.s8 %v328
    %v330 = vlaneseq
    %v331 = vshrl.u32 %v330, 7
    %v332 = vsub.s32 %v329, %v331
    %v333 = vrot.slane %v23, %v332
    %v335 = vunpack.c.l.s4 1983009808
    %v336 = vunpack.c.0.s8 %v335
    %v337 = vlaneseq
    %v338 = vshrl.u32 %v337, 7
    %v339 = vsub.s32 %v336, %v338
    %v340 = vrot.slane %v326, %v339
    %v341 = vcombine.high %v333, %v333
    %v342 = vcombine.high %v340, %v340
    %v343 = vcombine.high %v24, %v24
    %v345 = vunpack.c.l.s4 1983009808
    %v346 = vunpack.c.0.s8 %v345
    %v347 = vlaneseq
    %v348 = vshrl.u32 %v347, 7
    %v349 = vsub.s32 %v346, %v348
    %v350 = vrot.slane %v24, %v349
    %v352 = vunpack.c.l.s4 1983009808
    %v353 = vunpack.c.0.s8 %v352
    %v354 = vlaneseq
    %v355 = vshrl.u32 %v354, 7
    %v356 = vsub.s32 %v353, %v355
    %v357 = vrot.slane %v343, %v356
    %v358 = vcombine.high %v350, %v350
    %v359 = vcombine.high %v357, %v357
    %376 = vmatprep.subr.mxu0 0.0
    %377 = vmatpush1.msra.mxu0 %v25
    %378 = vmatprep.subr.mxu0 0.0
    %379 = vmatpush1.msra.mxu0 %v26
    %380 = vmatprep.subr.mxu0 0.0
    %381 = vmatpush1.msra.mxu0 %v27
    %382 = vmatprep.subr.mxu0 0.0
    %383 = vmatpush1.msra.mxu0 %v28
    %384 = vmatprep.subr.mxu0 0.0
    %385 = vmatpush1.msra.mxu0 %v29
    %386 = vmatprep.subr.mxu0 0.0
    %387 = vmatpush1.msra.mxu0 %v30
    %388 = vmatprep.subr.mxu0 0.0
    %389 = vmatpush1.msra.mxu0 %v31
    %390 = vmatprep.subr.mxu0 0.0
    %391 = vmatpush1.msra.mxu0 %v32
    %392 = vmatprep.subr.mxu0 0.0
    %393 = vmatpush1.msra.mxu0 %v33
    %394 = vmatprep.subr.mxu0 0.0
    %395 = vmatpush1.msra.mxu0 %v34
    %396 = vmatprep.subr.mxu0 0.0
    %397 = vmatpush1.msra.mxu0 %v35
    %398 = vmatprep.subr.mxu0 0.0
    %399 = vmatpush1.msra.mxu0 %v36
    %400 = vmatprep.subr.mxu0 0.0
    %401 = vmatpush1.msra.mxu0 %v37
    %402 = vmatprep.subr.mxu0 0.0
    %403 = vmatpush1.msra.mxu0 %v38
    %404 = vmatprep.subr.mxu0 0.0
    %405 = vmatpush1.msra.mxu0 %v39
    %406 = vmatprep.subr.mxu0 0.0
    %407 = vmatpush1.msra.mxu0 %v40
    %408 = vmatprep.subr.mxu0 0.0
    %409 = vmatpush1.msra.mxu0 %v41
    %410 = vmatprep.subr.mxu0 0.0
    %411 = vmatpush1.msra.mxu0 %v42
    %412 = vmatprep.subr.mxu0 0.0
    %413 = vmatpush1.msra.mxu0 %v43
    %414 = vmatprep.subr.mxu0 0.0
    %415 = vmatpush1.msra.mxu0 %v44
    %416 = vmatprep.subr.mxu0 0.0
    %417 = vmatpush1.msra.mxu0 %v45
    %418 = vmatprep.subr.mxu0 0.0
    %419 = vmatpush1.msra.mxu0 %v46
    %420 = vmatprep.subr.mxu0 0.0
    %421 = vmatpush1.msra.mxu0 %v47
    %422 = vmatprep.subr.mxu0 0.0
    %423 = vmatpush1.msra.mxu0 %v48
    %424 = vmatprep.subr.mxu0 0.0
    %425 = vmatpush1.msra.mxu0 %v49
    %426 = vmatprep.subr.mxu0 0.0
    %427 = vmatpush1.msra.mxu0 %v50
    %428 = vmatprep.subr.mxu0 0.0
    %429 = vmatpush1.msra.mxu0 %v51
    %430 = vmatprep.subr.mxu0 0.0
    %431 = vmatpush1.msra.mxu0 %v52
    %432 = vmatprep.subr.mxu0 0.0
    %433 = vmatpush1.msra.mxu0 %v53
    %434 = vmatprep.subr.mxu0 0.0
    %435 = vmatpush1.msra.mxu0 %v54
    %436 = vmatprep.subr.mxu0 0.0
    %437 = vmatpush1.msra.mxu0 %v55
    %438 = vmatprep.subr.mxu0 0.0
    %439 = vmatpush1.msra.mxu0 %v56
    %440 = vmatprep.mubr.f32.mxu0 %v307
    %441 = vmatmul.mubr.f32.gmra.mrb[0].mxu0 %v299
    %v442 = vpop.f32.mrb[0].mxu0
    %v443 = vadd.f32 %v286, %v442
    %v444 = vpop.f32.mrb[0].mxu0
    %445 = vdwg.mxu0
    %446 = vmatprep.subr.mxu0 0.0
    %447 = vmatpush1.msra.mxu0 %v57
    %448 = vmatprep.subr.mxu0 0.0
    %449 = vmatpush1.msra.mxu0 %v58
    %450 = vmatprep.subr.mxu0 0.0
    %451 = vmatpush1.msra.mxu0 %v59
    %452 = vmatprep.subr.mxu0 0.0
    %453 = vmatpush1.msra.mxu0 %v60
    %454 = vmatprep.subr.mxu0 0.0
    %455 = vmatpush1.msra.mxu0 %v61
    %456 = vmatprep.subr.mxu0 0.0
    %457 = vmatpush1.msra.mxu0 %v62
    %458 = vmatprep.subr.mxu0 0.0
    %459 = vmatpush1.msra.mxu0 %v63
    %460 = vmatprep.subr.mxu0 0.0
    %461 = vmatpush1.msra.mxu0 %v64
    %462 = vmatprep.subr.mxu0 0.0
    %463 = vmatpush1.msra.mxu0 %v65
    %464 = vmatprep.subr.mxu0 0.0
    %465 = vmatpush1.msra.mxu0 %v66
    %466 = vmatprep.subr.mxu0 0.0
    %467 = vmatpush1.msra.mxu0 %v67
    %468 = vmatprep.subr.mxu0 0.0
    %469 = vmatpush1.msra.mxu0 %v68
    %470 = vmatprep.subr.mxu0 0.0
    %471 = vmatpush1.msra.mxu0 %v69
    %472 = vmatprep.subr.mxu0 0.0
    %473 = vmatpush1.msra.mxu0 %v70
    %474 = vmatprep.subr.mxu0 0.0
    %475 = vmatpush1.msra.mxu0 %v71
    %476 = vmatprep.subr.mxu0 0.0
    %477 = vmatpush1.msra.mxu0 %v72
    %478 = vmatprep.subr.mxu0 0.0
    %479 = vmatpush1.msra.mxu0 %v73
    %480 = vmatprep.subr.mxu0 0.0
    %481 = vmatpush1.msra.mxu0 %v74
    %482 = vmatprep.subr.mxu0 0.0
    %483 = vmatpush1.msra.mxu0 %v75
    %484 = vmatprep.subr.mxu0 0.0
    %485 = vmatpush1.msra.mxu0 %v76
    %486 = vmatprep.subr.mxu0 0.0
    %487 = vmatpush1.msra.mxu0 %v77
    %488 = vmatprep.subr.mxu0 0.0
    %489 = vmatpush1.msra.mxu0 %v78
    %490 = vmatprep.subr.mxu0 0.0
    %491 = vmatpush1.msra.mxu0 %v79
    %492 = vmatprep.subr.mxu0 0.0
    %493 = vmatpush1.msra.mxu0 %v80
    %494 = vmatprep.subr.mxu0 0.0
    %495 = vmatpush1.msra.mxu0 %v81
    %496 = vmatprep.subr.mxu0 0.0
    %497 = vmatpush1.msra.mxu0 %v82
    %498 = vmatprep.subr.mxu0 0.0
    %499 = vmatpush1.msra.mxu0 %v83
    %500 = vmatprep.subr.mxu0 0.0
    %501 = vmatpush1.msra.mxu0 %v84
    %502 = vmatprep.subr.mxu0 0.0
    %503 = vmatpush1.msra.mxu0 %v85
    %504 = vmatprep.subr.mxu0 0.0
    %505 = vmatpush1.msra.mxu0 %v86
    %506 = vmatprep.subr.mxu0 0.0
    %507 = vmatpush1.msra.mxu0 %v87
    %508 = vmatprep.subr.mxu0 0.0
    %509 = vmatpush1.msra.mxu0 %v88
    %510 = vmatprep.mubr.f32.mxu0 %v308
    %511 = vmatmul.mubr.f32.gmra.mrb[0].mxu0 %v306
    %v512 = vpop.f32.mrb[0].mxu0
    %v513 = vadd.f32 %v443, %v512
    %v514 = vpop.f32.mrb[0].mxu0
    %515 = vdwg.mxu0
    %516 = vmatprep.subr.mxu0 0.0
    %517 = vmatpush1.msra.mxu0 %v89
    %518 = vmatprep.subr.mxu0 0.0
    %519 = vmatpush1.msra.mxu0 %v90
    %520 = vmatprep.subr.mxu0 0.0
    %521 = vmatpush1.msra.mxu0 %v91
    %522 = vmatprep.subr.mxu0 0.0
    %523 = vmatpush1.msra.mxu0 %v92
    %524 = vmatprep.subr.mxu0 0.0
    %525 = vmatpush1.msra.mxu0 %v93
    %526 = vmatprep.subr.mxu0 0.0
    %527 = vmatpush1.msra.mxu0 %v94
    %528 = vmatprep.subr.mxu0 0.0
    %529 = vmatpush1.msra.mxu0 %v95
    %530 = vmatprep.subr.mxu0 0.0
    %531 = vmatpush1.msra.mxu0 %v96
    %532 = vmatprep.subr.mxu0 0.0
    %533 = vmatpush1.msra.mxu0 %v97
    %534 = vmatprep.subr.mxu0 0.0
    %535 = vmatpush1.msra.mxu0 %v98
    %536 = vmatprep.subr.mxu0 0.0
    %537 = vmatpush1.msra.mxu0 %v99
    %538 = vmatprep.subr.mxu0 0.0
    %539 = vmatpush1.msra.mxu0 %v100
    %540 = vmatprep.subr.mxu0 0.0
    %541 = vmatpush1.msra.mxu0 %v101
    %542 = vmatprep.subr.mxu0 0.0
    %543 = vmatpush1.msra.mxu0 %v102
    %544 = vmatprep.subr.mxu0 0.0
    %545 = vmatpush1.msra.mxu0 %v103
    %546 = vmatprep.subr.mxu0 0.0
    %547 = vmatpush1.msra.mxu0 %v104
    %548 = vmatprep.subr.mxu0 0.0
    %549 = vmatpush1.msra.mxu0 %v105
    %550 = vmatprep.subr.mxu0 0.0
    %551 = vmatpush1.msra.mxu0 %v106
    %552 = vmatprep.subr.mxu0 0.0
    %553 = vmatpush1.msra.mxu0 %v107
    %554 = vmatprep.subr.mxu0 0.0
    %555 = vmatpush1.msra.mxu0 %v108
    %556 = vmatprep.subr.mxu0 0.0
    %557 = vmatpush1.msra.mxu0 %v109
    %558 = vmatprep.subr.mxu0 0.0
    %559 = vmatpush1.msra.mxu0 %v110
    %560 = vmatprep.subr.mxu0 0.0
    %561 = vmatpush1.msra.mxu0 %v111
    %562 = vmatprep.subr.mxu0 0.0
    %563 = vmatpush1.msra.mxu0 %v112
    %564 = vmatprep.subr.mxu0 0.0
    %565 = vmatpush1.msra.mxu0 %v113
    %566 = vmatprep.subr.mxu0 0.0
    %567 = vmatpush1.msra.mxu0 %v114
    %568 = vmatprep.subr.mxu0 0.0
    %569 = vmatpush1.msra.mxu0 %v115
    %570 = vmatprep.subr.mxu0 0.0
    %571 = vmatpush1.msra.mxu0 %v116
    %572 = vmatprep.subr.mxu0 0.0
    %573 = vmatpush1.msra.mxu0 %v117
    %574 = vmatprep.subr.mxu0 0.0
    %575 = vmatpush1.msra.mxu0 %v118
    %576 = vmatprep.subr.mxu0 0.0
    %577 = vmatpush1.msra.mxu0 %v119
    %578 = vmatprep.subr.mxu0 0.0
    %579 = vmatpush1.msra.mxu0 %v120
    %580 = vmatprep.mubr.f32.mxu0 %v324
    %581 = vmatmul.mubr.f32.gmra.mrb[0].mxu0 %v316
    %v582 = vpop.f32.mrb[0].mxu0
    %v583 = vadd.f32 %v513, %v582
    %v584 = vpop.f32.mrb[0].mxu0
    %585 = vdwg.mxu0
    %586 = vmatprep.subr.mxu0 0.0
    %587 = vmatpush1.msra.mxu0 %v121
    %588 = vmatprep.subr.mxu0 0.0
    %589 = vmatpush1.msra.mxu0 %v122
    %590 = vmatprep.subr.mxu0 0.0
    %591 = vmatpush1.msra.mxu0 %v123
    %592 = vmatprep.subr.mxu0 0.0
    %593 = vmatpush1.msra.mxu0 %v124
    %594 = vmatprep.subr.mxu0 0.0
    %595 = vmatpush1.msra.mxu0 %v125
    %596 = vmatprep.subr.mxu0 0.0
    %597 = vmatpush1.msra.mxu0 %v126
    %598 = vmatprep.subr.mxu0 0.0
    %599 = vmatpush1.msra.mxu0 %v127
    %600 = vmatprep.subr.mxu0 0.0
    %601 = vmatpush1.msra.mxu0 %v128
    %602 = vmatprep.subr.mxu0 0.0
    %603 = vmatpush1.msra.mxu0 %v129
    %604 = vmatprep.subr.mxu0 0.0
    %605 = vmatpush1.msra.mxu0 %v130
    %606 = vmatprep.subr.mxu0 0.0
    %607 = vmatpush1.msra.mxu0 %v131
    %608 = vmatprep.subr.mxu0 0.0
    %609 = vmatpush1.msra.mxu0 %v132
    %610 = vmatprep.subr.mxu0 0.0
    %611 = vmatpush1.msra.mxu0 %v133
    %612 = vmatprep.subr.mxu0 0.0
    %613 = vmatpush1.msra.mxu0 %v134
    %614 = vmatprep.subr.mxu0 0.0
    %615 = vmatpush1.msra.mxu0 %v135
    %616 = vmatprep.subr.mxu0 0.0
    %617 = vmatpush1.msra.mxu0 %v136
    %618 = vmatprep.subr.mxu0 0.0
    %619 = vmatpush1.msra.mxu0 %v137
    %620 = vmatprep.subr.mxu0 0.0
    %621 = vmatpush1.msra.mxu0 %v138
    %622 = vmatprep.subr.mxu0 0.0
    %623 = vmatpush1.msra.mxu0 %v139
    %624 = vmatprep.subr.mxu0 0.0
    %625 = vmatpush1.msra.mxu0 %v140
    %626 = vmatprep.subr.mxu0 0.0
    %627 = vmatpush1.msra.mxu0 %v141
    %628 = vmatprep.subr.mxu0 0.0
    %629 = vmatpush1.msra.mxu0 %v142
    %630 = vmatprep.subr.mxu0 0.0
    %631 = vmatpush1.msra.mxu0 %v143
    %632 = vmatprep.subr.mxu0 0.0
    %633 = vmatpush1.msra.mxu0 %v144
    %634 = vmatprep.subr.mxu0 0.0
    %635 = vmatpush1.msra.mxu0 %v145
    %636 = vmatprep.subr.mxu0 0.0
    %637 = vmatpush1.msra.mxu0 %v146
    %638 = vmatprep.subr.mxu0 0.0
    %639 = vmatpush1.msra.mxu0 %v147
    %640 = vmatprep.subr.mxu0 0.0
    %641 = vmatpush1.msra.mxu0 %v148
    %642 = vmatprep.subr.mxu0 0.0
    %643 = vmatpush1.msra.mxu0 %v149
    %644 = vmatprep.subr.mxu0 0.0
    %645 = vmatpush1.msra.mxu0 %v150
    %646 = vmatprep.subr.mxu0 0.0
    %647 = vmatpush1.msra.mxu0 %v151
    %648 = vmatprep.subr.mxu0 0.0
    %649 = vmatpush1.msra.mxu0 %v152
    %650 = vmatprep.mubr.f32.mxu0 %v325
    %651 = vmatmul.mubr.f32.gmra.mrb[0].mxu0 %v323
    %v652 = vpop.f32.mrb[0].mxu0
    %v653 = vadd.f32 %v583, %v652
    %v654 = vpop.f32.mrb[0].mxu0
    %655 = vdwg.mxu0
    %656 = vmatprep.subr.mxu0 0.0
    %657 = vmatpush1.msra.mxu0 %v153
    %658 = vmatprep.subr.mxu0 0.0
    %659 = vmatpush1.msra.mxu0 %v154
    %660 = vmatprep.subr.mxu0 0.0
    %661 = vmatpush1.msra.mxu0 %v155
    %662 = vmatprep.subr.mxu0 0.0
    %663 = vmatpush1.msra.mxu0 %v156
    %664 = vmatprep.subr.mxu0 0.0
    %665 = vmatpush1.msra.mxu0 %v157
    %666 = vmatprep.subr.mxu0 0.0
    %667 = vmatpush1.msra.mxu0 %v158
    %668 = vmatprep.subr.mxu0 0.0
    %669 = vmatpush1.msra.mxu0 %v159
    %670 = vmatprep.subr.mxu0 0.0
    %671 = vmatpush1.msra.mxu0 %v160
    %672 = vmatprep.subr.mxu0 0.0
    %673 = vmatpush1.msra.mxu0 %v161
    %674 = vmatprep.subr.mxu0 0.0
    %675 = vmatpush1.msra.mxu0 %v162
    %676 = vmatprep.subr.mxu0 0.0
    %677 = vmatpush1.msra.mxu0 %v163
    %678 = vmatprep.subr.mxu0 0.0
    %679 = vmatpush1.msra.mxu0 %v164
    %680 = vmatprep.subr.mxu0 0.0
    %681 = vmatpush1.msra.mxu0 %v165
    %682 = vmatprep.subr.mxu0 0.0
    %683 = vmatpush1.msra.mxu0 %v166
    %684 = vmatprep.subr.mxu0 0.0
    %685 = vmatpush1.msra.mxu0 %v167
    %686 = vmatprep.subr.mxu0 0.0
    %687 = vmatpush1.msra.mxu0 %v168
    %688 = vmatprep.subr.mxu0 0.0
    %689 = vmatpush1.msra.mxu0 %v169
    %690 = vmatprep.subr.mxu0 0.0
    %691 = vmatpush1.msra.mxu0 %v170
    %692 = vmatprep.subr.mxu0 0.0
    %693 = vmatpush1.msra.mxu0 %v171
    %694 = vmatprep.subr.mxu0 0.0
    %695 = vmatpush1.msra.mxu0 %v172
    %696 = vmatprep.subr.mxu0 0.0
    %697 = vmatpush1.msra.mxu0 %v173
    %698 = vmatprep.subr.mxu0 0.0
    %699 = vmatpush1.msra.mxu0 %v174
    %700 = vmatprep.subr.mxu0 0.0
    %701 = vmatpush1.msra.mxu0 %v175
    %702 = vmatprep.subr.mxu0 0.0
    %703 = vmatpush1.msra.mxu0 %v176
    %704 = vmatprep.subr.mxu0 0.0
    %705 = vmatpush1.msra.mxu0 %v177
    %706 = vmatprep.subr.mxu0 0.0
    %707 = vmatpush1.msra.mxu0 %v178
    %708 = vmatprep.subr.mxu0 0.0
    %709 = vmatpush1.msra.mxu0 %v179
    %710 = vmatprep.subr.mxu0 0.0
    %711 = vmatpush1.msra.mxu0 %v180
    %712 = vmatprep.subr.mxu0 0.0
    %713 = vmatpush1.msra.mxu0 %v181
    %714 = vmatprep.subr.mxu0 0.0
    %715 = vmatpush1.msra.mxu0 %v182
    %716 = vmatprep.subr.mxu0 0.0
    %717 = vmatpush1.msra.mxu0 %v183
    %718 = vmatprep.subr.mxu0 0.0
    %719 = vmatpush1.msra.mxu0 %v184
    %720 = vmatprep.mubr.f32.mxu0 %v341
    %721 = vmatmul.mubr.f32.gmra.mrb[0].mxu0 %v333
    %v722 = vpop.f32.mrb[0].mxu0
    %v723 = vadd.f32 %v653, %v722
    %v724 = vpop.f32.mrb[0].mxu0
    %725 = vdwg.mxu0
    %726 = vmatprep.subr.mxu0 0.0
    %727 = vmatpush1.msra.mxu0 %v185
    %728 = vmatprep.subr.mxu0 0.0
    %729 = vmatpush1.msra.mxu0 %v186
    %730 = vmatprep.subr.mxu0 0.0
    %731 = vmatpush1.msra.mxu0 %v187
    %732 = vmatprep.subr.mxu0 0.0
    %733 = vmatpush1.msra.mxu0 %v188
    %734 = vmatprep.subr.mxu0 0.0
    %735 = vmatpush1.msra.mxu0 %v189
    %736 = vmatprep.subr.mxu0 0.0
    %737 = vmatpush1.msra.mxu0 %v190
    %738 = vmatprep.subr.mxu0 0.0
    %739 = vmatpush1.msra.mxu0 %v191
    %740 = vmatprep.subr.mxu0 0.0
    %741 = vmatpush1.msra.mxu0 %v192
    %742 = vmatprep.subr.mxu0 0.0
    %743 = vmatpush1.msra.mxu0 %v193
    %744 = vmatprep.subr.mxu0 0.0
    %745 = vmatpush1.msra.mxu0 %v194
    %746 = vmatprep.subr.mxu0 0.0
    %747 = vmatpush1.msra.mxu0 %v195
    %748 = vmatprep.subr.mxu0 0.0
    %749 = vmatpush1.msra.mxu0 %v196
    %750 = vmatprep.subr.mxu0 0.0
    %751 = vmatpush1.msra.mxu0 %v197
    %752 = vmatprep.subr.mxu0 0.0
    %753 = vmatpush1.msra.mxu0 %v198
    %754 = vmatprep.subr.mxu0 0.0
    %755 = vmatpush1.msra.mxu0 %v199
    %756 = vmatprep.subr.mxu0 0.0
    %757 = vmatpush1.msra.mxu0 %v200
    %758 = vmatprep.subr.mxu0 0.0
    %759 = vmatpush1.msra.mxu0 %v201
    %760 = vmatprep.subr.mxu0 0.0
    %761 = vmatpush1.msra.mxu0 %v202
    %762 = vmatprep.subr.mxu0 0.0
    %763 = vmatpush1.msra.mxu0 %v203
    %764 = vmatprep.subr.mxu0 0.0
    %765 = vmatpush1.msra.mxu0 %v204
    %766 = vmatprep.subr.mxu0 0.0
    %767 = vmatpush1.msra.mxu0 %v205
    %768 = vmatprep.subr.mxu0 0.0
    %769 = vmatpush1.msra.mxu0 %v206
    %770 = vmatprep.subr.mxu0 0.0
    %771 = vmatpush1.msra.mxu0 %v207
    %772 = vmatprep.subr.mxu0 0.0
    %773 = vmatpush1.msra.mxu0 %v208
    %774 = vmatprep.subr.mxu0 0.0
    %775 = vmatpush1.msra.mxu0 %v209
    %776 = vmatprep.subr.mxu0 0.0
    %777 = vmatpush1.msra.mxu0 %v210
    %778 = vmatprep.subr.mxu0 0.0
    %779 = vmatpush1.msra.mxu0 %v211
    %780 = vmatprep.subr.mxu0 0.0
    %781 = vmatpush1.msra.mxu0 %v212
    %782 = vmatprep.subr.mxu0 0.0
    %783 = vmatpush1.msra.mxu0 %v213
    %784 = vmatprep.subr.mxu0 0.0
    %785 = vmatpush1.msra.mxu0 %v214
    %786 = vmatprep.subr.mxu0 0.0
    %787 = vmatpush1.msra.mxu0 %v215
    %788 = vmatprep.subr.mxu0 0.0
    %789 = vmatpush1.msra.mxu0 %v216
    %790 = vmatprep.mubr.f32.mxu0 %v342
    %791 = vmatmul.mubr.f32.gmra.mrb[0].mxu0 %v340
    %v792 = vpop.f32.mrb[0].mxu0
    %v793 = vadd.f32 %v723, %v792
    %v794 = vpop.f32.mrb[0].mxu0
    %795 = vdwg.mxu0
    %796 = vmatprep.subr.mxu0 0.0
    %797 = vmatpush1.msra.mxu0 %v217
    %798 = vmatprep.subr.mxu0 0.0
    %799 = vmatpush1.msra.mxu0 %v218
    %800 = vmatprep.subr.mxu0 0.0
    %801 = vmatpush1.msra.mxu0 %v219
    %802 = vmatprep.subr.mxu0 0.0
    %803 = vmatpush1.msra.mxu0 %v220
    %804 = vmatprep.subr.mxu0 0.0
    %805 = vmatpush1.msra.mxu0 %v221
    %806 = vmatprep.subr.mxu0 0.0
    %807 = vmatpush1.msra.mxu0 %v222
    %808 = vmatprep.subr.mxu0 0.0
    %809 = vmatpush1.msra.mxu0 %v223
    %810 = vmatprep.subr.mxu0 0.0
    %811 = vmatpush1.msra.mxu0 %v224
    %812 = vmatprep.subr.mxu0 0.0
    %813 = vmatpush1.msra.mxu0 %v225
    %814 = vmatprep.subr.mxu0 0.0
    %815 = vmatpush1.msra.mxu0 %v226
    %816 = vmatprep.subr.mxu0 0.0
    %817 = vmatpush1.msra.mxu0 %v227
    %818 = vmatprep.subr.mxu0 0.0
    %819 = vmatpush1.msra.mxu0 %v228
    %820 = vmatprep.subr.mxu0 0.0
    %821 = vmatpush1.msra.mxu0 %v229
    %822 = vmatprep.subr.mxu0 0.0
    %823 = vmatpush1.msra.mxu0 %v230
    %824 = vmatprep.subr.mxu0 0.0
    %825 = vmatpush1.msra.mxu0 %v231
    %826 = vmatprep.subr.mxu0 0.0
    %827 = vmatpush1.msra.mxu0 %v232
    %828 = vmatprep.subr.mxu0 0.0
    %829 = vmatpush1.msra.mxu0 %v233
    %830 = vmatprep.subr.mxu0 0.0
    %831 = vmatpush1.msra.mxu0 %v234
    %832 = vmatprep.subr.mxu0 0.0
    %833 = vmatpush1.msra.mxu0 %v235
    %834 = vmatprep.subr.mxu0 0.0
    %835 = vmatpush1.msra.mxu0 %v236
    %836 = vmatprep.subr.mxu0 0.0
    %837 = vmatpush1.msra.mxu0 %v237
    %838 = vmatprep.subr.mxu0 0.0
    %839 = vmatpush1.msra.mxu0 %v238
    %840 = vmatprep.subr.mxu0 0.0
    %841 = vmatpush1.msra.mxu0 %v239
    %842 = vmatprep.subr.mxu0 0.0
    %843 = vmatpush1.msra.mxu0 %v240
    %844 = vmatprep.subr.mxu0 0.0
    %845 = vmatpush1.msra.mxu0 %v241
    %846 = vmatprep.subr.mxu0 0.0
    %847 = vmatpush1.msra.mxu0 %v242
    %848 = vmatprep.subr.mxu0 0.0
    %849 = vmatpush1.msra.mxu0 %v243
    %850 = vmatprep.subr.mxu0 0.0
    %851 = vmatpush1.msra.mxu0 %v244
    %852 = vmatprep.subr.mxu0 0.0
    %853 = vmatpush1.msra.mxu0 %v245
    %854 = vmatprep.subr.mxu0 0.0
    %855 = vmatpush1.msra.mxu0 %v246
    %856 = vmatprep.subr.mxu0 0.0
    %857 = vmatpush1.msra.mxu0 %v247
    %858 = vmatprep.subr.mxu0 0.0
    %859 = vmatpush1.msra.mxu0 %v248
    %860 = vmatprep.mubr.f32.mxu0 %v358
    %861 = vmatmul.mubr.f32.gmra.mrb[0].mxu0 %v350
    %v862 = vpop.f32.mrb[0].mxu0
    %v863 = vadd.f32 %v793, %v862
    %v864 = vpop.f32.mrb[0].mxu0
    %865 = vdwg.mxu0
    %866 = vmatprep.subr.mxu0 0.0
    %867 = vmatpush1.msra.mxu0 %v249
    %868 = vmatprep.subr.mxu0 0.0
    %869 = vmatpush1.msra.mxu0 %v250
    %870 = vmatprep.subr.mxu0 0.0
    %871 = vmatpush1.msra.mxu0 %v251
    %872 = vmatprep.subr.mxu0 0.0
    %873 = vmatpush1.msra.mxu0 %v252
    %874 = vmatprep.subr.mxu0 0.0
    %875 = vmatpush1.msra.mxu0 %v253
    %876 = vmatprep.subr.mxu0 0.0
    %877 = vmatpush1.msra.mxu0 %v254
    %878 = vmatprep.subr.mxu0 0.0
    %879 = vmatpush1.msra.mxu0 %v255
    %880 = vmatprep.subr.mxu0 0.0
    %881 = vmatpush1.msra.mxu0 %v256
    %882 = vmatprep.subr.mxu0 0.0
    %883 = vmatpush1.msra.mxu0 %v257
    %884 = vmatprep.subr.mxu0 0.0
    %885 = vmatpush1.msra.mxu0 %v258
    %886 = vmatprep.subr.mxu0 0.0
    %887 = vmatpush1.msra.mxu0 %v259
    %888 = vmatprep.subr.mxu0 0.0
    %889 = vmatpush1.msra.mxu0 %v260
    %890 = vmatprep.subr.mxu0 0.0
    %891 = vmatpush1.msra.mxu0 %v261
    %892 = vmatprep.subr.mxu0 0.0
    %893 = vmatpush1.msra.mxu0 %v262
    %894 = vmatprep.subr.mxu0 0.0
    %895 = vmatpush1.msra.mxu0 %v263
    %896 = vmatprep.subr.mxu0 0.0
    %897 = vmatpush1.msra.mxu0 %v264
    %898 = vmatprep.subr.mxu0 0.0
    %899 = vmatpush1.msra.mxu0 %v265
    %900 = vmatprep.subr.mxu0 0.0
    %901 = vmatpush1.msra.mxu0 %v266
    %902 = vmatprep.subr.mxu0 0.0
    %903 = vmatpush1.msra.mxu0 %v267
    %904 = vmatprep.subr.mxu0 0.0
    %905 = vmatpush1.msra.mxu0 %v268
    %906 = vmatprep.subr.mxu0 0.0
    %907 = vmatpush1.msra.mxu0 %v269
    %908 = vmatprep.subr.mxu0 0.0
    %909 = vmatpush1.msra.mxu0 %v270
    %910 = vmatprep.subr.mxu0 0.0
    %911 = vmatpush1.msra.mxu0 %v271
    %912 = vmatprep.subr.mxu0 0.0
    %913 = vmatpush1.msra.mxu0 %v272
    %914 = vmatprep.subr.mxu0 0.0
    %915 = vmatpush1.msra.mxu0 %v273
    %916 = vmatprep.subr.mxu0 0.0
    %917 = vmatpush1.msra.mxu0 %v274
    %918 = vmatprep.subr.mxu0 0.0
    %919 = vmatpush1.msra.mxu0 %v275
    %920 = vmatprep.subr.mxu0 0.0
    %921 = vmatpush1.msra.mxu0 %v276
    %922 = vmatprep.subr.mxu0 0.0
    %923 = vmatpush1.msra.mxu0 %v277
    %924 = vmatprep.subr.mxu0 0.0
    %925 = vmatpush1.msra.mxu0 %v278
    %926 = vmatprep.subr.mxu0 0.0
    %927 = vmatpush1.msra.mxu0 %v279
    %928 = vmatprep.subr.mxu0 0.0
    %929 = vmatpush1.msra.mxu0 %v280
    %930 = vmatprep.mubr.f32.mxu0 %v359
    %931 = vmatmul.mubr.f32.gmra.mrb[0].mxu0 %v357
    %v932 = vpop.f32.mrb[0].mxu0
    %v933 = vadd.f32 %v863, %v932
    %v934 = vpop.f32.mrb[0].mxu0
    %935 = vdwg.mxu0
    %v936 = vmax.f32 %v933, 0.0
    %v937 = vld [vmem:[%s3] sm:$0xff]
    %v938 = vld [vmem:[%s3 + $0x8] sm:$0xff]
    %v939 = vld [vmem:[%s3 + $0x10] sm:$0xff]
    %v940 = vld [vmem:[%s3 + $0x18] sm:$0xff]
    %v941 = vld [vmem:[%s3 + $0x20] sm:$0xff]
    %v942 = vld [vmem:[%s3 + $0x28] sm:$0xff]
    %v943 = vld [vmem:[%s3 + $0x30] sm:$0xff]
    %v944 = vld [vmem:[%s3 + $0x38] sm:$0xff]
    %v945 = vld [vmem:[%s4] sm:$0x1]
    %v947 = vlaneseq
    %v948 = vshrl.u32 %v947, 7
    %v949 = vsub.s32 0, %v948
    %v950 = vrot.slane %v945, %v949
    %vm952 = vcmask 523264
    %v954 = vsel %vm952, %v936, 0
    %956 = vmatprep.subr.mxu0 0.0
    %957 = vmatpush1.msra.mxu0 %v937
    %958 = vmatprep.subr.mxu0 0.0
    %959 = vmatpush1.msra.mxu0 %v938
    %960 = vmatprep.subr.mxu0 0.0
    %961 = vmatpush1.msra.mxu0 %v939
    %962 = vmatprep.subr.mxu0 0.0
    %963 = vmatpush1.msra.mxu0 %v940
    %964 = vmatprep.subr.mxu0 0.0
    %965 = vmatpush1.msra.mxu0 %v941
    %966 = vmatprep.subr.mxu0 0.0
    %967 = vmatpush1.msra.mxu0 %v942
    %968 = vmatprep.subr.mxu0 0.0
    %969 = vmatpush1.msra.mxu0 %v943
    %970 = vmatprep.subr.mxu0 0.0
    %971 = vmatpush1.msra.mxu0 %v944
    %972 = vmatprep.subr.mxu0 0.0
    %973 = vmatpush1.msra.mxu0 0.0
    %974 = vmatprep.subr.mxu0 0.0
    %975 = vmatpush1.msra.mxu0 0.0
    %976 = vmatprep.subr.mxu0 0.0
    %977 = vmatpush1.msra.mxu0 0.0
    %978 = vmatprep.subr.mxu0 0.0
    %979 = vmatpush1.msra.mxu0 0.0
    %980 = vmatprep.subr.mxu0 0.0
    %981 = vmatpush1.msra.mxu0 0.0
    %982 = vmatprep.subr.mxu0 0.0
    %983 = vmatpush1.msra.mxu0 0.0
    %984 = vmatprep.subr.mxu0 0.0
    %985 = vmatpush1.msra.mxu0 0.0
    %986 = vmatprep.subr.mxu0 0.0
    %987 = vmatpush1.msra.mxu0 0.0
    %988 = vmatprep.subr.mxu0 0.0
    %989 = vmatpush1.msra.mxu0 0.0
    %990 = vmatprep.subr.mxu0 0.0
    %991 = vmatpush1.msra.mxu0 0.0
    %992 = vmatprep.subr.mxu0 0.0
    %993 = vmatpush1.msra.mxu0 0.0
    %994 = vmatprep.subr.mxu0 0.0
    %995 = vmatpush1.msra.mxu0 0.0
    %996 = vmatprep.subr.mxu0 0.0
    %997 = vmatpush1.msra.mxu0 0.0
    %998 = vmatprep.subr.mxu0 0.0
    %999 = vmatpush1.msra.mxu0 0.0
    %1000 = vmatprep.subr.mxu0 0.0
    %1001 = vmatpush1.msra.mxu0 0.0
    %1002 = vmatprep.subr.mxu0 0.0
    %1003 = vmatpush1.msra.mxu0 0.0
    %1004 = vmatprep.subr.mxu0 0.0
    %1005 = vmatpush1.msra.mxu0 0.0
    %1006 = vmatprep.subr.mxu0 0.0
    %1007 = vmatpush1.msra.mxu0 0.0
    %1008 = vmatprep.subr.mxu0 0.0
    %1009 = vmatpush1.msra.mxu0 0.0
    %1010 = vmatprep.subr.mxu0 0.0
    %1011 = vmatpush1.msra.mxu0 0.0
    %1012 = vmatprep.subr.mxu0 0.0
    %1013 = vmatpush1.msra.mxu0 0.0
    %1014 = vmatprep.subr.mxu0 0.0
    %1015 = vmatpush1.msra.mxu0 0.0
    %1016 = vmatprep.subr.mxu0 0.0
    %1017 = vmatpush1.msra.mxu0 0.0
    %1018 = vmatprep.subr.mxu0 0.0
    %1019 = vmatpush1.msra.mxu0 0.0
    %1020 = vmatprep.mubr.f32.mxu0 0.0
    %1021 = vmatmul.mubr.f32.gmra.mrb[0].mxu0 %v954
    %v1022 = vpop.f32.mrb[0].mxu0
    %v1023 = vadd.f32 %v950, %v1022
    %v1024 = vpop.f32.mrb[0].mxu0
    %1025 = vdwg.mxu0
    %vm1026 = vcmask 156672
    %1027 = vst.msk [vmem:[#allocation2] sm:$0x3] %vm1026, %v1023
    // Predicated region
    $region22: #{net_forward.7} parent=1 // pred_check
      _
    $region23: #{net_forward.7} parent=1 // pred_check_branch
      %1029 = sbr.rel (0) target = $region25
    $region24: #{net_forward.7} parent=1 // pred_region
      %s1031 = ssub.s32 32, 32
      %1032 = vsyncadd [#allocation3], %s1031
      %s1034 = sshll.u32 [#allocation2], 4
      %s1035 = int_to_ptr.vmem [resolvable:$true] %s1034
      %1037 = dma.vmem_to_hbm [thread:$0]  %s1035, 32, %s5, [#allocation3]
    $region25: #{net_forward.7} parent=1 // pred_fallthru
      _
    // Predicated region
    $region26: #{net_forward.7} parent=1 // pred_check
      _
    $region27: #{net_forward.7} parent=1 // pred_check_branch
      %1039 = sbr.rel (0) target = $region29
    $region28: #{net_forward.7} parent=1 // pred_region
      %1040 = dma.done [#allocation3], 32
    $region29: #{net_forward.7} parent=1 // pred_fallthru
      _
    %1041 = vsyncpa [#allocation3], 1

</llo_original>
